<compile_context>
chip_gen: v6e
topology: v6e:2x2x1
jax: 0.10.0
libtpu: 0.0.40
codegen_flags: <defaults>
</compile_context>

<pallas_src>
import functools
import numpy as np

import jax
import jax.numpy as jnp
from jax.experimental import pallas as pl
from jax.experimental.pallas import tpu as pltpu


# ----------------------------------------------------------------------------
# Fused Swin-block kernel
# ----------------------------------------------------------------------------

def swin_block_kernel(x_ref, bias_ref, oneh_ref, g1_ref, b1_ref, wqkv_ref,
                      bqkv_ref, wproj_ref, bproj_ref, g2_ref, b2_ref,
                      w1_ref, b1m_ref, w2_ref, b2m_ref, o_ref, *, num_heads):
    """One (1, H, ws, C) tile == H//ws windows (a column of windows)."""
    _, Hh, ws, C = x_ref.shape
    G = Hh // ws                 # windows in this tile
    N = ws * ws                  # tokens per window
    M = G * N
    inv_c = np.float32(1.0 / C)

    x = x_ref[0].reshape(M, C).astype(jnp.float32)        # free reshape

    # ---- LayerNorm1 (single-pass statistics) ----
    s1 = jnp.sum(x, axis=-1, keepdims=True)
    s2 = jnp.sum(x * x, axis=-1, keepdims=True)
    mu = s1 * inv_c
    var = s2 * inv_c - mu * mu
    xn = (x - mu) * jax.lax.rsqrt(var + 1e-5) * g1_ref[0] + b1_ref[0]

    # ---- qkv projection (bf16 operands, f32 acc; q-scale folded into wqkv) ----
    qkv = jnp.dot(xn.astype(jnp.bfloat16), wqkv_ref[...],
                  preferred_element_type=jnp.float32) + bqkv_ref[0]
    q = qkv[:, :C].reshape(G, N, C)
    k = qkv[:, C:2 * C].reshape(G, N, C)
    v = qkv[:, 2 * C:].reshape(G, N, C).astype(jnp.bfloat16)

    oneh = oneh_ref[...]                                   # (nH, 1, C) head one-hot

    # ---- head-batched scores: Q' (G, nH*N, C) @ kT (G, C, N) ----
    qh = (q[:, None, :, :] * oneh).reshape(G, num_heads * N, C)
    kt = jnp.swapaxes(k, 1, 2)                             # k transpose hoisted once
    s = jnp.einsum('gpc,gcm->gpm',
                   qh.astype(jnp.bfloat16), kt.astype(jnp.bfloat16),
                   preferred_element_type=jnp.float32)     # (G, nH*N, N)

    gb = bias_ref.shape[0] // num_heads                    # 1 (unshifted) or G (shifted)
    bias = bias_ref[...].reshape(gb, num_heads, N, N).astype(jnp.float32)
    s = s.reshape(G, num_heads, N, N) + bias               # broadcasts when gb == 1

    # ---- softmax (EUP reciprocal) ----
    s = s - jnp.max(s, axis=-1, keepdims=True)
    p = jnp.exp(s)
    p = p * pl.reciprocal(jnp.sum(p, axis=-1, keepdims=True), approx=True)

    # ---- head-batched P @ V (MXU), head-select reduction (VPU) ----
    pv = jnp.einsum('gpm,gmc->gpc',
                    p.reshape(G, num_heads * N, N).astype(jnp.bfloat16), v,
                    preferred_element_type=jnp.float32)    # (G, nH*N, C)
    att = jnp.sum(pv.reshape(G, num_heads, N, C) * oneh, axis=1)     # (G, N, C)

    # ---- output projection ----
    att = jnp.dot(att.reshape(M, C).astype(jnp.bfloat16), wproj_ref[...],
                  preferred_element_type=jnp.float32) + bproj_ref[0]

    # ---- residual + LayerNorm2 + MLP + residual (all per-token) ----
    x1 = x + att
    t1 = jnp.sum(x1, axis=-1, keepdims=True)
    t2 = jnp.sum(x1 * x1, axis=-1, keepdims=True)
    mu2 = t1 * inv_c
    var2 = t2 * inv_c - mu2 * mu2
    x1n = (x1 - mu2) * jax.lax.rsqrt(var2 + 1e-5) * g2_ref[0] + b2_ref[0]

    h = jnp.dot(x1n.astype(jnp.bfloat16), w1_ref[...],
                preferred_element_type=jnp.float32) + b1m_ref[0]
    h = 0.5 * h * (1.0 + jax.lax.erf(h * np.float32(0.7071067811865476)))
    y = jnp.dot(h.astype(jnp.bfloat16), w2_ref[...],
                preferred_element_type=jnp.float32) + b2m_ref[0]

    o_ref[...] = (x1 + y).astype(o_ref.dtype).reshape(1, Hh, ws, C)


# ----------------------------------------------------------------------------
# pallas_call wrapper
# ----------------------------------------------------------------------------

def swin_block_pallas(x_img, prep, *, num_heads, ws):
    B, H, W, C = x_img.shape
    N = ws * ws
    Gh = H // ws
    Wn = W // ws
    hidden = prep["w1"].shape[1]

    bias = prep["bias"]
    per_window_bias = bias.shape[0] > num_heads
    bias_block_rows = Gh * num_heads if per_window_bias else num_heads

    # ---- explicit VMEM accounting: 2x pipeline buffers on blocks + scratch ----
    f32b, bf16b = 4, 2
    m_tok = Gh * N
    block_bytes = (2 * H * ws * C * f32b
                   + bias_block_rows * N * N * bf16b
                   + (3 * C * C + C * C + 2 * C * hidden) * bf16b
                   + (12 * C + 2 * hidden + num_heads * C) * f32b)
    scratch_bytes = f32b * (m_tok * (10 * C + 2 * hidden)
                            + 3 * num_heads * m_tok * N
                            + 2 * num_heads * m_tok * C)
    vmem_limit = int(min(max(2 * (2 * block_bytes + scratch_bytes), 8 << 20),
                         32 << 20))

    zero2 = lambda b, j: (0, 0)
    zero3 = lambda b, j: (0, 0, 0)
    bias_map = (lambda b, j: (j, 0, 0)) if per_window_bias else zero3

    in_specs = [
        pl.BlockSpec((1, H, ws, C), lambda b, j: (b, 0, j, 0)),    # x (window column)
        pl.BlockSpec((bias_block_rows, N, N), bias_map),           # rel-bias (+mask), bf16
        pl.BlockSpec((num_heads, 1, C), zero3),                    # head one-hot
        pl.BlockSpec((1, C), zero2),                               # ln1 gamma
        pl.BlockSpec((1, C), zero2),                               # ln1 beta
        pl.BlockSpec((C, 3 * C), zero2),                           # wqkv (bf16, q pre-scaled)
        pl.BlockSpec((1, 3 * C), zero2),                           # bqkv
        pl.BlockSpec((C, C), zero2),                               # wproj (bf16)
        pl.BlockSpec((1, C), zero2),                               # bproj
        pl.BlockSpec((1, C), zero2),                               # ln2 gamma
        pl.BlockSpec((1, C), zero2),                               # ln2 beta
        pl.BlockSpec((C, hidden), zero2),                          # w1 (bf16)
        pl.BlockSpec((1, hidden), zero2),                          # b1
        pl.BlockSpec((hidden, C), zero2),                          # w2 (bf16)
        pl.BlockSpec((1, C), zero2),                               # b2
    ]

    return pl.pallas_call(
        functools.partial(swin_block_kernel, num_heads=num_heads),
        out_shape=jax.ShapeDtypeStruct((B, H, W, C), x_img.dtype),
        grid=(B, Wn),
        in_specs=in_specs,
        out_specs=pl.BlockSpec((1, H, ws, C), lambda b, j: (b, 0, j, 0)),
        compiler_params=pltpu.CompilerParams(
            dimension_semantics=("parallel", "parallel"),
            vmem_limit_bytes=vmem_limit),
    )(x_img, bias, prep["onehot"],
      prep["g1"], prep["b1"], prep["wqkv"], prep["bqkv"],
      prep["wproj"], prep["bproj"], prep["g2"], prep["b2"],
      prep["w1"], prep["b1m"], prep["w2"], prep["b2m"])


# ----------------------------------------------------------------------------
# Host-side precompute (done ONCE, eagerly, outside jit)
# ----------------------------------------------------------------------------

def calculate_mask(H, W, ws, shift):
    img_mask = np.zeros((1, H, W, 1), dtype=np.float32)
    h_slices = (slice(0, -ws), slice(-ws, -shift), slice(-shift, None))
    w_slices = (slice(0, -ws), slice(-ws, -shift), slice(-shift, None))
    cnt = 0
    for h in h_slices:
        for w in w_slices:
            img_mask[:, h, w, :] = cnt
            cnt += 1
    mw = img_mask.reshape(1, H // ws, ws, W // ws, ws, 1)
    mw = mw.transpose(0, 1, 3, 2, 4, 5).reshape(-1, ws * ws)
    attn_mask = mw[:, None, :] - mw[:, :, None]
    attn_mask = np.where(attn_mask != 0, -100.0, 0.0).astype(np.float32)
    return jnp.asarray(attn_mask)                  # (n_win, N, N)


def relative_position_index(ws):
    coords_h = np.arange(ws)
    coords_w = np.arange(ws)
    coords = np.stack(np.meshgrid(coords_h, coords_w, indexing="ij"))    # (2, ws, ws)
    coords_flat = coords.reshape(2, -1)
    rel = coords_flat[:, :, None] - coords_flat[:, None, :]              # (2, N, N)
    rel = rel.transpose(1, 2, 0).copy()
    rel[:, :, 0] += ws - 1
    rel[:, :, 1] += ws - 1
    rel[:, :, 0] *= 2 * ws - 1
    return rel.sum(-1)                                                   # (N, N)


def _layer_geometry(x_size, input_resolution, window_size):
    H, W = x_size
    ws = window_size
    shift_allowed = min(input_resolution) > window_size
    if not shift_allowed:
        ws = min(input_resolution)
    return H, W, ws, shift_allowed, window_size // 2


def prepare_layer(block_params, *, x_size, input_resolution, depth, num_heads,
                  window_size):
    """Fold q-scale into qkv, cast weights to bf16, merge rel-pos bias + shift
    mask into one per-block bf16 tensor in column-of-windows order."""
    H, W, ws, shift_allowed, shift = _layer_geometry(x_size, input_resolution,
                                                     window_size)
    N = ws * ws
    Hn, Wn = H // ws, W // ws
    C = block_params[0]["g1"].shape[0]
    hd = C // num_heads
    scale = np.float32(hd ** (-0.5))
    hidden = block_params[0]["w1"].shape[1]

    rel_index = jnp.asarray(relative_position_index(ws).reshape(-1))
    onehot = jnp.asarray(
        np.repeat(np.eye(num_heads, dtype=np.float32), hd, axis=1)
    ).reshape(num_heads, 1, C)
    mask = (calculate_mask(H, W, ws, shift)
            if (shift_allowed and depth > 1) else None)

    preps = []
    for i in range(depth):
        p = block_params[i]
        shifted = (i % 2 == 1) and shift_allowed

        rb = p["rpb_table"][rel_index].reshape(N, N, num_heads)
        rel_bias = jnp.transpose(rb, (2, 0, 1))                    # (nH, N, N)
        if shifted:
            comb = rel_bias[None] + mask[:, None]                  # (n_win, nH, N, N)
            comb = comb.reshape(Hn, Wn, num_heads, N, N)
            comb = jnp.transpose(comb, (1, 0, 2, 3, 4))            # column-major windows
            comb = comb.reshape(Wn * Hn * num_heads, N, N)
        else:
            comb = rel_bias                                        # (nH, N, N)

        wqkv = jnp.concatenate([p["wqkv"][:, :C] * scale, p["wqkv"][:, C:]],
                               axis=1).astype(jnp.bfloat16)
        bqkv = jnp.concatenate([p["bqkv"][:C] * scale, p["bqkv"][C:]]
                               ).reshape(1, 3 * C)

        preps.append(dict(
            bias=comb.astype(jnp.bfloat16),
            onehot=onehot,
            g1=p["g1"].reshape(1, C), b1=p["b1"].reshape(1, C),
            wqkv=wqkv, bqkv=bqkv,
            wproj=p["wproj"].astype(jnp.bfloat16),
            bproj=p["bproj"].reshape(1, C),
            g2=p["g2"].reshape(1, C), b2=p["b2"].reshape(1, C),
            w1=p["w1"].astype(jnp.bfloat16),
            b1m=p["b1m"].reshape(1, hidden),
            w2=p["w2"].astype(jnp.bfloat16),
            b2m=p["b2m"].reshape(1, C),
        ))
    return preps


def init_block_params(key, dim, num_heads, window_size, mlp_ratio):
    hidden = int(dim * mlp_ratio)
    ks = jax.random.split(key, 8)
    std = 0.02
    return {
        "g1": jnp.ones((dim,), jnp.float32),
        "b1": jnp.zeros((dim,), jnp.float32),
        "g2": jnp.ones((dim,), jnp.float32),
        "b2": jnp.zeros((dim,), jnp.float32),
        "wqkv": std * jax.random.normal(ks[0], (dim, 3 * dim), jnp.float32),
        "bqkv": jnp.zeros((3 * dim,), jnp.float32),
        "wproj": std * jax.random.normal(ks[1], (dim, dim), jnp.float32),
        "bproj": jnp.zeros((dim,), jnp.float32),
        "rpb_table": std * jax.random.normal(
            ks[2], ((2 * window_size - 1) * (2 * window_size - 1), num_heads),
            jnp.float32),
        "w1": std * jax.random.normal(ks[3], (dim, hidden), jnp.float32),
        "b1m": jnp.zeros((hidden,), jnp.float32),
        "w2": std * jax.random.normal(ks[4], (hidden, dim), jnp.float32),
        "b2m": jnp.zeros((dim,), jnp.float32),
    }


# ----------------------------------------------------------------------------
# Jitted forward (reshape + roll glue + one pallas_call per block)
# ----------------------------------------------------------------------------

def basic_layer_forward(x, preps, *, x_size, input_resolution, depth,
                        num_heads, window_size):
    H, W, ws, shift_allowed, shift = _layer_geometry(x_size, input_resolution,
                                                     window_size)
    B, C = x.shape[0], x.shape[1]

    # matches PyTorch `x.view(B, H, W, C)` (raw reshape on an NCHW tensor)
    x_img = x.reshape(B, H, W, C)

    for i in range(depth):
        shifted = (i % 2 == 1) and shift_allowed
        # TODO(synk): the cyclic shift wraps around window boundaries, which a
        # rectangular BlockSpec tile cannot express; it stays as jnp.roll glue.
        if shifted:
            x_img = jnp.roll(x_img, (-shift, -shift), (1, 2))
        x_img = swin_block_pallas(x_img, preps[i], num_heads=num_heads, ws=ws)
        if shifted:
            x_img = jnp.roll(x_img, (shift, shift), (1, 2))

    # TODO(synk): downsample=None in this configuration; not implemented.
    return x_img.reshape(B, C, H, W)   # matches PyTorch `x.view(B, C, H, W)`


# ----------------------------------------------------------------------------
# main
# ----------------------------------------------------------------------------

if __name__ == "__main__":
    B, C, H, W = 2, 32, 16, 16
    depth = 2
    num_heads = 4
    window_size = 8
    mlp_ratio = 4.0

    key = jax.random.PRNGKey(0)
    kx, kp = jax.random.split(key)
    x = jax.random.normal(kx, (B, C, H, W), jnp.float32)

    pkeys = jax.random.split(kp, depth)
    block_params = [init_block_params(pkeys[i], C, num_heads, window_size, mlp_ratio)
                    for i in range(depth)]

    cfg = dict(x_size=(H, W), input_resolution=(H, W), depth=depth,
               num_heads=num_heads, window_size=window_size)

    # one-time eager prep: bf16 weights, q-scale folding, bias+mask fusion
    preps = prepare_layer(block_params, **cfg)

    fwd = jax.jit(functools.partial(basic_layer_forward, **cfg))

    out = fwd(x, preps)
    out = jax.block_until_ready(out)
    assert out.shape == (B, C, H, W)
    assert jnp.all(jnp.isfinite(out))
    print("KERNEL_OK")
</pallas_src>

<mosaic_0001>
module attributes {stable_mosaic.version = 11 : i64} {
  func.func @swin_block_kernel(%arg0: i32, %arg1: i32, %arg2: memref<1x16x8x32xf32, #tpu.memory_space<vmem>>, %arg3: memref<4x64x64xbf16, #tpu.memory_space<vmem>>, %arg4: memref<4x1x32xf32, #tpu.memory_space<vmem>>, %arg5: memref<1x32xf32, #tpu.memory_space<vmem>>, %arg6: memref<1x32xf32, #tpu.memory_space<vmem>>, %arg7: memref<32x96xbf16, #tpu.memory_space<vmem>>, %arg8: memref<1x96xf32, #tpu.memory_space<vmem>>, %arg9: memref<32x32xbf16, #tpu.memory_space<vmem>>, %arg10: memref<1x32xf32, #tpu.memory_space<vmem>>, %arg11: memref<1x32xf32, #tpu.memory_space<vmem>>, %arg12: memref<1x32xf32, #tpu.memory_space<vmem>>, %arg13: memref<32x128xbf16, #tpu.memory_space<vmem>>, %arg14: memref<1x128xf32, #tpu.memory_space<vmem>>, %arg15: memref<128x32xbf16, #tpu.memory_space<vmem>>, %arg16: memref<1x32xf32, #tpu.memory_space<vmem>>, %arg17: memref<1x16x8x32xf32, #tpu.memory_space<vmem>>) attributes {dimension_semantics = [#tpu.dimension_semantics<parallel>, #tpu.dimension_semantics<parallel>], iteration_bounds = array<i64: 2, 2>, scalar_prefetch = 0 : i64, scratch_operands = 0 : i64, tpu.core_type = #tpu.core_type<tc>, window_params = [{transform_indices = @transform_0, window_bounds = array<i64: 1, 16, 8, 32>}, {pipeline_mode = #tpu.pipeline_mode<synchronous>, transform_indices = @transform_1, window_bounds = array<i64: 4, 64, 64>}, {pipeline_mode = #tpu.pipeline_mode<synchronous>, transform_indices = @transform_2, window_bounds = array<i64: 4, 1, 32>}, {pipeline_mode = #tpu.pipeline_mode<synchronous>, transform_indices = @transform_3, window_bounds = array<i64: 1, 32>}, {pipeline_mode = #tpu.pipeline_mode<synchronous>, transform_indices = @transform_4, window_bounds = array<i64: 1, 32>}, {pipeline_mode = #tpu.pipeline_mode<synchronous>, transform_indices = @transform_5, window_bounds = array<i64: 32, 96>}, {pipeline_mode = #tpu.pipeline_mode<synchronous>, transform_indices = @transform_6, window_bounds = array<i64: 1, 96>}, {pipeline_mode = #tpu.pipeline_mode<synchronous>, transform_indices = @transform_7, window_bounds = array<i64: 32, 32>}, {pipeline_mode = #tpu.pipeline_mode<synchronous>, transform_indices = @transform_8, window_bounds = array<i64: 1, 32>}, {pipeline_mode = #tpu.pipeline_mode<synchronous>, transform_indices = @transform_9, window_bounds = array<i64: 1, 32>}, {pipeline_mode = #tpu.pipeline_mode<synchronous>, transform_indices = @transform_10, window_bounds = array<i64: 1, 32>}, {pipeline_mode = #tpu.pipeline_mode<synchronous>, transform_indices = @transform_11, window_bounds = array<i64: 32, 128>}, {pipeline_mode = #tpu.pipeline_mode<synchronous>, transform_indices = @transform_12, window_bounds = array<i64: 1, 128>}, {pipeline_mode = #tpu.pipeline_mode<synchronous>, transform_indices = @transform_13, window_bounds = array<i64: 128, 32>}, {pipeline_mode = #tpu.pipeline_mode<synchronous>, transform_indices = @transform_14, window_bounds = array<i64: 1, 32>}, {transform_indices = @transform_15, window_bounds = array<i64: 1, 16, 8, 32>}]} {
    %c0 = arith.constant 0 : index
    %c0_0 = arith.constant 0 : index
    %c0_1 = arith.constant 0 : index
    %c0_2 = arith.constant 0 : index
    %0 = vector.load %arg2[%c0, %c0_0, %c0_1, %c0_2] : memref<1x16x8x32xf32, #tpu.memory_space<vmem>>, vector<1x16x8x32xf32>
    %1 = vector.shape_cast %0 : vector<1x16x8x32xf32> to vector<16x8x32xf32>
    %2 = vector.shape_cast %1 : vector<16x8x32xf32> to vector<128x32xf32>
    %cst = arith.constant dense<0.000000e+00> : vector<128xf32>
    %3 = vector.multi_reduction <add>, %2, %cst [1] : vector<128x32xf32> to vector<128xf32>
    %4 = vector.shape_cast %3 : vector<128xf32> to vector<128x1xf32>
    %5 = arith.mulf %2, %2 : vector<128x32xf32>
    %cst_3 = arith.constant dense<0.000000e+00> : vector<128xf32>
    %6 = vector.multi_reduction <add>, %5, %cst_3 [1] : vector<128x32xf32> to vector<128xf32>
    %7 = vector.shape_cast %6 : vector<128xf32> to vector<128x1xf32>
    %cst_4 = arith.constant 3.125000e-02 : f32
    %8 = vector.broadcast %cst_4 : f32 to vector<128x1xf32>
    %9 = arith.mulf %4, %8 : vector<128x1xf32>
    %cst_5 = arith.constant 3.125000e-02 : f32
    %10 = vector.broadcast %cst_5 : f32 to vector<128x1xf32>
    %11 = arith.mulf %7, %10 : vector<128x1xf32>
    %12 = arith.mulf %9, %9 : vector<128x1xf32>
    %13 = arith.subf %11, %12 : vector<128x1xf32>
    %14 = vector.broadcast %9 : vector<128x1xf32> to vector<128x32xf32>
    %15 = arith.subf %2, %14 : vector<128x32xf32>
    %cst_6 = arith.constant 9.99999974E-6 : f32
    %16 = vector.broadcast %cst_6 : f32 to vector<128x1xf32>
    %17 = arith.addf %13, %16 : vector<128x1xf32>
    %18 = math.rsqrt %17 : vector<128x1xf32>
    %19 = vector.broadcast %18 : vector<128x1xf32> to vector<128x32xf32>
    %20 = arith.mulf %15, %19 : vector<128x32xf32>
    %c0_7 = arith.constant 0 : index
    %c0_8 = arith.constant 0 : index
    %21 = vector.load %arg5[%c0_7, %c0_8] : memref<1x32xf32, #tpu.memory_space<vmem>>, vector<1x32xf32>
    %22 = vector.shape_cast %21 : vector<1x32xf32> to vector<32xf32>
    %23 = vector.shape_cast %22 : vector<32xf32> to vector<1x32xf32>
    %24 = vector.broadcast %23 : vector<1x32xf32> to vector<128x32xf32>
    %25 = arith.mulf %20, %24 : vector<128x32xf32>
    %c0_9 = arith.constant 0 : index
    %c0_10 = arith.constant 0 : index
    %26 = vector.load %arg6[%c0_9, %c0_10] : memref<1x32xf32, #tpu.memory_space<vmem>>, vector<1x32xf32>
    %27 = vector.shape_cast %26 : vector<1x32xf32> to vector<32xf32>
    %28 = vector.shape_cast %27 : vector<32xf32> to vector<1x32xf32>
    %29 = vector.broadcast %28 : vector<1x32xf32> to vector<128x32xf32>
    %30 = arith.addf %25, %29 : vector<128x32xf32>
    %31 = arith.truncf %30 : vector<128x32xf32> to vector<128x32xbf16>
    %c0_11 = arith.constant 0 : index
    %c0_12 = arith.constant 0 : index
    %32 = vector.load %arg7[%c0_11, %c0_12] : memref<32x96xbf16, #tpu.memory_space<vmem>>, vector<32x96xbf16>
    %cst_13 = arith.constant dense<0.000000e+00> : vector<128x96xf32>
    %33 = tpu.matmul %31, %32, %cst_13 {dimension_numbers = #tpu.dot_dimension_numbers<[1], [0], [0], [1], [0, 0, 1, 1], [], []>} : vector<128x32xbf16>, vector<32x96xbf16>, vector<128x96xf32> -> vector<128x96xf32>
    %c0_14 = arith.constant 0 : index
    %c0_15 = arith.constant 0 : index
    %34 = vector.load %arg8[%c0_14, %c0_15] : memref<1x96xf32, #tpu.memory_space<vmem>>, vector<1x96xf32>
    %35 = vector.shape_cast %34 : vector<1x96xf32> to vector<96xf32>
    %36 = vector.shape_cast %35 : vector<96xf32> to vector<1x96xf32>
    %37 = vector.broadcast %36 : vector<1x96xf32> to vector<128x96xf32>
    %38 = arith.addf %33, %37 : vector<128x96xf32>
    %39 = vector.extract_strided_slice %38 {offsets = [0, 0], sizes = [128, 32], strides = [1, 1]} : vector<128x96xf32> to vector<128x32xf32>
    %40 = vector.shape_cast %39 : vector<128x32xf32> to vector<2x64x32xf32>
    %41 = vector.extract_strided_slice %38 {offsets = [0, 32], sizes = [128, 32], strides = [1, 1]} : vector<128x96xf32> to vector<128x32xf32>
    %42 = vector.shape_cast %41 : vector<128x32xf32> to vector<2x64x32xf32>
    %43 = vector.extract_strided_slice %38 {offsets = [0, 64], sizes = [128, 32], strides = [1, 1]} : vector<128x96xf32> to vector<128x32xf32>
    %44 = vector.shape_cast %43 : vector<128x32xf32> to vector<2x64x32xf32>
    %45 = arith.truncf %44 : vector<2x64x32xf32> to vector<2x64x32xbf16>
    %c0_16 = arith.constant 0 : index
    %c0_17 = arith.constant 0 : index
    %c0_18 = arith.constant 0 : index
    %46 = vector.load %arg4[%c0_16, %c0_17, %c0_18] : memref<4x1x32xf32, #tpu.memory_space<vmem>>, vector<4x1x32xf32>
    %47 = vector.shape_cast %40 : vector<2x64x32xf32> to vector<2x1x64x32xf32>
    %48 = vector.shape_cast %46 : vector<4x1x32xf32> to vector<1x4x1x32xf32>
    %49 = vector.broadcast %47 : vector<2x1x64x32xf32> to vector<2x4x64x32xf32>
    %50 = vector.broadcast %48 : vector<1x4x1x32xf32> to vector<2x4x64x32xf32>
    %51 = arith.mulf %49, %50 : vector<2x4x64x32xf32>
    %52 = vector.shape_cast %51 : vector<2x4x64x32xf32> to vector<2x256x32xf32>
    %53 = tpu.transpose %42, [0, 2, 1] : vector<2x64x32xf32> -> vector<2x32x64xf32>
    %54 = arith.truncf %52 : vector<2x256x32xf32> to vector<2x256x32xbf16>
    %55 = arith.truncf %53 : vector<2x32x64xf32> to vector<2x32x64xbf16>
    "tpu.trace_start"() <{level = 10 : i32, message = "gpc,gcm->gpm"}> : () -> ()
    %cst_19 = arith.constant dense<0.000000e+00> : vector<2x256x64xf32>
    %56 = tpu.matmul %54, %55, %cst_19 {dimension_numbers = #tpu.dot_dimension_numbers<[2], [1], [1], [2], [0, 0, 0, 1, 1, 2], [0], [0]>} : vector<2x256x32xbf16>, vector<2x32x64xbf16>, vector<2x256x64xf32> -> vector<2x256x64xf32>
    "tpu.trace_stop"() : () -> ()
    %c0_20 = arith.constant 0 : index
    %c0_21 = arith.constant 0 : index
    %c0_22 = arith.constant 0 : index
    %57 = vector.load %arg3[%c0_20, %c0_21, %c0_22] : memref<4x64x64xbf16, #tpu.memory_space<vmem>>, vector<4x64x64xbf16>
    %58 = vector.shape_cast %57 : vector<4x64x64xbf16> to vector<1x4x64x64xbf16>
    %59 = arith.extf %58 : vector<1x4x64x64xbf16> to vector<1x4x64x64xf32>
    %60 = vector.shape_cast %56 : vector<2x256x64xf32> to vector<2x4x64x64xf32>
    %61 = vector.broadcast %59 : vector<1x4x64x64xf32> to vector<2x4x64x64xf32>
    %62 = arith.addf %60, %61 : vector<2x4x64x64xf32>
    %cst_23 = arith.constant dense<0xFF800000> : vector<2x4x64xf32>
    %63 = vector.multi_reduction <maximumf>, %62, %cst_23 [3] : vector<2x4x64x64xf32> to vector<2x4x64xf32>
    %64 = vector.shape_cast %63 : vector<2x4x64xf32> to vector<2x4x64x1xf32>
    %65 = vector.broadcast %64 : vector<2x4x64x1xf32> to vector<2x4x64x64xf32>
    %66 = arith.subf %62, %65 : vector<2x4x64x64xf32>
    %67 = math.exp %66 : vector<2x4x64x64xf32>
    %cst_24 = arith.constant dense<0.000000e+00> : vector<2x4x64xf32>
    %68 = vector.multi_reduction <add>, %67, %cst_24 [3] : vector<2x4x64x64xf32> to vector<2x4x64xf32>
    %69 = vector.shape_cast %68 : vector<2x4x64xf32> to vector<2x4x64x1xf32>
    %70 = tpu.reciprocal %69 {approx = true} : vector<2x4x64x1xf32> -> vector<2x4x64x1xf32>
    %71 = vector.broadcast %70 : vector<2x4x64x1xf32> to vector<2x4x64x64xf32>
    %72 = arith.mulf %67, %71 : vector<2x4x64x64xf32>
    %73 = vector.shape_cast %72 : vector<2x4x64x64xf32> to vector<2x256x64xf32>
    %74 = arith.truncf %73 : vector<2x256x64xf32> to vector<2x256x64xbf16>
    "tpu.trace_start"() <{level = 10 : i32, message = "gpm,gmc->gpc"}> : () -> ()
    %cst_25 = arith.constant dense<0.000000e+00> : vector<2x256x32xf32>
    %75 = tpu.matmul %74, %45, %cst_25 {dimension_numbers = #tpu.dot_dimension_numbers<[2], [1], [1], [2], [0, 0, 0, 1, 1, 2], [0], [0]>} : vector<2x256x64xbf16>, vector<2x64x32xbf16>, vector<2x256x32xf32> -> vector<2x256x32xf32>
    "tpu.trace_stop"() : () -> ()
    %76 = vector.shape_cast %75 : vector<2x256x32xf32> to vector<2x4x64x32xf32>
    %77 = vector.shape_cast %46 : vector<4x1x32xf32> to vector<1x4x1x32xf32>
    %78 = vector.broadcast %77 : vector<1x4x1x32xf32> to vector<2x4x64x32xf32>
    %79 = arith.mulf %76, %78 : vector<2x4x64x32xf32>
    %cst_26 = arith.constant dense<0.000000e+00> : vector<2x64x32xf32>
    %80 = vector.multi_reduction <add>, %79, %cst_26 [1] : vector<2x4x64x32xf32> to vector<2x64x32xf32>
    %81 = vector.shape_cast %80 : vector<2x64x32xf32> to vector<128x32xf32>
    %82 = arith.truncf %81 : vector<128x32xf32> to vector<128x32xbf16>
    %c0_27 = arith.constant 0 : index
    %c0_28 = arith.constant 0 : index
    %83 = vector.load %arg9[%c0_27, %c0_28] : memref<32x32xbf16, #tpu.memory_space<vmem>>, vector<32x32xbf16>
    %cst_29 = arith.constant dense<0.000000e+00> : vector<128x32xf32>
    %84 = tpu.matmul %82, %83, %cst_29 {dimension_numbers = #tpu.dot_dimension_numbers<[1], [0], [0], [1], [0, 0, 1, 1], [], []>} : vector<128x32xbf16>, vector<32x32xbf16>, vector<128x32xf32> -> vector<128x32xf32>
    %c0_30 = arith.constant 0 : index
    %c0_31 = arith.constant 0 : index
    %85 = vector.load %arg10[%c0_30, %c0_31] : memref<1x32xf32, #tpu.memory_space<vmem>>, vector<1x32xf32>
    %86 = vector.shape_cast %85 : vector<1x32xf32> to vector<32xf32>
    %87 = vector.shape_cast %86 : vector<32xf32> to vector<1x32xf32>
    %88 = vector.broadcast %87 : vector<1x32xf32> to vector<128x32xf32>
    %89 = arith.addf %84, %88 : vector<128x32xf32>
    %90 = arith.addf %2, %89 : vector<128x32xf32>
    %cst_32 = arith.constant dense<0.000000e+00> : vector<128xf32>
    %91 = vector.multi_reduction <add>, %90, %cst_32 [1] : vector<128x32xf32> to vector<128xf32>
    %92 = vector.shape_cast %91 : vector<128xf32> to vector<128x1xf32>
    %93 = arith.mulf %90, %90 : vector<128x32xf32>
    %cst_33 = arith.constant dense<0.000000e+00> : vector<128xf32>
    %94 = vector.multi_reduction <add>, %93, %cst_33 [1] : vector<128x32xf32> to vector<128xf32>
    %95 = vector.shape_cast %94 : vector<128xf32> to vector<128x1xf32>
    %cst_34 = arith.constant 3.125000e-02 : f32
    %96 = vector.broadcast %cst_34 : f32 to vector<128x1xf32>
    %97 = arith.mulf %92, %96 : vector<128x1xf32>
    %cst_35 = arith.constant 3.125000e-02 : f32
    %98 = vector.broadcast %cst_35 : f32 to vector<128x1xf32>
    %99 = arith.mulf %95, %98 : vector<128x1xf32>
    %100 = arith.mulf %97, %97 : vector<128x1xf32>
    %101 = arith.subf %99, %100 : vector<128x1xf32>
    %102 = vector.broadcast %97 : vector<128x1xf32> to vector<128x32xf32>
    %103 = arith.subf %90, %102 : vector<128x32xf32>
    %cst_36 = arith.constant 9.99999974E-6 : f32
    %104 = vector.broadcast %cst_36 : f32 to vector<128x1xf32>
    %105 = arith.addf %101, %104 : vector<128x1xf32>
    %106 = math.rsqrt %105 : vector<128x1xf32>
    %107 = vector.broadcast %106 : vector<128x1xf32> to vector<128x32xf32>
    %108 = arith.mulf %103, %107 : vector<128x32xf32>
    %c0_37 = arith.constant 0 : index
    %c0_38 = arith.constant 0 : index
    %109 = vector.load %arg11[%c0_37, %c0_38] : memref<1x32xf32, #tpu.memory_space<vmem>>, vector<1x32xf32>
    %110 = vector.shape_cast %109 : vector<1x32xf32> to vector<32xf32>
    %111 = vector.shape_cast %110 : vector<32xf32> to vector<1x32xf32>
    %112 = vector.broadcast %111 : vector<1x32xf32> to vector<128x32xf32>
    %113 = arith.mulf %108, %112 : vector<128x32xf32>
    %c0_39 = arith.constant 0 : index
    %c0_40 = arith.constant 0 : index
    %114 = vector.load %arg12[%c0_39, %c0_40] : memref<1x32xf32, #tpu.memory_space<vmem>>, vector<1x32xf32>
    %115 = vector.shape_cast %114 : vector<1x32xf32> to vector<32xf32>
    %116 = vector.shape_cast %115 : vector<32xf32> to vector<1x32xf32>
    %117 = vector.broadcast %116 : vector<1x32xf32> to vector<128x32xf32>
    %118 = arith.addf %113, %117 : vector<128x32xf32>
    %119 = arith.truncf %118 : vector<128x32xf32> to vector<128x32xbf16>
    %c0_41 = arith.constant 0 : index
    %c0_42 = arith.constant 0 : index
    %120 = vector.load %arg13[%c0_41, %c0_42] : memref<32x128xbf16, #tpu.memory_space<vmem>>, vector<32x128xbf16>
    %cst_43 = arith.constant dense<0.000000e+00> : vector<128x128xf32>
    %121 = tpu.matmul %119, %120, %cst_43 {dimension_numbers = #tpu.dot_dimension_numbers<[1], [0], [0], [1], [0, 0, 1, 1], [], []>} : vector<128x32xbf16>, vector<32x128xbf16>, vector<128x128xf32> -> vector<128x128xf32>
    %c0_44 = arith.constant 0 : index
    %c0_45 = arith.constant 0 : index
    %122 = vector.load %arg14[%c0_44, %c0_45] : memref<1x128xf32, #tpu.memory_space<vmem>>, vector<1x128xf32>
    %123 = vector.shape_cast %122 : vector<1x128xf32> to vector<128xf32>
    %124 = vector.shape_cast %123 : vector<128xf32> to vector<1x128xf32>
    %125 = vector.broadcast %124 : vector<1x128xf32> to vector<128x128xf32>
    %126 = arith.addf %121, %125 : vector<128x128xf32>
    %cst_46 = arith.constant 5.000000e-01 : f32
    %127 = vector.broadcast %cst_46 : f32 to vector<128x128xf32>
    %128 = arith.mulf %127, %126 : vector<128x128xf32>
    %cst_47 = arith.constant 0.707106769 : f32
    %129 = vector.broadcast %cst_47 : f32 to vector<128x128xf32>
    %130 = arith.mulf %126, %129 : vector<128x128xf32>
    %131 = math.erf %130 : vector<128x128xf32>
    %cst_48 = arith.constant 1.000000e+00 : f32
    %132 = vector.broadcast %cst_48 : f32 to vector<128x128xf32>
    %133 = arith.addf %132, %131 : vector<128x128xf32>
    %134 = arith.mulf %128, %133 : vector<128x128xf32>
    %135 = arith.truncf %134 : vector<128x128xf32> to vector<128x128xbf16>
    %c0_49 = arith.constant 0 : index
    %c0_50 = arith.constant 0 : index
    %136 = vector.load %arg15[%c0_49, %c0_50] : memref<128x32xbf16, #tpu.memory_space<vmem>>, vector<128x32xbf16>
    %cst_51 = arith.constant dense<0.000000e+00> : vector<128x32xf32>
    %137 = tpu.matmul %135, %136, %cst_51 {dimension_numbers = #tpu.dot_dimension_numbers<[1], [0], [0], [1], [0, 0, 1, 1], [], []>} : vector<128x128xbf16>, vector<128x32xbf16>, vector<128x32xf32> -> vector<128x32xf32>
    %c0_52 = arith.constant 0 : index
    %c0_53 = arith.constant 0 : index
    %138 = vector.load %arg16[%c0_52, %c0_53] : memref<1x32xf32, #tpu.memory_space<vmem>>, vector<1x32xf32>
    %139 = vector.shape_cast %138 : vector<1x32xf32> to vector<32xf32>
    %140 = vector.shape_cast %139 : vector<32xf32> to vector<1x32xf32>
    %141 = vector.broadcast %140 : vector<1x32xf32> to vector<128x32xf32>
    %142 = arith.addf %137, %141 : vector<128x32xf32>
    %143 = arith.addf %90, %142 : vector<128x32xf32>
    %144 = vector.shape_cast %143 : vector<128x32xf32> to vector<1x16x8x32xf32>
    %c0_54 = arith.constant 0 : index
    %c0_55 = arith.constant 0 : index
    %c0_56 = arith.constant 0 : index
    %c0_57 = arith.constant 0 : index
    %145 = vector.load %arg17[%c0_54, %c0_55, %c0_56, %c0_57] : memref<1x16x8x32xf32, #tpu.memory_space<vmem>>, vector<1x16x8x32xf32>
    tpu.vector_store %arg17[%c0_54, %c0_55, %c0_56, %c0_57], %144 {strides = array<i32>} : memref<1x16x8x32xf32, #tpu.memory_space<vmem>>, vector<1x16x8x32xf32>,
    return
  }
  func.func @transform_0(%arg0: i32, %arg1: i32) -> (i32, i32, i32, i32) {
    %c0_i32 = arith.constant 0 : i32
    %c0_i32_0 = arith.constant 0 : i32
    %c0_i32_1 = arith.constant 0 : i32
    return %arg0, %c0_i32, %arg1, %c0_i32_0 : i32, i32, i32, i32
  }
  func.func @transform_1(%arg0: i32, %arg1: i32) -> (i32, i32, i32) {
    %c0_i32 = arith.constant 0 : i32
    %c0_i32_0 = arith.constant 0 : i32
    %c0_i32_1 = arith.constant 0 : i32
    %c0_i32_2 = arith.constant 0 : i32
    return %c0_i32, %c0_i32_0, %c0_i32_1 : i32, i32, i32
  }
  func.func @transform_2(%arg0: i32, %arg1: i32) -> (i32, i32, i32) {
    %c0_i32 = arith.constant 0 : i32
    %c0_i32_0 = arith.constant 0 : i32
    %c0_i32_1 = arith.constant 0 : i32
    %c0_i32_2 = arith.constant 0 : i32
    return %c0_i32, %c0_i32_0, %c0_i32_1 : i32, i32, i32
  }
  func.func @transform_3(%arg0: i32, %arg1: i32) -> (i32, i32) {
    %c0_i32 = arith.constant 0 : i32
    %c0_i32_0 = arith.constant 0 : i32
    %c0_i32_1 = arith.constant 0 : i32
    return %c0_i32, %c0_i32_0 : i32, i32
  }
  func.func @transform_4(%arg0: i32, %arg1: i32) -> (i32, i32) {
    %c0_i32 = arith.constant 0 : i32
    %c0_i32_0 = arith.constant 0 : i32
    %c0_i32_1 = arith.constant 0 : i32
    return %c0_i32, %c0_i32_0 : i32, i32
  }
  func.func @transform_5(%arg0: i32, %arg1: i32) -> (i32, i32) {
    %c0_i32 = arith.constant 0 : i32
    %c0_i32_0 = arith.constant 0 : i32
    %c0_i32_1 = arith.constant 0 : i32
    return %c0_i32, %c0_i32_0 : i32, i32
  }
  func.func @transform_6(%arg0: i32, %arg1: i32) -> (i32, i32) {
    %c0_i32 = arith.constant 0 : i32
    %c0_i32_0 = arith.constant 0 : i32
    %c0_i32_1 = arith.constant 0 : i32
    return %c0_i32, %c0_i32_0 : i32, i32
  }
  func.func @transform_7(%arg0: i32, %arg1: i32) -> (i32, i32) {
    %c0_i32 = arith.constant 0 : i32
    %c0_i32_0 = arith.constant 0 : i32
    %c0_i32_1 = arith.constant 0 : i32
    return %c0_i32, %c0_i32_0 : i32, i32
  }
  func.func @transform_8(%arg0: i32, %arg1: i32) -> (i32, i32) {
    %c0_i32 = arith.constant 0 : i32
    %c0_i32_0 = arith.constant 0 : i32
    %c0_i32_1 = arith.constant 0 : i32
    return %c0_i32, %c0_i32_0 : i32, i32
  }
  func.func @transform_9(%arg0: i32, %arg1: i32) -> (i32, i32) {
    %c0_i32 = arith.constant 0 : i32
    %c0_i32_0 = arith.constant 0 : i32
    %c0_i32_1 = arith.constant 0 : i32
    return %c0_i32, %c0_i32_0 : i32, i32
  }
  func.func @transform_10(%arg0: i32, %arg1: i32) -> (i32, i32) {
    %c0_i32 = arith.constant 0 : i32
    %c0_i32_0 = arith.constant 0 : i32
    %c0_i32_1 = arith.constant 0 : i32
    return %c0_i32, %c0_i32_0 : i32, i32
  }
  func.func @transform_11(%arg0: i32, %arg1: i32) -> (i32, i32) {
    %c0_i32 = arith.constant 0 : i32
    %c0_i32_0 = arith.constant 0 : i32
    %c0_i32_1 = arith.constant 0 : i32
    return %c0_i32, %c0_i32_0 : i32, i32
  }
  func.func @transform_12(%arg0: i32, %arg1: i32) -> (i32, i32) {
    %c0_i32 = arith.constant 0 : i32
    %c0_i32_0 = arith.constant 0 : i32
    %c0_i32_1 = arith.constant 0 : i32
    return %c0_i32, %c0_i32_0 : i32, i32
  }
  func.func @transform_13(%arg0: i32, %arg1: i32) -> (i32, i32) {
    %c0_i32 = arith.constant 0 : i32
    %c0_i32_0 = arith.constant 0 : i32
    %c0_i32_1 = arith.constant 0 : i32
    return %c0_i32, %c0_i32_0 : i32, i32
  }
  func.func @transform_14(%arg0: i32, %arg1: i32) -> (i32, i32) {
    %c0_i32 = arith.constant 0 : i32
    %c0_i32_0 = arith.constant 0 : i32
    %c0_i32_1 = arith.constant 0 : i32
    return %c0_i32, %c0_i32_0 : i32, i32
  }
  func.func @transform_15(%arg0: i32, %arg1: i32) -> (i32, i32, i32, i32) {
    %c0_i32 = arith.constant 0 : i32
    %c0_i32_0 = arith.constant 0 : i32
    %c0_i32_1 = arith.constant 0 : i32
    return %arg0, %c0_i32, %arg1, %c0_i32_0 : i32, i32, i32, i32
  }
}

module attributes {stable_mosaic.version = 11 : i64} {
  func.func @swin_block_kernel(%arg0: i32, %arg1: i32, %arg2: memref<1x16x8x32xf32, #tpu.memory_space<vmem>>, %arg3: memref<8x64x64xbf16, #tpu.memory_space<vmem>>, %arg4: memref<4x1x32xf32, #tpu.memory_space<vmem>>, %arg5: memref<1x32xf32, #tpu.memory_space<vmem>>, %arg6: memref<1x32xf32, #tpu.memory_space<vmem>>, %arg7: memref<32x96xbf16, #tpu.memory_space<vmem>>, %arg8: memref<1x96xf32, #tpu.memory_space<vmem>>, %arg9: memref<32x32xbf16, #tpu.memory_space<vmem>>, %arg10: memref<1x32xf32, #tpu.memory_space<vmem>>, %arg11: memref<1x32xf32, #tpu.memory_space<vmem>>, %arg12: memref<1x32xf32, #tpu.memory_space<vmem>>, %arg13: memref<32x128xbf16, #tpu.memory_space<vmem>>, %arg14: memref<1x128xf32, #tpu.memory_space<vmem>>, %arg15: memref<128x32xbf16, #tpu.memory_space<vmem>>, %arg16: memref<1x32xf32, #tpu.memory_space<vmem>>, %arg17: memref<1x16x8x32xf32, #tpu.memory_space<vmem>>) attributes {dimension_semantics = [#tpu.dimension_semantics<parallel>, #tpu.dimension_semantics<parallel>], iteration_bounds = array<i64: 2, 2>, scalar_prefetch = 0 : i64, scratch_operands = 0 : i64, tpu.core_type = #tpu.core_type<tc>, window_params = [{transform_indices = @transform_0, window_bounds = array<i64: 1, 16, 8, 32>}, {transform_indices = @transform_1, window_bounds = array<i64: 8, 64, 64>}, {pipeline_mode = #tpu.pipeline_mode<synchronous>, transform_indices = @transform_2, window_bounds = array<i64: 4, 1, 32>}, {pipeline_mode = #tpu.pipeline_mode<synchronous>, transform_indices = @transform_3, window_bounds = array<i64: 1, 32>}, {pipeline_mode = #tpu.pipeline_mode<synchronous>, transform_indices = @transform_4, window_bounds = array<i64: 1, 32>}, {pipeline_mode = #tpu.pipeline_mode<synchronous>, transform_indices = @transform_5, window_bounds = array<i64: 32, 96>}, {pipeline_mode = #tpu.pipeline_mode<synchronous>, transform_indices = @transform_6, window_bounds = array<i64: 1, 96>}, {pipeline_mode = #tpu.pipeline_mode<synchronous>, transform_indices = @transform_7, window_bounds = array<i64: 32, 32>}, {pipeline_mode = #tpu.pipeline_mode<synchronous>, transform_indices = @transform_8, window_bounds = array<i64: 1, 32>}, {pipeline_mode = #tpu.pipeline_mode<synchronous>, transform_indices = @transform_9, window_bounds = array<i64: 1, 32>}, {pipeline_mode = #tpu.pipeline_mode<synchronous>, transform_indices = @transform_10, window_bounds = array<i64: 1, 32>}, {pipeline_mode = #tpu.pipeline_mode<synchronous>, transform_indices = @transform_11, window_bounds = array<i64: 32, 128>}, {pipeline_mode = #tpu.pipeline_mode<synchronous>, transform_indices = @transform_12, window_bounds = array<i64: 1, 128>}, {pipeline_mode = #tpu.pipeline_mode<synchronous>, transform_indices = @transform_13, window_bounds = array<i64: 128, 32>}, {pipeline_mode = #tpu.pipeline_mode<synchronous>, transform_indices = @transform_14, window_bounds = array<i64: 1, 32>}, {transform_indices = @transform_15, window_bounds = array<i64: 1, 16, 8, 32>}]} {
    %c0 = arith.constant 0 : index
    %c0_0 = arith.constant 0 : index
    %c0_1 = arith.constant 0 : index
    %c0_2 = arith.constant 0 : index
    %0 = vector.load %arg2[%c0, %c0_0, %c0_1, %c0_2] : memref<1x16x8x32xf32, #tpu.memory_space<vmem>>, vector<1x16x8x32xf32>
    %1 = vector.shape_cast %0 : vector<1x16x8x32xf32> to vector<16x8x32xf32>
    %2 = vector.shape_cast %1 : vector<16x8x32xf32> to vector<128x32xf32>
    %cst = arith.constant dense<0.000000e+00> : vector<128xf32>
    %3 = vector.multi_reduction <add>, %2, %cst [1] : vector<128x32xf32> to vector<128xf32>
    %4 = vector.shape_cast %3 : vector<128xf32> to vector<128x1xf32>
    %5 = arith.mulf %2, %2 : vector<128x32xf32>
    %cst_3 = arith.constant dense<0.000000e+00> : vector<128xf32>
    %6 = vector.multi_reduction <add>, %5, %cst_3 [1] : vector<128x32xf32> to vector<128xf32>
    %7 = vector.shape_cast %6 : vector<128xf32> to vector<128x1xf32>
    %cst_4 = arith.constant 3.125000e-02 : f32
    %8 = vector.broadcast %cst_4 : f32 to vector<128x1xf32>
    %9 = arith.mulf %4, %8 : vector<128x1xf32>
    %cst_5 = arith.constant 3.125000e-02 : f32
    %10 = vector.broadcast %cst_5 : f32 to vector<128x1xf32>
    %11 = arith.mulf %7, %10 : vector<128x1xf32>
    %12 = arith.mulf %9, %9 : vector<128x1xf32>
    %13 = arith.subf %11, %12 : vector<128x1xf32>
    %14 = vector.broadcast %9 : vector<128x1xf32> to vector<128x32xf32>
    %15 = arith.subf %2, %14 : vector<128x32xf32>
    %cst_6 = arith.constant 9.99999974E-6 : f32
    %16 = vector.broadcast %cst_6 : f32 to vector<128x1xf32>
    %17 = arith.addf %13, %16 : vector<128x1xf32>
    %18 = math.rsqrt %17 : vector<128x1xf32>
    %19 = vector.broadcast %18 : vector<128x1xf32> to vector<128x32xf32>
    %20 = arith.mulf %15, %19 : vector<128x32xf32>
    %c0_7 = arith.constant 0 : index
    %c0_8 = arith.constant 0 : index
    %21 = vector.load %arg5[%c0_7, %c0_8] : memref<1x32xf32, #tpu.memory_space<vmem>>, vector<1x32xf32>
    %22 = vector.shape_cast %21 : vector<1x32xf32> to vector<32xf32>
    %23 = vector.shape_cast %22 : vector<32xf32> to vector<1x32xf32>
    %24 = vector.broadcast %23 : vector<1x32xf32> to vector<128x32xf32>
    %25 = arith.mulf %20, %24 : vector<128x32xf32>
    %c0_9 = arith.constant 0 : index
    %c0_10 = arith.constant 0 : index
    %26 = vector.load %arg6[%c0_9, %c0_10] : memref<1x32xf32, #tpu.memory_space<vmem>>, vector<1x32xf32>
    %27 = vector.shape_cast %26 : vector<1x32xf32> to vector<32xf32>
    %28 = vector.shape_cast %27 : vector<32xf32> to vector<1x32xf32>
    %29 = vector.broadcast %28 : vector<1x32xf32> to vector<128x32xf32>
    %30 = arith.addf %25, %29 : vector<128x32xf32>
    %31 = arith.truncf %30 : vector<128x32xf32> to vector<128x32xbf16>
    %c0_11 = arith.constant 0 : index
    %c0_12 = arith.constant 0 : index
    %32 = vector.load %arg7[%c0_11, %c0_12] : memref<32x96xbf16, #tpu.memory_space<vmem>>, vector<32x96xbf16>
    %cst_13 = arith.constant dense<0.000000e+00> : vector<128x96xf32>
    %33 = tpu.matmul %31, %32, %cst_13 {dimension_numbers = #tpu.dot_dimension_numbers<[1], [0], [0], [1], [0, 0, 1, 1], [], []>} : vector<128x32xbf16>, vector<32x96xbf16>, vector<128x96xf32> -> vector<128x96xf32>
    %c0_14 = arith.constant 0 : index
    %c0_15 = arith.constant 0 : index
    %34 = vector.load %arg8[%c0_14, %c0_15] : memref<1x96xf32, #tpu.memory_space<vmem>>, vector<1x96xf32>
    %35 = vector.shape_cast %34 : vector<1x96xf32> to vector<96xf32>
    %36 = vector.shape_cast %35 : vector<96xf32> to vector<1x96xf32>
    %37 = vector.broadcast %36 : vector<1x96xf32> to vector<128x96xf32>
    %38 = arith.addf %33, %37 : vector<128x96xf32>
    %39 = vector.extract_strided_slice %38 {offsets = [0, 0], sizes = [128, 32], strides = [1, 1]} : vector<128x96xf32> to vector<128x32xf32>
    %40 = vector.shape_cast %39 : vector<128x32xf32> to vector<2x64x32xf32>
    %41 = vector.extract_strided_slice %38 {offsets = [0, 32], sizes = [128, 32], strides = [1, 1]} : vector<128x96xf32> to vector<128x32xf32>
    %42 = vector.shape_cast %41 : vector<128x32xf32> to vector<2x64x32xf32>
    %43 = vector.extract_strided_slice %38 {offsets = [0, 64], sizes = [128, 32], strides = [1, 1]} : vector<128x96xf32> to vector<128x32xf32>
    %44 = vector.shape_cast %43 : vector<128x32xf32> to vector<2x64x32xf32>
    %45 = arith.truncf %44 : vector<2x64x32xf32> to vector<2x64x32xbf16>
    %c0_16 = arith.constant 0 : index
    %c0_17 = arith.constant 0 : index
    %c0_18 = arith.constant 0 : index
    %46 = vector.load %arg4[%c0_16, %c0_17, %c0_18] : memref<4x1x32xf32, #tpu.memory_space<vmem>>, vector<4x1x32xf32>
    %47 = vector.shape_cast %40 : vector<2x64x32xf32> to vector<2x1x64x32xf32>
    %48 = vector.shape_cast %46 : vector<4x1x32xf32> to vector<1x4x1x32xf32>
    %49 = vector.broadcast %47 : vector<2x1x64x32xf32> to vector<2x4x64x32xf32>
    %50 = vector.broadcast %48 : vector<1x4x1x32xf32> to vector<2x4x64x32xf32>
    %51 = arith.mulf %49, %50 : vector<2x4x64x32xf32>
    %52 = vector.shape_cast %51 : vector<2x4x64x32xf32> to vector<2x256x32xf32>
    %53 = tpu.transpose %42, [0, 2, 1] : vector<2x64x32xf32> -> vector<2x32x64xf32>
    %54 = arith.truncf %52 : vector<2x256x32xf32> to vector<2x256x32xbf16>
    %55 = arith.truncf %53 : vector<2x32x64xf32> to vector<2x32x64xbf16>
    "tpu.trace_start"() <{level = 10 : i32, message = "gpc,gcm->gpm"}> : () -> ()
    %cst_19 = arith.constant dense<0.000000e+00> : vector<2x256x64xf32>
    %56 = tpu.matmul %54, %55, %cst_19 {dimension_numbers = #tpu.dot_dimension_numbers<[2], [1], [1], [2], [0, 0, 0, 1, 1, 2], [0], [0]>} : vector<2x256x32xbf16>, vector<2x32x64xbf16>, vector<2x256x64xf32> -> vector<2x256x64xf32>
    "tpu.trace_stop"() : () -> ()
    %c0_20 = arith.constant 0 : index
    %c0_21 = arith.constant 0 : index
    %c0_22 = arith.constant 0 : index
    %57 = vector.load %arg3[%c0_20, %c0_21, %c0_22] : memref<8x64x64xbf16, #tpu.memory_space<vmem>>, vector<8x64x64xbf16>
    %58 = vector.shape_cast %57 : vector<8x64x64xbf16> to vector<2x4x64x64xbf16>
    %59 = arith.extf %58 : vector<2x4x64x64xbf16> to vector<2x4x64x64xf32>
    %60 = vector.shape_cast %56 : vector<2x256x64xf32> to vector<2x4x64x64xf32>
    %61 = arith.addf %60, %59 : vector<2x4x64x64xf32>
    %cst_23 = arith.constant dense<0xFF800000> : vector<2x4x64xf32>
    %62 = vector.multi_reduction <maximumf>, %61, %cst_23 [3] : vector<2x4x64x64xf32> to vector<2x4x64xf32>
    %63 = vector.shape_cast %62 : vector<2x4x64xf32> to vector<2x4x64x1xf32>
    %64 = vector.broadcast %63 : vector<2x4x64x1xf32> to vector<2x4x64x64xf32>
    %65 = arith.subf %61, %64 : vector<2x4x64x64xf32>
    %66 = math.exp %65 : vector<2x4x64x64xf32>
    %cst_24 = arith.constant dense<0.000000e+00> : vector<2x4x64xf32>
    %67 = vector.multi_reduction <add>, %66, %cst_24 [3] : vector<2x4x64x64xf32> to vector<2x4x64xf32>
    %68 = vector.shape_cast %67 : vector<2x4x64xf32> to vector<2x4x64x1xf32>
    %69 = tpu.reciprocal %68 {approx = true} : vector<2x4x64x1xf32> -> vector<2x4x64x1xf32>
    %70 = vector.broadcast %69 : vector<2x4x64x1xf32> to vector<2x4x64x64xf32>
    %71 = arith.mulf %66, %70 : vector<2x4x64x64xf32>
    %72 = vector.shape_cast %71 : vector<2x4x64x64xf32> to vector<2x256x64xf32>
    %73 = arith.truncf %72 : vector<2x256x64xf32> to vector<2x256x64xbf16>
    "tpu.trace_start"() <{level = 10 : i32, message = "gpm,gmc->gpc"}> : () -> ()
    %cst_25 = arith.constant dense<0.000000e+00> : vector<2x256x32xf32>
    %74 = tpu.matmul %73, %45, %cst_25 {dimension_numbers = #tpu.dot_dimension_numbers<[2], [1], [1], [2], [0, 0, 0, 1, 1, 2], [0], [0]>} : vector<2x256x64xbf16>, vector<2x64x32xbf16>, vector<2x256x32xf32> -> vector<2x256x32xf32>
    "tpu.trace_stop"() : () -> ()
    %75 = vector.shape_cast %74 : vector<2x256x32xf32> to vector<2x4x64x32xf32>
    %76 = vector.shape_cast %46 : vector<4x1x32xf32> to vector<1x4x1x32xf32>
    %77 = vector.broadcast %76 : vector<1x4x1x32xf32> to vector<2x4x64x32xf32>
    %78 = arith.mulf %75, %77 : vector<2x4x64x32xf32>
    %cst_26 = arith.constant dense<0.000000e+00> : vector<2x64x32xf32>
    %79 = vector.multi_reduction <add>, %78, %cst_26 [1] : vector<2x4x64x32xf32> to vector<2x64x32xf32>
    %80 = vector.shape_cast %79 : vector<2x64x32xf32> to vector<128x32xf32>
    %81 = arith.truncf %80 : vector<128x32xf32> to vector<128x32xbf16>
    %c0_27 = arith.constant 0 : index
    %c0_28 = arith.constant 0 : index
    %82 = vector.load %arg9[%c0_27, %c0_28] : memref<32x32xbf16, #tpu.memory_space<vmem>>, vector<32x32xbf16>
    %cst_29 = arith.constant dense<0.000000e+00> : vector<128x32xf32>
    %83 = tpu.matmul %81, %82, %cst_29 {dimension_numbers = #tpu.dot_dimension_numbers<[1], [0], [0], [1], [0, 0, 1, 1], [], []>} : vector<128x32xbf16>, vector<32x32xbf16>, vector<128x32xf32> -> vector<128x32xf32>
    %c0_30 = arith.constant 0 : index
    %c0_31 = arith.constant 0 : index
    %84 = vector.load %arg10[%c0_30, %c0_31] : memref<1x32xf32, #tpu.memory_space<vmem>>, vector<1x32xf32>
    %85 = vector.shape_cast %84 : vector<1x32xf32> to vector<32xf32>
    %86 = vector.shape_cast %85 : vector<32xf32> to vector<1x32xf32>
    %87 = vector.broadcast %86 : vector<1x32xf32> to vector<128x32xf32>
    %88 = arith.addf %83, %87 : vector<128x32xf32>
    %89 = arith.addf %2, %88 : vector<128x32xf32>
    %cst_32 = arith.constant dense<0.000000e+00> : vector<128xf32>
    %90 = vector.multi_reduction <add>, %89, %cst_32 [1] : vector<128x32xf32> to vector<128xf32>
    %91 = vector.shape_cast %90 : vector<128xf32> to vector<128x1xf32>
    %92 = arith.mulf %89, %89 : vector<128x32xf32>
    %cst_33 = arith.constant dense<0.000000e+00> : vector<128xf32>
    %93 = vector.multi_reduction <add>, %92, %cst_33 [1] : vector<128x32xf32> to vector<128xf32>
    %94 = vector.shape_cast %93 : vector<128xf32> to vector<128x1xf32>
    %cst_34 = arith.constant 3.125000e-02 : f32
    %95 = vector.broadcast %cst_34 : f32 to vector<128x1xf32>
    %96 = arith.mulf %91, %95 : vector<128x1xf32>
    %cst_35 = arith.constant 3.125000e-02 : f32
    %97 = vector.broadcast %cst_35 : f32 to vector<128x1xf32>
    %98 = arith.mulf %94, %97 : vector<128x1xf32>
    %99 = arith.mulf %96, %96 : vector<128x1xf32>
    %100 = arith.subf %98, %99 : vector<128x1xf32>
    %101 = vector.broadcast %96 : vector<128x1xf32> to vector<128x32xf32>
    %102 = arith.subf %89, %101 : vector<128x32xf32>
    %cst_36 = arith.constant 9.99999974E-6 : f32
    %103 = vector.broadcast %cst_36 : f32 to vector<128x1xf32>
    %104 = arith.addf %100, %103 : vector<128x1xf32>
    %105 = math.rsqrt %104 : vector<128x1xf32>
    %106 = vector.broadcast %105 : vector<128x1xf32> to vector<128x32xf32>
    %107 = arith.mulf %102, %106 : vector<128x32xf32>
    %c0_37 = arith.constant 0 : index
    %c0_38 = arith.constant 0 : index
    %108 = vector.load %arg11[%c0_37, %c0_38] : memref<1x32xf32, #tpu.memory_space<vmem>>, vector<1x32xf32>
    %109 = vector.shape_cast %108 : vector<1x32xf32> to vector<32xf32>
    %110 = vector.shape_cast %109 : vector<32xf32> to vector<1x32xf32>
    %111 = vector.broadcast %110 : vector<1x32xf32> to vector<128x32xf32>
    %112 = arith.mulf %107, %111 : vector<128x32xf32>
    %c0_39 = arith.constant 0 : index
    %c0_40 = arith.constant 0 : index
    %113 = vector.load %arg12[%c0_39, %c0_40] : memref<1x32xf32, #tpu.memory_space<vmem>>, vector<1x32xf32>
    %114 = vector.shape_cast %113 : vector<1x32xf32> to vector<32xf32>
    %115 = vector.shape_cast %114 : vector<32xf32> to vector<1x32xf32>
    %116 = vector.broadcast %115 : vector<1x32xf32> to vector<128x32xf32>
    %117 = arith.addf %112, %116 : vector<128x32xf32>
    %118 = arith.truncf %117 : vector<128x32xf32> to vector<128x32xbf16>
    %c0_41 = arith.constant 0 : index
    %c0_42 = arith.constant 0 : index
    %119 = vector.load %arg13[%c0_41, %c0_42] : memref<32x128xbf16, #tpu.memory_space<vmem>>, vector<32x128xbf16>
    %cst_43 = arith.constant dense<0.000000e+00> : vector<128x128xf32>
    %120 = tpu.matmul %118, %119, %cst_43 {dimension_numbers = #tpu.dot_dimension_numbers<[1], [0], [0], [1], [0, 0, 1, 1], [], []>} : vector<128x32xbf16>, vector<32x128xbf16>, vector<128x128xf32> -> vector<128x128xf32>
    %c0_44 = arith.constant 0 : index
    %c0_45 = arith.constant 0 : index
    %121 = vector.load %arg14[%c0_44, %c0_45] : memref<1x128xf32, #tpu.memory_space<vmem>>, vector<1x128xf32>
    %122 = vector.shape_cast %121 : vector<1x128xf32> to vector<128xf32>
    %123 = vector.shape_cast %122 : vector<128xf32> to vector<1x128xf32>
    %124 = vector.broadcast %123 : vector<1x128xf32> to vector<128x128xf32>
    %125 = arith.addf %120, %124 : vector<128x128xf32>
    %cst_46 = arith.constant 5.000000e-01 : f32
    %126 = vector.broadcast %cst_46 : f32 to vector<128x128xf32>
    %127 = arith.mulf %126, %125 : vector<128x128xf32>
    %cst_47 = arith.constant 0.707106769 : f32
    %128 = vector.broadcast %cst_47 : f32 to vector<128x128xf32>
    %129 = arith.mulf %125, %128 : vector<128x128xf32>
    %130 = math.erf %129 : vector<128x128xf32>
    %cst_48 = arith.constant 1.000000e+00 : f32
    %131 = vector.broadcast %cst_48 : f32 to vector<128x128xf32>
    %132 = arith.addf %131, %130 : vector<128x128xf32>
    %133 = arith.mulf %127, %132 : vector<128x128xf32>
    %134 = arith.truncf %133 : vector<128x128xf32> to vector<128x128xbf16>
    %c0_49 = arith.constant 0 : index
    %c0_50 = arith.constant 0 : index
    %135 = vector.load %arg15[%c0_49, %c0_50] : memref<128x32xbf16, #tpu.memory_space<vmem>>, vector<128x32xbf16>
    %cst_51 = arith.constant dense<0.000000e+00> : vector<128x32xf32>
    %136 = tpu.matmul %134, %135, %cst_51 {dimension_numbers = #tpu.dot_dimension_numbers<[1], [0], [0], [1], [0, 0, 1, 1], [], []>} : vector<128x128xbf16>, vector<128x32xbf16>, vector<128x32xf32> -> vector<128x32xf32>
    %c0_52 = arith.constant 0 : index
    %c0_53 = arith.constant 0 : index
    %137 = vector.load %arg16[%c0_52, %c0_53] : memref<1x32xf32, #tpu.memory_space<vmem>>, vector<1x32xf32>
    %138 = vector.shape_cast %137 : vector<1x32xf32> to vector<32xf32>
    %139 = vector.shape_cast %138 : vector<32xf32> to vector<1x32xf32>
    %140 = vector.broadcast %139 : vector<1x32xf32> to vector<128x32xf32>
    %141 = arith.addf %136, %140 : vector<128x32xf32>
    %142 = arith.addf %89, %141 : vector<128x32xf32>
    %143 = vector.shape_cast %142 : vector<128x32xf32> to vector<1x16x8x32xf32>
    %c0_54 = arith.constant 0 : index
    %c0_55 = arith.constant 0 : index
    %c0_56 = arith.constant 0 : index
    %c0_57 = arith.constant 0 : index
    %144 = vector.load %arg17[%c0_54, %c0_55, %c0_56, %c0_57] : memref<1x16x8x32xf32, #tpu.memory_space<vmem>>, vector<1x16x8x32xf32>
    tpu.vector_store %arg17[%c0_54, %c0_55, %c0_56, %c0_57], %143 {strides = array<i32>} : memref<1x16x8x32xf32, #tpu.memory_space<vmem>>, vector<1x16x8x32xf32>,
    return
  }
  func.func @transform_0(%arg0: i32, %arg1: i32) -> (i32, i32, i32, i32) {
    %c0_i32 = arith.constant 0 : i32
    %c0_i32_0 = arith.constant 0 : i32
    %c0_i32_1 = arith.constant 0 : i32
    return %arg0, %c0_i32, %arg1, %c0_i32_0 : i32, i32, i32, i32
  }
  func.func @transform_1(%arg0: i32, %arg1: i32) -> (i32, i32, i32) {
    %c0_i32 = arith.constant 0 : i32
    %c0_i32_0 = arith.constant 0 : i32
    %c0_i32_1 = arith.constant 0 : i32
    return %arg1, %c0_i32, %c0_i32_0 : i32, i32, i32
  }
  func.func @transform_2(%arg0: i32, %arg1: i32) -> (i32, i32, i32) {
    %c0_i32 = arith.constant 0 : i32
    %c0_i32_0 = arith.constant 0 : i32
    %c0_i32_1 = arith.constant 0 : i32
    %c0_i32_2 = arith.constant 0 : i32
    return %c0_i32, %c0_i32_0, %c0_i32_1 : i32, i32, i32
  }
  func.func @transform_3(%arg0: i32, %arg1: i32) -> (i32, i32) {
    %c0_i32 = arith.constant 0 : i32
    %c0_i32_0 = arith.constant 0 : i32
    %c0_i32_1 = arith.constant 0 : i32
    return %c0_i32, %c0_i32_0 : i32, i32
  }
  func.func @transform_4(%arg0: i32, %arg1: i32) -> (i32, i32) {
    %c0_i32 = arith.constant 0 : i32
    %c0_i32_0 = arith.constant 0 : i32
    %c0_i32_1 = arith.constant 0 : i32
    return %c0_i32, %c0_i32_0 : i32, i32
  }
  func.func @transform_5(%arg0: i32, %arg1: i32) -> (i32, i32) {
    %c0_i32 = arith.constant 0 : i32
    %c0_i32_0 = arith.constant 0 : i32
    %c0_i32_1 = arith.constant 0 : i32
    return %c0_i32, %c0_i32_0 : i32, i32
  }
  func.func @transform_6(%arg0: i32, %arg1: i32) -> (i32, i32) {
    %c0_i32 = arith.constant 0 : i32
    %c0_i32_0 = arith.constant 0 : i32
    %c0_i32_1 = arith.constant 0 : i32
    return %c0_i32, %c0_i32_0 : i32, i32
  }
  func.func @transform_7(%arg0: i32, %arg1: i32) -> (i32, i32) {
    %c0_i32 = arith.constant 0 : i32
    %c0_i32_0 = arith.constant 0 : i32
    %c0_i32_1 = arith.constant 0 : i32
    return %c0_i32, %c0_i32_0 : i32, i32
  }
  func.func @transform_8(%arg0: i32, %arg1: i32) -> (i32, i32) {
    %c0_i32 = arith.constant 0 : i32
    %c0_i32_0 = arith.constant 0 : i32
    %c0_i32_1 = arith.constant 0 : i32
    return %c0_i32, %c0_i32_0 : i32, i32
  }
  func.func @transform_9(%arg0: i32, %arg1: i32) -> (i32, i32) {
    %c0_i32 = arith.constant 0 : i32
    %c0_i32_0 = arith.constant 0 : i32
    %c0_i32_1 = arith.constant 0 : i32
    return %c0_i32, %c0_i32_0 : i32, i32
  }
  func.func @transform_10(%arg0: i32, %arg1: i32) -> (i32, i32) {
    %c0_i32 = arith.constant 0 : i32
    %c0_i32_0 = arith.constant 0 : i32
    %c0_i32_1 = arith.constant 0 : i32
    return %c0_i32, %c0_i32_0 : i32, i32
  }
  func.func @transform_11(%arg0: i32, %arg1: i32) -> (i32, i32) {
    %c0_i32 = arith.constant 0 : i32
    %c0_i32_0 = arith.constant 0 : i32
    %c0_i32_1 = arith.constant 0 : i32
    return %c0_i32, %c0_i32_0 : i32, i32
  }
  func.func @transform_12(%arg0: i32, %arg1: i32) -> (i32, i32) {
    %c0_i32 = arith.constant 0 : i32
    %c0_i32_0 = arith.constant 0 : i32
    %c0_i32_1 = arith.constant 0 : i32
    return %c0_i32, %c0_i32_0 : i32, i32
  }
  func.func @transform_13(%arg0: i32, %arg1: i32) -> (i32, i32) {
    %c0_i32 = arith.constant 0 : i32
    %c0_i32_0 = arith.constant 0 : i32
    %c0_i32_1 = arith.constant 0 : i32
    return %c0_i32, %c0_i32_0 : i32, i32
  }
  func.func @transform_14(%arg0: i32, %arg1: i32) -> (i32, i32) {
    %c0_i32 = arith.constant 0 : i32
    %c0_i32_0 = arith.constant 0 : i32
    %c0_i32_1 = arith.constant 0 : i32
    return %c0_i32, %c0_i32_0 : i32, i32
  }
  func.func @transform_15(%arg0: i32, %arg1: i32) -> (i32, i32, i32, i32) {
    %c0_i32 = arith.constant 0 : i32
    %c0_i32_0 = arith.constant 0 : i32
    %c0_i32_1 = arith.constant 0 : i32
    return %arg0, %c0_i32, %arg1, %c0_i32_0 : i32, i32, i32, i32
  }
}

</mosaic_0001>

<llo_original>
// kernel: basic_layer_forward.2
$region0: #{basic_layer_forward.2}
  #allocation0 [shape = 'u32[]', space=smem, size = 0x4, offset = 0x4, fixed_abs, tag = 'smem constant byte address 0x4 - core index']
  #allocation1 [shape = 'u32[144,128]{1,0:T(1,128)}', space=vmem, size = 0x12000, scoped, tag = 'internal scratch']
  %s0 = inlined_call_operand.vmem [shape: f32[2,16,16,32], index: 0, kind: input, shape index: {}]
  %s1 = inlined_call_operand.vmem [shape: bf16[4,64,64], index: 1, kind: input, shape index: {}]
  %s2 = inlined_call_operand.vmem [shape: f32[4,1,32], index: 2, kind: input, shape index: {}]
  %s3 = inlined_call_operand.vmem [shape: f32[1,32], index: 3, kind: input, shape index: {}]
  %s4 = inlined_call_operand.vmem [shape: f32[1,32], index: 4, kind: input, shape index: {}]
  %s5 = inlined_call_operand.vmem [shape: bf16[32,96], index: 5, kind: input, shape index: {}]
  %s6 = inlined_call_operand.vmem [shape: f32[1,96], index: 6, kind: input, shape index: {}]
  %s7 = inlined_call_operand.vmem [shape: bf16[32,32], index: 7, kind: input, shape index: {}]
  %s8 = inlined_call_operand.vmem [shape: f32[1,32], index: 8, kind: input, shape index: {}]
  %s9 = inlined_call_operand.vmem [shape: f32[1,32], index: 9, kind: input, shape index: {}]
  %s10 = inlined_call_operand.vmem [shape: f32[1,32], index: 10, kind: input, shape index: {}]
  %s11 = inlined_call_operand.vmem [shape: bf16[32,128], index: 11, kind: input, shape index: {}]
  %s12 = inlined_call_operand.vmem [shape: f32[1,128], index: 12, kind: input, shape index: {}]
  %s13 = inlined_call_operand.vmem [shape: bf16[128,32], index: 13, kind: input, shape index: {}]
  %s14 = inlined_call_operand.vmem [shape: f32[1,32], index: 14, kind: input, shape index: {}]
  %s15 = inlined_call_operand.vmem [shape: f32[2,16,16,32], index: 15, kind: output, shape index: {}]
  %s16 = sld [smem:[#allocation0]]
  $region165: #{basic_layer_forward.2} parent=0
    _
  %s18 = ssub.s32 1, %s16
  %s19 = scalar_select 0, %s18, %s16
  $region1: #{basic_layer_forward.2} parent=0
    #allocation2 [shape = 'u8[131072]{0}', space=vmem, size = 0x20000, scoped, tag = 'input window, operand 0']
    #allocation3 [shape = 'u8[131072]{0}', space=vmem, size = 0x20000, scoped, tag = 'output window, operand 0']
    loop: start=0, step=1, limit=6
    $region2: #{basic_layer_forward.2} parent=1 // loop_pre_header
      _
    $region3: #{basic_layer_forward.2} parent=1 // loop_header
      %s21 = sphi 0, %s25
      %p22 = scmp.ge.s32.totalorder %s21, 6
      %s28 = sphi 0, %s40
      %s29 = sphi 0, %s36
      %s30 = sphi 0, %s28
      %s31 = sphi 0, %s29
      %s32 = sphi 0, %s30
      %s33 = sphi 0, %s31
      %s45 = sphi 0, %s47
      %s48 = sphi 0, %s45
      %s49 = sphi 0, %s48
      %s65 = sphi 0, %s49
      %s69 = sphi 0, %s69
      %s71 = sphi 0, %s69
      %s72 = sphi 0, %s71
      %s86 = sphi 0, %s72
      %s90 = sphi 0, %s90
      %s92 = sphi 0, %s90
      %s93 = sphi 0, %s92
      %s107 = sphi 0, %s93
      %s111 = sphi 0, %s111
      %s113 = sphi 0, %s111
      %s114 = sphi 0, %s113
      %s128 = sphi 0, %s114
      %s132 = sphi 0, %s132
      %s134 = sphi 0, %s132
      %s135 = sphi 0, %s134
      %s149 = sphi 0, %s135
      %s153 = sphi 0, %s153
      %s155 = sphi 0, %s153
      %s156 = sphi 0, %s155
      %s170 = sphi 0, %s156
      %s174 = sphi 0, %s174
      %s176 = sphi 0, %s174
      %s177 = sphi 0, %s176
      %s191 = sphi 0, %s177
      %s195 = sphi 0, %s195
      %s197 = sphi 0, %s195
      %s198 = sphi 0, %s197
      %s212 = sphi 0, %s198
      %s216 = sphi 0, %s216
      %s218 = sphi 0, %s216
      %s219 = sphi 0, %s218
      %s233 = sphi 0, %s219
      %s237 = sphi 0, %s237
      %s239 = sphi 0, %s237
      %s240 = sphi 0, %s239
      %s254 = sphi 0, %s240
      %s258 = sphi 0, %s258
      %s260 = sphi 0, %s258
      %s261 = sphi 0, %s260
      %s275 = sphi 0, %s261
      %s279 = sphi 0, %s279
      %s281 = sphi 0, %s279
      %s282 = sphi 0, %s281
      %s296 = sphi 0, %s282
      %s300 = sphi 0, %s300
      %s302 = sphi 0, %s300
      %s303 = sphi 0, %s302
      %s317 = sphi 0, %s303
      %s321 = sphi 0, %s321
      %s323 = sphi 0, %s321
      %s324 = sphi 0, %s323
      %s338 = sphi 0, %s324
      %s342 = sphi 0, %s342
      %s344 = sphi 0, %s342
      %s345 = sphi 0, %s344
      %s359 = sphi 0, %s345
      %s367 = sphi 0, %s369
      %s370 = sphi 0, %s367
      %s371 = sphi 0, %s370
      %s387 = sphi 0, %s371
    $region4: #{basic_layer_forward.2} parent=1 // loop_header_branch
      %24 = sbr.rel (%p22) target = $region8
    $region5: #{basic_layer_forward.2} parent=1 // loop_body
      %s26 = ssub.s32 %s21, 1
      %s27 = ssub.s32 %s21, 2
      %s34 = sadd.s32 1, %s29
      %p35 = scmp.ge.s32.totalorder %s34, 2
      %s36 = scalar_select %p35, 0, %s34
      %s37 = sadd.s32 1, %s28
      %s38 = scalar_select %p35, %s37, %s28
      %p39 = scmp.ge.s32.totalorder %s38, 2
      %s40 = scalar_select %p39, 0, %s38
      %s41 = ssub.s32 %s28, %s40
      %s42 = ssub.s32 %s29, %s36
      %s43 = sor.u32 %s41, %s42
      %p44 = scmp.eq.s32.totalorder %s43, 0
      %s46 = sadd.s32 %s45, 1
      %s47 = scalar_select %p44, %s45, %s46
      %p50 = pneg %p44
      %p51 = scmp.eq.s32.totalorder %s21, 3
      %p52 = por %p50, %p51
      %p53 = scmp.ne.s32.totalorder %s45, %s48
      %p54 = scmp.eq.s32.totalorder %s21, 0
      %p55 = por %p53, %p54
      %p56 = scmp.ne.s32.totalorder %s45, %s48
      %p57 = scmp.eq.s32.totalorder %s26, 3
      %p58 = por %p56, %p57
      %p59 = scmp.ne.s32.totalorder %s48, %s49
      %p60 = scmp.eq.s32.totalorder %s26, 0
      %p61 = por %p59, %p60
      %p62 = scmp.ne.s32.totalorder %s48, %s49
      %p63 = scmp.eq.s32.totalorder %s27, 3
      %p64 = por %p62, %p63
      %p66 = scmp.ne.s32.totalorder %s49, %s65
      %p67 = scmp.eq.s32.totalorder %s27, 0
      %p68 = por %p66, %p67
      %s70 = sadd.s32 %s69, 1
      %p73 = scmp.eq.s32.totalorder %s21, 3
      %p74 = scmp.ne.s32.totalorder %s69, %s71
      %p75 = scmp.eq.s32.totalorder %s21, 0
      %p76 = por %p74, %p75
      %p77 = scmp.ne.s32.totalorder %s69, %s71
      %p78 = scmp.eq.s32.totalorder %s26, 3
      %p79 = por %p77, %p78
      %p80 = scmp.ne.s32.totalorder %s71, %s72
      %p81 = scmp.eq.s32.totalorder %s26, 0
      %p82 = por %p80, %p81
      %p83 = scmp.ne.s32.totalorder %s71, %s72
      %p84 = scmp.eq.s32.totalorder %s27, 3
      %p85 = por %p83, %p84
      %p87 = scmp.ne.s32.totalorder %s72, %s86
      %p88 = scmp.eq.s32.totalorder %s27, 0
      %p89 = por %p87, %p88
      %s91 = sadd.s32 %s90, 1
      %p94 = scmp.eq.s32.totalorder %s21, 3
      %p95 = scmp.ne.s32.totalorder %s90, %s92
      %p96 = scmp.eq.s32.totalorder %s21, 0
      %p97 = por %p95, %p96
      %p98 = scmp.ne.s32.totalorder %s90, %s92
      %p99 = scmp.eq.s32.totalorder %s26, 3
      %p100 = por %p98, %p99
      %p101 = scmp.ne.s32.totalorder %s92, %s93
      %p102 = scmp.eq.s32.totalorder %s26, 0
      %p103 = por %p101, %p102
      %p104 = scmp.ne.s32.totalorder %s92, %s93
      %p105 = scmp.eq.s32.totalorder %s27, 3
      %p106 = por %p104, %p105
      %p108 = scmp.ne.s32.totalorder %s93, %s107
      %p109 = scmp.eq.s32.totalorder %s27, 0
      %p110 = por %p108, %p109
      %s112 = sadd.s32 %s111, 1
      %p115 = scmp.eq.s32.totalorder %s21, 3
      %p116 = scmp.ne.s32.totalorder %s111, %s113
      %p117 = scmp.eq.s32.totalorder %s21, 0
      %p118 = por %p116, %p117
      %p119 = scmp.ne.s32.totalorder %s111, %s113
      %p120 = scmp.eq.s32.totalorder %s26, 3
      %p121 = por %p119, %p120
      %p122 = scmp.ne.s32.totalorder %s113, %s114
      %p123 = scmp.eq.s32.totalorder %s26, 0
      %p124 = por %p122, %p123
      %p125 = scmp.ne.s32.totalorder %s113, %s114
      %p126 = scmp.eq.s32.totalorder %s27, 3
      %p127 = por %p125, %p126
      %p129 = scmp.ne.s32.totalorder %s114, %s128
      %p130 = scmp.eq.s32.totalorder %s27, 0
      %p131 = por %p129, %p130
      %s133 = sadd.s32 %s132, 1
      %p136 = scmp.eq.s32.totalorder %s21, 3
      %p137 = scmp.ne.s32.totalorder %s132, %s134
      %p138 = scmp.eq.s32.totalorder %s21, 0
      %p139 = por %p137, %p138
      %p140 = scmp.ne.s32.totalorder %s132, %s134
      %p141 = scmp.eq.s32.totalorder %s26, 3
      %p142 = por %p140, %p141
      %p143 = scmp.ne.s32.totalorder %s134, %s135
      %p144 = scmp.eq.s32.totalorder %s26, 0
      %p145 = por %p143, %p144
      %p146 = scmp.ne.s32.totalorder %s134, %s135
      %p147 = scmp.eq.s32.totalorder %s27, 3
      %p148 = por %p146, %p147
      %p150 = scmp.ne.s32.totalorder %s135, %s149
      %p151 = scmp.eq.s32.totalorder %s27, 0
      %p152 = por %p150, %p151
      %s154 = sadd.s32 %s153, 1
      %p157 = scmp.eq.s32.totalorder %s21, 3
      %p158 = scmp.ne.s32.totalorder %s153, %s155
      %p159 = scmp.eq.s32.totalorder %s21, 0
      %p160 = por %p158, %p159
      %p161 = scmp.ne.s32.totalorder %s153, %s155
      %p162 = scmp.eq.s32.totalorder %s26, 3
      %p163 = por %p161, %p162
      %p164 = scmp.ne.s32.totalorder %s155, %s156
      %p165 = scmp.eq.s32.totalorder %s26, 0
      %p166 = por %p164, %p165
      %p167 = scmp.ne.s32.totalorder %s155, %s156
      %p168 = scmp.eq.s32.totalorder %s27, 3
      %p169 = por %p167, %p168
      %p171 = scmp.ne.s32.totalorder %s156, %s170
      %p172 = scmp.eq.s32.totalorder %s27, 0
      %p173 = por %p171, %p172
      %s175 = sadd.s32 %s174, 1
      %p178 = scmp.eq.s32.totalorder %s21, 3
      %p179 = scmp.ne.s32.totalorder %s174, %s176
      %p180 = scmp.eq.s32.totalorder %s21, 0
      %p181 = por %p179, %p180
      %p182 = scmp.ne.s32.totalorder %s174, %s176
      %p183 = scmp.eq.s32.totalorder %s26, 3
      %p184 = por %p182, %p183
      %p185 = scmp.ne.s32.totalorder %s176, %s177
      %p186 = scmp.eq.s32.totalorder %s26, 0
      %p187 = por %p185, %p186
      %p188 = scmp.ne.s32.totalorder %s176, %s177
      %p189 = scmp.eq.s32.totalorder %s27, 3
      %p190 = por %p188, %p189
      %p192 = scmp.ne.s32.totalorder %s177, %s191
      %p193 = scmp.eq.s32.totalorder %s27, 0
      %p194 = por %p192, %p193
      %s196 = sadd.s32 %s195, 1
      %p199 = scmp.eq.s32.totalorder %s21, 3
      %p200 = scmp.ne.s32.totalorder %s195, %s197
      %p201 = scmp.eq.s32.totalorder %s21, 0
      %p202 = por %p200, %p201
      %p203 = scmp.ne.s32.totalorder %s195, %s197
      %p204 = scmp.eq.s32.totalorder %s26, 3
      %p205 = por %p203, %p204
      %p206 = scmp.ne.s32.totalorder %s197, %s198
      %p207 = scmp.eq.s32.totalorder %s26, 0
      %p208 = por %p206, %p207
      %p209 = scmp.ne.s32.totalorder %s197, %s198
      %p210 = scmp.eq.s32.totalorder %s27, 3
      %p211 = por %p209, %p210
      %p213 = scmp.ne.s32.totalorder %s198, %s212
      %p214 = scmp.eq.s32.totalorder %s27, 0
      %p215 = por %p213, %p214
      %s217 = sadd.s32 %s216, 1
      %p220 = scmp.eq.s32.totalorder %s21, 3
      %p221 = scmp.ne.s32.totalorder %s216, %s218
      %p222 = scmp.eq.s32.totalorder %s21, 0
      %p223 = por %p221, %p222
      %p224 = scmp.ne.s32.totalorder %s216, %s218
      %p225 = scmp.eq.s32.totalorder %s26, 3
      %p226 = por %p224, %p225
      %p227 = scmp.ne.s32.totalorder %s218, %s219
      %p228 = scmp.eq.s32.totalorder %s26, 0
      %p229 = por %p227, %p228
      %p230 = scmp.ne.s32.totalorder %s218, %s219
      %p231 = scmp.eq.s32.totalorder %s27, 3
      %p232 = por %p230, %p231
      %p234 = scmp.ne.s32.totalorder %s219, %s233
      %p235 = scmp.eq.s32.totalorder %s27, 0
      %p236 = por %p234, %p235
      %s238 = sadd.s32 %s237, 1
      %p241 = scmp.eq.s32.totalorder %s21, 3
      %p242 = scmp.ne.s32.totalorder %s237, %s239
      %p243 = scmp.eq.s32.totalorder %s21, 0
      %p244 = por %p242, %p243
      %p245 = scmp.ne.s32.totalorder %s237, %s239
      %p246 = scmp.eq.s32.totalorder %s26, 3
      %p247 = por %p245, %p246
      %p248 = scmp.ne.s32.totalorder %s239, %s240
      %p249 = scmp.eq.s32.totalorder %s26, 0
      %p250 = por %p248, %p249
      %p251 = scmp.ne.s32.totalorder %s239, %s240
      %p252 = scmp.eq.s32.totalorder %s27, 3
      %p253 = por %p251, %p252
      %p255 = scmp.ne.s32.totalorder %s240, %s254
      %p256 = scmp.eq.s32.totalorder %s27, 0
      %p257 = por %p255, %p256
      %s259 = sadd.s32 %s258, 1
      %p262 = scmp.eq.s32.totalorder %s21, 3
      %p263 = scmp.ne.s32.totalorder %s258, %s260
      %p264 = scmp.eq.s32.totalorder %s21, 0
      %p265 = por %p263, %p264
      %p266 = scmp.ne.s32.totalorder %s258, %s260
      %p267 = scmp.eq.s32.totalorder %s26, 3
      %p268 = por %p266, %p267
      %p269 = scmp.ne.s32.totalorder %s260, %s261
      %p270 = scmp.eq.s32.totalorder %s26, 0
      %p271 = por %p269, %p270
      %p272 = scmp.ne.s32.totalorder %s260, %s261
      %p273 = scmp.eq.s32.totalorder %s27, 3
      %p274 = por %p272, %p273
      %p276 = scmp.ne.s32.totalorder %s261, %s275
      %p277 = scmp.eq.s32.totalorder %s27, 0
      %p278 = por %p276, %p277
      %s280 = sadd.s32 %s279, 1
      %p283 = scmp.eq.s32.totalorder %s21, 3
      %p284 = scmp.ne.s32.totalorder %s279, %s281
      %p285 = scmp.eq.s32.totalorder %s21, 0
      %p286 = por %p284, %p285
      %p287 = scmp.ne.s32.totalorder %s279, %s281
      %p288 = scmp.eq.s32.totalorder %s26, 3
      %p289 = por %p287, %p288
      %p290 = scmp.ne.s32.totalorder %s281, %s282
      %p291 = scmp.eq.s32.totalorder %s26, 0
      %p292 = por %p290, %p291
      %p293 = scmp.ne.s32.totalorder %s281, %s282
      %p294 = scmp.eq.s32.totalorder %s27, 3
      %p295 = por %p293, %p294
      %p297 = scmp.ne.s32.totalorder %s282, %s296
      %p298 = scmp.eq.s32.totalorder %s27, 0
      %p299 = por %p297, %p298
      %s301 = sadd.s32 %s300, 1
      %p304 = scmp.eq.s32.totalorder %s21, 3
      %p305 = scmp.ne.s32.totalorder %s300, %s302
      %p306 = scmp.eq.s32.totalorder %s21, 0
      %p307 = por %p305, %p306
      %p308 = scmp.ne.s32.totalorder %s300, %s302
      %p309 = scmp.eq.s32.totalorder %s26, 3
      %p310 = por %p308, %p309
      %p311 = scmp.ne.s32.totalorder %s302, %s303
      %p312 = scmp.eq.s32.totalorder %s26, 0
      %p313 = por %p311, %p312
      %p314 = scmp.ne.s32.totalorder %s302, %s303
      %p315 = scmp.eq.s32.totalorder %s27, 3
      %p316 = por %p314, %p315
      %p318 = scmp.ne.s32.totalorder %s303, %s317
      %p319 = scmp.eq.s32.totalorder %s27, 0
      %p320 = por %p318, %p319
      %s322 = sadd.s32 %s321, 1
      %p325 = scmp.eq.s32.totalorder %s21, 3
      %p326 = scmp.ne.s32.totalorder %s321, %s323
      %p327 = scmp.eq.s32.totalorder %s21, 0
      %p328 = por %p326, %p327
      %p329 = scmp.ne.s32.totalorder %s321, %s323
      %p330 = scmp.eq.s32.totalorder %s26, 3
      %p331 = por %p329, %p330
      %p332 = scmp.ne.s32.totalorder %s323, %s324
      %p333 = scmp.eq.s32.totalorder %s26, 0
      %p334 = por %p332, %p333
      %p335 = scmp.ne.s32.totalorder %s323, %s324
      %p336 = scmp.eq.s32.totalorder %s27, 3
      %p337 = por %p335, %p336
      %p339 = scmp.ne.s32.totalorder %s324, %s338
      %p340 = scmp.eq.s32.totalorder %s27, 0
      %p341 = por %p339, %p340
      %s343 = sadd.s32 %s342, 1
      %p346 = scmp.eq.s32.totalorder %s21, 3
      %p347 = scmp.ne.s32.totalorder %s342, %s344
      %p348 = scmp.eq.s32.totalorder %s21, 0
      %p349 = por %p347, %p348
      %p350 = scmp.ne.s32.totalorder %s342, %s344
      %p351 = scmp.eq.s32.totalorder %s26, 3
      %p352 = por %p350, %p351
      %p353 = scmp.ne.s32.totalorder %s344, %s345
      %p354 = scmp.eq.s32.totalorder %s26, 0
      %p355 = por %p353, %p354
      %p356 = scmp.ne.s32.totalorder %s344, %s345
      %p357 = scmp.eq.s32.totalorder %s27, 3
      %p358 = por %p356, %p357
      %p360 = scmp.ne.s32.totalorder %s345, %s359
      %p361 = scmp.eq.s32.totalorder %s27, 0
      %p362 = por %p360, %p361
      %s363 = ssub.s32 %s28, %s40
      %s364 = ssub.s32 %s29, %s36
      %s365 = sor.u32 %s363, %s364
      %p366 = scmp.eq.s32.totalorder %s365, 0
      %s368 = sadd.s32 %s367, 1
      %s369 = scalar_select %p366, %s367, %s368
      %p372 = pneg %p366
      %p373 = scmp.eq.s32.totalorder %s21, 3
      %p374 = por %p372, %p373
      %p375 = scmp.ne.s32.totalorder %s367, %s370
      %p376 = scmp.eq.s32.totalorder %s21, 0
      %p377 = por %p375, %p376
      %p378 = scmp.ne.s32.totalorder %s367, %s370
      %p379 = scmp.eq.s32.totalorder %s26, 3
      %p380 = por %p378, %p379
      %p381 = scmp.ne.s32.totalorder %s370, %s371
      %p382 = scmp.eq.s32.totalorder %s26, 0
      %p383 = por %p381, %p382
      %p384 = scmp.ne.s32.totalorder %s370, %s371
      %p385 = scmp.eq.s32.totalorder %s27, 3
      %p386 = por %p384, %p385
      %p388 = scmp.ne.s32.totalorder %s371, %s387
      %p389 = scmp.eq.s32.totalorder %s27, 0
      %p390 = por %p388, %p389
      %p391 = scmp.le.s32.totalorder 1, %s21
      %p392 = scmp.lt.s32.totalorder %s21, 5
      %p393 = pnand %p391, %p392
      %p394 = pneg %p393
      // Predicated region
      $region9: #{basic_layer_forward.2} parent=5 // pred_check
        _
      $region10: #{basic_layer_forward.2} parent=5 // pred_check_branch
        %396 = sbr.rel (%p393) target = $region12
      $region11: #{basic_layer_forward.2} parent=5 // pred_region
        %s397 = ssub.s32 %s21, 1
        // Predicated region
        $region13: #{basic_layer_forward.2} parent=11 // pred_check
          %p398 = pneg %p82
        $region14: #{basic_layer_forward.2} parent=11 // pred_check_branch
          %400 = sbr.rel (%p398) target = $region16
        $region15: #{basic_layer_forward.2} parent=11 // pred_region
          _
        $region16: #{basic_layer_forward.2} parent=11 // pred_fallthru
          _
        // Predicated region
        $region17: #{basic_layer_forward.2} parent=11 // pred_check
          %p401 = pneg %p103
        $region18: #{basic_layer_forward.2} parent=11 // pred_check_branch
          %403 = sbr.rel (%p401) target = $region20
        $region19: #{basic_layer_forward.2} parent=11 // pred_region
          _
        $region20: #{basic_layer_forward.2} parent=11 // pred_fallthru
          _
        // Predicated region
        $region21: #{basic_layer_forward.2} parent=11 // pred_check
          %p404 = pneg %p124
        $region22: #{basic_layer_forward.2} parent=11 // pred_check_branch
          %406 = sbr.rel (%p404) target = $region24
        $region23: #{basic_layer_forward.2} parent=11 // pred_region
          _
        $region24: #{basic_layer_forward.2} parent=11 // pred_fallthru
          _
        // Predicated region
        $region25: #{basic_layer_forward.2} parent=11 // pred_check
          %p407 = pneg %p145
        $region26: #{basic_layer_forward.2} parent=11 // pred_check_branch
          %409 = sbr.rel (%p407) target = $region28
        $region27: #{basic_layer_forward.2} parent=11 // pred_region
          _
        $region28: #{basic_layer_forward.2} parent=11 // pred_fallthru
          _
        // Predicated region
        $region29: #{basic_layer_forward.2} parent=11 // pred_check
          %p410 = pneg %p166
        $region30: #{basic_layer_forward.2} parent=11 // pred_check_branch
          %412 = sbr.rel (%p410) target = $region32
        $region31: #{basic_layer_forward.2} parent=11 // pred_region
          _
        $region32: #{basic_layer_forward.2} parent=11 // pred_fallthru
          _
        // Predicated region
        $region33: #{basic_layer_forward.2} parent=11 // pred_check
          %p413 = pneg %p187
        $region34: #{basic_layer_forward.2} parent=11 // pred_check_branch
          %415 = sbr.rel (%p413) target = $region36
        $region35: #{basic_layer_forward.2} parent=11 // pred_region
          _
        $region36: #{basic_layer_forward.2} parent=11 // pred_fallthru
          _
        // Predicated region
        $region37: #{basic_layer_forward.2} parent=11 // pred_check
          %p416 = pneg %p208
        $region38: #{basic_layer_forward.2} parent=11 // pred_check_branch
          %418 = sbr.rel (%p416) target = $region40
        $region39: #{basic_layer_forward.2} parent=11 // pred_region
          _
        $region40: #{basic_layer_forward.2} parent=11 // pred_fallthru
          _
        // Predicated region
        $region41: #{basic_layer_forward.2} parent=11 // pred_check
          %p419 = pneg %p229
        $region42: #{basic_layer_forward.2} parent=11 // pred_check_branch
          %421 = sbr.rel (%p419) target = $region44
        $region43: #{basic_layer_forward.2} parent=11 // pred_region
          _
        $region44: #{basic_layer_forward.2} parent=11 // pred_fallthru
          _
        // Predicated region
        $region45: #{basic_layer_forward.2} parent=11 // pred_check
          %p422 = pneg %p250
        $region46: #{basic_layer_forward.2} parent=11 // pred_check_branch
          %424 = sbr.rel (%p422) target = $region48
        $region47: #{basic_layer_forward.2} parent=11 // pred_region
          _
        $region48: #{basic_layer_forward.2} parent=11 // pred_fallthru
          _
        // Predicated region
        $region49: #{basic_layer_forward.2} parent=11 // pred_check
          %p425 = pneg %p271
        $region50: #{basic_layer_forward.2} parent=11 // pred_check_branch
          %427 = sbr.rel (%p425) target = $region52
        $region51: #{basic_layer_forward.2} parent=11 // pred_region
          _
        $region52: #{basic_layer_forward.2} parent=11 // pred_fallthru
          _
        // Predicated region
        $region53: #{basic_layer_forward.2} parent=11 // pred_check
          %p428 = pneg %p292
        $region54: #{basic_layer_forward.2} parent=11 // pred_check_branch
          %430 = sbr.rel (%p428) target = $region56
        $region55: #{basic_layer_forward.2} parent=11 // pred_region
          _
        $region56: #{basic_layer_forward.2} parent=11 // pred_fallthru
          _
        // Predicated region
        $region57: #{basic_layer_forward.2} parent=11 // pred_check
          %p431 = pneg %p313
        $region58: #{basic_layer_forward.2} parent=11 // pred_check_branch
          %433 = sbr.rel (%p431) target = $region60
        $region59: #{basic_layer_forward.2} parent=11 // pred_region
          _
        $region60: #{basic_layer_forward.2} parent=11 // pred_fallthru
          _
        // Predicated region
        $region61: #{basic_layer_forward.2} parent=11 // pred_check
          %p434 = pneg %p334
        $region62: #{basic_layer_forward.2} parent=11 // pred_check_branch
          %436 = sbr.rel (%p434) target = $region64
        $region63: #{basic_layer_forward.2} parent=11 // pred_region
          _
        $region64: #{basic_layer_forward.2} parent=11 // pred_fallthru
          _
        // Predicated region
        $region65: #{basic_layer_forward.2} parent=11 // pred_check
          %p437 = pneg %p355
        $region66: #{basic_layer_forward.2} parent=11 // pred_check_branch
          %439 = sbr.rel (%p437) target = $region68
        $region67: #{basic_layer_forward.2} parent=11 // pred_region
          _
        $region68: #{basic_layer_forward.2} parent=11 // pred_fallthru
          _
      $region12: #{basic_layer_forward.2} parent=5 // pred_fallthru
        _
      %p440 = scmp.lt.s32.totalorder %s21, 4
      // Predicated region
      $region69: #{basic_layer_forward.2} parent=5 // pred_check
        %p441 = pneg %p440
      $region70: #{basic_layer_forward.2} parent=5 // pred_check_branch
        %443 = sbr.rel (%p441) target = $region72
      $region71: #{basic_layer_forward.2} parent=5 // pred_region
        // Predicated region
        $region73: #{basic_layer_forward.2} parent=71 // pred_check
          %p444 = pneg %p55
        $region74: #{basic_layer_forward.2} parent=71 // pred_check_branch
          %446 = sbr.rel (%p444) target = $region76
        $region75: #{basic_layer_forward.2} parent=71 // pred_region
          %s447 = sand.u32 %s45, 1
          %s448 = sand.u32 %s45, 1
          %s449 = smul.addr %s448, 128
          %s450 = scalar_lea.vmem [#allocation2], %s449
          %s451 = smul.addr %s28, 32
          %s452 = sadd.s32 %s29, %s451
          %s453 = smul.addr %s452, 8
          %s454 = scalar_lea.vmem %s0, %s453
          // Predicated region
          $region77: #{basic_layer_forward.2} parent=75 // pred_check
            _
          $region78: #{basic_layer_forward.2} parent=75 // pred_check_branch
            %456 = sbr.rel (0) target = $region80
          $region79: #{basic_layer_forward.2} parent=75 // pred_region
            // Predicated region
            $region81: #{basic_layer_forward.2} parent=79 // pred_check
              _
            $region82: #{basic_layer_forward.2} parent=79 // pred_check_branch
              %458 = sbr.rel (0) target = $region84
            $region83: #{basic_layer_forward.2} parent=79 // pred_region
              // Predicated region
              $region96: #{basic_layer_forward.2} parent=83 // pred_check
                _
              $region97: #{basic_layer_forward.2} parent=83 // pred_check_branch
                %504 = sbr.rel (0) target = $region99
              $region98: #{basic_layer_forward.2} parent=83 // pred_region
                loop: start=0, step=1, limit=1
                $region100: #{basic_layer_forward.2} parent=98 // loop_pre_header
                  _
                $region101: #{basic_layer_forward.2} parent=98 // loop_header
                  %s506 = sphi 0, %s510
                  %p507 = scmp.ge.s32.totalorder %s506, 1
                  %s511 = sphi %s454, %s454
                  %s512 = sphi %s450, %s450
                $region102: #{basic_layer_forward.2} parent=98 // loop_header_branch
                  %509 = sbr.rel (%p507) target = $region106
                $region103: #{basic_layer_forward.2} parent=98 // loop_body
                  %v513 = vld [vmem:[%s511] sm:$0xff]
                  %514 = vst [vmem:[%s512] sm:$0xff] %v513
                  %v515 = vld [vmem:[%s511 + $0x10] sm:$0xff]
                  %516 = vst [vmem:[%s512 + $0x8] sm:$0xff] %v515
                  %v517 = vld [vmem:[%s511 + $0x20] sm:$0xff]
                  %518 = vst [vmem:[%s512 + $0x10] sm:$0xff] %v517
                  %v519 = vld [vmem:[%s511 + $0x30] sm:$0xff]
                  %520 = vst [vmem:[%s512 + $0x18] sm:$0xff] %v519
                  %v521 = vld [vmem:[%s511 + $0x40] sm:$0xff]
                  %522 = vst [vmem:[%s512 + $0x20] sm:$0xff] %v521
                  %v523 = vld [vmem:[%s511 + $0x50] sm:$0xff]
                  %524 = vst [vmem:[%s512 + $0x28] sm:$0xff] %v523
                  %v525 = vld [vmem:[%s511 + $0x60] sm:$0xff]
                  %526 = vst [vmem:[%s512 + $0x30] sm:$0xff] %v525
                  %v527 = vld [vmem:[%s511 + $0x70] sm:$0xff]
                  %528 = vst [vmem:[%s512 + $0x38] sm:$0xff] %v527
                  %v529 = vld [vmem:[%s511 + $0x80] sm:$0xff]
                  %530 = vst [vmem:[%s512 + $0x40] sm:$0xff] %v529
                  %v531 = vld [vmem:[%s511 + $0x90] sm:$0xff]
                  %532 = vst [vmem:[%s512 + $0x48] sm:$0xff] %v531
                  %v533 = vld [vmem:[%s511 + $0xa0] sm:$0xff]
                  %534 = vst [vmem:[%s512 + $0x50] sm:$0xff] %v533
                  %v535 = vld [vmem:[%s511 + $0xb0] sm:$0xff]
                  %536 = vst [vmem:[%s512 + $0x58] sm:$0xff] %v535
                  %v537 = vld [vmem:[%s511 + $0xc0] sm:$0xff]
                  %538 = vst [vmem:[%s512 + $0x60] sm:$0xff] %v537
                  %v539 = vld [vmem:[%s511 + $0xd0] sm:$0xff]
                  %540 = vst [vmem:[%s512 + $0x68] sm:$0xff] %v539
                  %v541 = vld [vmem:[%s511 + $0xe0] sm:$0xff]
                  %542 = vst [vmem:[%s512 + $0x70] sm:$0xff] %v541
                  %v543 = vld [vmem:[%s511 + $0xf0] sm:$0xff]
                  %544 = vst [vmem:[%s512 + $0x78] sm:$0xff] %v543
                $region104: #{basic_layer_forward.2} parent=98 // loop_footer
                  %s510 = sadd.s32 1, %s506
                $region105: #{basic_layer_forward.2} parent=98 // loop_footer_branch
                  %505 = sbr.rel target = $region101
                $region106: #{basic_layer_forward.2} parent=98 // loop_exit
                  _
              $region99: #{basic_layer_forward.2} parent=83 // pred_fallthru
                _
              // Predicated region
              $region107: #{basic_layer_forward.2} parent=83 // pred_check
                _
              $region108: #{basic_layer_forward.2} parent=83 // pred_check_branch
                %546 = sbr.rel target = $region110
              $region109: #{basic_layer_forward.2} parent=83 // pred_region
                _
              $region110: #{basic_layer_forward.2} parent=83 // pred_fallthru
                _
            $region84: #{basic_layer_forward.2} parent=79 // pred_fallthru
              _
            // Predicated region
            $region85: #{basic_layer_forward.2} parent=79 // pred_check
              _
            $region86: #{basic_layer_forward.2} parent=79 // pred_check_branch
              %460 = sbr.rel target = $region88
            $region87: #{basic_layer_forward.2} parent=79 // pred_region
              %s462 = ssub.s32 256, 1
              loop: start=0, step=1, limit=1
              $region89: #{basic_layer_forward.2} parent=87 // loop_pre_header
                _
              $region90: #{basic_layer_forward.2} parent=87 // loop_header
                %s464 = sphi 0, %s468
                %p465 = scmp.ge.s32.totalorder %s464, 1
                %s469 = sphi %s454, %s454
                %s470 = sphi %s450, %s450
              $region91: #{basic_layer_forward.2} parent=87 // loop_header_branch
                %467 = sbr.rel (%p465) target = $region95
              $region92: #{basic_layer_forward.2} parent=87 // loop_body
                %v471 = vld [vmem:[%s469] sm:%s462]
                %472 = vst [vmem:[%s470] sm:%s462] %v471
                %v473 = vld [vmem:[%s469 + $0x10] sm:%s462]
                %474 = vst [vmem:[%s470 + $0x8] sm:%s462] %v473
                %v475 = vld [vmem:[%s469 + $0x20] sm:%s462]
                %476 = vst [vmem:[%s470 + $0x10] sm:%s462] %v475
                %v477 = vld [vmem:[%s469 + $0x30] sm:%s462]
                %478 = vst [vmem:[%s470 + $0x18] sm:%s462] %v477
                %v479 = vld [vmem:[%s469 + $0x40] sm:%s462]
                %480 = vst [vmem:[%s470 + $0x20] sm:%s462] %v479
                %v481 = vld [vmem:[%s469 + $0x50] sm:%s462]
                %482 = vst [vmem:[%s470 + $0x28] sm:%s462] %v481
                %v483 = vld [vmem:[%s469 + $0x60] sm:%s462]
                %484 = vst [vmem:[%s470 + $0x30] sm:%s462] %v483
                %v485 = vld [vmem:[%s469 + $0x70] sm:%s462]
                %486 = vst [vmem:[%s470 + $0x38] sm:%s462] %v485
                %v487 = vld [vmem:[%s469 + $0x80] sm:%s462]
                %488 = vst [vmem:[%s470 + $0x40] sm:%s462] %v487
                %v489 = vld [vmem:[%s469 + $0x90] sm:%s462]
                %490 = vst [vmem:[%s470 + $0x48] sm:%s462] %v489
                %v491 = vld [vmem:[%s469 + $0xa0] sm:%s462]
                %492 = vst [vmem:[%s470 + $0x50] sm:%s462] %v491
                %v493 = vld [vmem:[%s469 + $0xb0] sm:%s462]
                %494 = vst [vmem:[%s470 + $0x58] sm:%s462] %v493
                %v495 = vld [vmem:[%s469 + $0xc0] sm:%s462]
                %496 = vst [vmem:[%s470 + $0x60] sm:%s462] %v495
                %v497 = vld [vmem:[%s469 + $0xd0] sm:%s462]
                %498 = vst [vmem:[%s470 + $0x68] sm:%s462] %v497
                %v499 = vld [vmem:[%s469 + $0xe0] sm:%s462]
                %500 = vst [vmem:[%s470 + $0x70] sm:%s462] %v499
                %v501 = vld [vmem:[%s469 + $0xf0] sm:%s462]
                %502 = vst [vmem:[%s470 + $0x78] sm:%s462] %v501
              $region93: #{basic_layer_forward.2} parent=87 // loop_footer
                %s468 = sadd.s32 1, %s464
              $region94: #{basic_layer_forward.2} parent=87 // loop_footer_branch
                %463 = sbr.rel target = $region90
              $region95: #{basic_layer_forward.2} parent=87 // loop_exit
                _
            $region88: #{basic_layer_forward.2} parent=79 // pred_fallthru
              _
          $region80: #{basic_layer_forward.2} parent=75 // pred_fallthru
            _
          %547 = vnop
        $region76: #{basic_layer_forward.2} parent=71 // pred_fallthru
          _
      $region72: #{basic_layer_forward.2} parent=5 // pred_fallthru
        _
      %p548 = scmp.le.s32.totalorder 1, %s21
      %p549 = scmp.lt.s32.totalorder %s21, 5
      %p550 = pnand %p548, %p549
      %p551 = pneg %p550
      // Predicated region
      $region111: #{basic_layer_forward.2} parent=5 // pred_check
        _
      $region112: #{basic_layer_forward.2} parent=5 // pred_check_branch
        %553 = sbr.rel (%p550) target = $region114
      $region113: #{basic_layer_forward.2} parent=5 // pred_region
        %s554 = ssub.s32 %s21, 1
        %s555 = sand.u32 %s48, 1
        %s556 = sand.u32 %s48, 1
        %s557 = smul.addr %s556, 128
        %s558 = scalar_lea.vmem [#allocation2], %s557
        // Predicated region
        $region115: #{basic_layer_forward.2} parent=113 // pred_check
          %p559 = pneg %p61
        $region116: #{basic_layer_forward.2} parent=113 // pred_check_branch
          %561 = sbr.rel (%p559) target = $region118
        $region117: #{basic_layer_forward.2} parent=113 // pred_region
          _
        $region118: #{basic_layer_forward.2} parent=113 // pred_fallthru
          _
        %s562 = sand.u32 %s48, 1
        %s563 = sand.u32 %s48, 1
        %s564 = smul.addr %s563, 128
        %s565 = scalar_lea.vmem [#allocation2], %s564
        %p566 = pneg %p61
        %p567 = pneg %p58
        %p568 = pneg %p82
        %p569 = pneg %p79
        %p570 = pneg %p103
        %p571 = pneg %p100
        %p572 = pneg %p124
        %p573 = pneg %p121
        %p574 = pneg %p145
        %p575 = pneg %p142
        %p576 = pneg %p166
        %p577 = pneg %p163
        %p578 = pneg %p187
        %p579 = pneg %p184
        %p580 = pneg %p208
        %p581 = pneg %p205
        %p582 = pneg %p229
        %p583 = pneg %p226
        %p584 = pneg %p250
        %p585 = pneg %p247
        %p586 = pneg %p271
        %p587 = pneg %p268
        %p588 = pneg %p292
        %p589 = pneg %p289
        %p590 = pneg %p313
        %p591 = pneg %p310
        %p592 = pneg %p334
        %p593 = pneg %p331
        %p594 = pneg %p355
        %p595 = pneg %p352
        %p596 = pneg %p383
        %p597 = pneg %p380
        %s598 = sand.u32 %s370, 1
        %s599 = sand.u32 %s370, 1
        %s600 = smul.addr %s599, 128
        %s601 = scalar_lea.vmem [#allocation3], %s600
        %v603 = vld [vmem:[%s558] sm:$0xff]
        %v604 = vld [vmem:[%s558 + $0x8] sm:$0xff]
        %v605 = vld [vmem:[%s558 + $0x10] sm:$0xff]
        %v606 = vld [vmem:[%s558 + $0x18] sm:$0xff]
        %v607 = vld [vmem:[%s558 + $0x20] sm:$0xff]
        %v608 = vld [vmem:[%s558 + $0x28] sm:$0xff]
        %v609 = vld [vmem:[%s558 + $0x30] sm:$0xff]
        %v610 = vld [vmem:[%s558 + $0x38] sm:$0xff]
        %v611 = vld [vmem:[%s558 + $0x40] sm:$0xff]
        %v612 = vld [vmem:[%s558 + $0x48] sm:$0xff]
        %v613 = vld [vmem:[%s558 + $0x50] sm:$0xff]
        %v614 = vld [vmem:[%s558 + $0x58] sm:$0xff]
        %v615 = vld [vmem:[%s558 + $0x60] sm:$0xff]
        %v616 = vld [vmem:[%s558 + $0x68] sm:$0xff]
        %v617 = vld [vmem:[%s558 + $0x70] sm:$0xff]
        %v618 = vld [vmem:[%s558 + $0x78] sm:$0xff]
        %vm619 = vcmask 261120
        %v620 = vsel %vm619, %v603, 0.0
        %621 = vadd.xlane.f32.xlu0 %v620
        %v622 = vpop.xlane.xlu0 %621
        %v623 = vsel %vm619, %v604, 0.0
        %624 = vadd.xlane.f32.xlu0 %v623
        %v625 = vpop.xlane.xlu0 %624
        %v626 = vsel %vm619, %v605, 0.0
        %627 = vadd.xlane.f32.xlu0 %v626
        %v628 = vpop.xlane.xlu0 %627
        %v629 = vsel %vm619, %v606, 0.0
        %630 = vadd.xlane.f32.xlu0 %v629
        %v631 = vpop.xlane.xlu0 %630
        %v632 = vsel %vm619, %v607, 0.0
        %633 = vadd.xlane.f32.xlu0 %v632
        %v634 = vpop.xlane.xlu0 %633
        %v635 = vsel %vm619, %v608, 0.0
        %636 = vadd.xlane.f32.xlu0 %v635
        %v637 = vpop.xlane.xlu0 %636
        %v638 = vsel %vm619, %v609, 0.0
        %639 = vadd.xlane.f32.xlu0 %v638
        %v640 = vpop.xlane.xlu0 %639
        %v641 = vsel %vm619, %v610, 0.0
        %642 = vadd.xlane.f32.xlu0 %v641
        %v643 = vpop.xlane.xlu0 %642
        %v644 = vsel %vm619, %v611, 0.0
        %645 = vadd.xlane.f32.xlu0 %v644
        %v646 = vpop.xlane.xlu0 %645
        %v647 = vsel %vm619, %v612, 0.0
        %648 = vadd.xlane.f32.xlu0 %v647
        %v649 = vpop.xlane.xlu0 %648
        %v650 = vsel %vm619, %v613, 0.0
        %651 = vadd.xlane.f32.xlu0 %v650
        %v652 = vpop.xlane.xlu0 %651
        %v653 = vsel %vm619, %v614, 0.0
        %654 = vadd.xlane.f32.xlu0 %v653
        %v655 = vpop.xlane.xlu0 %654
        %v656 = vsel %vm619, %v615, 0.0
        %657 = vadd.xlane.f32.xlu0 %v656
        %v658 = vpop.xlane.xlu0 %657
        %v659 = vsel %vm619, %v616, 0.0
        %660 = vadd.xlane.f32.xlu0 %v659
        %v661 = vpop.xlane.xlu0 %660
        %v662 = vsel %vm619, %v617, 0.0
        %663 = vadd.xlane.f32.xlu0 %v662
        %v664 = vpop.xlane.xlu0 %663
        %v665 = vsel %vm619, %v618, 0.0
        %666 = vadd.xlane.f32.xlu0 %v665
        %v667 = vpop.xlane.xlu0 %666
        %v668 = vmul.f32 %v603, %v603
        %v669 = vmul.f32 %v604, %v604
        %v670 = vmul.f32 %v605, %v605
        %v671 = vmul.f32 %v606, %v606
        %v672 = vmul.f32 %v607, %v607
        %v673 = vmul.f32 %v608, %v608
        %v674 = vmul.f32 %v609, %v609
        %v675 = vmul.f32 %v610, %v610
        %v676 = vmul.f32 %v611, %v611
        %v677 = vmul.f32 %v612, %v612
        %v678 = vmul.f32 %v613, %v613
        %v679 = vmul.f32 %v614, %v614
        %v680 = vmul.f32 %v615, %v615
        %v681 = vmul.f32 %v616, %v616
        %v682 = vmul.f32 %v617, %v617
        %v683 = vmul.f32 %v618, %v618
        %v684 = vsel %vm619, %v668, 0.0
        %685 = vadd.xlane.f32.xlu0 %v684
        %v686 = vpop.xlane.xlu0 %685
        %v687 = vsel %vm619, %v669, 0.0
        %688 = vadd.xlane.f32.xlu0 %v687
        %v689 = vpop.xlane.xlu0 %688
        %v690 = vsel %vm619, %v670, 0.0
        %691 = vadd.xlane.f32.xlu0 %v690
        %v692 = vpop.xlane.xlu0 %691
        %v693 = vsel %vm619, %v671, 0.0
        %694 = vadd.xlane.f32.xlu0 %v693
        %v695 = vpop.xlane.xlu0 %694
        %v696 = vsel %vm619, %v672, 0.0
        %697 = vadd.xlane.f32.xlu0 %v696
        %v698 = vpop.xlane.xlu0 %697
        %v699 = vsel %vm619, %v673, 0.0
        %700 = vadd.xlane.f32.xlu0 %v699
        %v701 = vpop.xlane.xlu0 %700
        %v702 = vsel %vm619, %v674, 0.0
        %703 = vadd.xlane.f32.xlu0 %v702
        %v704 = vpop.xlane.xlu0 %703
        %v705 = vsel %vm619, %v675, 0.0
        %706 = vadd.xlane.f32.xlu0 %v705
        %v707 = vpop.xlane.xlu0 %706
        %v708 = vsel %vm619, %v676, 0.0
        %709 = vadd.xlane.f32.xlu0 %v708
        %v710 = vpop.xlane.xlu0 %709
        %v711 = vsel %vm619, %v677, 0.0
        %712 = vadd.xlane.f32.xlu0 %v711
        %v713 = vpop.xlane.xlu0 %712
        %v714 = vsel %vm619, %v678, 0.0
        %715 = vadd.xlane.f32.xlu0 %v714
        %v716 = vpop.xlane.xlu0 %715
        %v717 = vsel %vm619, %v679, 0.0
        %718 = vadd.xlane.f32.xlu0 %v717
        %v719 = vpop.xlane.xlu0 %718
        %v720 = vsel %vm619, %v680, 0.0
        %721 = vadd.xlane.f32.xlu0 %v720
        %v722 = vpop.xlane.xlu0 %721
        %v723 = vsel %vm619, %v681, 0.0
        %724 = vadd.xlane.f32.xlu0 %v723
        %v725 = vpop.xlane.xlu0 %724
        %v726 = vsel %vm619, %v682, 0.0
        %727 = vadd.xlane.f32.xlu0 %v726
        %v728 = vpop.xlane.xlu0 %727
        %v729 = vsel %vm619, %v683, 0.0
        %730 = vadd.xlane.f32.xlu0 %v729
        %v731 = vpop.xlane.xlu0 %730
        %v732 = vmul.f32 %v622, 0.03125
        %v733 = vmul.f32 %v625, 0.03125
        %v734 = vmul.f32 %v628, 0.03125
        %v735 = vmul.f32 %v631, 0.03125
        %v736 = vmul.f32 %v634, 0.03125
        %v737 = vmul.f32 %v637, 0.03125
        %v738 = vmul.f32 %v640, 0.03125
        %v739 = vmul.f32 %v643, 0.03125
        %v740 = vmul.f32 %v646, 0.03125
        %v741 = vmul.f32 %v649, 0.03125
        %v742 = vmul.f32 %v652, 0.03125
        %v743 = vmul.f32 %v655, 0.03125
        %v744 = vmul.f32 %v658, 0.03125
        %v745 = vmul.f32 %v661, 0.03125
        %v746 = vmul.f32 %v664, 0.03125
        %v747 = vmul.f32 %v667, 0.03125
        %v748 = vmul.f32 %v686, 0.03125
        %v749 = vmul.f32 %v689, 0.03125
        %v750 = vmul.f32 %v692, 0.03125
        %v751 = vmul.f32 %v695, 0.03125
        %v752 = vmul.f32 %v698, 0.03125
        %v753 = vmul.f32 %v701, 0.03125
        %v754 = vmul.f32 %v704, 0.03125
        %v755 = vmul.f32 %v707, 0.03125
        %v756 = vmul.f32 %v710, 0.03125
        %v757 = vmul.f32 %v713, 0.03125
        %v758 = vmul.f32 %v716, 0.03125
        %v759 = vmul.f32 %v719, 0.03125
        %v760 = vmul.f32 %v722, 0.03125
        %v761 = vmul.f32 %v725, 0.03125
        %v762 = vmul.f32 %v728, 0.03125
        %v763 = vmul.f32 %v731, 0.03125
        %v764 = vmul.f32 %v732, %v732
        %v765 = vmul.f32 %v733, %v733
        %v766 = vmul.f32 %v734, %v734
        %v767 = vmul.f32 %v735, %v735
        %v768 = vmul.f32 %v736, %v736
        %v769 = vmul.f32 %v737, %v737
        %v770 = vmul.f32 %v738, %v738
        %v771 = vmul.f32 %v739, %v739
        %v772 = vmul.f32 %v740, %v740
        %v773 = vmul.f32 %v741, %v741
        %v774 = vmul.f32 %v742, %v742
        %v775 = vmul.f32 %v743, %v743
        %v776 = vmul.f32 %v744, %v744
        %v777 = vmul.f32 %v745, %v745
        %v778 = vmul.f32 %v746, %v746
        %v779 = vmul.f32 %v747, %v747
        %v780 = vsub.f32 %v748, %v764
        %v781 = vsub.f32 %v749, %v765
        %v782 = vsub.f32 %v750, %v766
        %v783 = vsub.f32 %v751, %v767
        %v784 = vsub.f32 %v752, %v768
        %v785 = vsub.f32 %v753, %v769
        %v786 = vsub.f32 %v754, %v770
        %v787 = vsub.f32 %v755, %v771
        %v788 = vsub.f32 %v756, %v772
        %v789 = vsub.f32 %v757, %v773
        %v790 = vsub.f32 %v758, %v774
        %v791 = vsub.f32 %v759, %v775
        %v792 = vsub.f32 %v760, %v776
        %v793 = vsub.f32 %v761, %v777
        %v794 = vsub.f32 %v762, %v778
        %v795 = vsub.f32 %v763, %v779
        %v796 = vsub.f32 %v603, %v732
        %v797 = vsub.f32 %v604, %v733
        %v798 = vsub.f32 %v605, %v734
        %v799 = vsub.f32 %v606, %v735
        %v800 = vsub.f32 %v607, %v736
        %v801 = vsub.f32 %v608, %v737
        %v802 = vsub.f32 %v609, %v738
        %v803 = vsub.f32 %v610, %v739
        %v804 = vsub.f32 %v611, %v740
        %v805 = vsub.f32 %v612, %v741
        %v806 = vsub.f32 %v613, %v742
        %v807 = vsub.f32 %v614, %v743
        %v808 = vsub.f32 %v615, %v744
        %v809 = vsub.f32 %v616, %v745
        %v810 = vsub.f32 %v617, %v746
        %v811 = vsub.f32 %v618, %v747
        %v812 = vadd.f32 %v780, 1e-05
        %v813 = vadd.f32 %v781, 1e-05
        %v814 = vadd.f32 %v782, 1e-05
        %v815 = vadd.f32 %v783, 1e-05
        %v816 = vadd.f32 %v784, 1e-05
        %v817 = vadd.f32 %v785, 1e-05
        %v818 = vadd.f32 %v786, 1e-05
        %v819 = vadd.f32 %v787, 1e-05
        %v820 = vadd.f32 %v788, 1e-05
        %v821 = vadd.f32 %v789, 1e-05
        %v822 = vadd.f32 %v790, 1e-05
        %v823 = vadd.f32 %v791, 1e-05
        %v824 = vadd.f32 %v792, 1e-05
        %v825 = vadd.f32 %v793, 1e-05
        %v826 = vadd.f32 %v794, 1e-05
        %v827 = vadd.f32 %v795, 1e-05
        %v828 = vrsqrt.pop %v812
        %v829 = vrsqrt.pop %v813
        %v830 = vrsqrt.pop %v814
        %v831 = vrsqrt.pop %v815
        %v832 = vrsqrt.pop %v816
        %v833 = vrsqrt.pop %v817
        %v834 = vrsqrt.pop %v818
        %v835 = vrsqrt.pop %v819
        %v836 = vrsqrt.pop %v820
        %v837 = vrsqrt.pop %v821
        %v838 = vrsqrt.pop %v822
        %v839 = vrsqrt.pop %v823
        %v840 = vrsqrt.pop %v824
        %v841 = vrsqrt.pop %v825
        %v842 = vrsqrt.pop %v826
        %v843 = vrsqrt.pop %v827
        %v844 = vmul.f32 %v796, %v828
        %v845 = vmul.f32 %v797, %v829
        %v846 = vmul.f32 %v798, %v830
        %v847 = vmul.f32 %v799, %v831
        %v848 = vmul.f32 %v800, %v832
        %v849 = vmul.f32 %v801, %v833
        %v850 = vmul.f32 %v802, %v834
        %v851 = vmul.f32 %v803, %v835
        %v852 = vmul.f32 %v804, %v836
        %v853 = vmul.f32 %v805, %v837
        %v854 = vmul.f32 %v806, %v838
        %v855 = vmul.f32 %v807, %v839
        %v856 = vmul.f32 %v808, %v840
        %v857 = vmul.f32 %v809, %v841
        %v858 = vmul.f32 %v810, %v842
        %v859 = vmul.f32 %v811, %v843
        %v860 = vld [vmem:[%s3] sm:$0x1]
        %v862 = vlaneseq
        %v863 = vshrl.u32 %v862, 7
        %v864 = vsub.s32 0, %v863
        %v865 = vrot.slane %v860, %v864
        %v867 = vmul.f32 %v844, %v865
        %v868 = vmul.f32 %v845, %v865
        %v869 = vmul.f32 %v846, %v865
        %v870 = vmul.f32 %v847, %v865
        %v871 = vmul.f32 %v848, %v865
        %v872 = vmul.f32 %v849, %v865
        %v873 = vmul.f32 %v850, %v865
        %v874 = vmul.f32 %v851, %v865
        %v875 = vmul.f32 %v852, %v865
        %v876 = vmul.f32 %v853, %v865
        %v877 = vmul.f32 %v854, %v865
        %v878 = vmul.f32 %v855, %v865
        %v879 = vmul.f32 %v856, %v865
        %v880 = vmul.f32 %v857, %v865
        %v881 = vmul.f32 %v858, %v865
        %v882 = vmul.f32 %v859, %v865
        %v883 = vld [vmem:[%s4] sm:$0x1]
        %v885 = vlaneseq
        %v886 = vshrl.u32 %v885, 7
        %v887 = vsub.s32 0, %v886
        %v888 = vrot.slane %v883, %v887
        %v890 = vadd.f32 %v867, %v888
        %v891 = vadd.f32 %v868, %v888
        %v892 = vadd.f32 %v869, %v888
        %v893 = vadd.f32 %v870, %v888
        %v894 = vadd.f32 %v871, %v888
        %v895 = vadd.f32 %v872, %v888
        %v896 = vadd.f32 %v873, %v888
        %v897 = vadd.f32 %v874, %v888
        %v898 = vadd.f32 %v875, %v888
        %v899 = vadd.f32 %v876, %v888
        %v900 = vadd.f32 %v877, %v888
        %v901 = vadd.f32 %v878, %v888
        %v902 = vadd.f32 %v879, %v888
        %v903 = vadd.f32 %v880, %v888
        %v904 = vadd.f32 %v881, %v888
        %v905 = vadd.f32 %v882, %v888
        %v906 = vpack.c.bf16 %v891, %v890
        %v907 = vpack.c.bf16 %v893, %v892
        %v908 = vpack.c.bf16 %v895, %v894
        %v909 = vpack.c.bf16 %v897, %v896
        %v910 = vpack.c.bf16 %v899, %v898
        %v911 = vpack.c.bf16 %v901, %v900
        %v912 = vpack.c.bf16 %v903, %v902
        %v913 = vpack.c.bf16 %v905, %v904
        %v914 = vld [vmem:[%s5] sm:$0xf]
        %v915 = vld [vmem:[%s5 + $0x4] sm:$0xf]
        %v916 = vld [vmem:[%s5 + $0x8] sm:$0xf]
        %v917 = vld [vmem:[%s5 + $0xc] sm:$0xf]
        %v918 = vld [vmem:[%s6] sm:$0x1]
        %v920 = vlaneseq
        %v921 = vshrl.u32 %v920, 7
        %v922 = vsub.s32 0, %v921
        %v923 = vrot.slane %v918, %v922
        %v929 = vunpack.c.l.b16 %v914
        %v930 = vunpack.c.l.b16 %v915
        %v931 = vunpack.c.l.b16 %v916
        %v932 = vunpack.c.l.b16 %v917
        %v933 = vpack.c.b16 %v930, %v929
        %v934 = vpack.c.b16 %v932, %v931
        %v938 = vsel %vm619, %v906, 0
        %v941 = vsel %vm619, %v907, 0
        %v944 = vsel %vm619, %v908, 0
        %v947 = vsel %vm619, %v909, 0
        %v950 = vsel %vm619, %v910, 0
        %v953 = vsel %vm619, %v911, 0
        %v956 = vsel %vm619, %v912, 0
        %v959 = vsel %vm619, %v913, 0
        %961 = vmatprep.subr.bf16.mxu0 0
        %962 = vmatpush1.bf16.msra.mxu0 0
        %963 = vmatprep.subr.bf16.mxu0 0
        %964 = vmatpush1.bf16.msra.mxu0 0
        %965 = vmatprep.subr.bf16.mxu0 0
        %966 = vmatpush1.bf16.msra.mxu0 0
        %967 = vmatprep.subr.bf16.mxu0 0
        %968 = vmatpush1.bf16.msra.mxu0 0
        %969 = vmatprep.subr.bf16.mxu0 0
        %970 = vmatpush1.bf16.msra.mxu0 0
        %971 = vmatprep.subr.bf16.mxu0 0
        %972 = vmatpush1.bf16.msra.mxu0 0
        %973 = vmatprep.subr.bf16.mxu0 0
        %974 = vmatpush1.bf16.msra.mxu0 %v934
        %975 = vmatprep.subr.bf16.mxu0 0
        %976 = vmatpush1.bf16.msra.mxu0 %v933
        %977 = vmatprep.subr.bf16.mxu0 0
        %978 = vmatpush2.bf16.msra.mxu0 0
        %979 = vmatprep.subr.bf16.mxu0 0
        %980 = vmatpush2.bf16.msra.mxu0 0
        %981 = vmatprep.subr.bf16.mxu0 0
        %982 = vmatpush2.bf16.msra.mxu0 0
        %983 = vmatprep.subr.bf16.mxu0 0
        %984 = vmatpush2.bf16.msra.mxu0 0
        %985 = vmatprep.subr.bf16.mxu0 0
        %986 = vmatpush2.bf16.msra.mxu0 0
        %987 = vmatprep.subr.bf16.mxu0 0
        %988 = vmatpush2.bf16.msra.mxu0 0
        %989 = vmatprep.subr.bf16.mxu0 0
        %990 = vmatpush2.bf16.msra.mxu0 0
        %991 = vmatprep.subr.bf16.mxu0 0
        %992 = vmatpush2.bf16.msra.mxu0 0
        %993 = vmatprep.mubr.bf16.mxu0 0
        %994 = vmatmul.mubr.bf16.gmra.mxu0 %v938
        %v995 = vpop.f32.mrf.mxu0
        %v996 = vadd.f32 %v923, %v995
        %v997 = vpop.f32.mrf.mxu0
        %v998 = vpop.f32.mrf.mxu0
        %v999 = vadd.f32 %v923, %v998
        %v1000 = vpop.f32.mrf.mxu0
        %1001 = vmatprep.mubr.bf16.mxu0 0
        %1002 = vmatmul.mubr.bf16.gmra.mxu0 %v941
        %v1003 = vpop.f32.mrf.mxu0
        %v1004 = vadd.f32 %v923, %v1003
        %v1005 = vpop.f32.mrf.mxu0
        %v1006 = vpop.f32.mrf.mxu0
        %v1007 = vadd.f32 %v923, %v1006
        %v1008 = vpop.f32.mrf.mxu0
        %1009 = vmatprep.mubr.bf16.mxu0 0
        %1010 = vmatmul.mubr.bf16.gmra.mxu0 %v944
        %v1011 = vpop.f32.mrf.mxu0
        %v1012 = vadd.f32 %v923, %v1011
        %v1013 = vpop.f32.mrf.mxu0
        %v1014 = vpop.f32.mrf.mxu0
        %v1015 = vadd.f32 %v923, %v1014
        %v1016 = vpop.f32.mrf.mxu0
        %1017 = vmatprep.mubr.bf16.mxu0 0
        %1018 = vmatmul.mubr.bf16.gmra.mxu0 %v947
        %v1019 = vpop.f32.mrf.mxu0
        %v1020 = vadd.f32 %v923, %v1019
        %v1021 = vpop.f32.mrf.mxu0
        %v1022 = vpop.f32.mrf.mxu0
        %v1023 = vadd.f32 %v923, %v1022
        %v1024 = vpop.f32.mrf.mxu0
        %1025 = vmatprep.mubr.bf16.mxu0 0
        %1026 = vmatmul.mubr.bf16.gmra.mxu0 %v950
        %v1027 = vpop.f32.mrf.mxu0
        %v1028 = vadd.f32 %v923, %v1027
        %v1029 = vpop.f32.mrf.mxu0
        %v1030 = vpop.f32.mrf.mxu0
        %v1031 = vadd.f32 %v923, %v1030
        %v1032 = vpop.f32.mrf.mxu0
        %1033 = vmatprep.mubr.bf16.mxu0 0
        %1034 = vmatmul.mubr.bf16.gmra.mxu0 %v953
        %v1035 = vpop.f32.mrf.mxu0
        %v1036 = vadd.f32 %v923, %v1035
        %v1037 = vpop.f32.mrf.mxu0
        %v1038 = vpop.f32.mrf.mxu0
        %v1039 = vadd.f32 %v923, %v1038
        %v1040 = vpop.f32.mrf.mxu0
        %1041 = vmatprep.mubr.bf16.mxu0 0
        %1042 = vmatmul.mubr.bf16.gmra.mxu0 %v956
        %v1043 = vpop.f32.mrf.mxu0
        %v1044 = vadd.f32 %v923, %v1043
        %v1045 = vpop.f32.mrf.mxu0
        %v1046 = vpop.f32.mrf.mxu0
        %v1047 = vadd.f32 %v923, %v1046
        %v1048 = vpop.f32.mrf.mxu0
        %1049 = vmatprep.mubr.bf16.mxu0 0
        %1050 = vmatmul.mubr.bf16.gmra.mxu0 %v959
        %v1051 = vpop.f32.mrf.mxu0
        %v1052 = vadd.f32 %v923, %v1051
        %v1053 = vpop.f32.mrf.mxu0
        %v1054 = vpop.f32.mrf.mxu0
        %v1055 = vadd.f32 %v923, %v1054
        %v1056 = vpop.f32.mrf.mxu0
        %1057 = vdwg.mxu0
        %v1058 = vpack.c.bf16 %v999, %v996
        %v1059 = vpack.c.bf16 %v1007, %v1004
        %v1060 = vpack.c.bf16 %v1015, %v1012
        %v1061 = vpack.c.bf16 %v1023, %v1020
        %v1062 = vpack.c.bf16 %v1031, %v1028
        %v1063 = vpack.c.bf16 %v1039, %v1036
        %v1064 = vpack.c.bf16 %v1047, %v1044
        %v1065 = vpack.c.bf16 %v1055, %v1052
        %v1066 = vld [vmem:[%s2] sm:$0x1]
        %v1067 = vld [vmem:[%s2 + $0x1] sm:$0x1]
        %v1068 = vld [vmem:[%s2 + $0x2] sm:$0x1]
        %v1069 = vld [vmem:[%s2 + $0x3] sm:$0x1]
        %v1074 = vlaneseq
        %v1075 = vshrl.u32 %v1074, 7
        %v1076 = vsub.s32 0, %v1075
        %v1077 = vrot.slane %v1066, %v1076
        %v1078 = vlaneseq
        %v1079 = vshrl.u32 %v1078, 7
        %v1080 = vsub.s32 0, %v1079
        %v1081 = vrot.slane %v1067, %v1080
        %v1082 = vlaneseq
        %v1083 = vshrl.u32 %v1082, 7
        %v1084 = vsub.s32 0, %v1083
        %v1085 = vrot.slane %v1068, %v1084
        %v1086 = vlaneseq
        %v1087 = vshrl.u32 %v1086, 7
        %v1088 = vsub.s32 0, %v1087
        %v1089 = vrot.slane %v1069, %v1088
        %v1094 = vmul.f32 %v996, %v1077
        %v1095 = vmul.f32 %v999, %v1077
        %v1096 = vmul.f32 %v1004, %v1077
        %v1097 = vmul.f32 %v1007, %v1077
        %v1098 = vmul.f32 %v1012, %v1077
        %v1099 = vmul.f32 %v1015, %v1077
        %v1100 = vmul.f32 %v1020, %v1077
        %v1101 = vmul.f32 %v1023, %v1077
        %v1102 = vmul.f32 %v996, %v1081
        %v1103 = vmul.f32 %v999, %v1081
        %v1104 = vmul.f32 %v1004, %v1081
        %v1105 = vmul.f32 %v1007, %v1081
        %v1106 = vmul.f32 %v1012, %v1081
        %v1107 = vmul.f32 %v1015, %v1081
        %v1108 = vmul.f32 %v1020, %v1081
        %v1109 = vmul.f32 %v1023, %v1081
        %v1110 = vmul.f32 %v996, %v1085
        %v1111 = vmul.f32 %v999, %v1085
        %v1112 = vmul.f32 %v1004, %v1085
        %v1113 = vmul.f32 %v1007, %v1085
        %v1114 = vmul.f32 %v1012, %v1085
        %v1115 = vmul.f32 %v1015, %v1085
        %v1116 = vmul.f32 %v1020, %v1085
        %v1117 = vmul.f32 %v1023, %v1085
        %v1118 = vmul.f32 %v996, %v1089
        %v1119 = vmul.f32 %v999, %v1089
        %v1120 = vmul.f32 %v1004, %v1089
        %v1121 = vmul.f32 %v1007, %v1089
        %v1122 = vmul.f32 %v1012, %v1089
        %v1123 = vmul.f32 %v1015, %v1089
        %v1124 = vmul.f32 %v1020, %v1089
        %v1125 = vmul.f32 %v1023, %v1089
        %v1126 = vmul.f32 %v1028, %v1077
        %v1127 = vmul.f32 %v1031, %v1077
        %v1128 = vmul.f32 %v1036, %v1077
        %v1129 = vmul.f32 %v1039, %v1077
        %v1130 = vmul.f32 %v1044, %v1077
        %v1131 = vmul.f32 %v1047, %v1077
        %v1132 = vmul.f32 %v1052, %v1077
        %v1133 = vmul.f32 %v1055, %v1077
        %v1134 = vmul.f32 %v1028, %v1081
        %v1135 = vmul.f32 %v1031, %v1081
        %v1136 = vmul.f32 %v1036, %v1081
        %v1137 = vmul.f32 %v1039, %v1081
        %v1138 = vmul.f32 %v1044, %v1081
        %v1139 = vmul.f32 %v1047, %v1081
        %v1140 = vmul.f32 %v1052, %v1081
        %v1141 = vmul.f32 %v1055, %v1081
        %v1142 = vmul.f32 %v1028, %v1085
        %v1143 = vmul.f32 %v1031, %v1085
        %v1144 = vmul.f32 %v1036, %v1085
        %v1145 = vmul.f32 %v1039, %v1085
        %v1146 = vmul.f32 %v1044, %v1085
        %v1147 = vmul.f32 %v1047, %v1085
        %v1148 = vmul.f32 %v1052, %v1085
        %v1149 = vmul.f32 %v1055, %v1085
        %v1150 = vmul.f32 %v1028, %v1089
        %v1151 = vmul.f32 %v1031, %v1089
        %v1152 = vmul.f32 %v1036, %v1089
        %v1153 = vmul.f32 %v1039, %v1089
        %v1154 = vmul.f32 %v1044, %v1089
        %v1155 = vmul.f32 %v1047, %v1089
        %v1156 = vmul.f32 %v1052, %v1089
        %v1157 = vmul.f32 %v1055, %v1089
        %1174 = vrot.lane.b32.xlu0 %v996, 96
        %v1175 = vpop.permute.xlu0 %1174
        %1176 = vrot.lane.b32.xlu0 %v999, 96
        %v1177 = vpop.permute.xlu0 %1176
        %1178 = vrot.lane.b32.xlu0 %v1004, 96
        %v1179 = vpop.permute.xlu0 %1178
        %1180 = vrot.lane.b32.xlu0 %v1007, 96
        %v1181 = vpop.permute.xlu0 %1180
        %1182 = vrot.lane.b32.xlu0 %v1012, 96
        %v1183 = vpop.permute.xlu0 %1182
        %1184 = vrot.lane.b32.xlu0 %v1015, 96
        %v1185 = vpop.permute.xlu0 %1184
        %1186 = vrot.lane.b32.xlu0 %v1020, 96
        %v1187 = vpop.permute.xlu0 %1186
        %1188 = vrot.lane.b32.xlu0 %v1023, 96
        %v1189 = vpop.permute.xlu0 %1188
        %1190 = vrot.lane.b32.xlu0 %v1028, 96
        %v1191 = vpop.permute.xlu0 %1190
        %1192 = vrot.lane.b32.xlu0 %v1031, 96
        %v1193 = vpop.permute.xlu0 %1192
        %1194 = vrot.lane.b32.xlu0 %v1036, 96
        %v1195 = vpop.permute.xlu0 %1194
        %1196 = vrot.lane.b32.xlu0 %v1039, 96
        %v1197 = vpop.permute.xlu0 %1196
        %1198 = vrot.lane.b32.xlu0 %v1044, 96
        %v1199 = vpop.permute.xlu0 %1198
        %1200 = vrot.lane.b32.xlu0 %v1047, 96
        %v1201 = vpop.permute.xlu0 %1200
        %1202 = vrot.lane.b32.xlu0 %v1052, 96
        %v1203 = vpop.permute.xlu0 %1202
        %1204 = vrot.lane.b32.xlu0 %v1055, 96
        %v1205 = vpop.permute.xlu0 %1204
        %1222 = vxpose.xlu0.b32.start [1/16] %v1175, 128
        %1223 = vxpose.xlu0.b32.cont [2/16] %v1177, 128
        %1224 = vxpose.xlu0.b32.cont [3/16] %v1179, 128
        %1225 = vxpose.xlu0.b32.cont [4/16] %v1181, 128
        %1226 = vxpose.xlu0.b32.cont [5/16] %v1183, 128
        %1227 = vxpose.xlu0.b32.cont [6/16] %v1185, 128
        %1228 = vxpose.xlu0.b32.cont [7/16] %v1187, 128
        %1229 = vxpose.xlu0.b32.cont [8/16] %v1189, 128
        %1230 = vxpose.xlu0.b32.cont [9/16] 0.0, 128
        %1231 = vxpose.xlu0.b32.cont [10/16] 0.0, 128
        %1232 = vxpose.xlu0.b32.cont [11/16] 0.0, 128
        %1233 = vxpose.xlu0.b32.cont [12/16] 0.0, 128
        %1234 = vxpose.xlu0.b32.cont [13/16] 0.0, 128
        %1235 = vxpose.xlu0.b32.cont [14/16] 0.0, 128
        %1236 = vxpose.xlu0.b32.cont [15/16] 0.0, 128
        %1237 = vxpose.xlu0.b32.end [16/16] 0.0, 128
        %v1238 = vpop.trf.xlu0
        %v1239 = vpop.trf.xlu0
        %v1240 = vpop.trf.xlu0
        %v1241 = vpop.trf.xlu0
        %v1242 = vpop.trf.xlu0
        %v1243 = vpop.trf.xlu0
        %v1244 = vpop.trf.xlu0
        %v1245 = vpop.trf.xlu0
        %v1246 = vpop.trf.xlu0
        %v1247 = vpop.trf.xlu0
        %v1248 = vpop.trf.xlu0
        %v1249 = vpop.trf.xlu0
        %v1250 = vpop.trf.xlu0
        %v1251 = vpop.trf.xlu0
        %v1252 = vpop.trf.xlu0
        %v1253 = vpop.trf.xlu0
        %1254 = vxpose.xlu0.b32.start [1/16] %v1191, 128
        %1255 = vxpose.xlu0.b32.cont [2/16] %v1193, 128
        %1256 = vxpose.xlu0.b32.cont [3/16] %v1195, 128
        %1257 = vxpose.xlu0.b32.cont [4/16] %v1197, 128
        %1258 = vxpose.xlu0.b32.cont [5/16] %v1199, 128
        %1259 = vxpose.xlu0.b32.cont [6/16] %v1201, 128
        %1260 = vxpose.xlu0.b32.cont [7/16] %v1203, 128
        %1261 = vxpose.xlu0.b32.cont [8/16] %v1205, 128
        %1262 = vxpose.xlu0.b32.cont [9/16] 0.0, 128
        %1263 = vxpose.xlu0.b32.cont [10/16] 0.0, 128
        %1264 = vxpose.xlu0.b32.cont [11/16] 0.0, 128
        %1265 = vxpose.xlu0.b32.cont [12/16] 0.0, 128
        %1266 = vxpose.xlu0.b32.cont [13/16] 0.0, 128
        %1267 = vxpose.xlu0.b32.cont [14/16] 0.0, 128
        %1268 = vxpose.xlu0.b32.cont [15/16] 0.0, 128
        %1269 = vxpose.xlu0.b32.end [16/16] 0.0, 128
        %v1270 = vpop.trf.xlu0
        %v1271 = vpop.trf.xlu0
        %v1272 = vpop.trf.xlu0
        %v1273 = vpop.trf.xlu0
        %v1274 = vpop.trf.xlu0
        %v1275 = vpop.trf.xlu0
        %v1276 = vpop.trf.xlu0
        %v1277 = vpop.trf.xlu0
        %v1278 = vpop.trf.xlu0
        %v1279 = vpop.trf.xlu0
        %v1280 = vpop.trf.xlu0
        %v1281 = vpop.trf.xlu0
        %v1282 = vpop.trf.xlu0
        %v1283 = vpop.trf.xlu0
        %v1284 = vpop.trf.xlu0
        %v1285 = vpop.trf.xlu0
        %v1286 = vpack.c.bf16 %v1095, %v1094
        %v1287 = vpack.c.bf16 %v1097, %v1096
        %v1288 = vpack.c.bf16 %v1099, %v1098
        %v1289 = vpack.c.bf16 %v1101, %v1100
        %v1290 = vpack.c.bf16 %v1103, %v1102
        %v1291 = vpack.c.bf16 %v1105, %v1104
        %v1292 = vpack.c.bf16 %v1107, %v1106
        %v1293 = vpack.c.bf16 %v1109, %v1108
        %v1294 = vpack.c.bf16 %v1111, %v1110
        %v1295 = vpack.c.bf16 %v1113, %v1112
        %v1296 = vpack.c.bf16 %v1115, %v1114
        %v1297 = vpack.c.bf16 %v1117, %v1116
        %v1298 = vpack.c.bf16 %v1119, %v1118
        %v1299 = vpack.c.bf16 %v1121, %v1120
        %v1300 = vpack.c.bf16 %v1123, %v1122
        %v1301 = vpack.c.bf16 %v1125, %v1124
        %v1302 = vpack.c.bf16 %v1127, %v1126
        %v1303 = vpack.c.bf16 %v1129, %v1128
        %v1304 = vpack.c.bf16 %v1131, %v1130
        %v1305 = vpack.c.bf16 %v1133, %v1132
        %v1306 = vpack.c.bf16 %v1135, %v1134
        %v1307 = vpack.c.bf16 %v1137, %v1136
        %v1308 = vpack.c.bf16 %v1139, %v1138
        %v1309 = vpack.c.bf16 %v1141, %v1140
        %v1310 = vpack.c.bf16 %v1143, %v1142
        %v1311 = vpack.c.bf16 %v1145, %v1144
        %v1312 = vpack.c.bf16 %v1147, %v1146
        %v1313 = vpack.c.bf16 %v1149, %v1148
        %v1314 = vpack.c.bf16 %v1151, %v1150
        %v1315 = vpack.c.bf16 %v1153, %v1152
        %v1316 = vpack.c.bf16 %v1155, %v1154
        %v1317 = vpack.c.bf16 %v1157, %v1156
        %v1318 = vpack.c.bf16 %v1239, %v1238
        %v1319 = vpack.c.bf16 %v1241, %v1240
        %v1320 = vpack.c.bf16 %v1271, %v1270
        %v1321 = vpack.c.bf16 %v1273, %v1272
        %v1323 = vsel %vm619, %v1286, 0
        %v1326 = vsel %vm619, %v1287, 0
        %v1329 = vsel %vm619, %v1288, 0
        %v1332 = vsel %vm619, %v1289, 0
        %v1335 = vsel %vm619, %v1290, 0
        %v1338 = vsel %vm619, %v1291, 0
        %v1341 = vsel %vm619, %v1292, 0
        %v1344 = vsel %vm619, %v1293, 0
        %v1347 = vsel %vm619, %v1294, 0
        %v1350 = vsel %vm619, %v1295, 0
        %v1353 = vsel %vm619, %v1296, 0
        %v1356 = vsel %vm619, %v1297, 0
        %v1359 = vsel %vm619, %v1298, 0
        %v1362 = vsel %vm619, %v1299, 0
        %v1365 = vsel %vm619, %v1300, 0
        %v1368 = vsel %vm619, %v1301, 0
        %1370 = vmatprep.subr.bf16.mxu0 0
        %1371 = vmatpush1.bf16.msra.mxu0 0
        %1372 = vmatprep.subr.bf16.mxu0 0
        %1373 = vmatpush1.bf16.msra.mxu0 0
        %1374 = vmatprep.subr.bf16.mxu0 0
        %1375 = vmatpush1.bf16.msra.mxu0 0
        %1376 = vmatprep.subr.bf16.mxu0 0
        %1377 = vmatpush1.bf16.msra.mxu0 0
        %1378 = vmatprep.subr.bf16.mxu0 0
        %1379 = vmatpush1.bf16.msra.mxu0 0
        %1380 = vmatprep.subr.bf16.mxu0 0
        %1381 = vmatpush1.bf16.msra.mxu0 0
        %1382 = vmatprep.subr.bf16.mxu0 0
        %1383 = vmatpush1.bf16.msra.mxu0 %v1319
        %1384 = vmatprep.subr.bf16.mxu0 0
        %1385 = vmatpush1.bf16.msra.mxu0 %v1318
        %1386 = vmatprep.subr.bf16.mxu0 0
        %1387 = vmatpush2.bf16.msra.mxu0 0
        %1388 = vmatprep.subr.bf16.mxu0 0
        %1389 = vmatpush2.bf16.msra.mxu0 0
        %1390 = vmatprep.subr.bf16.mxu0 0
        %1391 = vmatpush2.bf16.msra.mxu0 0
        %1392 = vmatprep.subr.bf16.mxu0 0
        %1393 = vmatpush2.bf16.msra.mxu0 0
        %1394 = vmatprep.subr.bf16.mxu0 0
        %1395 = vmatpush2.bf16.msra.mxu0 0
        %1396 = vmatprep.subr.bf16.mxu0 0
        %1397 = vmatpush2.bf16.msra.mxu0 0
        %1398 = vmatprep.subr.bf16.mxu0 0
        %1399 = vmatpush2.bf16.msra.mxu0 0
        %1400 = vmatprep.subr.bf16.mxu0 0
        %1401 = vmatpush2.bf16.msra.mxu0 0
        %1402 = vmatprep.mubr.bf16.mxu0 0
        %1403 = vmatmul.mubr.bf16.gmra.mxu0 %v1323
        %v1404 = vpop.f32.mrf.mxu0
        %v1405 = vadd.f32 0.0, %v1404
        %v1406 = vpop.f32.mrf.mxu0
        %v1407 = vpop.f32.mrf.mxu0
        %v1408 = vadd.f32 0.0, %v1407
        %v1409 = vpop.f32.mrf.mxu0
        %1410 = vmatprep.mubr.bf16.mxu0 0
        %1411 = vmatmul.mubr.bf16.gmra.mxu0 %v1326
        %v1412 = vpop.f32.mrf.mxu0
        %v1413 = vadd.f32 0.0, %v1412
        %v1414 = vpop.f32.mrf.mxu0
        %v1415 = vpop.f32.mrf.mxu0
        %v1416 = vadd.f32 0.0, %v1415
        %v1417 = vpop.f32.mrf.mxu0
        %1418 = vmatprep.mubr.bf16.mxu0 0
        %1419 = vmatmul.mubr.bf16.gmra.mxu0 %v1329
        %v1420 = vpop.f32.mrf.mxu0
        %v1421 = vadd.f32 0.0, %v1420
        %v1422 = vpop.f32.mrf.mxu0
        %v1423 = vpop.f32.mrf.mxu0
        %v1424 = vadd.f32 0.0, %v1423
        %v1425 = vpop.f32.mrf.mxu0
        %1426 = vmatprep.mubr.bf16.mxu0 0
        %1427 = vmatmul.mubr.bf16.gmra.mxu0 %v1332
        %v1428 = vpop.f32.mrf.mxu0
        %v1429 = vadd.f32 0.0, %v1428
        %v1430 = vpop.f32.mrf.mxu0
        %v1431 = vpop.f32.mrf.mxu0
        %v1432 = vadd.f32 0.0, %v1431
        %v1433 = vpop.f32.mrf.mxu0
        %1434 = vmatprep.mubr.bf16.mxu0 0
        %1435 = vmatmul.mubr.bf16.gmra.mxu0 %v1335
        %v1436 = vpop.f32.mrf.mxu0
        %v1437 = vadd.f32 0.0, %v1436
        %v1438 = vpop.f32.mrf.mxu0
        %v1439 = vpop.f32.mrf.mxu0
        %v1440 = vadd.f32 0.0, %v1439
        %v1441 = vpop.f32.mrf.mxu0
        %1442 = vmatprep.mubr.bf16.mxu0 0
        %1443 = vmatmul.mubr.bf16.gmra.mxu0 %v1338
        %v1444 = vpop.f32.mrf.mxu0
        %v1445 = vadd.f32 0.0, %v1444
        %v1446 = vpop.f32.mrf.mxu0
        %v1447 = vpop.f32.mrf.mxu0
        %v1448 = vadd.f32 0.0, %v1447
        %v1449 = vpop.f32.mrf.mxu0
        %1450 = vmatprep.mubr.bf16.mxu0 0
        %1451 = vmatmul.mubr.bf16.gmra.mxu0 %v1341
        %v1452 = vpop.f32.mrf.mxu0
        %v1453 = vadd.f32 0.0, %v1452
        %v1454 = vpop.f32.mrf.mxu0
        %v1455 = vpop.f32.mrf.mxu0
        %v1456 = vadd.f32 0.0, %v1455
        %v1457 = vpop.f32.mrf.mxu0
        %1458 = vmatprep.mubr.bf16.mxu0 0
        %1459 = vmatmul.mubr.bf16.gmra.mxu0 %v1344
        %v1460 = vpop.f32.mrf.mxu0
        %v1461 = vadd.f32 0.0, %v1460
        %v1462 = vpop.f32.mrf.mxu0
        %v1463 = vpop.f32.mrf.mxu0
        %v1464 = vadd.f32 0.0, %v1463
        %v1465 = vpop.f32.mrf.mxu0
        %1466 = vmatprep.mubr.bf16.mxu0 0
        %1467 = vmatmul.mubr.bf16.gmra.mxu0 %v1347
        %v1468 = vpop.f32.mrf.mxu0
        %v1469 = vadd.f32 0.0, %v1468
        %v1470 = vpop.f32.mrf.mxu0
        %v1471 = vpop.f32.mrf.mxu0
        %v1472 = vadd.f32 0.0, %v1471
        %v1473 = vpop.f32.mrf.mxu0
        %1474 = vmatprep.mubr.bf16.mxu0 0
        %1475 = vmatmul.mubr.bf16.gmra.mxu0 %v1350
        %v1476 = vpop.f32.mrf.mxu0
        %v1477 = vadd.f32 0.0, %v1476
        %v1478 = vpop.f32.mrf.mxu0
        %v1479 = vpop.f32.mrf.mxu0
        %v1480 = vadd.f32 0.0, %v1479
        %v1481 = vpop.f32.mrf.mxu0
        %1482 = vmatprep.mubr.bf16.mxu0 0
        %1483 = vmatmul.mubr.bf16.gmra.mxu0 %v1353
        %v1484 = vpop.f32.mrf.mxu0
        %v1485 = vadd.f32 0.0, %v1484
        %v1486 = vpop.f32.mrf.mxu0
        %v1487 = vpop.f32.mrf.mxu0
        %v1488 = vadd.f32 0.0, %v1487
        %v1489 = vpop.f32.mrf.mxu0
        %1490 = vmatprep.mubr.bf16.mxu0 0
        %1491 = vmatmul.mubr.bf16.gmra.mxu0 %v1356
        %v1492 = vpop.f32.mrf.mxu0
        %v1493 = vadd.f32 0.0, %v1492
        %v1494 = vpop.f32.mrf.mxu0
        %v1495 = vpop.f32.mrf.mxu0
        %v1496 = vadd.f32 0.0, %v1495
        %v1497 = vpop.f32.mrf.mxu0
        %1498 = vmatprep.mubr.bf16.mxu0 0
        %1499 = vmatmul.mubr.bf16.gmra.mxu0 %v1359
        %v1500 = vpop.f32.mrf.mxu0
        %v1501 = vadd.f32 0.0, %v1500
        %v1502 = vpop.f32.mrf.mxu0
        %v1503 = vpop.f32.mrf.mxu0
        %v1504 = vadd.f32 0.0, %v1503
        %v1505 = vpop.f32.mrf.mxu0
        %1506 = vmatprep.mubr.bf16.mxu0 0
        %1507 = vmatmul.mubr.bf16.gmra.mxu0 %v1362
        %v1508 = vpop.f32.mrf.mxu0
        %v1509 = vadd.f32 0.0, %v1508
        %v1510 = vpop.f32.mrf.mxu0
        %v1511 = vpop.f32.mrf.mxu0
        %v1512 = vadd.f32 0.0, %v1511
        %v1513 = vpop.f32.mrf.mxu0
        %1514 = vmatprep.mubr.bf16.mxu0 0
        %1515 = vmatmul.mubr.bf16.gmra.mxu0 %v1365
        %v1516 = vpop.f32.mrf.mxu0
        %v1517 = vadd.f32 0.0, %v1516
        %v1518 = vpop.f32.mrf.mxu0
        %v1519 = vpop.f32.mrf.mxu0
        %v1520 = vadd.f32 0.0, %v1519
        %v1521 = vpop.f32.mrf.mxu0
        %1522 = vmatprep.mubr.bf16.mxu0 0
        %1523 = vmatmul.mubr.bf16.gmra.mxu0 %v1368
        %v1524 = vpop.f32.mrf.mxu0
        %v1525 = vadd.f32 0.0, %v1524
        %v1526 = vpop.f32.mrf.mxu0
        %v1527 = vpop.f32.mrf.mxu0
        %v1528 = vadd.f32 0.0, %v1527
        %v1529 = vpop.f32.mrf.mxu0
        %1530 = vdwg.mxu0
        %v1532 = vsel %vm619, %v1302, 0
        %v1535 = vsel %vm619, %v1303, 0
        %v1538 = vsel %vm619, %v1304, 0
        %v1541 = vsel %vm619, %v1305, 0
        %v1544 = vsel %vm619, %v1306, 0
        %v1547 = vsel %vm619, %v1307, 0
        %v1550 = vsel %vm619, %v1308, 0
        %v1553 = vsel %vm619, %v1309, 0
        %v1556 = vsel %vm619, %v1310, 0
        %v1559 = vsel %vm619, %v1311, 0
        %v1562 = vsel %vm619, %v1312, 0
        %v1565 = vsel %vm619, %v1313, 0
        %v1568 = vsel %vm619, %v1314, 0
        %v1571 = vsel %vm619, %v1315, 0
        %v1574 = vsel %vm619, %v1316, 0
        %v1577 = vsel %vm619, %v1317, 0
        %1579 = vmatprep.subr.bf16.mxu0 0
        %1580 = vmatpush1.bf16.msra.mxu0 0
        %1581 = vmatprep.subr.bf16.mxu0 0
        %1582 = vmatpush1.bf16.msra.mxu0 0
        %1583 = vmatprep.subr.bf16.mxu0 0
        %1584 = vmatpush1.bf16.msra.mxu0 0
        %1585 = vmatprep.subr.bf16.mxu0 0
        %1586 = vmatpush1.bf16.msra.mxu0 0
        %1587 = vmatprep.subr.bf16.mxu0 0
        %1588 = vmatpush1.bf16.msra.mxu0 0
        %1589 = vmatprep.subr.bf16.mxu0 0
        %1590 = vmatpush1.bf16.msra.mxu0 0
        %1591 = vmatprep.subr.bf16.mxu0 0
        %1592 = vmatpush1.bf16.msra.mxu0 %v1321
        %1593 = vmatprep.subr.bf16.mxu0 0
        %1594 = vmatpush1.bf16.msra.mxu0 %v1320
        %1595 = vmatprep.subr.bf16.mxu0 0
        %1596 = vmatpush2.bf16.msra.mxu0 0
        %1597 = vmatprep.subr.bf16.mxu0 0
        %1598 = vmatpush2.bf16.msra.mxu0 0
        %1599 = vmatprep.subr.bf16.mxu0 0
        %1600 = vmatpush2.bf16.msra.mxu0 0
        %1601 = vmatprep.subr.bf16.mxu0 0
        %1602 = vmatpush2.bf16.msra.mxu0 0
        %1603 = vmatprep.subr.bf16.mxu0 0
        %1604 = vmatpush2.bf16.msra.mxu0 0
        %1605 = vmatprep.subr.bf16.mxu0 0
        %1606 = vmatpush2.bf16.msra.mxu0 0
        %1607 = vmatprep.subr.bf16.mxu0 0
        %1608 = vmatpush2.bf16.msra.mxu0 0
        %1609 = vmatprep.subr.bf16.mxu0 0
        %1610 = vmatpush2.bf16.msra.mxu0 0
        %1611 = vmatprep.mubr.bf16.mxu0 0
        %1612 = vmatmul.mubr.bf16.gmra.mxu0 %v1532
        %v1613 = vpop.f32.mrf.mxu0
        %v1614 = vadd.f32 0.0, %v1613
        %v1615 = vpop.f32.mrf.mxu0
        %v1616 = vpop.f32.mrf.mxu0
        %v1617 = vadd.f32 0.0, %v1616
        %v1618 = vpop.f32.mrf.mxu0
        %1619 = vmatprep.mubr.bf16.mxu0 0
        %1620 = vmatmul.mubr.bf16.gmra.mxu0 %v1535
        %v1621 = vpop.f32.mrf.mxu0
        %v1622 = vadd.f32 0.0, %v1621
        %v1623 = vpop.f32.mrf.mxu0
        %v1624 = vpop.f32.mrf.mxu0
        %v1625 = vadd.f32 0.0, %v1624
        %v1626 = vpop.f32.mrf.mxu0
        %1627 = vmatprep.mubr.bf16.mxu0 0
        %1628 = vmatmul.mubr.bf16.gmra.mxu0 %v1538
        %v1629 = vpop.f32.mrf.mxu0
        %v1630 = vadd.f32 0.0, %v1629
        %v1631 = vpop.f32.mrf.mxu0
        %v1632 = vpop.f32.mrf.mxu0
        %v1633 = vadd.f32 0.0, %v1632
        %v1634 = vpop.f32.mrf.mxu0
        %1635 = vmatprep.mubr.bf16.mxu0 0
        %1636 = vmatmul.mubr.bf16.gmra.mxu0 %v1541
        %v1637 = vpop.f32.mrf.mxu0
        %v1638 = vadd.f32 0.0, %v1637
        %v1639 = vpop.f32.mrf.mxu0
        %v1640 = vpop.f32.mrf.mxu0
        %v1641 = vadd.f32 0.0, %v1640
        %v1642 = vpop.f32.mrf.mxu0
        %1643 = vmatprep.mubr.bf16.mxu0 0
        %1644 = vmatmul.mubr.bf16.gmra.mxu0 %v1544
        %v1645 = vpop.f32.mrf.mxu0
        %v1646 = vadd.f32 0.0, %v1645
        %v1647 = vpop.f32.mrf.mxu0
        %v1648 = vpop.f32.mrf.mxu0
        %v1649 = vadd.f32 0.0, %v1648
        %v1650 = vpop.f32.mrf.mxu0
        %1651 = vmatprep.mubr.bf16.mxu0 0
        %1652 = vmatmul.mubr.bf16.gmra.mxu0 %v1547
        %v1653 = vpop.f32.mrf.mxu0
        %v1654 = vadd.f32 0.0, %v1653
        %v1655 = vpop.f32.mrf.mxu0
        %v1656 = vpop.f32.mrf.mxu0
        %v1657 = vadd.f32 0.0, %v1656
        %v1658 = vpop.f32.mrf.mxu0
        %1659 = vmatprep.mubr.bf16.mxu0 0
        %1660 = vmatmul.mubr.bf16.gmra.mxu0 %v1550
        %v1661 = vpop.f32.mrf.mxu0
        %v1662 = vadd.f32 0.0, %v1661
        %v1663 = vpop.f32.mrf.mxu0
        %v1664 = vpop.f32.mrf.mxu0
        %v1665 = vadd.f32 0.0, %v1664
        %v1666 = vpop.f32.mrf.mxu0
        %1667 = vmatprep.mubr.bf16.mxu0 0
        %1668 = vmatmul.mubr.bf16.gmra.mxu0 %v1553
        %v1669 = vpop.f32.mrf.mxu0
        %v1670 = vadd.f32 0.0, %v1669
        %v1671 = vpop.f32.mrf.mxu0
        %v1672 = vpop.f32.mrf.mxu0
        %v1673 = vadd.f32 0.0, %v1672
        %v1674 = vpop.f32.mrf.mxu0
        %1675 = vmatprep.mubr.bf16.mxu0 0
        %1676 = vmatmul.mubr.bf16.gmra.mxu0 %v1556
        %v1677 = vpop.f32.mrf.mxu0
        %v1678 = vadd.f32 0.0, %v1677
        %v1679 = vpop.f32.mrf.mxu0
        %v1680 = vpop.f32.mrf.mxu0
        %v1681 = vadd.f32 0.0, %v1680
        %v1682 = vpop.f32.mrf.mxu0
        %1683 = vmatprep.mubr.bf16.mxu0 0
        %1684 = vmatmul.mubr.bf16.gmra.mxu0 %v1559
        %v1685 = vpop.f32.mrf.mxu0
        %v1686 = vadd.f32 0.0, %v1685
        %v1687 = vpop.f32.mrf.mxu0
        %v1688 = vpop.f32.mrf.mxu0
        %v1689 = vadd.f32 0.0, %v1688
        %v1690 = vpop.f32.mrf.mxu0
        %1691 = vmatprep.mubr.bf16.mxu0 0
        %1692 = vmatmul.mubr.bf16.gmra.mxu0 %v1562
        %v1693 = vpop.f32.mrf.mxu0
        %v1694 = vadd.f32 0.0, %v1693
        %v1695 = vpop.f32.mrf.mxu0
        %v1696 = vpop.f32.mrf.mxu0
        %v1697 = vadd.f32 0.0, %v1696
        %v1698 = vpop.f32.mrf.mxu0
        %1699 = vmatprep.mubr.bf16.mxu0 0
        %1700 = vmatmul.mubr.bf16.gmra.mxu0 %v1565
        %v1701 = vpop.f32.mrf.mxu0
        %v1702 = vadd.f32 0.0, %v1701
        %v1703 = vpop.f32.mrf.mxu0
        %v1704 = vpop.f32.mrf.mxu0
        %v1705 = vadd.f32 0.0, %v1704
        %v1706 = vpop.f32.mrf.mxu0
        %1707 = vmatprep.mubr.bf16.mxu0 0
        %1708 = vmatmul.mubr.bf16.gmra.mxu0 %v1568
        %v1709 = vpop.f32.mrf.mxu0
        %v1710 = vadd.f32 0.0, %v1709
        %v1711 = vpop.f32.mrf.mxu0
        %v1712 = vpop.f32.mrf.mxu0
        %v1713 = vadd.f32 0.0, %v1712
        %v1714 = vpop.f32.mrf.mxu0
        %1715 = vmatprep.mubr.bf16.mxu0 0
        %1716 = vmatmul.mubr.bf16.gmra.mxu0 %v1571
        %v1717 = vpop.f32.mrf.mxu0
        %v1718 = vadd.f32 0.0, %v1717
        %v1719 = vpop.f32.mrf.mxu0
        %v1720 = vpop.f32.mrf.mxu0
        %v1721 = vadd.f32 0.0, %v1720
        %v1722 = vpop.f32.mrf.mxu0
        %1723 = vmatprep.mubr.bf16.mxu0 0
        %1724 = vmatmul.mubr.bf16.gmra.mxu0 %v1574
        %v1725 = vpop.f32.mrf.mxu0
        %v1726 = vadd.f32 0.0, %v1725
        %v1727 = vpop.f32.mrf.mxu0
        %v1728 = vpop.f32.mrf.mxu0
        %v1729 = vadd.f32 0.0, %v1728
        %v1730 = vpop.f32.mrf.mxu0
        %1731 = vmatprep.mubr.bf16.mxu0 0
        %1732 = vmatmul.mubr.bf16.gmra.mxu0 %v1577
        %v1733 = vpop.f32.mrf.mxu0
        %v1734 = vadd.f32 0.0, %v1733
        %v1735 = vpop.f32.mrf.mxu0
        %v1736 = vpop.f32.mrf.mxu0
        %v1737 = vadd.f32 0.0, %v1736
        %v1738 = vpop.f32.mrf.mxu0
        %1739 = vdwg.mxu0
        %v1740 = vld [vmem:[%s1] sm:$0xf]
        %v1741 = vld [vmem:[%s1 + $0x4] sm:$0xf]
        %v1742 = vld [vmem:[%s1 + $0x8] sm:$0xf]
        %v1743 = vld [vmem:[%s1 + $0xc] sm:$0xf]
        %v1744 = vld [vmem:[%s1 + $0x10] sm:$0xf]
        %v1745 = vld [vmem:[%s1 + $0x14] sm:$0xf]
        %v1746 = vld [vmem:[%s1 + $0x18] sm:$0xf]
        %v1747 = vld [vmem:[%s1 + $0x1c] sm:$0xf]
        %v1748 = vld [vmem:[%s1 + $0x20] sm:$0xf]
        %v1749 = vld [vmem:[%s1 + $0x24] sm:$0xf]
        %v1750 = vld [vmem:[%s1 + $0x28] sm:$0xf]
        %v1751 = vld [vmem:[%s1 + $0x2c] sm:$0xf]
        %v1752 = vld [vmem:[%s1 + $0x30] sm:$0xf]
        %v1753 = vld [vmem:[%s1 + $0x34] sm:$0xf]
        %v1754 = vld [vmem:[%s1 + $0x38] sm:$0xf]
        %v1755 = vld [vmem:[%s1 + $0x3c] sm:$0xf]
        %v1756 = vld [vmem:[%s1 + $0x40] sm:$0xf]
        %v1757 = vld [vmem:[%s1 + $0x44] sm:$0xf]
        %v1758 = vld [vmem:[%s1 + $0x48] sm:$0xf]
        %v1759 = vld [vmem:[%s1 + $0x4c] sm:$0xf]
        %v1760 = vld [vmem:[%s1 + $0x50] sm:$0xf]
        %v1761 = vld [vmem:[%s1 + $0x54] sm:$0xf]
        %v1762 = vld [vmem:[%s1 + $0x58] sm:$0xf]
        %v1763 = vld [vmem:[%s1 + $0x5c] sm:$0xf]
        %v1764 = vld [vmem:[%s1 + $0x60] sm:$0xf]
        %v1765 = vld [vmem:[%s1 + $0x64] sm:$0xf]
        %v1766 = vld [vmem:[%s1 + $0x68] sm:$0xf]
        %v1767 = vld [vmem:[%s1 + $0x6c] sm:$0xf]
        %v1768 = vld [vmem:[%s1 + $0x70] sm:$0xf]
        %v1769 = vld [vmem:[%s1 + $0x74] sm:$0xf]
        %v1770 = vld [vmem:[%s1 + $0x78] sm:$0xf]
        %v1771 = vld [vmem:[%s1 + $0x7c] sm:$0xf]
        %v1772 = vunpack.c.l.bf16 %v1740
        %v1773 = vunpack.c.l.bf16 %v1741
        %v1774 = vunpack.c.l.bf16 %v1742
        %v1775 = vunpack.c.l.bf16 %v1743
        %v1776 = vunpack.c.l.bf16 %v1744
        %v1777 = vunpack.c.l.bf16 %v1745
        %v1778 = vunpack.c.l.bf16 %v1746
        %v1779 = vunpack.c.l.bf16 %v1747
        %v1780 = vunpack.c.l.bf16 %v1748
        %v1781 = vunpack.c.l.bf16 %v1749
        %v1782 = vunpack.c.l.bf16 %v1750
        %v1783 = vunpack.c.l.bf16 %v1751
        %v1784 = vunpack.c.l.bf16 %v1752
        %v1785 = vunpack.c.l.bf16 %v1753
        %v1786 = vunpack.c.l.bf16 %v1754
        %v1787 = vunpack.c.l.bf16 %v1755
        %v1788 = vunpack.c.l.bf16 %v1756
        %v1789 = vunpack.c.l.bf16 %v1757
        %v1790 = vunpack.c.l.bf16 %v1758
        %v1791 = vunpack.c.l.bf16 %v1759
        %v1792 = vunpack.c.l.bf16 %v1760
        %v1793 = vunpack.c.l.bf16 %v1761
        %v1794 = vunpack.c.l.bf16 %v1762
        %v1795 = vunpack.c.l.bf16 %v1763
        %v1796 = vunpack.c.l.bf16 %v1764
        %v1797 = vunpack.c.l.bf16 %v1765
        %v1798 = vunpack.c.l.bf16 %v1766
        %v1799 = vunpack.c.l.bf16 %v1767
        %v1800 = vunpack.c.l.bf16 %v1768
        %v1801 = vunpack.c.l.bf16 %v1769
        %v1802 = vunpack.c.l.bf16 %v1770
        %v1803 = vunpack.c.l.bf16 %v1771
        %v1804 = vadd.f32 %v1405, %v1772
        %v1805 = vadd.f32 %v1408, %v1773
        %v1806 = vadd.f32 %v1413, %v1774
        %v1807 = vadd.f32 %v1416, %v1775
        %v1808 = vadd.f32 %v1421, %v1776
        %v1809 = vadd.f32 %v1424, %v1777
        %v1810 = vadd.f32 %v1429, %v1778
        %v1811 = vadd.f32 %v1432, %v1779
        %v1812 = vadd.f32 %v1437, %v1780
        %v1813 = vadd.f32 %v1440, %v1781
        %v1814 = vadd.f32 %v1445, %v1782
        %v1815 = vadd.f32 %v1448, %v1783
        %v1816 = vadd.f32 %v1453, %v1784
        %v1817 = vadd.f32 %v1456, %v1785
        %v1818 = vadd.f32 %v1461, %v1786
        %v1819 = vadd.f32 %v1464, %v1787
        %v1820 = vadd.f32 %v1469, %v1788
        %v1821 = vadd.f32 %v1472, %v1789
        %v1822 = vadd.f32 %v1477, %v1790
        %v1823 = vadd.f32 %v1480, %v1791
        %v1824 = vadd.f32 %v1485, %v1792
        %v1825 = vadd.f32 %v1488, %v1793
        %v1826 = vadd.f32 %v1493, %v1794
        %v1827 = vadd.f32 %v1496, %v1795
        %v1828 = vadd.f32 %v1501, %v1796
        %v1829 = vadd.f32 %v1504, %v1797
        %v1830 = vadd.f32 %v1509, %v1798
        %v1831 = vadd.f32 %v1512, %v1799
        %v1832 = vadd.f32 %v1517, %v1800
        %v1833 = vadd.f32 %v1520, %v1801
        %v1834 = vadd.f32 %v1525, %v1802
        %v1835 = vadd.f32 %v1528, %v1803
        %v1836 = vadd.f32 %v1614, %v1772
        %v1837 = vadd.f32 %v1617, %v1773
        %v1838 = vadd.f32 %v1622, %v1774
        %v1839 = vadd.f32 %v1625, %v1775
        %v1840 = vadd.f32 %v1630, %v1776
        %v1841 = vadd.f32 %v1633, %v1777
        %v1842 = vadd.f32 %v1638, %v1778
        %v1843 = vadd.f32 %v1641, %v1779
        %v1844 = vadd.f32 %v1646, %v1780
        %v1845 = vadd.f32 %v1649, %v1781
        %v1846 = vadd.f32 %v1654, %v1782
        %v1847 = vadd.f32 %v1657, %v1783
        %v1848 = vadd.f32 %v1662, %v1784
        %v1849 = vadd.f32 %v1665, %v1785
        %v1850 = vadd.f32 %v1670, %v1786
        %v1851 = vadd.f32 %v1673, %v1787
        %v1852 = vadd.f32 %v1678, %v1788
        %v1853 = vadd.f32 %v1681, %v1789
        %v1854 = vadd.f32 %v1686, %v1790
        %v1855 = vadd.f32 %v1689, %v1791
        %v1856 = vadd.f32 %v1694, %v1792
        %v1857 = vadd.f32 %v1697, %v1793
        %v1858 = vadd.f32 %v1702, %v1794
        %v1859 = vadd.f32 %v1705, %v1795
        %v1860 = vadd.f32 %v1710, %v1796
        %v1861 = vadd.f32 %v1713, %v1797
        %v1862 = vadd.f32 %v1718, %v1798
        %v1863 = vadd.f32 %v1721, %v1799
        %v1864 = vadd.f32 %v1726, %v1800
        %v1865 = vadd.f32 %v1729, %v1801
        %v1866 = vadd.f32 %v1734, %v1802
        %v1867 = vadd.f32 %v1737, %v1803
        %vm1868 = vcmask 523264
        %v1869 = vsel %vm1868, %v1804, -inf
        %1870 = vmax.xlane.f32.xlu0 %v1869
        %v1871 = vpop.xlane.xlu0 %1870
        %v1872 = vsel %vm1868, %v1805, -inf
        %1873 = vmax.xlane.f32.xlu0 %v1872
        %v1874 = vpop.xlane.xlu0 %1873
        %v1875 = vsel %vm1868, %v1806, -inf
        %1876 = vmax.xlane.f32.xlu0 %v1875
        %v1877 = vpop.xlane.xlu0 %1876
        %v1878 = vsel %vm1868, %v1807, -inf
        %1879 = vmax.xlane.f32.xlu0 %v1878
        %v1880 = vpop.xlane.xlu0 %1879
        %v1881 = vsel %vm1868, %v1808, -inf
        %1882 = vmax.xlane.f32.xlu0 %v1881
        %v1883 = vpop.xlane.xlu0 %1882
        %v1884 = vsel %vm1868, %v1809, -inf
        %1885 = vmax.xlane.f32.xlu0 %v1884
        %v1886 = vpop.xlane.xlu0 %1885
        %v1887 = vsel %vm1868, %v1810, -inf
        %1888 = vmax.xlane.f32.xlu0 %v1887
        %v1889 = vpop.xlane.xlu0 %1888
        %v1890 = vsel %vm1868, %v1811, -inf
        %1891 = vmax.xlane.f32.xlu0 %v1890
        %v1892 = vpop.xlane.xlu0 %1891
        %v1893 = vsel %vm1868, %v1812, -inf
        %1894 = vmax.xlane.f32.xlu0 %v1893
        %v1895 = vpop.xlane.xlu0 %1894
        %v1896 = vsel %vm1868, %v1813, -inf
        %1897 = vmax.xlane.f32.xlu0 %v1896
        %v1898 = vpop.xlane.xlu0 %1897
        %v1899 = vsel %vm1868, %v1814, -inf
        %1900 = vmax.xlane.f32.xlu0 %v1899
        %v1901 = vpop.xlane.xlu0 %1900
        %v1902 = vsel %vm1868, %v1815, -inf
        %1903 = vmax.xlane.f32.xlu0 %v1902
        %v1904 = vpop.xlane.xlu0 %1903
        %v1905 = vsel %vm1868, %v1816, -inf
        %1906 = vmax.xlane.f32.xlu0 %v1905
        %v1907 = vpop.xlane.xlu0 %1906
        %v1908 = vsel %vm1868, %v1817, -inf
        %1909 = vmax.xlane.f32.xlu0 %v1908
        %v1910 = vpop.xlane.xlu0 %1909
        %v1911 = vsel %vm1868, %v1818, -inf
        %1912 = vmax.xlane.f32.xlu0 %v1911
        %v1913 = vpop.xlane.xlu0 %1912
        %v1914 = vsel %vm1868, %v1819, -inf
        %1915 = vmax.xlane.f32.xlu0 %v1914
        %v1916 = vpop.xlane.xlu0 %1915
        %v1917 = vsel %vm1868, %v1820, -inf
        %1918 = vmax.xlane.f32.xlu0 %v1917
        %v1919 = vpop.xlane.xlu0 %1918
        %v1920 = vsel %vm1868, %v1821, -inf
        %1921 = vmax.xlane.f32.xlu0 %v1920
        %v1922 = vpop.xlane.xlu0 %1921
        %v1923 = vsel %vm1868, %v1822, -inf
        %1924 = vmax.xlane.f32.xlu0 %v1923
        %v1925 = vpop.xlane.xlu0 %1924
        %v1926 = vsel %vm1868, %v1823, -inf
        %1927 = vmax.xlane.f32.xlu0 %v1926
        %v1928 = vpop.xlane.xlu0 %1927
        %v1929 = vsel %vm1868, %v1824, -inf
        %1930 = vmax.xlane.f32.xlu0 %v1929
        %v1931 = vpop.xlane.xlu0 %1930
        %v1932 = vsel %vm1868, %v1825, -inf
        %1933 = vmax.xlane.f32.xlu0 %v1932
        %v1934 = vpop.xlane.xlu0 %1933
        %v1935 = vsel %vm1868, %v1826, -inf
        %1936 = vmax.xlane.f32.xlu0 %v1935
        %v1937 = vpop.xlane.xlu0 %1936
        %v1938 = vsel %vm1868, %v1827, -inf
        %1939 = vmax.xlane.f32.xlu0 %v1938
        %v1940 = vpop.xlane.xlu0 %1939
        %v1941 = vsel %vm1868, %v1828, -inf
        %1942 = vmax.xlane.f32.xlu0 %v1941
        %v1943 = vpop.xlane.xlu0 %1942
        %v1944 = vsel %vm1868, %v1829, -inf
        %1945 = vmax.xlane.f32.xlu0 %v1944
        %v1946 = vpop.xlane.xlu0 %1945
        %v1947 = vsel %vm1868, %v1830, -inf
        %1948 = vmax.xlane.f32.xlu0 %v1947
        %v1949 = vpop.xlane.xlu0 %1948
        %v1950 = vsel %vm1868, %v1831, -inf
        %1951 = vmax.xlane.f32.xlu0 %v1950
        %v1952 = vpop.xlane.xlu0 %1951
        %v1953 = vsel %vm1868, %v1832, -inf
        %1954 = vmax.xlane.f32.xlu0 %v1953
        %v1955 = vpop.xlane.xlu0 %1954
        %v1956 = vsel %vm1868, %v1833, -inf
        %1957 = vmax.xlane.f32.xlu0 %v1956
        %v1958 = vpop.xlane.xlu0 %1957
        %v1959 = vsel %vm1868, %v1834, -inf
        %1960 = vmax.xlane.f32.xlu0 %v1959
        %v1961 = vpop.xlane.xlu0 %1960
        %v1962 = vsel %vm1868, %v1835, -inf
        %1963 = vmax.xlane.f32.xlu0 %v1962
        %v1964 = vpop.xlane.xlu0 %1963
        %v1965 = vsel %vm1868, %v1836, -inf
        %1966 = vmax.xlane.f32.xlu0 %v1965
        %v1967 = vpop.xlane.xlu0 %1966
        %v1968 = vsel %vm1868, %v1837, -inf
        %1969 = vmax.xlane.f32.xlu0 %v1968
        %v1970 = vpop.xlane.xlu0 %1969
        %v1971 = vsel %vm1868, %v1838, -inf
        %1972 = vmax.xlane.f32.xlu0 %v1971
        %v1973 = vpop.xlane.xlu0 %1972
        %v1974 = vsel %vm1868, %v1839, -inf
        %1975 = vmax.xlane.f32.xlu0 %v1974
        %v1976 = vpop.xlane.xlu0 %1975
        %v1977 = vsel %vm1868, %v1840, -inf
        %1978 = vmax.xlane.f32.xlu0 %v1977
        %v1979 = vpop.xlane.xlu0 %1978
        %v1980 = vsel %vm1868, %v1841, -inf
        %1981 = vmax.xlane.f32.xlu0 %v1980
        %v1982 = vpop.xlane.xlu0 %1981
        %v1983 = vsel %vm1868, %v1842, -inf
        %1984 = vmax.xlane.f32.xlu0 %v1983
        %v1985 = vpop.xlane.xlu0 %1984
        %v1986 = vsel %vm1868, %v1843, -inf
        %1987 = vmax.xlane.f32.xlu0 %v1986
        %v1988 = vpop.xlane.xlu0 %1987
        %v1989 = vsel %vm1868, %v1844, -inf
        %1990 = vmax.xlane.f32.xlu0 %v1989
        %v1991 = vpop.xlane.xlu0 %1990
        %v1992 = vsel %vm1868, %v1845, -inf
        %1993 = vmax.xlane.f32.xlu0 %v1992
        %v1994 = vpop.xlane.xlu0 %1993
        %v1995 = vsel %vm1868, %v1846, -inf
        %1996 = vmax.xlane.f32.xlu0 %v1995
        %v1997 = vpop.xlane.xlu0 %1996
        %v1998 = vsel %vm1868, %v1847, -inf
        %1999 = vmax.xlane.f32.xlu0 %v1998
        %v2000 = vpop.xlane.xlu0 %1999
        %v2001 = vsel %vm1868, %v1848, -inf
        %2002 = vmax.xlane.f32.xlu0 %v2001
        %v2003 = vpop.xlane.xlu0 %2002
        %v2004 = vsel %vm1868, %v1849, -inf
        %2005 = vmax.xlane.f32.xlu0 %v2004
        %v2006 = vpop.xlane.xlu0 %2005
        %v2007 = vsel %vm1868, %v1850, -inf
        %2008 = vmax.xlane.f32.xlu0 %v2007
        %v2009 = vpop.xlane.xlu0 %2008
        %v2010 = vsel %vm1868, %v1851, -inf
        %2011 = vmax.xlane.f32.xlu0 %v2010
        %v2012 = vpop.xlane.xlu0 %2011
        %v2013 = vsel %vm1868, %v1852, -inf
        %2014 = vmax.xlane.f32.xlu0 %v2013
        %v2015 = vpop.xlane.xlu0 %2014
        %v2016 = vsel %vm1868, %v1853, -inf
        %2017 = vmax.xlane.f32.xlu0 %v2016
        %v2018 = vpop.xlane.xlu0 %2017
        %v2019 = vsel %vm1868, %v1854, -inf
        %2020 = vmax.xlane.f32.xlu0 %v2019
        %v2021 = vpop.xlane.xlu0 %2020
        %v2022 = vsel %vm1868, %v1855, -inf
        %2023 = vmax.xlane.f32.xlu0 %v2022
        %v2024 = vpop.xlane.xlu0 %2023
        %v2025 = vsel %vm1868, %v1856, -inf
        %2026 = vmax.xlane.f32.xlu0 %v2025
        %v2027 = vpop.xlane.xlu0 %2026
        %v2028 = vsel %vm1868, %v1857, -inf
        %2029 = vmax.xlane.f32.xlu0 %v2028
        %v2030 = vpop.xlane.xlu0 %2029
        %v2031 = vsel %vm1868, %v1858, -inf
        %2032 = vmax.xlane.f32.xlu0 %v2031
        %v2033 = vpop.xlane.xlu0 %2032
        %v2034 = vsel %vm1868, %v1859, -inf
        %2035 = vmax.xlane.f32.xlu0 %v2034
        %v2036 = vpop.xlane.xlu0 %2035
        %v2037 = vsel %vm1868, %v1860, -inf
        %2038 = vmax.xlane.f32.xlu0 %v2037
        %v2039 = vpop.xlane.xlu0 %2038
        %v2040 = vsel %vm1868, %v1861, -inf
        %2041 = vmax.xlane.f32.xlu0 %v2040
        %v2042 = vpop.xlane.xlu0 %2041
        %v2043 = vsel %vm1868, %v1862, -inf
        %2044 = vmax.xlane.f32.xlu0 %v2043
        %v2045 = vpop.xlane.xlu0 %2044
        %v2046 = vsel %vm1868, %v1863, -inf
        %2047 = vmax.xlane.f32.xlu0 %v2046
        %v2048 = vpop.xlane.xlu0 %2047
        %v2049 = vsel %vm1868, %v1864, -inf
        %2050 = vmax.xlane.f32.xlu0 %v2049
        %v2051 = vpop.xlane.xlu0 %2050
        %v2052 = vsel %vm1868, %v1865, -inf
        %2053 = vmax.xlane.f32.xlu0 %v2052
        %v2054 = vpop.xlane.xlu0 %2053
        %v2055 = vsel %vm1868, %v1866, -inf
        %2056 = vmax.xlane.f32.xlu0 %v2055
        %v2057 = vpop.xlane.xlu0 %2056
        %v2058 = vsel %vm1868, %v1867, -inf
        %2059 = vmax.xlane.f32.xlu0 %v2058
        %v2060 = vpop.xlane.xlu0 %2059
        %v2061 = vsub.f32 %v1804, %v1871
        %v2062 = vsub.f32 %v1805, %v1874
        %v2063 = vsub.f32 %v1806, %v1877
        %v2064 = vsub.f32 %v1807, %v1880
        %v2065 = vsub.f32 %v1808, %v1883
        %v2066 = vsub.f32 %v1809, %v1886
        %v2067 = vsub.f32 %v1810, %v1889
        %v2068 = vsub.f32 %v1811, %v1892
        %v2069 = vsub.f32 %v1812, %v1895
        %v2070 = vsub.f32 %v1813, %v1898
        %v2071 = vsub.f32 %v1814, %v1901
        %v2072 = vsub.f32 %v1815, %v1904
        %v2073 = vsub.f32 %v1816, %v1907
        %v2074 = vsub.f32 %v1817, %v1910
        %v2075 = vsub.f32 %v1818, %v1913
        %v2076 = vsub.f32 %v1819, %v1916
        %v2077 = vsub.f32 %v1820, %v1919
        %v2078 = vsub.f32 %v1821, %v1922
        %v2079 = vsub.f32 %v1822, %v1925
        %v2080 = vsub.f32 %v1823, %v1928
        %v2081 = vsub.f32 %v1824, %v1931
        %v2082 = vsub.f32 %v1825, %v1934
        %v2083 = vsub.f32 %v1826, %v1937
        %v2084 = vsub.f32 %v1827, %v1940
        %v2085 = vsub.f32 %v1828, %v1943
        %v2086 = vsub.f32 %v1829, %v1946
        %v2087 = vsub.f32 %v1830, %v1949
        %v2088 = vsub.f32 %v1831, %v1952
        %v2089 = vsub.f32 %v1832, %v1955
        %v2090 = vsub.f32 %v1833, %v1958
        %v2091 = vsub.f32 %v1834, %v1961
        %v2092 = vsub.f32 %v1835, %v1964
        %v2093 = vsub.f32 %v1836, %v1967
        %v2094 = vsub.f32 %v1837, %v1970
        %v2095 = vsub.f32 %v1838, %v1973
        %v2096 = vsub.f32 %v1839, %v1976
        %v2097 = vsub.f32 %v1840, %v1979
        %v2098 = vsub.f32 %v1841, %v1982
        %v2099 = vsub.f32 %v1842, %v1985
        %v2100 = vsub.f32 %v1843, %v1988
        %v2101 = vsub.f32 %v1844, %v1991
        %v2102 = vsub.f32 %v1845, %v1994
        %v2103 = vsub.f32 %v1846, %v1997
        %v2104 = vsub.f32 %v1847, %v2000
        %v2105 = vsub.f32 %v1848, %v2003
        %v2106 = vsub.f32 %v1849, %v2006
        %v2107 = vsub.f32 %v1850, %v2009
        %v2108 = vsub.f32 %v1851, %v2012
        %v2109 = vsub.f32 %v1852, %v2015
        %v2110 = vsub.f32 %v1853, %v2018
        %v2111 = vsub.f32 %v1854, %v2021
        %v2112 = vsub.f32 %v1855, %v2024
        %v2113 = vsub.f32 %v1856, %v2027
        %v2114 = vsub.f32 %v1857, %v2030
        %v2115 = vsub.f32 %v1858, %v2033
        %v2116 = vsub.f32 %v1859, %v2036
        %v2117 = vsub.f32 %v1860, %v2039
        %v2118 = vsub.f32 %v1861, %v2042
        %v2119 = vsub.f32 %v1862, %v2045
        %v2120 = vsub.f32 %v1863, %v2048
        %v2121 = vsub.f32 %v1864, %v2051
        %v2122 = vsub.f32 %v1865, %v2054
        %v2123 = vsub.f32 %v1866, %v2057
        %v2124 = vsub.f32 %v1867, %v2060
        %v2125 = vmul.f32 %v2061, 1.442695
        %v2126 = vpow.pop %v2125
        %v2127 = vmul.f32 %v2062, 1.442695
        %v2128 = vpow.pop %v2127
        %v2129 = vmul.f32 %v2063, 1.442695
        %v2130 = vpow.pop %v2129
        %v2131 = vmul.f32 %v2064, 1.442695
        %v2132 = vpow.pop %v2131
        %v2133 = vmul.f32 %v2065, 1.442695
        %v2134 = vpow.pop %v2133
        %v2135 = vmul.f32 %v2066, 1.442695
        %v2136 = vpow.pop %v2135
        %v2137 = vmul.f32 %v2067, 1.442695
        %v2138 = vpow.pop %v2137
        %v2139 = vmul.f32 %v2068, 1.442695
        %v2140 = vpow.pop %v2139
        %v2141 = vmul.f32 %v2069, 1.442695
        %v2142 = vpow.pop %v2141
        %v2143 = vmul.f32 %v2070, 1.442695
        %v2144 = vpow.pop %v2143
        %v2145 = vmul.f32 %v2071, 1.442695
        %v2146 = vpow.pop %v2145
        %v2147 = vmul.f32 %v2072, 1.442695
        %v2148 = vpow.pop %v2147
        %v2149 = vmul.f32 %v2073, 1.442695
        %v2150 = vpow.pop %v2149
        %v2151 = vmul.f32 %v2074, 1.442695
        %v2152 = vpow.pop %v2151
        %v2153 = vmul.f32 %v2075, 1.442695
        %v2154 = vpow.pop %v2153
        %v2155 = vmul.f32 %v2076, 1.442695
        %v2156 = vpow.pop %v2155
        %v2157 = vmul.f32 %v2077, 1.442695
        %v2158 = vpow.pop %v2157
        %v2159 = vmul.f32 %v2078, 1.442695
        %v2160 = vpow.pop %v2159
        %v2161 = vmul.f32 %v2079, 1.442695
        %v2162 = vpow.pop %v2161
        %v2163 = vmul.f32 %v2080, 1.442695
        %v2164 = vpow.pop %v2163
        %v2165 = vmul.f32 %v2081, 1.442695
        %v2166 = vpow.pop %v2165
        %v2167 = vmul.f32 %v2082, 1.442695
        %v2168 = vpow.pop %v2167
        %v2169 = vmul.f32 %v2083, 1.442695
        %v2170 = vpow.pop %v2169
        %v2171 = vmul.f32 %v2084, 1.442695
        %v2172 = vpow.pop %v2171
        %v2173 = vmul.f32 %v2085, 1.442695
        %v2174 = vpow.pop %v2173
        %v2175 = vmul.f32 %v2086, 1.442695
        %v2176 = vpow.pop %v2175
        %v2177 = vmul.f32 %v2087, 1.442695
        %v2178 = vpow.pop %v2177
        %v2179 = vmul.f32 %v2088, 1.442695
        %v2180 = vpow.pop %v2179
        %v2181 = vmul.f32 %v2089, 1.442695
        %v2182 = vpow.pop %v2181
        %v2183 = vmul.f32 %v2090, 1.442695
        %v2184 = vpow.pop %v2183
        %v2185 = vmul.f32 %v2091, 1.442695
        %v2186 = vpow.pop %v2185
        %v2187 = vmul.f32 %v2092, 1.442695
        %v2188 = vpow.pop %v2187
        %v2189 = vmul.f32 %v2093, 1.442695
        %v2190 = vpow.pop %v2189
        %v2191 = vmul.f32 %v2094, 1.442695
        %v2192 = vpow.pop %v2191
        %v2193 = vmul.f32 %v2095, 1.442695
        %v2194 = vpow.pop %v2193
        %v2195 = vmul.f32 %v2096, 1.442695
        %v2196 = vpow.pop %v2195
        %v2197 = vmul.f32 %v2097, 1.442695
        %v2198 = vpow.pop %v2197
        %v2199 = vmul.f32 %v2098, 1.442695
        %v2200 = vpow.pop %v2199
        %v2201 = vmul.f32 %v2099, 1.442695
        %v2202 = vpow.pop %v2201
        %v2203 = vmul.f32 %v2100, 1.442695
        %v2204 = vpow.pop %v2203
        %v2205 = vmul.f32 %v2101, 1.442695
        %v2206 = vpow.pop %v2205
        %v2207 = vmul.f32 %v2102, 1.442695
        %v2208 = vpow.pop %v2207
        %v2209 = vmul.f32 %v2103, 1.442695
        %v2210 = vpow.pop %v2209
        %v2211 = vmul.f32 %v2104, 1.442695
        %v2212 = vpow.pop %v2211
        %v2213 = vmul.f32 %v2105, 1.442695
        %v2214 = vpow.pop %v2213
        %v2215 = vmul.f32 %v2106, 1.442695
        %v2216 = vpow.pop %v2215
        %v2217 = vmul.f32 %v2107, 1.442695
        %v2218 = vpow.pop %v2217
        %v2219 = vmul.f32 %v2108, 1.442695
        %v2220 = vpow.pop %v2219
        %v2221 = vmul.f32 %v2109, 1.442695
        %v2222 = vpow.pop %v2221
        %v2223 = vmul.f32 %v2110, 1.442695
        %v2224 = vpow.pop %v2223
        %v2225 = vmul.f32 %v2111, 1.442695
        %v2226 = vpow.pop %v2225
        %v2227 = vmul.f32 %v2112, 1.442695
        %v2228 = vpow.pop %v2227
        %v2229 = vmul.f32 %v2113, 1.442695
        %v2230 = vpow.pop %v2229
        %v2231 = vmul.f32 %v2114, 1.442695
        %v2232 = vpow.pop %v2231
        %v2233 = vmul.f32 %v2115, 1.442695
        %v2234 = vpow.pop %v2233
        %v2235 = vmul.f32 %v2116, 1.442695
        %v2236 = vpow.pop %v2235
        %v2237 = vmul.f32 %v2117, 1.442695
        %v2238 = vpow.pop %v2237
        %v2239 = vmul.f32 %v2118, 1.442695
        %v2240 = vpow.pop %v2239
        %v2241 = vmul.f32 %v2119, 1.442695
        %v2242 = vpow.pop %v2241
        %v2243 = vmul.f32 %v2120, 1.442695
        %v2244 = vpow.pop %v2243
        %v2245 = vmul.f32 %v2121, 1.442695
        %v2246 = vpow.pop %v2245
        %v2247 = vmul.f32 %v2122, 1.442695
        %v2248 = vpow.pop %v2247
        %v2249 = vmul.f32 %v2123, 1.442695
        %v2250 = vpow.pop %v2249
        %v2251 = vmul.f32 %v2124, 1.442695
        %v2252 = vpow.pop %v2251
        %v2253 = vsel %vm1868, %v2126, 0.0
        %2254 = vadd.xlane.f32.xlu0 %v2253
        %v2255 = vpop.xlane.xlu0 %2254
        %v2256 = vsel %vm1868, %v2128, 0.0
        %2257 = vadd.xlane.f32.xlu0 %v2256
        %v2258 = vpop.xlane.xlu0 %2257
        %v2259 = vsel %vm1868, %v2130, 0.0
        %2260 = vadd.xlane.f32.xlu0 %v2259
        %v2261 = vpop.xlane.xlu0 %2260
        %v2262 = vsel %vm1868, %v2132, 0.0
        %2263 = vadd.xlane.f32.xlu0 %v2262
        %v2264 = vpop.xlane.xlu0 %2263
        %v2265 = vsel %vm1868, %v2134, 0.0
        %2266 = vadd.xlane.f32.xlu0 %v2265
        %v2267 = vpop.xlane.xlu0 %2266
        %v2268 = vsel %vm1868, %v2136, 0.0
        %2269 = vadd.xlane.f32.xlu0 %v2268
        %v2270 = vpop.xlane.xlu0 %2269
        %v2271 = vsel %vm1868, %v2138, 0.0
        %2272 = vadd.xlane.f32.xlu0 %v2271
        %v2273 = vpop.xlane.xlu0 %2272
        %v2274 = vsel %vm1868, %v2140, 0.0
        %2275 = vadd.xlane.f32.xlu0 %v2274
        %v2276 = vpop.xlane.xlu0 %2275
        %v2277 = vsel %vm1868, %v2142, 0.0
        %2278 = vadd.xlane.f32.xlu0 %v2277
        %v2279 = vpop.xlane.xlu0 %2278
        %v2280 = vsel %vm1868, %v2144, 0.0
        %2281 = vadd.xlane.f32.xlu0 %v2280
        %v2282 = vpop.xlane.xlu0 %2281
        %v2283 = vsel %vm1868, %v2146, 0.0
        %2284 = vadd.xlane.f32.xlu0 %v2283
        %v2285 = vpop.xlane.xlu0 %2284
        %v2286 = vsel %vm1868, %v2148, 0.0
        %2287 = vadd.xlane.f32.xlu0 %v2286
        %v2288 = vpop.xlane.xlu0 %2287
        %v2289 = vsel %vm1868, %v2150, 0.0
        %2290 = vadd.xlane.f32.xlu0 %v2289
        %v2291 = vpop.xlane.xlu0 %2290
        %v2292 = vsel %vm1868, %v2152, 0.0
        %2293 = vadd.xlane.f32.xlu0 %v2292
        %v2294 = vpop.xlane.xlu0 %2293
        %v2295 = vsel %vm1868, %v2154, 0.0
        %2296 = vadd.xlane.f32.xlu0 %v2295
        %v2297 = vpop.xlane.xlu0 %2296
        %v2298 = vsel %vm1868, %v2156, 0.0
        %2299 = vadd.xlane.f32.xlu0 %v2298
        %v2300 = vpop.xlane.xlu0 %2299
        %v2301 = vsel %vm1868, %v2158, 0.0
        %2302 = vadd.xlane.f32.xlu0 %v2301
        %v2303 = vpop.xlane.xlu0 %2302
        %v2304 = vsel %vm1868, %v2160, 0.0
        %2305 = vadd.xlane.f32.xlu0 %v2304
        %v2306 = vpop.xlane.xlu0 %2305
        %v2307 = vsel %vm1868, %v2162, 0.0
        %2308 = vadd.xlane.f32.xlu0 %v2307
        %v2309 = vpop.xlane.xlu0 %2308
        %v2310 = vsel %vm1868, %v2164, 0.0
        %2311 = vadd.xlane.f32.xlu0 %v2310
        %v2312 = vpop.xlane.xlu0 %2311
        %v2313 = vsel %vm1868, %v2166, 0.0
        %2314 = vadd.xlane.f32.xlu0 %v2313
        %v2315 = vpop.xlane.xlu0 %2314
        %v2316 = vsel %vm1868, %v2168, 0.0
        %2317 = vadd.xlane.f32.xlu0 %v2316
        %v2318 = vpop.xlane.xlu0 %2317
        %v2319 = vsel %vm1868, %v2170, 0.0
        %2320 = vadd.xlane.f32.xlu0 %v2319
        %v2321 = vpop.xlane.xlu0 %2320
        %v2322 = vsel %vm1868, %v2172, 0.0
        %2323 = vadd.xlane.f32.xlu0 %v2322
        %v2324 = vpop.xlane.xlu0 %2323
        %v2325 = vsel %vm1868, %v2174, 0.0
        %2326 = vadd.xlane.f32.xlu0 %v2325
        %v2327 = vpop.xlane.xlu0 %2326
        %v2328 = vsel %vm1868, %v2176, 0.0
        %2329 = vadd.xlane.f32.xlu0 %v2328
        %v2330 = vpop.xlane.xlu0 %2329
        %v2331 = vsel %vm1868, %v2178, 0.0
        %2332 = vadd.xlane.f32.xlu0 %v2331
        %v2333 = vpop.xlane.xlu0 %2332
        %v2334 = vsel %vm1868, %v2180, 0.0
        %2335 = vadd.xlane.f32.xlu0 %v2334
        %v2336 = vpop.xlane.xlu0 %2335
        %v2337 = vsel %vm1868, %v2182, 0.0
        %2338 = vadd.xlane.f32.xlu0 %v2337
        %v2339 = vpop.xlane.xlu0 %2338
        %v2340 = vsel %vm1868, %v2184, 0.0
        %2341 = vadd.xlane.f32.xlu0 %v2340
        %v2342 = vpop.xlane.xlu0 %2341
        %v2343 = vsel %vm1868, %v2186, 0.0
        %2344 = vadd.xlane.f32.xlu0 %v2343
        %v2345 = vpop.xlane.xlu0 %2344
        %v2346 = vsel %vm1868, %v2188, 0.0
        %2347 = vadd.xlane.f32.xlu0 %v2346
        %v2348 = vpop.xlane.xlu0 %2347
        %v2349 = vsel %vm1868, %v2190, 0.0
        %2350 = vadd.xlane.f32.xlu0 %v2349
        %v2351 = vpop.xlane.xlu0 %2350
        %v2352 = vsel %vm1868, %v2192, 0.0
        %2353 = vadd.xlane.f32.xlu0 %v2352
        %v2354 = vpop.xlane.xlu0 %2353
        %v2355 = vsel %vm1868, %v2194, 0.0
        %2356 = vadd.xlane.f32.xlu0 %v2355
        %v2357 = vpop.xlane.xlu0 %2356
        %v2358 = vsel %vm1868, %v2196, 0.0
        %2359 = vadd.xlane.f32.xlu0 %v2358
        %v2360 = vpop.xlane.xlu0 %2359
        %v2361 = vsel %vm1868, %v2198, 0.0
        %2362 = vadd.xlane.f32.xlu0 %v2361
        %v2363 = vpop.xlane.xlu0 %2362
        %v2364 = vsel %vm1868, %v2200, 0.0
        %2365 = vadd.xlane.f32.xlu0 %v2364
        %v2366 = vpop.xlane.xlu0 %2365
        %v2367 = vsel %vm1868, %v2202, 0.0
        %2368 = vadd.xlane.f32.xlu0 %v2367
        %v2369 = vpop.xlane.xlu0 %2368
        %v2370 = vsel %vm1868, %v2204, 0.0
        %2371 = vadd.xlane.f32.xlu0 %v2370
        %v2372 = vpop.xlane.xlu0 %2371
        %v2373 = vsel %vm1868, %v2206, 0.0
        %2374 = vadd.xlane.f32.xlu0 %v2373
        %v2375 = vpop.xlane.xlu0 %2374
        %v2376 = vsel %vm1868, %v2208, 0.0
        %2377 = vadd.xlane.f32.xlu0 %v2376
        %v2378 = vpop.xlane.xlu0 %2377
        %v2379 = vsel %vm1868, %v2210, 0.0
        %2380 = vadd.xlane.f32.xlu0 %v2379
        %v2381 = vpop.xlane.xlu0 %2380
        %v2382 = vsel %vm1868, %v2212, 0.0
        %2383 = vadd.xlane.f32.xlu0 %v2382
        %v2384 = vpop.xlane.xlu0 %2383
        %v2385 = vsel %vm1868, %v2214, 0.0
        %2386 = vadd.xlane.f32.xlu0 %v2385
        %v2387 = vpop.xlane.xlu0 %2386
        %v2388 = vsel %vm1868, %v2216, 0.0
        %2389 = vadd.xlane.f32.xlu0 %v2388
        %v2390 = vpop.xlane.xlu0 %2389
        %v2391 = vsel %vm1868, %v2218, 0.0
        %2392 = vadd.xlane.f32.xlu0 %v2391
        %v2393 = vpop.xlane.xlu0 %2392
        %v2394 = vsel %vm1868, %v2220, 0.0
        %2395 = vadd.xlane.f32.xlu0 %v2394
        %v2396 = vpop.xlane.xlu0 %2395
        %v2397 = vsel %vm1868, %v2222, 0.0
        %2398 = vadd.xlane.f32.xlu0 %v2397
        %v2399 = vpop.xlane.xlu0 %2398
        %v2400 = vsel %vm1868, %v2224, 0.0
        %2401 = vadd.xlane.f32.xlu0 %v2400
        %v2402 = vpop.xlane.xlu0 %2401
        %v2403 = vsel %vm1868, %v2226, 0.0
        %2404 = vadd.xlane.f32.xlu0 %v2403
        %v2405 = vpop.xlane.xlu0 %2404
        %v2406 = vsel %vm1868, %v2228, 0.0
        %2407 = vadd.xlane.f32.xlu0 %v2406
        %v2408 = vpop.xlane.xlu0 %2407
        %v2409 = vsel %vm1868, %v2230, 0.0
        %2410 = vadd.xlane.f32.xlu0 %v2409
        %v2411 = vpop.xlane.xlu0 %2410
        %v2412 = vsel %vm1868, %v2232, 0.0
        %2413 = vadd.xlane.f32.xlu0 %v2412
        %v2414 = vpop.xlane.xlu0 %2413
        %v2415 = vsel %vm1868, %v2234, 0.0
        %2416 = vadd.xlane.f32.xlu0 %v2415
        %v2417 = vpop.xlane.xlu0 %2416
        %v2418 = vsel %vm1868, %v2236, 0.0
        %2419 = vadd.xlane.f32.xlu0 %v2418
        %v2420 = vpop.xlane.xlu0 %2419
        %v2421 = vsel %vm1868, %v2238, 0.0
        %2422 = vadd.xlane.f32.xlu0 %v2421
        %v2423 = vpop.xlane.xlu0 %2422
        %v2424 = vsel %vm1868, %v2240, 0.0
        %2425 = vadd.xlane.f32.xlu0 %v2424
        %v2426 = vpop.xlane.xlu0 %2425
        %v2427 = vsel %vm1868, %v2242, 0.0
        %2428 = vadd.xlane.f32.xlu0 %v2427
        %v2429 = vpop.xlane.xlu0 %2428
        %v2430 = vsel %vm1868, %v2244, 0.0
        %2431 = vadd.xlane.f32.xlu0 %v2430
        %v2432 = vpop.xlane.xlu0 %2431
        %v2433 = vsel %vm1868, %v2246, 0.0
        %2434 = vadd.xlane.f32.xlu0 %v2433
        %v2435 = vpop.xlane.xlu0 %2434
        %v2436 = vsel %vm1868, %v2248, 0.0
        %2437 = vadd.xlane.f32.xlu0 %v2436
        %v2438 = vpop.xlane.xlu0 %2437
        %v2439 = vsel %vm1868, %v2250, 0.0
        %2440 = vadd.xlane.f32.xlu0 %v2439
        %v2441 = vpop.xlane.xlu0 %2440
        %v2442 = vsel %vm1868, %v2252, 0.0
        %2443 = vadd.xlane.f32.xlu0 %v2442
        %v2444 = vpop.xlane.xlu0 %2443
        %v2445 = vrcp.pop %v2255
        %v2446 = vrcp.pop %v2258
        %v2447 = vrcp.pop %v2261
        %v2448 = vrcp.pop %v2264
        %v2449 = vrcp.pop %v2267
        %v2450 = vrcp.pop %v2270
        %v2451 = vrcp.pop %v2273
        %v2452 = vrcp.pop %v2276
        %v2453 = vrcp.pop %v2279
        %v2454 = vrcp.pop %v2282
        %v2455 = vrcp.pop %v2285
        %v2456 = vrcp.pop %v2288
        %v2457 = vrcp.pop %v2291
        %v2458 = vrcp.pop %v2294
        %v2459 = vrcp.pop %v2297
        %v2460 = vrcp.pop %v2300
        %v2461 = vrcp.pop %v2303
        %v2462 = vrcp.pop %v2306
        %v2463 = vrcp.pop %v2309
        %v2464 = vrcp.pop %v2312
        %v2465 = vrcp.pop %v2315
        %v2466 = vrcp.pop %v2318
        %v2467 = vrcp.pop %v2321
        %v2468 = vrcp.pop %v2324
        %v2469 = vrcp.pop %v2327
        %v2470 = vrcp.pop %v2330
        %v2471 = vrcp.pop %v2333
        %v2472 = vrcp.pop %v2336
        %v2473 = vrcp.pop %v2339
        %v2474 = vrcp.pop %v2342
        %v2475 = vrcp.pop %v2345
        %v2476 = vrcp.pop %v2348
        %v2477 = vrcp.pop %v2351
        %v2478 = vrcp.pop %v2354
        %v2479 = vrcp.pop %v2357
        %v2480 = vrcp.pop %v2360
        %v2481 = vrcp.pop %v2363
        %v2482 = vrcp.pop %v2366
        %v2483 = vrcp.pop %v2369
        %v2484 = vrcp.pop %v2372
        %v2485 = vrcp.pop %v2375
        %v2486 = vrcp.pop %v2378
        %v2487 = vrcp.pop %v2381
        %v2488 = vrcp.pop %v2384
        %v2489 = vrcp.pop %v2387
        %v2490 = vrcp.pop %v2390
        %v2491 = vrcp.pop %v2393
        %v2492 = vrcp.pop %v2396
        %v2493 = vrcp.pop %v2399
        %v2494 = vrcp.pop %v2402
        %v2495 = vrcp.pop %v2405
        %v2496 = vrcp.pop %v2408
        %v2497 = vrcp.pop %v2411
        %v2498 = vrcp.pop %v2414
        %v2499 = vrcp.pop %v2417
        %v2500 = vrcp.pop %v2420
        %v2501 = vrcp.pop %v2423
        %v2502 = vrcp.pop %v2426
        %v2503 = vrcp.pop %v2429
        %v2504 = vrcp.pop %v2432
        %v2505 = vrcp.pop %v2435
        %v2506 = vrcp.pop %v2438
        %v2507 = vrcp.pop %v2441
        %v2508 = vrcp.pop %v2444
        %v2509 = vmul.f32 %v2126, %v2445
        %v2510 = vmul.f32 %v2128, %v2446
        %v2511 = vmul.f32 %v2130, %v2447
        %v2512 = vmul.f32 %v2132, %v2448
        %v2513 = vmul.f32 %v2134, %v2449
        %v2514 = vmul.f32 %v2136, %v2450
        %v2515 = vmul.f32 %v2138, %v2451
        %v2516 = vmul.f32 %v2140, %v2452
        %v2517 = vmul.f32 %v2142, %v2453
        %v2518 = vmul.f32 %v2144, %v2454
        %v2519 = vmul.f32 %v2146, %v2455
        %v2520 = vmul.f32 %v2148, %v2456
        %v2521 = vmul.f32 %v2150, %v2457
        %v2522 = vmul.f32 %v2152, %v2458
        %v2523 = vmul.f32 %v2154, %v2459
        %v2524 = vmul.f32 %v2156, %v2460
        %v2525 = vmul.f32 %v2158, %v2461
        %v2526 = vmul.f32 %v2160, %v2462
        %v2527 = vmul.f32 %v2162, %v2463
        %v2528 = vmul.f32 %v2164, %v2464
        %v2529 = vmul.f32 %v2166, %v2465
        %v2530 = vmul.f32 %v2168, %v2466
        %v2531 = vmul.f32 %v2170, %v2467
        %v2532 = vmul.f32 %v2172, %v2468
        %v2533 = vmul.f32 %v2174, %v2469
        %v2534 = vmul.f32 %v2176, %v2470
        %v2535 = vmul.f32 %v2178, %v2471
        %v2536 = vmul.f32 %v2180, %v2472
        %v2537 = vmul.f32 %v2182, %v2473
        %v2538 = vmul.f32 %v2184, %v2474
        %v2539 = vmul.f32 %v2186, %v2475
        %v2540 = vmul.f32 %v2188, %v2476
        %v2541 = vmul.f32 %v2190, %v2477
        %v2542 = vmul.f32 %v2192, %v2478
        %v2543 = vmul.f32 %v2194, %v2479
        %v2544 = vmul.f32 %v2196, %v2480
        %v2545 = vmul.f32 %v2198, %v2481
        %v2546 = vmul.f32 %v2200, %v2482
        %v2547 = vmul.f32 %v2202, %v2483
        %v2548 = vmul.f32 %v2204, %v2484
        %v2549 = vmul.f32 %v2206, %v2485
        %v2550 = vmul.f32 %v2208, %v2486
        %v2551 = vmul.f32 %v2210, %v2487
        %v2552 = vmul.f32 %v2212, %v2488
        %v2553 = vmul.f32 %v2214, %v2489
        %v2554 = vmul.f32 %v2216, %v2490
        %v2555 = vmul.f32 %v2218, %v2491
        %v2556 = vmul.f32 %v2220, %v2492
        %v2557 = vmul.f32 %v2222, %v2493
        %v2558 = vmul.f32 %v2224, %v2494
        %v2559 = vmul.f32 %v2226, %v2495
        %v2560 = vmul.f32 %v2228, %v2496
        %v2561 = vmul.f32 %v2230, %v2497
        %v2562 = vmul.f32 %v2232, %v2498
        %v2563 = vmul.f32 %v2234, %v2499
        %v2564 = vmul.f32 %v2236, %v2500
        %v2565 = vmul.f32 %v2238, %v2501
        %v2566 = vmul.f32 %v2240, %v2502
        %v2567 = vmul.f32 %v2242, %v2503
        %v2568 = vmul.f32 %v2244, %v2504
        %v2569 = vmul.f32 %v2246, %v2505
        %v2570 = vmul.f32 %v2248, %v2506
        %v2571 = vmul.f32 %v2250, %v2507
        %v2572 = vmul.f32 %v2252, %v2508
        %v2573 = vpack.c.bf16 %v2510, %v2509
        %v2574 = vpack.c.bf16 %v2512, %v2511
        %v2575 = vpack.c.bf16 %v2514, %v2513
        %v2576 = vpack.c.bf16 %v2516, %v2515
        %v2577 = vpack.c.bf16 %v2518, %v2517
        %v2578 = vpack.c.bf16 %v2520, %v2519
        %v2579 = vpack.c.bf16 %v2522, %v2521
        %v2580 = vpack.c.bf16 %v2524, %v2523
        %v2581 = vpack.c.bf16 %v2526, %v2525
        %v2582 = vpack.c.bf16 %v2528, %v2527
        %v2583 = vpack.c.bf16 %v2530, %v2529
        %v2584 = vpack.c.bf16 %v2532, %v2531
        %v2585 = vpack.c.bf16 %v2534, %v2533
        %v2586 = vpack.c.bf16 %v2536, %v2535
        %v2587 = vpack.c.bf16 %v2538, %v2537
        %v2588 = vpack.c.bf16 %v2540, %v2539
        %v2589 = vpack.c.bf16 %v2542, %v2541
        %v2590 = vpack.c.bf16 %v2544, %v2543
        %v2591 = vpack.c.bf16 %v2546, %v2545
        %v2592 = vpack.c.bf16 %v2548, %v2547
        %v2593 = vpack.c.bf16 %v2550, %v2549
        %v2594 = vpack.c.bf16 %v2552, %v2551
        %v2595 = vpack.c.bf16 %v2554, %v2553
        %v2596 = vpack.c.bf16 %v2556, %v2555
        %v2597 = vpack.c.bf16 %v2558, %v2557
        %v2598 = vpack.c.bf16 %v2560, %v2559
        %v2599 = vpack.c.bf16 %v2562, %v2561
        %v2600 = vpack.c.bf16 %v2564, %v2563
        %v2601 = vpack.c.bf16 %v2566, %v2565
        %v2602 = vpack.c.bf16 %v2568, %v2567
        %v2603 = vpack.c.bf16 %v2570, %v2569
        %v2604 = vpack.c.bf16 %v2572, %v2571
        %2609 = vrot.lane.b32.xlu0 %v1058, 64
        %v2610 = vpop.permute.xlu0 %2609
        %2611 = vrot.lane.b32.xlu0 %v1059, 64
        %v2612 = vpop.permute.xlu0 %2611
        %2613 = vrot.lane.b32.xlu0 %v1060, 64
        %v2614 = vpop.permute.xlu0 %2613
        %2615 = vrot.lane.b32.xlu0 %v1061, 64
        %v2616 = vpop.permute.xlu0 %2615
        %v2622 = vsel %vm1868, %v2573, 0
        %v2625 = vsel %vm1868, %v2574, 0
        %v2628 = vsel %vm1868, %v2575, 0
        %v2631 = vsel %vm1868, %v2576, 0
        %v2634 = vsel %vm1868, %v2577, 0
        %v2637 = vsel %vm1868, %v2578, 0
        %v2640 = vsel %vm1868, %v2579, 0
        %v2643 = vsel %vm1868, %v2580, 0
        %v2646 = vsel %vm1868, %v2581, 0
        %v2649 = vsel %vm1868, %v2582, 0
        %v2652 = vsel %vm1868, %v2583, 0
        %v2655 = vsel %vm1868, %v2584, 0
        %v2658 = vsel %vm1868, %v2585, 0
        %v2661 = vsel %vm1868, %v2586, 0
        %v2664 = vsel %vm1868, %v2587, 0
        %v2667 = vsel %vm1868, %v2588, 0
        %2669 = vmatprep.subr.bf16.mxu0 0
        %2670 = vmatpush1.bf16.msra.mxu0 0
        %2671 = vmatprep.subr.bf16.mxu0 0
        %2672 = vmatpush1.bf16.msra.mxu0 0
        %2673 = vmatprep.subr.bf16.mxu0 0
        %2674 = vmatpush1.bf16.msra.mxu0 0
        %2675 = vmatprep.subr.bf16.mxu0 0
        %2676 = vmatpush1.bf16.msra.mxu0 0
        %2677 = vmatprep.subr.bf16.mxu0 0
        %2678 = vmatpush1.bf16.msra.mxu0 %v2616
        %2679 = vmatprep.subr.bf16.mxu0 0
        %2680 = vmatpush1.bf16.msra.mxu0 %v2614
        %2681 = vmatprep.subr.bf16.mxu0 0
        %2682 = vmatpush1.bf16.msra.mxu0 %v2612
        %2683 = vmatprep.subr.bf16.mxu0 0
        %2684 = vmatpush1.bf16.msra.mxu0 %v2610
        %2685 = vmatprep.subr.bf16.mxu0 0
        %2686 = vmatpush2.bf16.msra.mxu0 0
        %2687 = vmatprep.subr.bf16.mxu0 0
        %2688 = vmatpush2.bf16.msra.mxu0 0
        %2689 = vmatprep.subr.bf16.mxu0 0
        %2690 = vmatpush2.bf16.msra.mxu0 0
        %2691 = vmatprep.subr.bf16.mxu0 0
        %2692 = vmatpush2.bf16.msra.mxu0 0
        %2693 = vmatprep.subr.bf16.mxu0 0
        %2694 = vmatpush2.bf16.msra.mxu0 0
        %2695 = vmatprep.subr.bf16.mxu0 0
        %2696 = vmatpush2.bf16.msra.mxu0 0
        %2697 = vmatprep.subr.bf16.mxu0 0
        %2698 = vmatpush2.bf16.msra.mxu0 0
        %2699 = vmatprep.subr.bf16.mxu0 0
        %2700 = vmatpush2.bf16.msra.mxu0 0
        %2701 = vmatprep.mubr.bf16.mxu0 0
        %2702 = vmatmul.mubr.bf16.gmra.mxu0 %v2622
        %v2703 = vpop.f32.mrf.mxu0
        %v2704 = vadd.f32 0.0, %v2703
        %v2705 = vpop.f32.mrf.mxu0
        %v2706 = vpop.f32.mrf.mxu0
        %v2707 = vadd.f32 0.0, %v2706
        %v2708 = vpop.f32.mrf.mxu0
        %2709 = vmatprep.mubr.bf16.mxu0 0
        %2710 = vmatmul.mubr.bf16.gmra.mxu0 %v2625
        %v2711 = vpop.f32.mrf.mxu0
        %v2712 = vadd.f32 0.0, %v2711
        %v2713 = vpop.f32.mrf.mxu0
        %v2714 = vpop.f32.mrf.mxu0
        %v2715 = vadd.f32 0.0, %v2714
        %v2716 = vpop.f32.mrf.mxu0
        %2717 = vmatprep.mubr.bf16.mxu0 0
        %2718 = vmatmul.mubr.bf16.gmra.mxu0 %v2628
        %v2719 = vpop.f32.mrf.mxu0
        %v2720 = vadd.f32 0.0, %v2719
        %v2721 = vpop.f32.mrf.mxu0
        %v2722 = vpop.f32.mrf.mxu0
        %v2723 = vadd.f32 0.0, %v2722
        %v2724 = vpop.f32.mrf.mxu0
        %2725 = vmatprep.mubr.bf16.mxu0 0
        %2726 = vmatmul.mubr.bf16.gmra.mxu0 %v2631
        %v2727 = vpop.f32.mrf.mxu0
        %v2728 = vadd.f32 0.0, %v2727
        %v2729 = vpop.f32.mrf.mxu0
        %v2730 = vpop.f32.mrf.mxu0
        %v2731 = vadd.f32 0.0, %v2730
        %v2732 = vpop.f32.mrf.mxu0
        %2733 = vmatprep.mubr.bf16.mxu0 0
        %2734 = vmatmul.mubr.bf16.gmra.mxu0 %v2634
        %v2735 = vpop.f32.mrf.mxu0
        %v2736 = vadd.f32 0.0, %v2735
        %v2737 = vpop.f32.mrf.mxu0
        %v2738 = vpop.f32.mrf.mxu0
        %v2739 = vadd.f32 0.0, %v2738
        %v2740 = vpop.f32.mrf.mxu0
        %2741 = vmatprep.mubr.bf16.mxu0 0
        %2742 = vmatmul.mubr.bf16.gmra.mxu0 %v2637
        %v2743 = vpop.f32.mrf.mxu0
        %v2744 = vadd.f32 0.0, %v2743
        %v2745 = vpop.f32.mrf.mxu0
        %v2746 = vpop.f32.mrf.mxu0
        %v2747 = vadd.f32 0.0, %v2746
        %v2748 = vpop.f32.mrf.mxu0
        %2749 = vmatprep.mubr.bf16.mxu0 0
        %2750 = vmatmul.mubr.bf16.gmra.mxu0 %v2640
        %v2751 = vpop.f32.mrf.mxu0
        %v2752 = vadd.f32 0.0, %v2751
        %v2753 = vpop.f32.mrf.mxu0
        %v2754 = vpop.f32.mrf.mxu0
        %v2755 = vadd.f32 0.0, %v2754
        %v2756 = vpop.f32.mrf.mxu0
        %2757 = vmatprep.mubr.bf16.mxu0 0
        %2758 = vmatmul.mubr.bf16.gmra.mxu0 %v2643
        %v2759 = vpop.f32.mrf.mxu0
        %v2760 = vadd.f32 0.0, %v2759
        %v2761 = vpop.f32.mrf.mxu0
        %v2762 = vpop.f32.mrf.mxu0
        %v2763 = vadd.f32 0.0, %v2762
        %v2764 = vpop.f32.mrf.mxu0
        %2765 = vmatprep.mubr.bf16.mxu0 0
        %2766 = vmatmul.mubr.bf16.gmra.mxu0 %v2646
        %v2767 = vpop.f32.mrf.mxu0
        %v2768 = vadd.f32 0.0, %v2767
        %v2769 = vpop.f32.mrf.mxu0
        %v2770 = vpop.f32.mrf.mxu0
        %v2771 = vadd.f32 0.0, %v2770
        %v2772 = vpop.f32.mrf.mxu0
        %2773 = vmatprep.mubr.bf16.mxu0 0
        %2774 = vmatmul.mubr.bf16.gmra.mxu0 %v2649
        %v2775 = vpop.f32.mrf.mxu0
        %v2776 = vadd.f32 0.0, %v2775
        %v2777 = vpop.f32.mrf.mxu0
        %v2778 = vpop.f32.mrf.mxu0
        %v2779 = vadd.f32 0.0, %v2778
        %v2780 = vpop.f32.mrf.mxu0
        %2781 = vmatprep.mubr.bf16.mxu0 0
        %2782 = vmatmul.mubr.bf16.gmra.mxu0 %v2652
        %v2783 = vpop.f32.mrf.mxu0
        %v2784 = vadd.f32 0.0, %v2783
        %v2785 = vpop.f32.mrf.mxu0
        %v2786 = vpop.f32.mrf.mxu0
        %v2787 = vadd.f32 0.0, %v2786
        %v2788 = vpop.f32.mrf.mxu0
        %2789 = vmatprep.mubr.bf16.mxu0 0
        %2790 = vmatmul.mubr.bf16.gmra.mxu0 %v2655
        %v2791 = vpop.f32.mrf.mxu0
        %v2792 = vadd.f32 0.0, %v2791
        %v2793 = vpop.f32.mrf.mxu0
        %v2794 = vpop.f32.mrf.mxu0
        %v2795 = vadd.f32 0.0, %v2794
        %v2796 = vpop.f32.mrf.mxu0
        %2797 = vmatprep.mubr.bf16.mxu0 0
        %2798 = vmatmul.mubr.bf16.gmra.mxu0 %v2658
        %v2799 = vpop.f32.mrf.mxu0
        %v2800 = vadd.f32 0.0, %v2799
        %v2801 = vpop.f32.mrf.mxu0
        %v2802 = vpop.f32.mrf.mxu0
        %v2803 = vadd.f32 0.0, %v2802
        %v2804 = vpop.f32.mrf.mxu0
        %2805 = vmatprep.mubr.bf16.mxu0 0
        %2806 = vmatmul.mubr.bf16.gmra.mxu0 %v2661
        %v2807 = vpop.f32.mrf.mxu0
        %v2808 = vadd.f32 0.0, %v2807
        %v2809 = vpop.f32.mrf.mxu0
        %v2810 = vpop.f32.mrf.mxu0
        %v2811 = vadd.f32 0.0, %v2810
        %v2812 = vpop.f32.mrf.mxu0
        %2813 = vmatprep.mubr.bf16.mxu0 0
        %2814 = vmatmul.mubr.bf16.gmra.mxu0 %v2664
        %v2815 = vpop.f32.mrf.mxu0
        %v2816 = vadd.f32 0.0, %v2815
        %v2817 = vpop.f32.mrf.mxu0
        %v2818 = vpop.f32.mrf.mxu0
        %v2819 = vadd.f32 0.0, %v2818
        %v2820 = vpop.f32.mrf.mxu0
        %2821 = vmatprep.mubr.bf16.mxu0 0
        %2822 = vmatmul.mubr.bf16.gmra.mxu0 %v2667
        %v2823 = vpop.f32.mrf.mxu0
        %v2824 = vadd.f32 0.0, %v2823
        %v2825 = vpop.f32.mrf.mxu0
        %v2826 = vpop.f32.mrf.mxu0
        %v2827 = vadd.f32 0.0, %v2826
        %v2828 = vpop.f32.mrf.mxu0
        %2829 = vdwg.mxu0
        %2834 = vrot.lane.b32.xlu0 %v1062, 64
        %v2835 = vpop.permute.xlu0 %2834
        %2836 = vrot.lane.b32.xlu0 %v1063, 64
        %v2837 = vpop.permute.xlu0 %2836
        %2838 = vrot.lane.b32.xlu0 %v1064, 64
        %v2839 = vpop.permute.xlu0 %2838
        %2840 = vrot.lane.b32.xlu0 %v1065, 64
        %v2841 = vpop.permute.xlu0 %2840
        %v2847 = vsel %vm1868, %v2589, 0
        %v2850 = vsel %vm1868, %v2590, 0
        %v2853 = vsel %vm1868, %v2591, 0
        %v2856 = vsel %vm1868, %v2592, 0
        %v2859 = vsel %vm1868, %v2593, 0
        %v2862 = vsel %vm1868, %v2594, 0
        %v2865 = vsel %vm1868, %v2595, 0
        %v2868 = vsel %vm1868, %v2596, 0
        %v2871 = vsel %vm1868, %v2597, 0
        %v2874 = vsel %vm1868, %v2598, 0
        %v2877 = vsel %vm1868, %v2599, 0
        %v2880 = vsel %vm1868, %v2600, 0
        %v2883 = vsel %vm1868, %v2601, 0
        %v2886 = vsel %vm1868, %v2602, 0
        %v2889 = vsel %vm1868, %v2603, 0
        %v2892 = vsel %vm1868, %v2604, 0
        %2894 = vmatprep.subr.bf16.mxu0 0
        %2895 = vmatpush1.bf16.msra.mxu0 0
        %2896 = vmatprep.subr.bf16.mxu0 0
        %2897 = vmatpush1.bf16.msra.mxu0 0
        %2898 = vmatprep.subr.bf16.mxu0 0
        %2899 = vmatpush1.bf16.msra.mxu0 0
        %2900 = vmatprep.subr.bf16.mxu0 0
        %2901 = vmatpush1.bf16.msra.mxu0 0
        %2902 = vmatprep.subr.bf16.mxu0 0
        %2903 = vmatpush1.bf16.msra.mxu0 %v2841
        %2904 = vmatprep.subr.bf16.mxu0 0
        %2905 = vmatpush1.bf16.msra.mxu0 %v2839
        %2906 = vmatprep.subr.bf16.mxu0 0
        %2907 = vmatpush1.bf16.msra.mxu0 %v2837
        %2908 = vmatprep.subr.bf16.mxu0 0
        %2909 = vmatpush1.bf16.msra.mxu0 %v2835
        %2910 = vmatprep.subr.bf16.mxu0 0
        %2911 = vmatpush2.bf16.msra.mxu0 0
        %2912 = vmatprep.subr.bf16.mxu0 0
        %2913 = vmatpush2.bf16.msra.mxu0 0
        %2914 = vmatprep.subr.bf16.mxu0 0
        %2915 = vmatpush2.bf16.msra.mxu0 0
        %2916 = vmatprep.subr.bf16.mxu0 0
        %2917 = vmatpush2.bf16.msra.mxu0 0
        %2918 = vmatprep.subr.bf16.mxu0 0
        %2919 = vmatpush2.bf16.msra.mxu0 0
        %2920 = vmatprep.subr.bf16.mxu0 0
        %2921 = vmatpush2.bf16.msra.mxu0 0
        %2922 = vmatprep.subr.bf16.mxu0 0
        %2923 = vmatpush2.bf16.msra.mxu0 0
        %2924 = vmatprep.subr.bf16.mxu0 0
        %2925 = vmatpush2.bf16.msra.mxu0 0
        %2926 = vmatprep.mubr.bf16.mxu0 0
        %2927 = vmatmul.mubr.bf16.gmra.mxu0 %v2847
        %v2928 = vpop.f32.mrf.mxu0
        %v2929 = vadd.f32 0.0, %v2928
        %v2930 = vpop.f32.mrf.mxu0
        %v2931 = vpop.f32.mrf.mxu0
        %v2932 = vadd.f32 0.0, %v2931
        %v2933 = vpop.f32.mrf.mxu0
        %2934 = vmatprep.mubr.bf16.mxu0 0
        %2935 = vmatmul.mubr.bf16.gmra.mxu0 %v2850
        %v2936 = vpop.f32.mrf.mxu0
        %v2937 = vadd.f32 0.0, %v2936
        %v2938 = vpop.f32.mrf.mxu0
        %v2939 = vpop.f32.mrf.mxu0
        %v2940 = vadd.f32 0.0, %v2939
        %v2941 = vpop.f32.mrf.mxu0
        %2942 = vmatprep.mubr.bf16.mxu0 0
        %2943 = vmatmul.mubr.bf16.gmra.mxu0 %v2853
        %v2944 = vpop.f32.mrf.mxu0
        %v2945 = vadd.f32 0.0, %v2944
        %v2946 = vpop.f32.mrf.mxu0
        %v2947 = vpop.f32.mrf.mxu0
        %v2948 = vadd.f32 0.0, %v2947
        %v2949 = vpop.f32.mrf.mxu0
        %2950 = vmatprep.mubr.bf16.mxu0 0
        %2951 = vmatmul.mubr.bf16.gmra.mxu0 %v2856
        %v2952 = vpop.f32.mrf.mxu0
        %v2953 = vadd.f32 0.0, %v2952
        %v2954 = vpop.f32.mrf.mxu0
        %v2955 = vpop.f32.mrf.mxu0
        %v2956 = vadd.f32 0.0, %v2955
        %v2957 = vpop.f32.mrf.mxu0
        %2958 = vmatprep.mubr.bf16.mxu0 0
        %2959 = vmatmul.mubr.bf16.gmra.mxu0 %v2859
        %v2960 = vpop.f32.mrf.mxu0
        %v2961 = vadd.f32 0.0, %v2960
        %v2962 = vpop.f32.mrf.mxu0
        %v2963 = vpop.f32.mrf.mxu0
        %v2964 = vadd.f32 0.0, %v2963
        %v2965 = vpop.f32.mrf.mxu0
        %2966 = vmatprep.mubr.bf16.mxu0 0
        %2967 = vmatmul.mubr.bf16.gmra.mxu0 %v2862
        %v2968 = vpop.f32.mrf.mxu0
        %v2969 = vadd.f32 0.0, %v2968
        %v2970 = vpop.f32.mrf.mxu0
        %v2971 = vpop.f32.mrf.mxu0
        %v2972 = vadd.f32 0.0, %v2971
        %v2973 = vpop.f32.mrf.mxu0
        %2974 = vmatprep.mubr.bf16.mxu0 0
        %2975 = vmatmul.mubr.bf16.gmra.mxu0 %v2865
        %v2976 = vpop.f32.mrf.mxu0
        %v2977 = vadd.f32 0.0, %v2976
        %v2978 = vpop.f32.mrf.mxu0
        %v2979 = vpop.f32.mrf.mxu0
        %v2980 = vadd.f32 0.0, %v2979
        %v2981 = vpop.f32.mrf.mxu0
        %2982 = vmatprep.mubr.bf16.mxu0 0
        %2983 = vmatmul.mubr.bf16.gmra.mxu0 %v2868
        %v2984 = vpop.f32.mrf.mxu0
        %v2985 = vadd.f32 0.0, %v2984
        %v2986 = vpop.f32.mrf.mxu0
        %v2987 = vpop.f32.mrf.mxu0
        %v2988 = vadd.f32 0.0, %v2987
        %v2989 = vpop.f32.mrf.mxu0
        %2990 = vmatprep.mubr.bf16.mxu0 0
        %2991 = vmatmul.mubr.bf16.gmra.mxu0 %v2871
        %v2992 = vpop.f32.mrf.mxu0
        %v2993 = vadd.f32 0.0, %v2992
        %v2994 = vpop.f32.mrf.mxu0
        %v2995 = vpop.f32.mrf.mxu0
        %v2996 = vadd.f32 0.0, %v2995
        %v2997 = vpop.f32.mrf.mxu0
        %2998 = vmatprep.mubr.bf16.mxu0 0
        %2999 = vmatmul.mubr.bf16.gmra.mxu0 %v2874
        %v3000 = vpop.f32.mrf.mxu0
        %v3001 = vadd.f32 0.0, %v3000
        %v3002 = vpop.f32.mrf.mxu0
        %v3003 = vpop.f32.mrf.mxu0
        %v3004 = vadd.f32 0.0, %v3003
        %v3005 = vpop.f32.mrf.mxu0
        %3006 = vmatprep.mubr.bf16.mxu0 0
        %3007 = vmatmul.mubr.bf16.gmra.mxu0 %v2877
        %v3008 = vpop.f32.mrf.mxu0
        %v3009 = vadd.f32 0.0, %v3008
        %v3010 = vpop.f32.mrf.mxu0
        %v3011 = vpop.f32.mrf.mxu0
        %v3012 = vadd.f32 0.0, %v3011
        %v3013 = vpop.f32.mrf.mxu0
        %3014 = vmatprep.mubr.bf16.mxu0 0
        %3015 = vmatmul.mubr.bf16.gmra.mxu0 %v2880
        %v3016 = vpop.f32.mrf.mxu0
        %v3017 = vadd.f32 0.0, %v3016
        %v3018 = vpop.f32.mrf.mxu0
        %v3019 = vpop.f32.mrf.mxu0
        %v3020 = vadd.f32 0.0, %v3019
        %v3021 = vpop.f32.mrf.mxu0
        %3022 = vmatprep.mubr.bf16.mxu0 0
        %3023 = vmatmul.mubr.bf16.gmra.mxu0 %v2883
        %v3024 = vpop.f32.mrf.mxu0
        %v3025 = vadd.f32 0.0, %v3024
        %v3026 = vpop.f32.mrf.mxu0
        %v3027 = vpop.f32.mrf.mxu0
        %v3028 = vadd.f32 0.0, %v3027
        %v3029 = vpop.f32.mrf.mxu0
        %3030 = vmatprep.mubr.bf16.mxu0 0
        %3031 = vmatmul.mubr.bf16.gmra.mxu0 %v2886
        %v3032 = vpop.f32.mrf.mxu0
        %v3033 = vadd.f32 0.0, %v3032
        %v3034 = vpop.f32.mrf.mxu0
        %v3035 = vpop.f32.mrf.mxu0
        %v3036 = vadd.f32 0.0, %v3035
        %v3037 = vpop.f32.mrf.mxu0
        %3038 = vmatprep.mubr.bf16.mxu0 0
        %3039 = vmatmul.mubr.bf16.gmra.mxu0 %v2889
        %v3040 = vpop.f32.mrf.mxu0
        %v3041 = vadd.f32 0.0, %v3040
        %v3042 = vpop.f32.mrf.mxu0
        %v3043 = vpop.f32.mrf.mxu0
        %v3044 = vadd.f32 0.0, %v3043
        %v3045 = vpop.f32.mrf.mxu0
        %3046 = vmatprep.mubr.bf16.mxu0 0
        %3047 = vmatmul.mubr.bf16.gmra.mxu0 %v2892
        %v3048 = vpop.f32.mrf.mxu0
        %v3049 = vadd.f32 0.0, %v3048
        %v3050 = vpop.f32.mrf.mxu0
        %v3051 = vpop.f32.mrf.mxu0
        %v3052 = vadd.f32 0.0, %v3051
        %v3053 = vpop.f32.mrf.mxu0
        %3054 = vdwg.mxu0
        %v3055 = vmul.f32 %v2704, %v1077
        %v3056 = vmul.f32 %v2707, %v1077
        %v3057 = vmul.f32 %v2712, %v1077
        %v3058 = vmul.f32 %v2715, %v1077
        %v3059 = vmul.f32 %v2720, %v1077
        %v3060 = vmul.f32 %v2723, %v1077
        %v3061 = vmul.f32 %v2728, %v1077
        %v3062 = vmul.f32 %v2731, %v1077
        %v3063 = vmul.f32 %v2736, %v1081
        %v3064 = vmul.f32 %v2739, %v1081
        %v3065 = vmul.f32 %v2744, %v1081
        %v3066 = vmul.f32 %v2747, %v1081
        %v3067 = vmul.f32 %v2752, %v1081
        %v3068 = vmul.f32 %v2755, %v1081
        %v3069 = vmul.f32 %v2760, %v1081
        %v3070 = vmul.f32 %v2763, %v1081
        %v3071 = vmul.f32 %v2768, %v1085
        %v3072 = vmul.f32 %v2771, %v1085
        %v3073 = vmul.f32 %v2776, %v1085
        %v3074 = vmul.f32 %v2779, %v1085
        %v3075 = vmul.f32 %v2784, %v1085
        %v3076 = vmul.f32 %v2787, %v1085
        %v3077 = vmul.f32 %v2792, %v1085
        %v3078 = vmul.f32 %v2795, %v1085
        %v3079 = vmul.f32 %v2800, %v1089
        %v3080 = vmul.f32 %v2803, %v1089
        %v3081 = vmul.f32 %v2808, %v1089
        %v3082 = vmul.f32 %v2811, %v1089
        %v3083 = vmul.f32 %v2816, %v1089
        %v3084 = vmul.f32 %v2819, %v1089
        %v3085 = vmul.f32 %v2824, %v1089
        %v3086 = vmul.f32 %v2827, %v1089
        %v3087 = vmul.f32 %v2929, %v1077
        %v3088 = vmul.f32 %v2932, %v1077
        %v3089 = vmul.f32 %v2937, %v1077
        %v3090 = vmul.f32 %v2940, %v1077
        %v3091 = vmul.f32 %v2945, %v1077
        %v3092 = vmul.f32 %v2948, %v1077
        %v3093 = vmul.f32 %v2953, %v1077
        %v3094 = vmul.f32 %v2956, %v1077
        %v3095 = vmul.f32 %v2961, %v1081
        %v3096 = vmul.f32 %v2964, %v1081
        %v3097 = vmul.f32 %v2969, %v1081
        %v3098 = vmul.f32 %v2972, %v1081
        %v3099 = vmul.f32 %v2977, %v1081
        %v3100 = vmul.f32 %v2980, %v1081
        %v3101 = vmul.f32 %v2985, %v1081
        %v3102 = vmul.f32 %v2988, %v1081
        %v3103 = vmul.f32 %v2993, %v1085
        %v3104 = vmul.f32 %v2996, %v1085
        %v3105 = vmul.f32 %v3001, %v1085
        %v3106 = vmul.f32 %v3004, %v1085
        %v3107 = vmul.f32 %v3009, %v1085
        %v3108 = vmul.f32 %v3012, %v1085
        %v3109 = vmul.f32 %v3017, %v1085
        %v3110 = vmul.f32 %v3020, %v1085
        %v3111 = vmul.f32 %v3025, %v1089
        %v3112 = vmul.f32 %v3028, %v1089
        %v3113 = vmul.f32 %v3033, %v1089
        %v3114 = vmul.f32 %v3036, %v1089
        %v3115 = vmul.f32 %v3041, %v1089
        %v3116 = vmul.f32 %v3044, %v1089
        %v3117 = vmul.f32 %v3049, %v1089
        %v3118 = vmul.f32 %v3052, %v1089
        %v3119 = vsel %vm619, %v3055, 0.0
        %v3120 = vsel %vm619, %v3063, 0.0
        %v3121 = vadd.f32 %v3119, %v3120
        %v3122 = vsel %vm619, %v3071, 0.0
        %v3123 = vadd.f32 %v3121, %v3122
        %v3124 = vsel %vm619, %v3079, 0.0
        %v3125 = vadd.f32 %v3123, %v3124
        %v3126 = vsel %vm619, %v3056, 0.0
        %v3127 = vsel %vm619, %v3064, 0.0
        %v3128 = vadd.f32 %v3126, %v3127
        %v3129 = vsel %vm619, %v3072, 0.0
        %v3130 = vadd.f32 %v3128, %v3129
        %v3131 = vsel %vm619, %v3080, 0.0
        %v3132 = vadd.f32 %v3130, %v3131
        %v3133 = vsel %vm619, %v3057, 0.0
        %v3134 = vsel %vm619, %v3065, 0.0
        %v3135 = vadd.f32 %v3133, %v3134
        %v3136 = vsel %vm619, %v3073, 0.0
        %v3137 = vadd.f32 %v3135, %v3136
        %v3138 = vsel %vm619, %v3081, 0.0
        %v3139 = vadd.f32 %v3137, %v3138
        %v3140 = vsel %vm619, %v3058, 0.0
        %v3141 = vsel %vm619, %v3066, 0.0
        %v3142 = vadd.f32 %v3140, %v3141
        %v3143 = vsel %vm619, %v3074, 0.0
        %v3144 = vadd.f32 %v3142, %v3143
        %v3145 = vsel %vm619, %v3082, 0.0
        %v3146 = vadd.f32 %v3144, %v3145
        %v3147 = vsel %vm619, %v3059, 0.0
        %v3148 = vsel %vm619, %v3067, 0.0
        %v3149 = vadd.f32 %v3147, %v3148
        %v3150 = vsel %vm619, %v3075, 0.0
        %v3151 = vadd.f32 %v3149, %v3150
        %v3152 = vsel %vm619, %v3083, 0.0
        %v3153 = vadd.f32 %v3151, %v3152
        %v3154 = vsel %vm619, %v3060, 0.0
        %v3155 = vsel %vm619, %v3068, 0.0
        %v3156 = vadd.f32 %v3154, %v3155
        %v3157 = vsel %vm619, %v3076, 0.0
        %v3158 = vadd.f32 %v3156, %v3157
        %v3159 = vsel %vm619, %v3084, 0.0
        %v3160 = vadd.f32 %v3158, %v3159
        %v3161 = vsel %vm619, %v3061, 0.0
        %v3162 = vsel %vm619, %v3069, 0.0
        %v3163 = vadd.f32 %v3161, %v3162
        %v3164 = vsel %vm619, %v3077, 0.0
        %v3165 = vadd.f32 %v3163, %v3164
        %v3166 = vsel %vm619, %v3085, 0.0
        %v3167 = vadd.f32 %v3165, %v3166
        %v3168 = vsel %vm619, %v3062, 0.0
        %v3169 = vsel %vm619, %v3070, 0.0
        %v3170 = vadd.f32 %v3168, %v3169
        %v3171 = vsel %vm619, %v3078, 0.0
        %v3172 = vadd.f32 %v3170, %v3171
        %v3173 = vsel %vm619, %v3086, 0.0
        %v3174 = vadd.f32 %v3172, %v3173
        %v3175 = vsel %vm619, %v3087, 0.0
        %v3176 = vsel %vm619, %v3095, 0.0
        %v3177 = vadd.f32 %v3175, %v3176
        %v3178 = vsel %vm619, %v3103, 0.0
        %v3179 = vadd.f32 %v3177, %v3178
        %v3180 = vsel %vm619, %v3111, 0.0
        %v3181 = vadd.f32 %v3179, %v3180
        %v3182 = vsel %vm619, %v3088, 0.0
        %v3183 = vsel %vm619, %v3096, 0.0
        %v3184 = vadd.f32 %v3182, %v3183
        %v3185 = vsel %vm619, %v3104, 0.0
        %v3186 = vadd.f32 %v3184, %v3185
        %v3187 = vsel %vm619, %v3112, 0.0
        %v3188 = vadd.f32 %v3186, %v3187
        %v3189 = vsel %vm619, %v3089, 0.0
        %v3190 = vsel %vm619, %v3097, 0.0
        %v3191 = vadd.f32 %v3189, %v3190
        %v3192 = vsel %vm619, %v3105, 0.0
        %v3193 = vadd.f32 %v3191, %v3192
        %v3194 = vsel %vm619, %v3113, 0.0
        %v3195 = vadd.f32 %v3193, %v3194
        %v3196 = vsel %vm619, %v3090, 0.0
        %v3197 = vsel %vm619, %v3098, 0.0
        %v3198 = vadd.f32 %v3196, %v3197
        %v3199 = vsel %vm619, %v3106, 0.0
        %v3200 = vadd.f32 %v3198, %v3199
        %v3201 = vsel %vm619, %v3114, 0.0
        %v3202 = vadd.f32 %v3200, %v3201
        %v3203 = vsel %vm619, %v3091, 0.0
        %v3204 = vsel %vm619, %v3099, 0.0
        %v3205 = vadd.f32 %v3203, %v3204
        %v3206 = vsel %vm619, %v3107, 0.0
        %v3207 = vadd.f32 %v3205, %v3206
        %v3208 = vsel %vm619, %v3115, 0.0
        %v3209 = vadd.f32 %v3207, %v3208
        %v3210 = vsel %vm619, %v3092, 0.0
        %v3211 = vsel %vm619, %v3100, 0.0
        %v3212 = vadd.f32 %v3210, %v3211
        %v3213 = vsel %vm619, %v3108, 0.0
        %v3214 = vadd.f32 %v3212, %v3213
        %v3215 = vsel %vm619, %v3116, 0.0
        %v3216 = vadd.f32 %v3214, %v3215
        %v3217 = vsel %vm619, %v3093, 0.0
        %v3218 = vsel %vm619, %v3101, 0.0
        %v3219 = vadd.f32 %v3217, %v3218
        %v3220 = vsel %vm619, %v3109, 0.0
        %v3221 = vadd.f32 %v3219, %v3220
        %v3222 = vsel %vm619, %v3117, 0.0
        %v3223 = vadd.f32 %v3221, %v3222
        %v3224 = vsel %vm619, %v3094, 0.0
        %v3225 = vsel %vm619, %v3102, 0.0
        %v3226 = vadd.f32 %v3224, %v3225
        %v3227 = vsel %vm619, %v3110, 0.0
        %v3228 = vadd.f32 %v3226, %v3227
        %v3229 = vsel %vm619, %v3118, 0.0
        %v3230 = vadd.f32 %v3228, %v3229
        %v3231 = vpack.c.bf16 %v3132, %v3125
        %v3232 = vpack.c.bf16 %v3146, %v3139
        %v3233 = vpack.c.bf16 %v3160, %v3153
        %v3234 = vpack.c.bf16 %v3174, %v3167
        %v3235 = vpack.c.bf16 %v3188, %v3181
        %v3236 = vpack.c.bf16 %v3202, %v3195
        %v3237 = vpack.c.bf16 %v3216, %v3209
        %v3238 = vpack.c.bf16 %v3230, %v3223
        %v3239 = vld [vmem:[%s7] sm:$0xf]
        %v3240 = vld [vmem:[%s7 + $0x4] sm:$0xf]
        %v3241 = vld [vmem:[%s7 + $0x8] sm:$0xf]
        %v3242 = vld [vmem:[%s7 + $0xc] sm:$0xf]
        %v3243 = vld [vmem:[%s8] sm:$0x1]
        %v3245 = vlaneseq
        %v3246 = vshrl.u32 %v3245, 7
        %v3247 = vsub.s32 0, %v3246
        %v3248 = vrot.slane %v3243, %v3247
        %v3254 = vunpack.c.l.b16 %v3239
        %v3255 = vunpack.c.l.b16 %v3240
        %v3256 = vunpack.c.l.b16 %v3241
        %v3257 = vunpack.c.l.b16 %v3242
        %v3258 = vpack.c.b16 %v3255, %v3254
        %v3259 = vpack.c.b16 %v3257, %v3256
        %v3263 = vsel %vm619, %v3231, 0
        %v3266 = vsel %vm619, %v3232, 0
        %v3269 = vsel %vm619, %v3233, 0
        %v3272 = vsel %vm619, %v3234, 0
        %v3275 = vsel %vm619, %v3235, 0
        %v3278 = vsel %vm619, %v3236, 0
        %v3281 = vsel %vm619, %v3237, 0
        %v3284 = vsel %vm619, %v3238, 0
        %3286 = vmatprep.subr.bf16.mxu0 0
        %3287 = vmatpush1.bf16.msra.mxu0 0
        %3288 = vmatprep.subr.bf16.mxu0 0
        %3289 = vmatpush1.bf16.msra.mxu0 0
        %3290 = vmatprep.subr.bf16.mxu0 0
        %3291 = vmatpush1.bf16.msra.mxu0 0
        %3292 = vmatprep.subr.bf16.mxu0 0
        %3293 = vmatpush1.bf16.msra.mxu0 0
        %3294 = vmatprep.subr.bf16.mxu0 0
        %3295 = vmatpush1.bf16.msra.mxu0 0
        %3296 = vmatprep.subr.bf16.mxu0 0
        %3297 = vmatpush1.bf16.msra.mxu0 0
        %3298 = vmatprep.subr.bf16.mxu0 0
        %3299 = vmatpush1.bf16.msra.mxu0 %v3259
        %3300 = vmatprep.subr.bf16.mxu0 0
        %3301 = vmatpush1.bf16.msra.mxu0 %v3258
        %3302 = vmatprep.subr.bf16.mxu0 0
        %3303 = vmatpush2.bf16.msra.mxu0 0
        %3304 = vmatprep.subr.bf16.mxu0 0
        %3305 = vmatpush2.bf16.msra.mxu0 0
        %3306 = vmatprep.subr.bf16.mxu0 0
        %3307 = vmatpush2.bf16.msra.mxu0 0
        %3308 = vmatprep.subr.bf16.mxu0 0
        %3309 = vmatpush2.bf16.msra.mxu0 0
        %3310 = vmatprep.subr.bf16.mxu0 0
        %3311 = vmatpush2.bf16.msra.mxu0 0
        %3312 = vmatprep.subr.bf16.mxu0 0
        %3313 = vmatpush2.bf16.msra.mxu0 0
        %3314 = vmatprep.subr.bf16.mxu0 0
        %3315 = vmatpush2.bf16.msra.mxu0 0
        %3316 = vmatprep.subr.bf16.mxu0 0
        %3317 = vmatpush2.bf16.msra.mxu0 0
        %3318 = vmatprep.mubr.bf16.mxu0 0
        %3319 = vmatmul.mubr.bf16.gmra.mxu0 %v3263
        %v3320 = vpop.f32.mrf.mxu0
        %v3321 = vadd.f32 %v3248, %v3320
        %v3322 = vpop.f32.mrf.mxu0
        %v3323 = vpop.f32.mrf.mxu0
        %v3324 = vadd.f32 %v3248, %v3323
        %v3325 = vpop.f32.mrf.mxu0
        %3326 = vmatprep.mubr.bf16.mxu0 0
        %3327 = vmatmul.mubr.bf16.gmra.mxu0 %v3266
        %v3328 = vpop.f32.mrf.mxu0
        %v3329 = vadd.f32 %v3248, %v3328
        %v3330 = vpop.f32.mrf.mxu0
        %v3331 = vpop.f32.mrf.mxu0
        %v3332 = vadd.f32 %v3248, %v3331
        %v3333 = vpop.f32.mrf.mxu0
        %3334 = vmatprep.mubr.bf16.mxu0 0
        %3335 = vmatmul.mubr.bf16.gmra.mxu0 %v3269
        %v3336 = vpop.f32.mrf.mxu0
        %v3337 = vadd.f32 %v3248, %v3336
        %v3338 = vpop.f32.mrf.mxu0
        %v3339 = vpop.f32.mrf.mxu0
        %v3340 = vadd.f32 %v3248, %v3339
        %v3341 = vpop.f32.mrf.mxu0
        %3342 = vmatprep.mubr.bf16.mxu0 0
        %3343 = vmatmul.mubr.bf16.gmra.mxu0 %v3272
        %v3344 = vpop.f32.mrf.mxu0
        %v3345 = vadd.f32 %v3248, %v3344
        %v3346 = vpop.f32.mrf.mxu0
        %v3347 = vpop.f32.mrf.mxu0
        %v3348 = vadd.f32 %v3248, %v3347
        %v3349 = vpop.f32.mrf.mxu0
        %3350 = vmatprep.mubr.bf16.mxu0 0
        %3351 = vmatmul.mubr.bf16.gmra.mxu0 %v3275
        %v3352 = vpop.f32.mrf.mxu0
        %v3353 = vadd.f32 %v3248, %v3352
        %v3354 = vpop.f32.mrf.mxu0
        %v3355 = vpop.f32.mrf.mxu0
        %v3356 = vadd.f32 %v3248, %v3355
        %v3357 = vpop.f32.mrf.mxu0
        %3358 = vmatprep.mubr.bf16.mxu0 0
        %3359 = vmatmul.mubr.bf16.gmra.mxu0 %v3278
        %v3360 = vpop.f32.mrf.mxu0
        %v3361 = vadd.f32 %v3248, %v3360
        %v3362 = vpop.f32.mrf.mxu0
        %v3363 = vpop.f32.mrf.mxu0
        %v3364 = vadd.f32 %v3248, %v3363
        %v3365 = vpop.f32.mrf.mxu0
        %3366 = vmatprep.mubr.bf16.mxu0 0
        %3367 = vmatmul.mubr.bf16.gmra.mxu0 %v3281
        %v3368 = vpop.f32.mrf.mxu0
        %v3369 = vadd.f32 %v3248, %v3368
        %v3370 = vpop.f32.mrf.mxu0
        %v3371 = vpop.f32.mrf.mxu0
        %v3372 = vadd.f32 %v3248, %v3371
        %v3373 = vpop.f32.mrf.mxu0
        %3374 = vmatprep.mubr.bf16.mxu0 0
        %3375 = vmatmul.mubr.bf16.gmra.mxu0 %v3284
        %v3376 = vpop.f32.mrf.mxu0
        %v3377 = vadd.f32 %v3248, %v3376
        %v3378 = vpop.f32.mrf.mxu0
        %v3379 = vpop.f32.mrf.mxu0
        %v3380 = vadd.f32 %v3248, %v3379
        %v3381 = vpop.f32.mrf.mxu0
        %3382 = vdwg.mxu0
        %v3383 = vadd.f32 %v603, %v3321
        %v3384 = vadd.f32 %v604, %v3324
        %v3385 = vadd.f32 %v605, %v3329
        %v3386 = vadd.f32 %v606, %v3332
        %v3387 = vadd.f32 %v607, %v3337
        %v3388 = vadd.f32 %v608, %v3340
        %v3389 = vadd.f32 %v609, %v3345
        %v3390 = vadd.f32 %v610, %v3348
        %v3391 = vadd.f32 %v611, %v3353
        %v3392 = vadd.f32 %v612, %v3356
        %v3393 = vadd.f32 %v613, %v3361
        %v3394 = vadd.f32 %v614, %v3364
        %v3395 = vadd.f32 %v615, %v3369
        %v3396 = vadd.f32 %v616, %v3372
        %v3397 = vadd.f32 %v617, %v3377
        %v3398 = vadd.f32 %v618, %v3380
        %v3399 = vsel %vm619, %v3383, 0.0
        %3400 = vadd.xlane.f32.xlu0 %v3399
        %v3401 = vpop.xlane.xlu0 %3400
        %v3402 = vsel %vm619, %v3384, 0.0
        %3403 = vadd.xlane.f32.xlu0 %v3402
        %v3404 = vpop.xlane.xlu0 %3403
        %v3405 = vsel %vm619, %v3385, 0.0
        %3406 = vadd.xlane.f32.xlu0 %v3405
        %v3407 = vpop.xlane.xlu0 %3406
        %v3408 = vsel %vm619, %v3386, 0.0
        %3409 = vadd.xlane.f32.xlu0 %v3408
        %v3410 = vpop.xlane.xlu0 %3409
        %v3411 = vsel %vm619, %v3387, 0.0
        %3412 = vadd.xlane.f32.xlu0 %v3411
        %v3413 = vpop.xlane.xlu0 %3412
        %v3414 = vsel %vm619, %v3388, 0.0
        %3415 = vadd.xlane.f32.xlu0 %v3414
        %v3416 = vpop.xlane.xlu0 %3415
        %v3417 = vsel %vm619, %v3389, 0.0
        %3418 = vadd.xlane.f32.xlu0 %v3417
        %v3419 = vpop.xlane.xlu0 %3418
        %v3420 = vsel %vm619, %v3390, 0.0
        %3421 = vadd.xlane.f32.xlu0 %v3420
        %v3422 = vpop.xlane.xlu0 %3421
        %v3423 = vsel %vm619, %v3391, 0.0
        %3424 = vadd.xlane.f32.xlu0 %v3423
        %v3425 = vpop.xlane.xlu0 %3424
        %v3426 = vsel %vm619, %v3392, 0.0
        %3427 = vadd.xlane.f32.xlu0 %v3426
        %v3428 = vpop.xlane.xlu0 %3427
        %v3429 = vsel %vm619, %v3393, 0.0
        %3430 = vadd.xlane.f32.xlu0 %v3429
        %v3431 = vpop.xlane.xlu0 %3430
        %v3432 = vsel %vm619, %v3394, 0.0
        %3433 = vadd.xlane.f32.xlu0 %v3432
        %v3434 = vpop.xlane.xlu0 %3433
        %v3435 = vsel %vm619, %v3395, 0.0
        %3436 = vadd.xlane.f32.xlu0 %v3435
        %v3437 = vpop.xlane.xlu0 %3436
        %v3438 = vsel %vm619, %v3396, 0.0
        %3439 = vadd.xlane.f32.xlu0 %v3438
        %v3440 = vpop.xlane.xlu0 %3439
        %v3441 = vsel %vm619, %v3397, 0.0
        %3442 = vadd.xlane.f32.xlu0 %v3441
        %v3443 = vpop.xlane.xlu0 %3442
        %v3444 = vsel %vm619, %v3398, 0.0
        %3445 = vadd.xlane.f32.xlu0 %v3444
        %v3446 = vpop.xlane.xlu0 %3445
        %v3447 = vmul.f32 %v3383, %v3383
        %v3448 = vmul.f32 %v3384, %v3384
        %v3449 = vmul.f32 %v3385, %v3385
        %v3450 = vmul.f32 %v3386, %v3386
        %v3451 = vmul.f32 %v3387, %v3387
        %v3452 = vmul.f32 %v3388, %v3388
        %v3453 = vmul.f32 %v3389, %v3389
        %v3454 = vmul.f32 %v3390, %v3390
        %v3455 = vmul.f32 %v3391, %v3391
        %v3456 = vmul.f32 %v3392, %v3392
        %v3457 = vmul.f32 %v3393, %v3393
        %v3458 = vmul.f32 %v3394, %v3394
        %v3459 = vmul.f32 %v3395, %v3395
        %v3460 = vmul.f32 %v3396, %v3396
        %v3461 = vmul.f32 %v3397, %v3397
        %v3462 = vmul.f32 %v3398, %v3398
        %v3463 = vsel %vm619, %v3447, 0.0
        %3464 = vadd.xlane.f32.xlu0 %v3463
        %v3465 = vpop.xlane.xlu0 %3464
        %v3466 = vsel %vm619, %v3448, 0.0
        %3467 = vadd.xlane.f32.xlu0 %v3466
        %v3468 = vpop.xlane.xlu0 %3467
        %v3469 = vsel %vm619, %v3449, 0.0
        %3470 = vadd.xlane.f32.xlu0 %v3469
        %v3471 = vpop.xlane.xlu0 %3470
        %v3472 = vsel %vm619, %v3450, 0.0
        %3473 = vadd.xlane.f32.xlu0 %v3472
        %v3474 = vpop.xlane.xlu0 %3473
        %v3475 = vsel %vm619, %v3451, 0.0
        %3476 = vadd.xlane.f32.xlu0 %v3475
        %v3477 = vpop.xlane.xlu0 %3476
        %v3478 = vsel %vm619, %v3452, 0.0
        %3479 = vadd.xlane.f32.xlu0 %v3478
        %v3480 = vpop.xlane.xlu0 %3479
        %v3481 = vsel %vm619, %v3453, 0.0
        %3482 = vadd.xlane.f32.xlu0 %v3481
        %v3483 = vpop.xlane.xlu0 %3482
        %v3484 = vsel %vm619, %v3454, 0.0
        %3485 = vadd.xlane.f32.xlu0 %v3484
        %v3486 = vpop.xlane.xlu0 %3485
        %v3487 = vsel %vm619, %v3455, 0.0
        %3488 = vadd.xlane.f32.xlu0 %v3487
        %v3489 = vpop.xlane.xlu0 %3488
        %v3490 = vsel %vm619, %v3456, 0.0
        %3491 = vadd.xlane.f32.xlu0 %v3490
        %v3492 = vpop.xlane.xlu0 %3491
        %v3493 = vsel %vm619, %v3457, 0.0
        %3494 = vadd.xlane.f32.xlu0 %v3493
        %v3495 = vpop.xlane.xlu0 %3494
        %v3496 = vsel %vm619, %v3458, 0.0
        %3497 = vadd.xlane.f32.xlu0 %v3496
        %v3498 = vpop.xlane.xlu0 %3497
        %v3499 = vsel %vm619, %v3459, 0.0
        %3500 = vadd.xlane.f32.xlu0 %v3499
        %v3501 = vpop.xlane.xlu0 %3500
        %v3502 = vsel %vm619, %v3460, 0.0
        %3503 = vadd.xlane.f32.xlu0 %v3502
        %v3504 = vpop.xlane.xlu0 %3503
        %v3505 = vsel %vm619, %v3461, 0.0
        %3506 = vadd.xlane.f32.xlu0 %v3505
        %v3507 = vpop.xlane.xlu0 %3506
        %v3508 = vsel %vm619, %v3462, 0.0
        %3509 = vadd.xlane.f32.xlu0 %v3508
        %v3510 = vpop.xlane.xlu0 %3509
        %v3511 = vmul.f32 %v3401, 0.03125
        %v3512 = vmul.f32 %v3404, 0.03125
        %v3513 = vmul.f32 %v3407, 0.03125
        %v3514 = vmul.f32 %v3410, 0.03125
        %v3515 = vmul.f32 %v3413, 0.03125
        %v3516 = vmul.f32 %v3416, 0.03125
        %v3517 = vmul.f32 %v3419, 0.03125
        %v3518 = vmul.f32 %v3422, 0.03125
        %v3519 = vmul.f32 %v3425, 0.03125
        %v3520 = vmul.f32 %v3428, 0.03125
        %v3521 = vmul.f32 %v3431, 0.03125
        %v3522 = vmul.f32 %v3434, 0.03125
        %v3523 = vmul.f32 %v3437, 0.03125
        %v3524 = vmul.f32 %v3440, 0.03125
        %v3525 = vmul.f32 %v3443, 0.03125
        %v3526 = vmul.f32 %v3446, 0.03125
        %v3527 = vmul.f32 %v3465, 0.03125
        %v3528 = vmul.f32 %v3468, 0.03125
        %v3529 = vmul.f32 %v3471, 0.03125
        %v3530 = vmul.f32 %v3474, 0.03125
        %v3531 = vmul.f32 %v3477, 0.03125
        %v3532 = vmul.f32 %v3480, 0.03125
        %v3533 = vmul.f32 %v3483, 0.03125
        %v3534 = vmul.f32 %v3486, 0.03125
        %v3535 = vmul.f32 %v3489, 0.03125
        %v3536 = vmul.f32 %v3492, 0.03125
        %v3537 = vmul.f32 %v3495, 0.03125
        %v3538 = vmul.f32 %v3498, 0.03125
        %v3539 = vmul.f32 %v3501, 0.03125
        %v3540 = vmul.f32 %v3504, 0.03125
        %v3541 = vmul.f32 %v3507, 0.03125
        %v3542 = vmul.f32 %v3510, 0.03125
        %v3543 = vmul.f32 %v3511, %v3511
        %v3544 = vmul.f32 %v3512, %v3512
        %v3545 = vmul.f32 %v3513, %v3513
        %v3546 = vmul.f32 %v3514, %v3514
        %v3547 = vmul.f32 %v3515, %v3515
        %v3548 = vmul.f32 %v3516, %v3516
        %v3549 = vmul.f32 %v3517, %v3517
        %v3550 = vmul.f32 %v3518, %v3518
        %v3551 = vmul.f32 %v3519, %v3519
        %v3552 = vmul.f32 %v3520, %v3520
        %v3553 = vmul.f32 %v3521, %v3521
        %v3554 = vmul.f32 %v3522, %v3522
        %v3555 = vmul.f32 %v3523, %v3523
        %v3556 = vmul.f32 %v3524, %v3524
        %v3557 = vmul.f32 %v3525, %v3525
        %v3558 = vmul.f32 %v3526, %v3526
        %v3559 = vsub.f32 %v3527, %v3543
        %v3560 = vsub.f32 %v3528, %v3544
        %v3561 = vsub.f32 %v3529, %v3545
        %v3562 = vsub.f32 %v3530, %v3546
        %v3563 = vsub.f32 %v3531, %v3547
        %v3564 = vsub.f32 %v3532, %v3548
        %v3565 = vsub.f32 %v3533, %v3549
        %v3566 = vsub.f32 %v3534, %v3550
        %v3567 = vsub.f32 %v3535, %v3551
        %v3568 = vsub.f32 %v3536, %v3552
        %v3569 = vsub.f32 %v3537, %v3553
        %v3570 = vsub.f32 %v3538, %v3554
        %v3571 = vsub.f32 %v3539, %v3555
        %v3572 = vsub.f32 %v3540, %v3556
        %v3573 = vsub.f32 %v3541, %v3557
        %v3574 = vsub.f32 %v3542, %v3558
        %v3575 = vsub.f32 %v3383, %v3511
        %v3576 = vsub.f32 %v3384, %v3512
        %v3577 = vsub.f32 %v3385, %v3513
        %v3578 = vsub.f32 %v3386, %v3514
        %v3579 = vsub.f32 %v3387, %v3515
        %v3580 = vsub.f32 %v3388, %v3516
        %v3581 = vsub.f32 %v3389, %v3517
        %v3582 = vsub.f32 %v3390, %v3518
        %v3583 = vsub.f32 %v3391, %v3519
        %v3584 = vsub.f32 %v3392, %v3520
        %v3585 = vsub.f32 %v3393, %v3521
        %v3586 = vsub.f32 %v3394, %v3522
        %v3587 = vsub.f32 %v3395, %v3523
        %v3588 = vsub.f32 %v3396, %v3524
        %v3589 = vsub.f32 %v3397, %v3525
        %v3590 = vsub.f32 %v3398, %v3526
        %v3591 = vadd.f32 %v3559, 1e-05
        %v3592 = vadd.f32 %v3560, 1e-05
        %v3593 = vadd.f32 %v3561, 1e-05
        %v3594 = vadd.f32 %v3562, 1e-05
        %v3595 = vadd.f32 %v3563, 1e-05
        %v3596 = vadd.f32 %v3564, 1e-05
        %v3597 = vadd.f32 %v3565, 1e-05
        %v3598 = vadd.f32 %v3566, 1e-05
        %v3599 = vadd.f32 %v3567, 1e-05
        %v3600 = vadd.f32 %v3568, 1e-05
        %v3601 = vadd.f32 %v3569, 1e-05
        %v3602 = vadd.f32 %v3570, 1e-05
        %v3603 = vadd.f32 %v3571, 1e-05
        %v3604 = vadd.f32 %v3572, 1e-05
        %v3605 = vadd.f32 %v3573, 1e-05
        %v3606 = vadd.f32 %v3574, 1e-05
        %v3607 = vrsqrt.pop %v3591
        %v3608 = vrsqrt.pop %v3592
        %v3609 = vrsqrt.pop %v3593
        %v3610 = vrsqrt.pop %v3594
        %v3611 = vrsqrt.pop %v3595
        %v3612 = vrsqrt.pop %v3596
        %v3613 = vrsqrt.pop %v3597
        %v3614 = vrsqrt.pop %v3598
        %v3615 = vrsqrt.pop %v3599
        %v3616 = vrsqrt.pop %v3600
        %v3617 = vrsqrt.pop %v3601
        %v3618 = vrsqrt.pop %v3602
        %v3619 = vrsqrt.pop %v3603
        %v3620 = vrsqrt.pop %v3604
        %v3621 = vrsqrt.pop %v3605
        %v3622 = vrsqrt.pop %v3606
        %v3623 = vmul.f32 %v3575, %v3607
        %v3624 = vmul.f32 %v3576, %v3608
        %v3625 = vmul.f32 %v3577, %v3609
        %v3626 = vmul.f32 %v3578, %v3610
        %v3627 = vmul.f32 %v3579, %v3611
        %v3628 = vmul.f32 %v3580, %v3612
        %v3629 = vmul.f32 %v3581, %v3613
        %v3630 = vmul.f32 %v3582, %v3614
        %v3631 = vmul.f32 %v3583, %v3615
        %v3632 = vmul.f32 %v3584, %v3616
        %v3633 = vmul.f32 %v3585, %v3617
        %v3634 = vmul.f32 %v3586, %v3618
        %v3635 = vmul.f32 %v3587, %v3619
        %v3636 = vmul.f32 %v3588, %v3620
        %v3637 = vmul.f32 %v3589, %v3621
        %v3638 = vmul.f32 %v3590, %v3622
        %v3639 = vld [vmem:[%s9] sm:$0x1]
        %v3641 = vlaneseq
        %v3642 = vshrl.u32 %v3641, 7
        %v3643 = vsub.s32 0, %v3642
        %v3644 = vrot.slane %v3639, %v3643
        %v3646 = vmul.f32 %v3623, %v3644
        %v3647 = vmul.f32 %v3624, %v3644
        %v3648 = vmul.f32 %v3625, %v3644
        %v3649 = vmul.f32 %v3626, %v3644
        %v3650 = vmul.f32 %v3627, %v3644
        %v3651 = vmul.f32 %v3628, %v3644
        %v3652 = vmul.f32 %v3629, %v3644
        %v3653 = vmul.f32 %v3630, %v3644
        %v3654 = vmul.f32 %v3631, %v3644
        %v3655 = vmul.f32 %v3632, %v3644
        %v3656 = vmul.f32 %v3633, %v3644
        %v3657 = vmul.f32 %v3634, %v3644
        %v3658 = vmul.f32 %v3635, %v3644
        %v3659 = vmul.f32 %v3636, %v3644
        %v3660 = vmul.f32 %v3637, %v3644
        %v3661 = vmul.f32 %v3638, %v3644
        %v3662 = vld [vmem:[%s10] sm:$0x1]
        %v3664 = vlaneseq
        %v3665 = vshrl.u32 %v3664, 7
        %v3666 = vsub.s32 0, %v3665
        %v3667 = vrot.slane %v3662, %v3666
        %v3669 = vadd.f32 %v3646, %v3667
        %v3670 = vadd.f32 %v3647, %v3667
        %v3671 = vadd.f32 %v3648, %v3667
        %v3672 = vadd.f32 %v3649, %v3667
        %v3673 = vadd.f32 %v3650, %v3667
        %v3674 = vadd.f32 %v3651, %v3667
        %v3675 = vadd.f32 %v3652, %v3667
        %v3676 = vadd.f32 %v3653, %v3667
        %v3677 = vadd.f32 %v3654, %v3667
        %v3678 = vadd.f32 %v3655, %v3667
        %v3679 = vadd.f32 %v3656, %v3667
        %v3680 = vadd.f32 %v3657, %v3667
        %v3681 = vadd.f32 %v3658, %v3667
        %v3682 = vadd.f32 %v3659, %v3667
        %v3683 = vadd.f32 %v3660, %v3667
        %v3684 = vadd.f32 %v3661, %v3667
        %v3685 = vpack.c.bf16 %v3670, %v3669
        %v3686 = vpack.c.bf16 %v3672, %v3671
        %v3687 = vpack.c.bf16 %v3674, %v3673
        %v3688 = vpack.c.bf16 %v3676, %v3675
        %v3689 = vpack.c.bf16 %v3678, %v3677
        %v3690 = vpack.c.bf16 %v3680, %v3679
        %v3691 = vpack.c.bf16 %v3682, %v3681
        %v3692 = vpack.c.bf16 %v3684, %v3683
        %v3693 = vld [vmem:[%s11] sm:$0xf]
        %v3694 = vld [vmem:[%s11 + $0x4] sm:$0xf]
        %v3695 = vld [vmem:[%s11 + $0x8] sm:$0xf]
        %v3696 = vld [vmem:[%s11 + $0xc] sm:$0xf]
        %v3697 = vld [vmem:[%s12] sm:$0x1]
        %v3699 = vlaneseq
        %v3700 = vshrl.u32 %v3699, 7
        %v3701 = vsub.s32 0, %v3700
        %v3702 = vrot.slane %v3697, %v3701
        %v3708 = vunpack.c.l.b16 %v3693
        %v3709 = vunpack.c.l.b16 %v3694
        %v3710 = vunpack.c.l.b16 %v3695
        %v3711 = vunpack.c.l.b16 %v3696
        %v3712 = vpack.c.b16 %v3709, %v3708
        %v3713 = vpack.c.b16 %v3711, %v3710
        %v3717 = vsel %vm619, %v3685, 0
        %v3720 = vsel %vm619, %v3686, 0
        %v3723 = vsel %vm619, %v3687, 0
        %v3726 = vsel %vm619, %v3688, 0
        %v3729 = vsel %vm619, %v3689, 0
        %v3732 = vsel %vm619, %v3690, 0
        %v3735 = vsel %vm619, %v3691, 0
        %v3738 = vsel %vm619, %v3692, 0
        %3740 = vmatprep.subr.bf16.mxu0 0
        %3741 = vmatpush1.bf16.msra.mxu0 0
        %3742 = vmatprep.subr.bf16.mxu0 0
        %3743 = vmatpush1.bf16.msra.mxu0 0
        %3744 = vmatprep.subr.bf16.mxu0 0
        %3745 = vmatpush1.bf16.msra.mxu0 0
        %3746 = vmatprep.subr.bf16.mxu0 0
        %3747 = vmatpush1.bf16.msra.mxu0 0
        %3748 = vmatprep.subr.bf16.mxu0 0
        %3749 = vmatpush1.bf16.msra.mxu0 0
        %3750 = vmatprep.subr.bf16.mxu0 0
        %3751 = vmatpush1.bf16.msra.mxu0 0
        %3752 = vmatprep.subr.bf16.mxu0 0
        %3753 = vmatpush1.bf16.msra.mxu0 %v3713
        %3754 = vmatprep.subr.bf16.mxu0 0
        %3755 = vmatpush1.bf16.msra.mxu0 %v3712
        %3756 = vmatprep.subr.bf16.mxu0 0
        %3757 = vmatpush2.bf16.msra.mxu0 0
        %3758 = vmatprep.subr.bf16.mxu0 0
        %3759 = vmatpush2.bf16.msra.mxu0 0
        %3760 = vmatprep.subr.bf16.mxu0 0
        %3761 = vmatpush2.bf16.msra.mxu0 0
        %3762 = vmatprep.subr.bf16.mxu0 0
        %3763 = vmatpush2.bf16.msra.mxu0 0
        %3764 = vmatprep.subr.bf16.mxu0 0
        %3765 = vmatpush2.bf16.msra.mxu0 0
        %3766 = vmatprep.subr.bf16.mxu0 0
        %3767 = vmatpush2.bf16.msra.mxu0 0
        %3768 = vmatprep.subr.bf16.mxu0 0
        %3769 = vmatpush2.bf16.msra.mxu0 0
        %3770 = vmatprep.subr.bf16.mxu0 0
        %3771 = vmatpush2.bf16.msra.mxu0 0
        %3772 = vmatprep.mubr.bf16.mxu0 0
        %3773 = vmatmul.mubr.bf16.gmra.mxu0 %v3717
        %v3774 = vpop.f32.mrf.mxu0
        %v3775 = vadd.f32 %v3702, %v3774
        %v3776 = vpop.f32.mrf.mxu0
        %v3777 = vpop.f32.mrf.mxu0
        %v3778 = vadd.f32 %v3702, %v3777
        %v3779 = vpop.f32.mrf.mxu0
        %3780 = vmatprep.mubr.bf16.mxu0 0
        %3781 = vmatmul.mubr.bf16.gmra.mxu0 %v3720
        %v3782 = vpop.f32.mrf.mxu0
        %v3783 = vadd.f32 %v3702, %v3782
        %v3784 = vpop.f32.mrf.mxu0
        %v3785 = vpop.f32.mrf.mxu0
        %v3786 = vadd.f32 %v3702, %v3785
        %v3787 = vpop.f32.mrf.mxu0
        %3788 = vmatprep.mubr.bf16.mxu0 0
        %3789 = vmatmul.mubr.bf16.gmra.mxu0 %v3723
        %v3790 = vpop.f32.mrf.mxu0
        %v3791 = vadd.f32 %v3702, %v3790
        %v3792 = vpop.f32.mrf.mxu0
        %v3793 = vpop.f32.mrf.mxu0
        %v3794 = vadd.f32 %v3702, %v3793
        %v3795 = vpop.f32.mrf.mxu0
        %3796 = vmatprep.mubr.bf16.mxu0 0
        %3797 = vmatmul.mubr.bf16.gmra.mxu0 %v3726
        %v3798 = vpop.f32.mrf.mxu0
        %v3799 = vadd.f32 %v3702, %v3798
        %v3800 = vpop.f32.mrf.mxu0
        %v3801 = vpop.f32.mrf.mxu0
        %v3802 = vadd.f32 %v3702, %v3801
        %v3803 = vpop.f32.mrf.mxu0
        %3804 = vmatprep.mubr.bf16.mxu0 0
        %3805 = vmatmul.mubr.bf16.gmra.mxu0 %v3729
        %v3806 = vpop.f32.mrf.mxu0
        %v3807 = vadd.f32 %v3702, %v3806
        %v3808 = vpop.f32.mrf.mxu0
        %v3809 = vpop.f32.mrf.mxu0
        %v3810 = vadd.f32 %v3702, %v3809
        %v3811 = vpop.f32.mrf.mxu0
        %3812 = vmatprep.mubr.bf16.mxu0 0
        %3813 = vmatmul.mubr.bf16.gmra.mxu0 %v3732
        %v3814 = vpop.f32.mrf.mxu0
        %v3815 = vadd.f32 %v3702, %v3814
        %v3816 = vpop.f32.mrf.mxu0
        %v3817 = vpop.f32.mrf.mxu0
        %v3818 = vadd.f32 %v3702, %v3817
        %v3819 = vpop.f32.mrf.mxu0
        %3820 = vmatprep.mubr.bf16.mxu0 0
        %3821 = vmatmul.mubr.bf16.gmra.mxu0 %v3735
        %v3822 = vpop.f32.mrf.mxu0
        %v3823 = vadd.f32 %v3702, %v3822
        %v3824 = vpop.f32.mrf.mxu0
        %v3825 = vpop.f32.mrf.mxu0
        %v3826 = vadd.f32 %v3702, %v3825
        %v3827 = vpop.f32.mrf.mxu0
        %3828 = vmatprep.mubr.bf16.mxu0 0
        %3829 = vmatmul.mubr.bf16.gmra.mxu0 %v3738
        %v3830 = vpop.f32.mrf.mxu0
        %v3831 = vadd.f32 %v3702, %v3830
        %v3832 = vpop.f32.mrf.mxu0
        %v3833 = vpop.f32.mrf.mxu0
        %v3834 = vadd.f32 %v3702, %v3833
        %v3835 = vpop.f32.mrf.mxu0
        %3836 = vdwg.mxu0
        %v3837 = vmul.f32 %v3775, 0.5
        %v3838 = vmul.f32 %v3778, 0.5
        %v3839 = vmul.f32 %v3783, 0.5
        %v3840 = vmul.f32 %v3786, 0.5
        %v3841 = vmul.f32 %v3791, 0.5
        %v3842 = vmul.f32 %v3794, 0.5
        %v3843 = vmul.f32 %v3799, 0.5
        %v3844 = vmul.f32 %v3802, 0.5
        %v3845 = vmul.f32 %v3807, 0.5
        %v3846 = vmul.f32 %v3810, 0.5
        %v3847 = vmul.f32 %v3815, 0.5
        %v3848 = vmul.f32 %v3818, 0.5
        %v3849 = vmul.f32 %v3823, 0.5
        %v3850 = vmul.f32 %v3826, 0.5
        %v3851 = vmul.f32 %v3831, 0.5
        %v3852 = vmul.f32 %v3834, 0.5
        %v3853 = vmul.f32 %v3775, 0.70710677
        %v3854 = vmul.f32 %v3778, 0.70710677
        %v3855 = vmul.f32 %v3783, 0.70710677
        %v3856 = vmul.f32 %v3786, 0.70710677
        %v3857 = vmul.f32 %v3791, 0.70710677
        %v3858 = vmul.f32 %v3794, 0.70710677
        %v3859 = vmul.f32 %v3799, 0.70710677
        %v3860 = vmul.f32 %v3802, 0.70710677
        %v3861 = vmul.f32 %v3807, 0.70710677
        %v3862 = vmul.f32 %v3810, 0.70710677
        %v3863 = vmul.f32 %v3815, 0.70710677
        %v3864 = vmul.f32 %v3818, 0.70710677
        %v3865 = vmul.f32 %v3823, 0.70710677
        %v3866 = vmul.f32 %v3826, 0.70710677
        %v3867 = vmul.f32 %v3831, 0.70710677
        %v3868 = vmul.f32 %v3834, 0.70710677
        %v3869 = verf.f32.pop %v3853
        %v3870 = verf.f32.pop %v3854
        %v3871 = verf.f32.pop %v3855
        %v3872 = verf.f32.pop %v3856
        %v3873 = verf.f32.pop %v3857
        %v3874 = verf.f32.pop %v3858
        %v3875 = verf.f32.pop %v3859
        %v3876 = verf.f32.pop %v3860
        %v3877 = verf.f32.pop %v3861
        %v3878 = verf.f32.pop %v3862
        %v3879 = verf.f32.pop %v3863
        %v3880 = verf.f32.pop %v3864
        %v3881 = verf.f32.pop %v3865
        %v3882 = verf.f32.pop %v3866
        %v3883 = verf.f32.pop %v3867
        %v3884 = verf.f32.pop %v3868
        %v3885 = vadd.f32 %v3869, 1.0
        %v3886 = vadd.f32 %v3870, 1.0
        %v3887 = vadd.f32 %v3871, 1.0
        %v3888 = vadd.f32 %v3872, 1.0
        %v3889 = vadd.f32 %v3873, 1.0
        %v3890 = vadd.f32 %v3874, 1.0
        %v3891 = vadd.f32 %v3875, 1.0
        %v3892 = vadd.f32 %v3876, 1.0
        %v3893 = vadd.f32 %v3877, 1.0
        %v3894 = vadd.f32 %v3878, 1.0
        %v3895 = vadd.f32 %v3879, 1.0
        %v3896 = vadd.f32 %v3880, 1.0
        %v3897 = vadd.f32 %v3881, 1.0
        %v3898 = vadd.f32 %v3882, 1.0
        %v3899 = vadd.f32 %v3883, 1.0
        %v3900 = vadd.f32 %v3884, 1.0
        %v3901 = vmul.f32 %v3837, %v3885
        %v3902 = vmul.f32 %v3838, %v3886
        %v3903 = vmul.f32 %v3839, %v3887
        %v3904 = vmul.f32 %v3840, %v3888
        %v3905 = vmul.f32 %v3841, %v3889
        %v3906 = vmul.f32 %v3842, %v3890
        %v3907 = vmul.f32 %v3843, %v3891
        %v3908 = vmul.f32 %v3844, %v3892
        %v3909 = vmul.f32 %v3845, %v3893
        %v3910 = vmul.f32 %v3846, %v3894
        %v3911 = vmul.f32 %v3847, %v3895
        %v3912 = vmul.f32 %v3848, %v3896
        %v3913 = vmul.f32 %v3849, %v3897
        %v3914 = vmul.f32 %v3850, %v3898
        %v3915 = vmul.f32 %v3851, %v3899
        %v3916 = vmul.f32 %v3852, %v3900
        %v3917 = vpack.c.bf16 %v3902, %v3901
        %v3918 = vpack.c.bf16 %v3904, %v3903
        %v3919 = vpack.c.bf16 %v3906, %v3905
        %v3920 = vpack.c.bf16 %v3908, %v3907
        %v3921 = vpack.c.bf16 %v3910, %v3909
        %v3922 = vpack.c.bf16 %v3912, %v3911
        %v3923 = vpack.c.bf16 %v3914, %v3913
        %v3924 = vpack.c.bf16 %v3916, %v3915
        %v3925 = vld [vmem:[%s13] sm:$0xf]
        %v3926 = vld [vmem:[%s13 + $0x4] sm:$0xf]
        %v3927 = vld [vmem:[%s13 + $0x8] sm:$0xf]
        %v3928 = vld [vmem:[%s13 + $0xc] sm:$0xf]
        %v3929 = vld [vmem:[%s13 + $0x10] sm:$0xf]
        %v3930 = vld [vmem:[%s13 + $0x14] sm:$0xf]
        %v3931 = vld [vmem:[%s13 + $0x18] sm:$0xf]
        %v3932 = vld [vmem:[%s13 + $0x1c] sm:$0xf]
        %v3933 = vld [vmem:[%s13 + $0x20] sm:$0xf]
        %v3934 = vld [vmem:[%s13 + $0x24] sm:$0xf]
        %v3935 = vld [vmem:[%s13 + $0x28] sm:$0xf]
        %v3936 = vld [vmem:[%s13 + $0x2c] sm:$0xf]
        %v3937 = vld [vmem:[%s13 + $0x30] sm:$0xf]
        %v3938 = vld [vmem:[%s13 + $0x34] sm:$0xf]
        %v3939 = vld [vmem:[%s13 + $0x38] sm:$0xf]
        %v3940 = vld [vmem:[%s13 + $0x3c] sm:$0xf]
        %v3941 = vld [vmem:[%s14] sm:$0x1]
        %v3943 = vlaneseq
        %v3944 = vshrl.u32 %v3943, 7
        %v3945 = vsub.s32 0, %v3944
        %v3946 = vrot.slane %v3941, %v3945
        %v3964 = vunpack.c.l.b16 %v3925
        %v3965 = vunpack.c.l.b16 %v3926
        %v3966 = vunpack.c.l.b16 %v3927
        %v3967 = vunpack.c.l.b16 %v3928
        %v3968 = vunpack.c.l.b16 %v3929
        %v3969 = vunpack.c.l.b16 %v3930
        %v3970 = vunpack.c.l.b16 %v3931
        %v3971 = vunpack.c.l.b16 %v3932
        %v3972 = vunpack.c.l.b16 %v3933
        %v3973 = vunpack.c.l.b16 %v3934
        %v3974 = vunpack.c.l.b16 %v3935
        %v3975 = vunpack.c.l.b16 %v3936
        %v3976 = vunpack.c.l.b16 %v3937
        %v3977 = vunpack.c.l.b16 %v3938
        %v3978 = vunpack.c.l.b16 %v3939
        %v3979 = vunpack.c.l.b16 %v3940
        %v3980 = vpack.c.b16 %v3965, %v3964
        %v3981 = vpack.c.b16 %v3967, %v3966
        %v3982 = vpack.c.b16 %v3969, %v3968
        %v3983 = vpack.c.b16 %v3971, %v3970
        %v3984 = vpack.c.b16 %v3973, %v3972
        %v3985 = vpack.c.b16 %v3975, %v3974
        %v3986 = vpack.c.b16 %v3977, %v3976
        %v3987 = vpack.c.b16 %v3979, %v3978
        %3996 = vmatprep.subr.bf16.mxu0 0
        %3997 = vmatpush1.bf16.msra.mxu0 %v3987
        %3998 = vmatprep.subr.bf16.mxu0 0
        %3999 = vmatpush1.bf16.msra.mxu0 %v3986
        %4000 = vmatprep.subr.bf16.mxu0 0
        %4001 = vmatpush1.bf16.msra.mxu0 %v3985
        %4002 = vmatprep.subr.bf16.mxu0 0
        %4003 = vmatpush1.bf16.msra.mxu0 %v3984
        %4004 = vmatprep.subr.bf16.mxu0 0
        %4005 = vmatpush1.bf16.msra.mxu0 %v3983
        %4006 = vmatprep.subr.bf16.mxu0 0
        %4007 = vmatpush1.bf16.msra.mxu0 %v3982
        %4008 = vmatprep.subr.bf16.mxu0 0
        %4009 = vmatpush1.bf16.msra.mxu0 %v3981
        %4010 = vmatprep.subr.bf16.mxu0 0
        %4011 = vmatpush1.bf16.msra.mxu0 %v3980
        %4012 = vmatprep.subr.bf16.mxu0 0
        %4013 = vmatpush2.bf16.msra.mxu0 0
        %4014 = vmatprep.subr.bf16.mxu0 0
        %4015 = vmatpush2.bf16.msra.mxu0 0
        %4016 = vmatprep.subr.bf16.mxu0 0
        %4017 = vmatpush2.bf16.msra.mxu0 0
        %4018 = vmatprep.subr.bf16.mxu0 0
        %4019 = vmatpush2.bf16.msra.mxu0 0
        %4020 = vmatprep.subr.bf16.mxu0 0
        %4021 = vmatpush2.bf16.msra.mxu0 0
        %4022 = vmatprep.subr.bf16.mxu0 0
        %4023 = vmatpush2.bf16.msra.mxu0 0
        %4024 = vmatprep.subr.bf16.mxu0 0
        %4025 = vmatpush2.bf16.msra.mxu0 0
        %4026 = vmatprep.subr.bf16.mxu0 0
        %4027 = vmatpush2.bf16.msra.mxu0 0
        %4028 = vmatprep.mubr.bf16.mxu0 0
        %4029 = vmatmul.mubr.bf16.gmra.mxu0 %v3917
        %v4030 = vpop.f32.mrf.mxu0
        %v4031 = vadd.f32 %v3946, %v4030
        %v4032 = vpop.f32.mrf.mxu0
        %v4033 = vpop.f32.mrf.mxu0
        %v4034 = vadd.f32 %v3946, %v4033
        %v4035 = vpop.f32.mrf.mxu0
        %4036 = vmatprep.mubr.bf16.mxu0 0
        %4037 = vmatmul.mubr.bf16.gmra.mxu0 %v3918
        %v4038 = vpop.f32.mrf.mxu0
        %v4039 = vadd.f32 %v3946, %v4038
        %v4040 = vpop.f32.mrf.mxu0
        %v4041 = vpop.f32.mrf.mxu0
        %v4042 = vadd.f32 %v3946, %v4041
        %v4043 = vpop.f32.mrf.mxu0
        %4044 = vmatprep.mubr.bf16.mxu0 0
        %4045 = vmatmul.mubr.bf16.gmra.mxu0 %v3919
        %v4046 = vpop.f32.mrf.mxu0
        %v4047 = vadd.f32 %v3946, %v4046
        %v4048 = vpop.f32.mrf.mxu0
        %v4049 = vpop.f32.mrf.mxu0
        %v4050 = vadd.f32 %v3946, %v4049
        %v4051 = vpop.f32.mrf.mxu0
        %4052 = vmatprep.mubr.bf16.mxu0 0
        %4053 = vmatmul.mubr.bf16.gmra.mxu0 %v3920
        %v4054 = vpop.f32.mrf.mxu0
        %v4055 = vadd.f32 %v3946, %v4054
        %v4056 = vpop.f32.mrf.mxu0
        %v4057 = vpop.f32.mrf.mxu0
        %v4058 = vadd.f32 %v3946, %v4057
        %v4059 = vpop.f32.mrf.mxu0
        %4060 = vmatprep.mubr.bf16.mxu0 0
        %4061 = vmatmul.mubr.bf16.gmra.mxu0 %v3921
        %v4062 = vpop.f32.mrf.mxu0
        %v4063 = vadd.f32 %v3946, %v4062
        %v4064 = vpop.f32.mrf.mxu0
        %v4065 = vpop.f32.mrf.mxu0
        %v4066 = vadd.f32 %v3946, %v4065
        %v4067 = vpop.f32.mrf.mxu0
        %4068 = vmatprep.mubr.bf16.mxu0 0
        %4069 = vmatmul.mubr.bf16.gmra.mxu0 %v3922
        %v4070 = vpop.f32.mrf.mxu0
        %v4071 = vadd.f32 %v3946, %v4070
        %v4072 = vpop.f32.mrf.mxu0
        %v4073 = vpop.f32.mrf.mxu0
        %v4074 = vadd.f32 %v3946, %v4073
        %v4075 = vpop.f32.mrf.mxu0
        %4076 = vmatprep.mubr.bf16.mxu0 0
        %4077 = vmatmul.mubr.bf16.gmra.mxu0 %v3923
        %v4078 = vpop.f32.mrf.mxu0
        %v4079 = vadd.f32 %v3946, %v4078
        %v4080 = vpop.f32.mrf.mxu0
        %v4081 = vpop.f32.mrf.mxu0
        %v4082 = vadd.f32 %v3946, %v4081
        %v4083 = vpop.f32.mrf.mxu0
        %4084 = vmatprep.mubr.bf16.mxu0 0
        %4085 = vmatmul.mubr.bf16.gmra.mxu0 %v3924
        %v4086 = vpop.f32.mrf.mxu0
        %v4087 = vadd.f32 %v3946, %v4086
        %v4088 = vpop.f32.mrf.mxu0
        %v4089 = vpop.f32.mrf.mxu0
        %v4090 = vadd.f32 %v3946, %v4089
        %v4091 = vpop.f32.mrf.mxu0
        %4092 = vdwg.mxu0
        %v4093 = vadd.f32 %v3383, %v4031
        %v4094 = vadd.f32 %v3384, %v4034
        %v4095 = vadd.f32 %v3385, %v4039
        %v4096 = vadd.f32 %v3386, %v4042
        %v4097 = vadd.f32 %v3387, %v4047
        %v4098 = vadd.f32 %v3388, %v4050
        %v4099 = vadd.f32 %v3389, %v4055
        %v4100 = vadd.f32 %v3390, %v4058
        %v4101 = vadd.f32 %v3391, %v4063
        %v4102 = vadd.f32 %v3392, %v4066
        %v4103 = vadd.f32 %v3393, %v4071
        %v4104 = vadd.f32 %v3394, %v4074
        %v4105 = vadd.f32 %v3395, %v4079
        %v4106 = vadd.f32 %v3396, %v4082
        %v4107 = vadd.f32 %v3397, %v4087
        %v4108 = vadd.f32 %v3398, %v4090
        %4109 = vst.msk [vmem:[%s601] sm:$0xff] %vm619, %v4093
        %4110 = vst.msk [vmem:[%s601 + $0x8] sm:$0xff] %vm619, %v4094
        %4111 = vst.msk [vmem:[%s601 + $0x10] sm:$0xff] %vm619, %v4095
        %4112 = vst.msk [vmem:[%s601 + $0x18] sm:$0xff] %vm619, %v4096
        %4113 = vst.msk [vmem:[%s601 + $0x20] sm:$0xff] %vm619, %v4097
        %4114 = vst.msk [vmem:[%s601 + $0x28] sm:$0xff] %vm619, %v4098
        %4115 = vst.msk [vmem:[%s601 + $0x30] sm:$0xff] %vm619, %v4099
        %4116 = vst.msk [vmem:[%s601 + $0x38] sm:$0xff] %vm619, %v4100
        %4117 = vst.msk [vmem:[%s601 + $0x40] sm:$0xff] %vm619, %v4101
        %4118 = vst.msk [vmem:[%s601 + $0x48] sm:$0xff] %vm619, %v4102
        %4119 = vst.msk [vmem:[%s601 + $0x50] sm:$0xff] %vm619, %v4103
        %4120 = vst.msk [vmem:[%s601 + $0x58] sm:$0xff] %vm619, %v4104
        %4121 = vst.msk [vmem:[%s601 + $0x60] sm:$0xff] %vm619, %v4105
        %4122 = vst.msk [vmem:[%s601 + $0x68] sm:$0xff] %vm619, %v4106
        %4123 = vst.msk [vmem:[%s601 + $0x70] sm:$0xff] %vm619, %v4107
        %4124 = vst.msk [vmem:[%s601 + $0x78] sm:$0xff] %vm619, %v4108
        %s4125 = sand.u32 %s370, 1
        %s4126 = sand.u32 %s370, 1
        %s4127 = smul.addr %s4126, 128
        %s4128 = scalar_lea.vmem [#allocation3], %s4127
        // Predicated region
        $region119: #{basic_layer_forward.2} parent=113 // pred_check
          %p4129 = pneg %p380
        $region120: #{basic_layer_forward.2} parent=113 // pred_check_branch
          %4131 = sbr.rel (%p4129) target = $region122
        $region121: #{basic_layer_forward.2} parent=113 // pred_region
          %s4132 = smul.addr %s30, 32
          %s4133 = sadd.s32 %s31, %s4132
          %s4134 = smul.addr %s4133, 8
          %s4135 = scalar_lea.vmem %s15, %s4134
          // Predicated region
          $region123: #{basic_layer_forward.2} parent=121 // pred_check
            _
          $region124: #{basic_layer_forward.2} parent=121 // pred_check_branch
            %4137 = sbr.rel (0) target = $region126
          $region125: #{basic_layer_forward.2} parent=121 // pred_region
            // Predicated region
            $region127: #{basic_layer_forward.2} parent=125 // pred_check
              _
            $region128: #{basic_layer_forward.2} parent=125 // pred_check_branch
              %4139 = sbr.rel (0) target = $region130
            $region129: #{basic_layer_forward.2} parent=125 // pred_region
              // Predicated region
              $region142: #{basic_layer_forward.2} parent=129 // pred_check
                _
              $region143: #{basic_layer_forward.2} parent=129 // pred_check_branch
                %4185 = sbr.rel (0) target = $region145
              $region144: #{basic_layer_forward.2} parent=129 // pred_region
                loop: start=0, step=1, limit=1
                $region146: #{basic_layer_forward.2} parent=144 // loop_pre_header
                  _
                $region147: #{basic_layer_forward.2} parent=144 // loop_header
                  %s4187 = sphi 0, %s4191
                  %p4188 = scmp.ge.s32.totalorder %s4187, 1
                  %s4192 = sphi %s4128, %s4128
                  %s4193 = sphi %s4135, %s4135
                $region148: #{basic_layer_forward.2} parent=144 // loop_header_branch
                  %4190 = sbr.rel (%p4188) target = $region152
                $region149: #{basic_layer_forward.2} parent=144 // loop_body
                  %v4194 = vld [vmem:[%s4192] sm:$0xff]
                  %4195 = vst [vmem:[%s4193] sm:$0xff] %v4194
                  %v4196 = vld [vmem:[%s4192 + $0x8] sm:$0xff]
                  %4197 = vst [vmem:[%s4193 + $0x10] sm:$0xff] %v4196
                  %v4198 = vld [vmem:[%s4192 + $0x10] sm:$0xff]
                  %4199 = vst [vmem:[%s4193 + $0x20] sm:$0xff] %v4198
                  %v4200 = vld [vmem:[%s4192 + $0x18] sm:$0xff]
                  %4201 = vst [vmem:[%s4193 + $0x30] sm:$0xff] %v4200
                  %v4202 = vld [vmem:[%s4192 + $0x20] sm:$0xff]
                  %4203 = vst [vmem:[%s4193 + $0x40] sm:$0xff] %v4202
                  %v4204 = vld [vmem:[%s4192 + $0x28] sm:$0xff]
                  %4205 = vst [vmem:[%s4193 + $0x50] sm:$0xff] %v4204
                  %v4206 = vld [vmem:[%s4192 + $0x30] sm:$0xff]
                  %4207 = vst [vmem:[%s4193 + $0x60] sm:$0xff] %v4206
                  %v4208 = vld [vmem:[%s4192 + $0x38] sm:$0xff]
                  %4209 = vst [vmem:[%s4193 + $0x70] sm:$0xff] %v4208
                  %v4210 = vld [vmem:[%s4192 + $0x40] sm:$0xff]
                  %4211 = vst [vmem:[%s4193 + $0x80] sm:$0xff] %v4210
                  %v4212 = vld [vmem:[%s4192 + $0x48] sm:$0xff]
                  %4213 = vst [vmem:[%s4193 + $0x90] sm:$0xff] %v4212
                  %v4214 = vld [vmem:[%s4192 + $0x50] sm:$0xff]
                  %4215 = vst [vmem:[%s4193 + $0xa0] sm:$0xff] %v4214
                  %v4216 = vld [vmem:[%s4192 + $0x58] sm:$0xff]
                  %4217 = vst [vmem:[%s4193 + $0xb0] sm:$0xff] %v4216
                  %v4218 = vld [vmem:[%s4192 + $0x60] sm:$0xff]
                  %4219 = vst [vmem:[%s4193 + $0xc0] sm:$0xff] %v4218
                  %v4220 = vld [vmem:[%s4192 + $0x68] sm:$0xff]
                  %4221 = vst [vmem:[%s4193 + $0xd0] sm:$0xff] %v4220
                  %v4222 = vld [vmem:[%s4192 + $0x70] sm:$0xff]
                  %4223 = vst [vmem:[%s4193 + $0xe0] sm:$0xff] %v4222
                  %v4224 = vld [vmem:[%s4192 + $0x78] sm:$0xff]
                  %4225 = vst [vmem:[%s4193 + $0xf0] sm:$0xff] %v4224
                $region150: #{basic_layer_forward.2} parent=144 // loop_footer
                  %s4191 = sadd.s32 1, %s4187
                $region151: #{basic_layer_forward.2} parent=144 // loop_footer_branch
                  %4186 = sbr.rel target = $region147
                $region152: #{basic_layer_forward.2} parent=144 // loop_exit
                  _
              $region145: #{basic_layer_forward.2} parent=129 // pred_fallthru
                _
              // Predicated region
              $region153: #{basic_layer_forward.2} parent=129 // pred_check
                _
              $region154: #{basic_layer_forward.2} parent=129 // pred_check_branch
                %4227 = sbr.rel target = $region156
              $region155: #{basic_layer_forward.2} parent=129 // pred_region
                _
              $region156: #{basic_layer_forward.2} parent=129 // pred_fallthru
                _
            $region130: #{basic_layer_forward.2} parent=125 // pred_fallthru
              _
            // Predicated region
            $region131: #{basic_layer_forward.2} parent=125 // pred_check
              _
            $region132: #{basic_layer_forward.2} parent=125 // pred_check_branch
              %4141 = sbr.rel target = $region134
            $region133: #{basic_layer_forward.2} parent=125 // pred_region
              %s4143 = ssub.s32 256, 1
              loop: start=0, step=1, limit=1
              $region135: #{basic_layer_forward.2} parent=133 // loop_pre_header
                _
              $region136: #{basic_layer_forward.2} parent=133 // loop_header
                %s4145 = sphi 0, %s4149
                %p4146 = scmp.ge.s32.totalorder %s4145, 1
                %s4150 = sphi %s4128, %s4128
                %s4151 = sphi %s4135, %s4135
              $region137: #{basic_layer_forward.2} parent=133 // loop_header_branch
                %4148 = sbr.rel (%p4146) target = $region141
              $region138: #{basic_layer_forward.2} parent=133 // loop_body
                %v4152 = vld [vmem:[%s4150] sm:%s4143]
                %4153 = vst [vmem:[%s4151] sm:%s4143] %v4152
                %v4154 = vld [vmem:[%s4150 + $0x8] sm:%s4143]
                %4155 = vst [vmem:[%s4151 + $0x10] sm:%s4143] %v4154
                %v4156 = vld [vmem:[%s4150 + $0x10] sm:%s4143]
                %4157 = vst [vmem:[%s4151 + $0x20] sm:%s4143] %v4156
                %v4158 = vld [vmem:[%s4150 + $0x18] sm:%s4143]
                %4159 = vst [vmem:[%s4151 + $0x30] sm:%s4143] %v4158
                %v4160 = vld [vmem:[%s4150 + $0x20] sm:%s4143]
                %4161 = vst [vmem:[%s4151 + $0x40] sm:%s4143] %v4160
                %v4162 = vld [vmem:[%s4150 + $0x28] sm:%s4143]
                %4163 = vst [vmem:[%s4151 + $0x50] sm:%s4143] %v4162
                %v4164 = vld [vmem:[%s4150 + $0x30] sm:%s4143]
                %4165 = vst [vmem:[%s4151 + $0x60] sm:%s4143] %v4164
                %v4166 = vld [vmem:[%s4150 + $0x38] sm:%s4143]
                %4167 = vst [vmem:[%s4151 + $0x70] sm:%s4143] %v4166
                %v4168 = vld [vmem:[%s4150 + $0x40] sm:%s4143]
                %4169 = vst [vmem:[%s4151 + $0x80] sm:%s4143] %v4168
                %v4170 = vld [vmem:[%s4150 + $0x48] sm:%s4143]
                %4171 = vst [vmem:[%s4151 + $0x90] sm:%s4143] %v4170
                %v4172 = vld [vmem:[%s4150 + $0x50] sm:%s4143]
                %4173 = vst [vmem:[%s4151 + $0xa0] sm:%s4143] %v4172
                %v4174 = vld [vmem:[%s4150 + $0x58] sm:%s4143]
                %4175 = vst [vmem:[%s4151 + $0xb0] sm:%s4143] %v4174
                %v4176 = vld [vmem:[%s4150 + $0x60] sm:%s4143]
                %4177 = vst [vmem:[%s4151 + $0xc0] sm:%s4143] %v4176
                %v4178 = vld [vmem:[%s4150 + $0x68] sm:%s4143]
                %4179 = vst [vmem:[%s4151 + $0xd0] sm:%s4143] %v4178
                %v4180 = vld [vmem:[%s4150 + $0x70] sm:%s4143]
                %4181 = vst [vmem:[%s4151 + $0xe0] sm:%s4143] %v4180
                %v4182 = vld [vmem:[%s4150 + $0x78] sm:%s4143]
                %4183 = vst [vmem:[%s4151 + $0xf0] sm:%s4143] %v4182
              $region139: #{basic_layer_forward.2} parent=133 // loop_footer
                %s4149 = sadd.s32 1, %s4145
              $region140: #{basic_layer_forward.2} parent=133 // loop_footer_branch
                %4144 = sbr.rel target = $region136
              $region141: #{basic_layer_forward.2} parent=133 // loop_exit
                _
            $region134: #{basic_layer_forward.2} parent=125 // pred_fallthru
              _
          $region126: #{basic_layer_forward.2} parent=121 // pred_fallthru
            _
          %4228 = vnop
        $region122: #{basic_layer_forward.2} parent=113 // pred_fallthru
          _
      $region114: #{basic_layer_forward.2} parent=5 // pred_fallthru
        _
      %p4229 = scmp.le.s32.totalorder 2, %s21
      // Predicated region
      $region157: #{basic_layer_forward.2} parent=5 // pred_check
        %p4230 = pneg %p4229
      $region158: #{basic_layer_forward.2} parent=5 // pred_check_branch
        %4232 = sbr.rel (%p4230) target = $region160
      $region159: #{basic_layer_forward.2} parent=5 // pred_region
        %s4233 = ssub.s32 %s21, 2
        // Predicated region
        $region161: #{basic_layer_forward.2} parent=159 // pred_check
          %p4234 = pneg %p386
        $region162: #{basic_layer_forward.2} parent=159 // pred_check_branch
          %4236 = sbr.rel (%p4234) target = $region164
        $region163: #{basic_layer_forward.2} parent=159 // pred_region
          %s4237 = sand.u32 %s371, 1
          %s4238 = sand.u32 %s371, 1
          %s4239 = smul.addr %s4238, 128
          %s4240 = scalar_lea.vmem [#allocation3], %s4239
        $region164: #{basic_layer_forward.2} parent=159 // pred_fallthru
          _
      $region160: #{basic_layer_forward.2} parent=5 // pred_fallthru
        _
    $region6: #{basic_layer_forward.2} parent=1 // loop_footer
      %s25 = sadd.s32 1, %s21
    $region7: #{basic_layer_forward.2} parent=1 // loop_footer_branch
      %20 = sbr.rel target = $region3
    $region8: #{basic_layer_forward.2} parent=1 // loop_exit
      _

// kernel: basic_layer_forward.3
$region0: #{basic_layer_forward.3}
  #allocation0 [shape = 'u32[]', space=smem, size = 0x4, offset = 0x4, fixed_abs, tag = 'smem constant byte address 0x4 - core index']
  #allocation1 [shape = 'u32[144,128]{1,0:T(1,128)}', space=vmem, size = 0x12000, scoped, tag = 'internal scratch']
  %s0 = inlined_call_operand.vmem [shape: f32[2,16,16,32], index: 0, kind: input, shape index: {}]
  %s1 = inlined_call_operand.vmem [shape: bf16[16,64,64], index: 1, kind: input, shape index: {}]
  %s2 = inlined_call_operand.vmem [shape: f32[4,1,32], index: 2, kind: input, shape index: {}]
  %s3 = inlined_call_operand.vmem [shape: f32[1,32], index: 3, kind: input, shape index: {}]
  %s4 = inlined_call_operand.vmem [shape: f32[1,32], index: 4, kind: input, shape index: {}]
  %s5 = inlined_call_operand.vmem [shape: bf16[32,96], index: 5, kind: input, shape index: {}]
  %s6 = inlined_call_operand.vmem [shape: f32[1,96], index: 6, kind: input, shape index: {}]
  %s7 = inlined_call_operand.vmem [shape: bf16[32,32], index: 7, kind: input, shape index: {}]
  %s8 = inlined_call_operand.vmem [shape: f32[1,32], index: 8, kind: input, shape index: {}]
  %s9 = inlined_call_operand.vmem [shape: f32[1,32], index: 9, kind: input, shape index: {}]
  %s10 = inlined_call_operand.vmem [shape: f32[1,32], index: 10, kind: input, shape index: {}]
  %s11 = inlined_call_operand.vmem [shape: bf16[32,128], index: 11, kind: input, shape index: {}]
  %s12 = inlined_call_operand.vmem [shape: f32[1,128], index: 12, kind: input, shape index: {}]
  %s13 = inlined_call_operand.vmem [shape: bf16[128,32], index: 13, kind: input, shape index: {}]
  %s14 = inlined_call_operand.vmem [shape: f32[1,32], index: 14, kind: input, shape index: {}]
  %s15 = inlined_call_operand.vmem [shape: f32[2,16,16,32], index: 15, kind: output, shape index: {}]
  %s16 = sld [smem:[#allocation0]]
  $region165: #{basic_layer_forward.3} parent=0
    _
  %s18 = ssub.s32 1, %s16
  %s19 = scalar_select 0, %s18, %s16
  $region1: #{basic_layer_forward.3} parent=0
    #allocation2 [shape = 'u8[131072]{0}', space=vmem, size = 0x20000, scoped, tag = 'input window, operand 0']
    #allocation3 [shape = 'u8[131072]{0}', space=vmem, size = 0x20000, scoped, tag = 'output window, operand 0']
    loop: start=0, step=1, limit=6
    $region2: #{basic_layer_forward.3} parent=1 // loop_pre_header
      _
    $region3: #{basic_layer_forward.3} parent=1 // loop_header
      %s21 = sphi 0, %s25
      %p22 = scmp.ge.s32.totalorder %s21, 6
      %s28 = sphi 0, %s40
      %s29 = sphi 0, %s36
      %s30 = sphi 0, %s28
      %s31 = sphi 0, %s29
      %s32 = sphi 0, %s30
      %s33 = sphi 0, %s31
      %s45 = sphi 0, %s47
      %s48 = sphi 0, %s45
      %s49 = sphi 0, %s48
      %s65 = sphi 0, %s49
      %s71 = sphi 0, %s73
      %s74 = sphi 0, %s71
      %s75 = sphi 0, %s74
      %s91 = sphi 0, %s75
      %s95 = sphi 0, %s95
      %s97 = sphi 0, %s95
      %s98 = sphi 0, %s97
      %s112 = sphi 0, %s98
      %s116 = sphi 0, %s116
      %s118 = sphi 0, %s116
      %s119 = sphi 0, %s118
      %s133 = sphi 0, %s119
      %s137 = sphi 0, %s137
      %s139 = sphi 0, %s137
      %s140 = sphi 0, %s139
      %s154 = sphi 0, %s140
      %s158 = sphi 0, %s158
      %s160 = sphi 0, %s158
      %s161 = sphi 0, %s160
      %s175 = sphi 0, %s161
      %s179 = sphi 0, %s179
      %s181 = sphi 0, %s179
      %s182 = sphi 0, %s181
      %s196 = sphi 0, %s182
      %s200 = sphi 0, %s200
      %s202 = sphi 0, %s200
      %s203 = sphi 0, %s202
      %s217 = sphi 0, %s203
      %s221 = sphi 0, %s221
      %s223 = sphi 0, %s221
      %s224 = sphi 0, %s223
      %s238 = sphi 0, %s224
      %s242 = sphi 0, %s242
      %s244 = sphi 0, %s242
      %s245 = sphi 0, %s244
      %s259 = sphi 0, %s245
      %s263 = sphi 0, %s263
      %s265 = sphi 0, %s263
      %s266 = sphi 0, %s265
      %s280 = sphi 0, %s266
      %s284 = sphi 0, %s284
      %s286 = sphi 0, %s284
      %s287 = sphi 0, %s286
      %s301 = sphi 0, %s287
      %s305 = sphi 0, %s305
      %s307 = sphi 0, %s305
      %s308 = sphi 0, %s307
      %s322 = sphi 0, %s308
      %s326 = sphi 0, %s326
      %s328 = sphi 0, %s326
      %s329 = sphi 0, %s328
      %s343 = sphi 0, %s329
      %s347 = sphi 0, %s347
      %s349 = sphi 0, %s347
      %s350 = sphi 0, %s349
      %s364 = sphi 0, %s350
      %s372 = sphi 0, %s374
      %s375 = sphi 0, %s372
      %s376 = sphi 0, %s375
      %s392 = sphi 0, %s376
    $region4: #{basic_layer_forward.3} parent=1 // loop_header_branch
      %24 = sbr.rel (%p22) target = $region8
    $region5: #{basic_layer_forward.3} parent=1 // loop_body
      %s26 = ssub.s32 %s21, 1
      %s27 = ssub.s32 %s21, 2
      %s34 = sadd.s32 1, %s29
      %p35 = scmp.ge.s32.totalorder %s34, 2
      %s36 = scalar_select %p35, 0, %s34
      %s37 = sadd.s32 1, %s28
      %s38 = scalar_select %p35, %s37, %s28
      %p39 = scmp.ge.s32.totalorder %s38, 2
      %s40 = scalar_select %p39, 0, %s38
      %s41 = ssub.s32 %s28, %s40
      %s42 = ssub.s32 %s29, %s36
      %s43 = sor.u32 %s41, %s42
      %p44 = scmp.eq.s32.totalorder %s43, 0
      %s46 = sadd.s32 %s45, 1
      %s47 = scalar_select %p44, %s45, %s46
      %p50 = pneg %p44
      %p51 = scmp.eq.s32.totalorder %s21, 3
      %p52 = por %p50, %p51
      %p53 = scmp.ne.s32.totalorder %s45, %s48
      %p54 = scmp.eq.s32.totalorder %s21, 0
      %p55 = por %p53, %p54
      %p56 = scmp.ne.s32.totalorder %s45, %s48
      %p57 = scmp.eq.s32.totalorder %s26, 3
      %p58 = por %p56, %p57
      %p59 = scmp.ne.s32.totalorder %s48, %s49
      %p60 = scmp.eq.s32.totalorder %s26, 0
      %p61 = por %p59, %p60
      %p62 = scmp.ne.s32.totalorder %s48, %s49
      %p63 = scmp.eq.s32.totalorder %s27, 3
      %p64 = por %p62, %p63
      %p66 = scmp.ne.s32.totalorder %s49, %s65
      %p67 = scmp.eq.s32.totalorder %s27, 0
      %p68 = por %p66, %p67
      %s69 = ssub.s32 %s29, %s36
      %p70 = scmp.eq.s32.totalorder %s69, 0
      %s72 = sadd.s32 %s71, 1
      %s73 = scalar_select %p70, %s71, %s72
      %p76 = pneg %p70
      %p77 = scmp.eq.s32.totalorder %s21, 3
      %p78 = por %p76, %p77
      %p79 = scmp.ne.s32.totalorder %s71, %s74
      %p80 = scmp.eq.s32.totalorder %s21, 0
      %p81 = por %p79, %p80
      %p82 = scmp.ne.s32.totalorder %s71, %s74
      %p83 = scmp.eq.s32.totalorder %s26, 3
      %p84 = por %p82, %p83
      %p85 = scmp.ne.s32.totalorder %s74, %s75
      %p86 = scmp.eq.s32.totalorder %s26, 0
      %p87 = por %p85, %p86
      %p88 = scmp.ne.s32.totalorder %s74, %s75
      %p89 = scmp.eq.s32.totalorder %s27, 3
      %p90 = por %p88, %p89
      %p92 = scmp.ne.s32.totalorder %s75, %s91
      %p93 = scmp.eq.s32.totalorder %s27, 0
      %p94 = por %p92, %p93
      %s96 = sadd.s32 %s95, 1
      %p99 = scmp.eq.s32.totalorder %s21, 3
      %p100 = scmp.ne.s32.totalorder %s95, %s97
      %p101 = scmp.eq.s32.totalorder %s21, 0
      %p102 = por %p100, %p101
      %p103 = scmp.ne.s32.totalorder %s95, %s97
      %p104 = scmp.eq.s32.totalorder %s26, 3
      %p105 = por %p103, %p104
      %p106 = scmp.ne.s32.totalorder %s97, %s98
      %p107 = scmp.eq.s32.totalorder %s26, 0
      %p108 = por %p106, %p107
      %p109 = scmp.ne.s32.totalorder %s97, %s98
      %p110 = scmp.eq.s32.totalorder %s27, 3
      %p111 = por %p109, %p110
      %p113 = scmp.ne.s32.totalorder %s98, %s112
      %p114 = scmp.eq.s32.totalorder %s27, 0
      %p115 = por %p113, %p114
      %s117 = sadd.s32 %s116, 1
      %p120 = scmp.eq.s32.totalorder %s21, 3
      %p121 = scmp.ne.s32.totalorder %s116, %s118
      %p122 = scmp.eq.s32.totalorder %s21, 0
      %p123 = por %p121, %p122
      %p124 = scmp.ne.s32.totalorder %s116, %s118
      %p125 = scmp.eq.s32.totalorder %s26, 3
      %p126 = por %p124, %p125
      %p127 = scmp.ne.s32.totalorder %s118, %s119
      %p128 = scmp.eq.s32.totalorder %s26, 0
      %p129 = por %p127, %p128
      %p130 = scmp.ne.s32.totalorder %s118, %s119
      %p131 = scmp.eq.s32.totalorder %s27, 3
      %p132 = por %p130, %p131
      %p134 = scmp.ne.s32.totalorder %s119, %s133
      %p135 = scmp.eq.s32.totalorder %s27, 0
      %p136 = por %p134, %p135
      %s138 = sadd.s32 %s137, 1
      %p141 = scmp.eq.s32.totalorder %s21, 3
      %p142 = scmp.ne.s32.totalorder %s137, %s139
      %p143 = scmp.eq.s32.totalorder %s21, 0
      %p144 = por %p142, %p143
      %p145 = scmp.ne.s32.totalorder %s137, %s139
      %p146 = scmp.eq.s32.totalorder %s26, 3
      %p147 = por %p145, %p146
      %p148 = scmp.ne.s32.totalorder %s139, %s140
      %p149 = scmp.eq.s32.totalorder %s26, 0
      %p150 = por %p148, %p149
      %p151 = scmp.ne.s32.totalorder %s139, %s140
      %p152 = scmp.eq.s32.totalorder %s27, 3
      %p153 = por %p151, %p152
      %p155 = scmp.ne.s32.totalorder %s140, %s154
      %p156 = scmp.eq.s32.totalorder %s27, 0
      %p157 = por %p155, %p156
      %s159 = sadd.s32 %s158, 1
      %p162 = scmp.eq.s32.totalorder %s21, 3
      %p163 = scmp.ne.s32.totalorder %s158, %s160
      %p164 = scmp.eq.s32.totalorder %s21, 0
      %p165 = por %p163, %p164
      %p166 = scmp.ne.s32.totalorder %s158, %s160
      %p167 = scmp.eq.s32.totalorder %s26, 3
      %p168 = por %p166, %p167
      %p169 = scmp.ne.s32.totalorder %s160, %s161
      %p170 = scmp.eq.s32.totalorder %s26, 0
      %p171 = por %p169, %p170
      %p172 = scmp.ne.s32.totalorder %s160, %s161
      %p173 = scmp.eq.s32.totalorder %s27, 3
      %p174 = por %p172, %p173
      %p176 = scmp.ne.s32.totalorder %s161, %s175
      %p177 = scmp.eq.s32.totalorder %s27, 0
      %p178 = por %p176, %p177
      %s180 = sadd.s32 %s179, 1
      %p183 = scmp.eq.s32.totalorder %s21, 3
      %p184 = scmp.ne.s32.totalorder %s179, %s181
      %p185 = scmp.eq.s32.totalorder %s21, 0
      %p186 = por %p184, %p185
      %p187 = scmp.ne.s32.totalorder %s179, %s181
      %p188 = scmp.eq.s32.totalorder %s26, 3
      %p189 = por %p187, %p188
      %p190 = scmp.ne.s32.totalorder %s181, %s182
      %p191 = scmp.eq.s32.totalorder %s26, 0
      %p192 = por %p190, %p191
      %p193 = scmp.ne.s32.totalorder %s181, %s182
      %p194 = scmp.eq.s32.totalorder %s27, 3
      %p195 = por %p193, %p194
      %p197 = scmp.ne.s32.totalorder %s182, %s196
      %p198 = scmp.eq.s32.totalorder %s27, 0
      %p199 = por %p197, %p198
      %s201 = sadd.s32 %s200, 1
      %p204 = scmp.eq.s32.totalorder %s21, 3
      %p205 = scmp.ne.s32.totalorder %s200, %s202
      %p206 = scmp.eq.s32.totalorder %s21, 0
      %p207 = por %p205, %p206
      %p208 = scmp.ne.s32.totalorder %s200, %s202
      %p209 = scmp.eq.s32.totalorder %s26, 3
      %p210 = por %p208, %p209
      %p211 = scmp.ne.s32.totalorder %s202, %s203
      %p212 = scmp.eq.s32.totalorder %s26, 0
      %p213 = por %p211, %p212
      %p214 = scmp.ne.s32.totalorder %s202, %s203
      %p215 = scmp.eq.s32.totalorder %s27, 3
      %p216 = por %p214, %p215
      %p218 = scmp.ne.s32.totalorder %s203, %s217
      %p219 = scmp.eq.s32.totalorder %s27, 0
      %p220 = por %p218, %p219
      %s222 = sadd.s32 %s221, 1
      %p225 = scmp.eq.s32.totalorder %s21, 3
      %p226 = scmp.ne.s32.totalorder %s221, %s223
      %p227 = scmp.eq.s32.totalorder %s21, 0
      %p228 = por %p226, %p227
      %p229 = scmp.ne.s32.totalorder %s221, %s223
      %p230 = scmp.eq.s32.totalorder %s26, 3
      %p231 = por %p229, %p230
      %p232 = scmp.ne.s32.totalorder %s223, %s224
      %p233 = scmp.eq.s32.totalorder %s26, 0
      %p234 = por %p232, %p233
      %p235 = scmp.ne.s32.totalorder %s223, %s224
      %p236 = scmp.eq.s32.totalorder %s27, 3
      %p237 = por %p235, %p236
      %p239 = scmp.ne.s32.totalorder %s224, %s238
      %p240 = scmp.eq.s32.totalorder %s27, 0
      %p241 = por %p239, %p240
      %s243 = sadd.s32 %s242, 1
      %p246 = scmp.eq.s32.totalorder %s21, 3
      %p247 = scmp.ne.s32.totalorder %s242, %s244
      %p248 = scmp.eq.s32.totalorder %s21, 0
      %p249 = por %p247, %p248
      %p250 = scmp.ne.s32.totalorder %s242, %s244
      %p251 = scmp.eq.s32.totalorder %s26, 3
      %p252 = por %p250, %p251
      %p253 = scmp.ne.s32.totalorder %s244, %s245
      %p254 = scmp.eq.s32.totalorder %s26, 0
      %p255 = por %p253, %p254
      %p256 = scmp.ne.s32.totalorder %s244, %s245
      %p257 = scmp.eq.s32.totalorder %s27, 3
      %p258 = por %p256, %p257
      %p260 = scmp.ne.s32.totalorder %s245, %s259
      %p261 = scmp.eq.s32.totalorder %s27, 0
      %p262 = por %p260, %p261
      %s264 = sadd.s32 %s263, 1
      %p267 = scmp.eq.s32.totalorder %s21, 3
      %p268 = scmp.ne.s32.totalorder %s263, %s265
      %p269 = scmp.eq.s32.totalorder %s21, 0
      %p270 = por %p268, %p269
      %p271 = scmp.ne.s32.totalorder %s263, %s265
      %p272 = scmp.eq.s32.totalorder %s26, 3
      %p273 = por %p271, %p272
      %p274 = scmp.ne.s32.totalorder %s265, %s266
      %p275 = scmp.eq.s32.totalorder %s26, 0
      %p276 = por %p274, %p275
      %p277 = scmp.ne.s32.totalorder %s265, %s266
      %p278 = scmp.eq.s32.totalorder %s27, 3
      %p279 = por %p277, %p278
      %p281 = scmp.ne.s32.totalorder %s266, %s280
      %p282 = scmp.eq.s32.totalorder %s27, 0
      %p283 = por %p281, %p282
      %s285 = sadd.s32 %s284, 1
      %p288 = scmp.eq.s32.totalorder %s21, 3
      %p289 = scmp.ne.s32.totalorder %s284, %s286
      %p290 = scmp.eq.s32.totalorder %s21, 0
      %p291 = por %p289, %p290
      %p292 = scmp.ne.s32.totalorder %s284, %s286
      %p293 = scmp.eq.s32.totalorder %s26, 3
      %p294 = por %p292, %p293
      %p295 = scmp.ne.s32.totalorder %s286, %s287
      %p296 = scmp.eq.s32.totalorder %s26, 0
      %p297 = por %p295, %p296
      %p298 = scmp.ne.s32.totalorder %s286, %s287
      %p299 = scmp.eq.s32.totalorder %s27, 3
      %p300 = por %p298, %p299
      %p302 = scmp.ne.s32.totalorder %s287, %s301
      %p303 = scmp.eq.s32.totalorder %s27, 0
      %p304 = por %p302, %p303
      %s306 = sadd.s32 %s305, 1
      %p309 = scmp.eq.s32.totalorder %s21, 3
      %p310 = scmp.ne.s32.totalorder %s305, %s307
      %p311 = scmp.eq.s32.totalorder %s21, 0
      %p312 = por %p310, %p311
      %p313 = scmp.ne.s32.totalorder %s305, %s307
      %p314 = scmp.eq.s32.totalorder %s26, 3
      %p315 = por %p313, %p314
      %p316 = scmp.ne.s32.totalorder %s307, %s308
      %p317 = scmp.eq.s32.totalorder %s26, 0
      %p318 = por %p316, %p317
      %p319 = scmp.ne.s32.totalorder %s307, %s308
      %p320 = scmp.eq.s32.totalorder %s27, 3
      %p321 = por %p319, %p320
      %p323 = scmp.ne.s32.totalorder %s308, %s322
      %p324 = scmp.eq.s32.totalorder %s27, 0
      %p325 = por %p323, %p324
      %s327 = sadd.s32 %s326, 1
      %p330 = scmp.eq.s32.totalorder %s21, 3
      %p331 = scmp.ne.s32.totalorder %s326, %s328
      %p332 = scmp.eq.s32.totalorder %s21, 0
      %p333 = por %p331, %p332
      %p334 = scmp.ne.s32.totalorder %s326, %s328
      %p335 = scmp.eq.s32.totalorder %s26, 3
      %p336 = por %p334, %p335
      %p337 = scmp.ne.s32.totalorder %s328, %s329
      %p338 = scmp.eq.s32.totalorder %s26, 0
      %p339 = por %p337, %p338
      %p340 = scmp.ne.s32.totalorder %s328, %s329
      %p341 = scmp.eq.s32.totalorder %s27, 3
      %p342 = por %p340, %p341
      %p344 = scmp.ne.s32.totalorder %s329, %s343
      %p345 = scmp.eq.s32.totalorder %s27, 0
      %p346 = por %p344, %p345
      %s348 = sadd.s32 %s347, 1
      %p351 = scmp.eq.s32.totalorder %s21, 3
      %p352 = scmp.ne.s32.totalorder %s347, %s349
      %p353 = scmp.eq.s32.totalorder %s21, 0
      %p354 = por %p352, %p353
      %p355 = scmp.ne.s32.totalorder %s347, %s349
      %p356 = scmp.eq.s32.totalorder %s26, 3
      %p357 = por %p355, %p356
      %p358 = scmp.ne.s32.totalorder %s349, %s350
      %p359 = scmp.eq.s32.totalorder %s26, 0
      %p360 = por %p358, %p359
      %p361 = scmp.ne.s32.totalorder %s349, %s350
      %p362 = scmp.eq.s32.totalorder %s27, 3
      %p363 = por %p361, %p362
      %p365 = scmp.ne.s32.totalorder %s350, %s364
      %p366 = scmp.eq.s32.totalorder %s27, 0
      %p367 = por %p365, %p366
      %s368 = ssub.s32 %s28, %s40
      %s369 = ssub.s32 %s29, %s36
      %s370 = sor.u32 %s368, %s369
      %p371 = scmp.eq.s32.totalorder %s370, 0
      %s373 = sadd.s32 %s372, 1
      %s374 = scalar_select %p371, %s372, %s373
      %p377 = pneg %p371
      %p378 = scmp.eq.s32.totalorder %s21, 3
      %p379 = por %p377, %p378
      %p380 = scmp.ne.s32.totalorder %s372, %s375
      %p381 = scmp.eq.s32.totalorder %s21, 0
      %p382 = por %p380, %p381
      %p383 = scmp.ne.s32.totalorder %s372, %s375
      %p384 = scmp.eq.s32.totalorder %s26, 3
      %p385 = por %p383, %p384
      %p386 = scmp.ne.s32.totalorder %s375, %s376
      %p387 = scmp.eq.s32.totalorder %s26, 0
      %p388 = por %p386, %p387
      %p389 = scmp.ne.s32.totalorder %s375, %s376
      %p390 = scmp.eq.s32.totalorder %s27, 3
      %p391 = por %p389, %p390
      %p393 = scmp.ne.s32.totalorder %s376, %s392
      %p394 = scmp.eq.s32.totalorder %s27, 0
      %p395 = por %p393, %p394
      %p396 = scmp.le.s32.totalorder 1, %s21
      %p397 = scmp.lt.s32.totalorder %s21, 5
      %p398 = pnand %p396, %p397
      %p399 = pneg %p398
      // Predicated region
      $region9: #{basic_layer_forward.3} parent=5 // pred_check
        _
      $region10: #{basic_layer_forward.3} parent=5 // pred_check_branch
        %401 = sbr.rel (%p398) target = $region12
      $region11: #{basic_layer_forward.3} parent=5 // pred_region
        %s402 = ssub.s32 %s21, 1
        // Predicated region
        $region13: #{basic_layer_forward.3} parent=11 // pred_check
          %p403 = pneg %p108
        $region14: #{basic_layer_forward.3} parent=11 // pred_check_branch
          %405 = sbr.rel (%p403) target = $region16
        $region15: #{basic_layer_forward.3} parent=11 // pred_region
          _
        $region16: #{basic_layer_forward.3} parent=11 // pred_fallthru
          _
        // Predicated region
        $region17: #{basic_layer_forward.3} parent=11 // pred_check
          %p406 = pneg %p129
        $region18: #{basic_layer_forward.3} parent=11 // pred_check_branch
          %408 = sbr.rel (%p406) target = $region20
        $region19: #{basic_layer_forward.3} parent=11 // pred_region
          _
        $region20: #{basic_layer_forward.3} parent=11 // pred_fallthru
          _
        // Predicated region
        $region21: #{basic_layer_forward.3} parent=11 // pred_check
          %p409 = pneg %p150
        $region22: #{basic_layer_forward.3} parent=11 // pred_check_branch
          %411 = sbr.rel (%p409) target = $region24
        $region23: #{basic_layer_forward.3} parent=11 // pred_region
          _
        $region24: #{basic_layer_forward.3} parent=11 // pred_fallthru
          _
        // Predicated region
        $region25: #{basic_layer_forward.3} parent=11 // pred_check
          %p412 = pneg %p171
        $region26: #{basic_layer_forward.3} parent=11 // pred_check_branch
          %414 = sbr.rel (%p412) target = $region28
        $region27: #{basic_layer_forward.3} parent=11 // pred_region
          _
        $region28: #{basic_layer_forward.3} parent=11 // pred_fallthru
          _
        // Predicated region
        $region29: #{basic_layer_forward.3} parent=11 // pred_check
          %p415 = pneg %p192
        $region30: #{basic_layer_forward.3} parent=11 // pred_check_branch
          %417 = sbr.rel (%p415) target = $region32
        $region31: #{basic_layer_forward.3} parent=11 // pred_region
          _
        $region32: #{basic_layer_forward.3} parent=11 // pred_fallthru
          _
        // Predicated region
        $region33: #{basic_layer_forward.3} parent=11 // pred_check
          %p418 = pneg %p213
        $region34: #{basic_layer_forward.3} parent=11 // pred_check_branch
          %420 = sbr.rel (%p418) target = $region36
        $region35: #{basic_layer_forward.3} parent=11 // pred_region
          _
        $region36: #{basic_layer_forward.3} parent=11 // pred_fallthru
          _
        // Predicated region
        $region37: #{basic_layer_forward.3} parent=11 // pred_check
          %p421 = pneg %p234
        $region38: #{basic_layer_forward.3} parent=11 // pred_check_branch
          %423 = sbr.rel (%p421) target = $region40
        $region39: #{basic_layer_forward.3} parent=11 // pred_region
          _
        $region40: #{basic_layer_forward.3} parent=11 // pred_fallthru
          _
        // Predicated region
        $region41: #{basic_layer_forward.3} parent=11 // pred_check
          %p424 = pneg %p255
        $region42: #{basic_layer_forward.3} parent=11 // pred_check_branch
          %426 = sbr.rel (%p424) target = $region44
        $region43: #{basic_layer_forward.3} parent=11 // pred_region
          _
        $region44: #{basic_layer_forward.3} parent=11 // pred_fallthru
          _
        // Predicated region
        $region45: #{basic_layer_forward.3} parent=11 // pred_check
          %p427 = pneg %p276
        $region46: #{basic_layer_forward.3} parent=11 // pred_check_branch
          %429 = sbr.rel (%p427) target = $region48
        $region47: #{basic_layer_forward.3} parent=11 // pred_region
          _
        $region48: #{basic_layer_forward.3} parent=11 // pred_fallthru
          _
        // Predicated region
        $region49: #{basic_layer_forward.3} parent=11 // pred_check
          %p430 = pneg %p297
        $region50: #{basic_layer_forward.3} parent=11 // pred_check_branch
          %432 = sbr.rel (%p430) target = $region52
        $region51: #{basic_layer_forward.3} parent=11 // pred_region
          _
        $region52: #{basic_layer_forward.3} parent=11 // pred_fallthru
          _
        // Predicated region
        $region53: #{basic_layer_forward.3} parent=11 // pred_check
          %p433 = pneg %p318
        $region54: #{basic_layer_forward.3} parent=11 // pred_check_branch
          %435 = sbr.rel (%p433) target = $region56
        $region55: #{basic_layer_forward.3} parent=11 // pred_region
          _
        $region56: #{basic_layer_forward.3} parent=11 // pred_fallthru
          _
        // Predicated region
        $region57: #{basic_layer_forward.3} parent=11 // pred_check
          %p436 = pneg %p339
        $region58: #{basic_layer_forward.3} parent=11 // pred_check_branch
          %438 = sbr.rel (%p436) target = $region60
        $region59: #{basic_layer_forward.3} parent=11 // pred_region
          _
        $region60: #{basic_layer_forward.3} parent=11 // pred_fallthru
          _
        // Predicated region
        $region61: #{basic_layer_forward.3} parent=11 // pred_check
          %p439 = pneg %p360
        $region62: #{basic_layer_forward.3} parent=11 // pred_check_branch
          %441 = sbr.rel (%p439) target = $region64
        $region63: #{basic_layer_forward.3} parent=11 // pred_region
          _
        $region64: #{basic_layer_forward.3} parent=11 // pred_fallthru
          _
      $region12: #{basic_layer_forward.3} parent=5 // pred_fallthru
        _
      %p442 = scmp.lt.s32.totalorder %s21, 4
      // Predicated region
      $region65: #{basic_layer_forward.3} parent=5 // pred_check
        %p443 = pneg %p442
      $region66: #{basic_layer_forward.3} parent=5 // pred_check_branch
        %445 = sbr.rel (%p443) target = $region68
      $region67: #{basic_layer_forward.3} parent=5 // pred_region
        // Predicated region
        $region69: #{basic_layer_forward.3} parent=67 // pred_check
          %p446 = pneg %p55
        $region70: #{basic_layer_forward.3} parent=67 // pred_check_branch
          %448 = sbr.rel (%p446) target = $region72
        $region71: #{basic_layer_forward.3} parent=67 // pred_region
          %s449 = sand.u32 %s45, 1
          %s450 = sand.u32 %s45, 1
          %s451 = smul.addr %s450, 128
          %s452 = scalar_lea.vmem [#allocation2], %s451
          %s453 = smul.addr %s28, 32
          %s454 = sadd.s32 %s29, %s453
          %s455 = smul.addr %s454, 8
          %s456 = scalar_lea.vmem %s0, %s455
          // Predicated region
          $region73: #{basic_layer_forward.3} parent=71 // pred_check
            _
          $region74: #{basic_layer_forward.3} parent=71 // pred_check_branch
            %458 = sbr.rel (0) target = $region76
          $region75: #{basic_layer_forward.3} parent=71 // pred_region
            // Predicated region
            $region77: #{basic_layer_forward.3} parent=75 // pred_check
              _
            $region78: #{basic_layer_forward.3} parent=75 // pred_check_branch
              %460 = sbr.rel (0) target = $region80
            $region79: #{basic_layer_forward.3} parent=75 // pred_region
              // Predicated region
              $region92: #{basic_layer_forward.3} parent=79 // pred_check
                _
              $region93: #{basic_layer_forward.3} parent=79 // pred_check_branch
                %506 = sbr.rel (0) target = $region95
              $region94: #{basic_layer_forward.3} parent=79 // pred_region
                loop: start=0, step=1, limit=1
                $region96: #{basic_layer_forward.3} parent=94 // loop_pre_header
                  _
                $region97: #{basic_layer_forward.3} parent=94 // loop_header
                  %s508 = sphi 0, %s512
                  %p509 = scmp.ge.s32.totalorder %s508, 1
                  %s513 = sphi %s456, %s456
                  %s514 = sphi %s452, %s452
                $region98: #{basic_layer_forward.3} parent=94 // loop_header_branch
                  %511 = sbr.rel (%p509) target = $region102
                $region99: #{basic_layer_forward.3} parent=94 // loop_body
                  %v515 = vld [vmem:[%s513] sm:$0xff]
                  %516 = vst [vmem:[%s514] sm:$0xff] %v515
                  %v517 = vld [vmem:[%s513 + $0x10] sm:$0xff]
                  %518 = vst [vmem:[%s514 + $0x8] sm:$0xff] %v517
                  %v519 = vld [vmem:[%s513 + $0x20] sm:$0xff]
                  %520 = vst [vmem:[%s514 + $0x10] sm:$0xff] %v519
                  %v521 = vld [vmem:[%s513 + $0x30] sm:$0xff]
                  %522 = vst [vmem:[%s514 + $0x18] sm:$0xff] %v521
                  %v523 = vld [vmem:[%s513 + $0x40] sm:$0xff]
                  %524 = vst [vmem:[%s514 + $0x20] sm:$0xff] %v523
                  %v525 = vld [vmem:[%s513 + $0x50] sm:$0xff]
                  %526 = vst [vmem:[%s514 + $0x28] sm:$0xff] %v525
                  %v527 = vld [vmem:[%s513 + $0x60] sm:$0xff]
                  %528 = vst [vmem:[%s514 + $0x30] sm:$0xff] %v527
                  %v529 = vld [vmem:[%s513 + $0x70] sm:$0xff]
                  %530 = vst [vmem:[%s514 + $0x38] sm:$0xff] %v529
                  %v531 = vld [vmem:[%s513 + $0x80] sm:$0xff]
                  %532 = vst [vmem:[%s514 + $0x40] sm:$0xff] %v531
                  %v533 = vld [vmem:[%s513 + $0x90] sm:$0xff]
                  %534 = vst [vmem:[%s514 + $0x48] sm:$0xff] %v533
                  %v535 = vld [vmem:[%s513 + $0xa0] sm:$0xff]
                  %536 = vst [vmem:[%s514 + $0x50] sm:$0xff] %v535
                  %v537 = vld [vmem:[%s513 + $0xb0] sm:$0xff]
                  %538 = vst [vmem:[%s514 + $0x58] sm:$0xff] %v537
                  %v539 = vld [vmem:[%s513 + $0xc0] sm:$0xff]
                  %540 = vst [vmem:[%s514 + $0x60] sm:$0xff] %v539
                  %v541 = vld [vmem:[%s513 + $0xd0] sm:$0xff]
                  %542 = vst [vmem:[%s514 + $0x68] sm:$0xff] %v541
                  %v543 = vld [vmem:[%s513 + $0xe0] sm:$0xff]
                  %544 = vst [vmem:[%s514 + $0x70] sm:$0xff] %v543
                  %v545 = vld [vmem:[%s513 + $0xf0] sm:$0xff]
                  %546 = vst [vmem:[%s514 + $0x78] sm:$0xff] %v545
                $region100: #{basic_layer_forward.3} parent=94 // loop_footer
                  %s512 = sadd.s32 1, %s508
                $region101: #{basic_layer_forward.3} parent=94 // loop_footer_branch
                  %507 = sbr.rel target = $region97
                $region102: #{basic_layer_forward.3} parent=94 // loop_exit
                  _
              $region95: #{basic_layer_forward.3} parent=79 // pred_fallthru
                _
              // Predicated region
              $region103: #{basic_layer_forward.3} parent=79 // pred_check
                _
              $region104: #{basic_layer_forward.3} parent=79 // pred_check_branch
                %548 = sbr.rel target = $region106
              $region105: #{basic_layer_forward.3} parent=79 // pred_region
                _
              $region106: #{basic_layer_forward.3} parent=79 // pred_fallthru
                _
            $region80: #{basic_layer_forward.3} parent=75 // pred_fallthru
              _
            // Predicated region
            $region81: #{basic_layer_forward.3} parent=75 // pred_check
              _
            $region82: #{basic_layer_forward.3} parent=75 // pred_check_branch
              %462 = sbr.rel target = $region84
            $region83: #{basic_layer_forward.3} parent=75 // pred_region
              %s464 = ssub.s32 256, 1
              loop: start=0, step=1, limit=1
              $region85: #{basic_layer_forward.3} parent=83 // loop_pre_header
                _
              $region86: #{basic_layer_forward.3} parent=83 // loop_header
                %s466 = sphi 0, %s470
                %p467 = scmp.ge.s32.totalorder %s466, 1
                %s471 = sphi %s456, %s456
                %s472 = sphi %s452, %s452
              $region87: #{basic_layer_forward.3} parent=83 // loop_header_branch
                %469 = sbr.rel (%p467) target = $region91
              $region88: #{basic_layer_forward.3} parent=83 // loop_body
                %v473 = vld [vmem:[%s471] sm:%s464]
                %474 = vst [vmem:[%s472] sm:%s464] %v473
                %v475 = vld [vmem:[%s471 + $0x10] sm:%s464]
                %476 = vst [vmem:[%s472 + $0x8] sm:%s464] %v475
                %v477 = vld [vmem:[%s471 + $0x20] sm:%s464]
                %478 = vst [vmem:[%s472 + $0x10] sm:%s464] %v477
                %v479 = vld [vmem:[%s471 + $0x30] sm:%s464]
                %480 = vst [vmem:[%s472 + $0x18] sm:%s464] %v479
                %v481 = vld [vmem:[%s471 + $0x40] sm:%s464]
                %482 = vst [vmem:[%s472 + $0x20] sm:%s464] %v481
                %v483 = vld [vmem:[%s471 + $0x50] sm:%s464]
                %484 = vst [vmem:[%s472 + $0x28] sm:%s464] %v483
                %v485 = vld [vmem:[%s471 + $0x60] sm:%s464]
                %486 = vst [vmem:[%s472 + $0x30] sm:%s464] %v485
                %v487 = vld [vmem:[%s471 + $0x70] sm:%s464]
                %488 = vst [vmem:[%s472 + $0x38] sm:%s464] %v487
                %v489 = vld [vmem:[%s471 + $0x80] sm:%s464]
                %490 = vst [vmem:[%s472 + $0x40] sm:%s464] %v489
                %v491 = vld [vmem:[%s471 + $0x90] sm:%s464]
                %492 = vst [vmem:[%s472 + $0x48] sm:%s464] %v491
                %v493 = vld [vmem:[%s471 + $0xa0] sm:%s464]
                %494 = vst [vmem:[%s472 + $0x50] sm:%s464] %v493
                %v495 = vld [vmem:[%s471 + $0xb0] sm:%s464]
                %496 = vst [vmem:[%s472 + $0x58] sm:%s464] %v495
                %v497 = vld [vmem:[%s471 + $0xc0] sm:%s464]
                %498 = vst [vmem:[%s472 + $0x60] sm:%s464] %v497
                %v499 = vld [vmem:[%s471 + $0xd0] sm:%s464]
                %500 = vst [vmem:[%s472 + $0x68] sm:%s464] %v499
                %v501 = vld [vmem:[%s471 + $0xe0] sm:%s464]
                %502 = vst [vmem:[%s472 + $0x70] sm:%s464] %v501
                %v503 = vld [vmem:[%s471 + $0xf0] sm:%s464]
                %504 = vst [vmem:[%s472 + $0x78] sm:%s464] %v503
              $region89: #{basic_layer_forward.3} parent=83 // loop_footer
                %s470 = sadd.s32 1, %s466
              $region90: #{basic_layer_forward.3} parent=83 // loop_footer_branch
                %465 = sbr.rel target = $region86
              $region91: #{basic_layer_forward.3} parent=83 // loop_exit
                _
            $region84: #{basic_layer_forward.3} parent=75 // pred_fallthru
              _
          $region76: #{basic_layer_forward.3} parent=71 // pred_fallthru
            _
          %549 = vnop
        $region72: #{basic_layer_forward.3} parent=67 // pred_fallthru
          _
        // Predicated region
        $region107: #{basic_layer_forward.3} parent=67 // pred_check
          %p550 = pneg %p81
        $region108: #{basic_layer_forward.3} parent=67 // pred_check_branch
          %552 = sbr.rel (%p550) target = $region110
        $region109: #{basic_layer_forward.3} parent=67 // pred_region
          %s553 = smul.u32 8, %s29
          %p554 = scmp.lt.s32.totalorder %s553, 15
          %s555 = scalar_select %p554, %s553, 15
          %s556 = smul.addr %s555, 8
          %s557 = smul.addr %s556, 4
          %s558 = scalar_lea.vmem %s1, %s557
          %s559 = smul.u32 8, %s29
        $region110: #{basic_layer_forward.3} parent=67 // pred_fallthru
          _
      $region68: #{basic_layer_forward.3} parent=5 // pred_fallthru
        _
      %p560 = scmp.le.s32.totalorder 1, %s21
      %p561 = scmp.lt.s32.totalorder %s21, 5
      %p562 = pnand %p560, %p561
      %p563 = pneg %p562
      // Predicated region
      $region111: #{basic_layer_forward.3} parent=5 // pred_check
        _
      $region112: #{basic_layer_forward.3} parent=5 // pred_check_branch
        %565 = sbr.rel (%p562) target = $region114
      $region113: #{basic_layer_forward.3} parent=5 // pred_region
        %s566 = ssub.s32 %s21, 1
        %s567 = sand.u32 %s48, 1
        %s568 = sand.u32 %s48, 1
        %s569 = smul.addr %s568, 128
        %s570 = scalar_lea.vmem [#allocation2], %s569
        // Predicated region
        $region115: #{basic_layer_forward.3} parent=113 // pred_check
          %p571 = pneg %p61
        $region116: #{basic_layer_forward.3} parent=113 // pred_check_branch
          %573 = sbr.rel (%p571) target = $region118
        $region117: #{basic_layer_forward.3} parent=113 // pred_region
          _
        $region118: #{basic_layer_forward.3} parent=113 // pred_fallthru
          _
        %s574 = sand.u32 %s48, 1
        %s575 = sand.u32 %s48, 1
        %s576 = smul.addr %s575, 128
        %s577 = scalar_lea.vmem [#allocation2], %s576
        %p578 = pneg %p61
        %p579 = pneg %p58
        %s580 = smul.u32 8, %s31
        %p581 = scmp.lt.s32.totalorder %s580, 15
        %s582 = scalar_select %p581, %s580, 15
        %s583 = smul.addr %s582, 8
        %s584 = smul.addr %s583, 4
        %s585 = scalar_lea.vmem %s1, %s584
        %p586 = pneg %p87
        %p587 = pneg %p84
        %p588 = pneg %p108
        %p589 = pneg %p105
        %p590 = pneg %p129
        %p591 = pneg %p126
        %p592 = pneg %p150
        %p593 = pneg %p147
        %p594 = pneg %p171
        %p595 = pneg %p168
        %p596 = pneg %p192
        %p597 = pneg %p189
        %p598 = pneg %p213
        %p599 = pneg %p210
        %p600 = pneg %p234
        %p601 = pneg %p231
        %p602 = pneg %p255
        %p603 = pneg %p252
        %p604 = pneg %p276
        %p605 = pneg %p273
        %p606 = pneg %p297
        %p607 = pneg %p294
        %p608 = pneg %p318
        %p609 = pneg %p315
        %p610 = pneg %p339
        %p611 = pneg %p336
        %p612 = pneg %p360
        %p613 = pneg %p357
        %p614 = pneg %p388
        %p615 = pneg %p385
        %s616 = sand.u32 %s375, 1
        %s617 = sand.u32 %s375, 1
        %s618 = smul.addr %s617, 128
        %s619 = scalar_lea.vmem [#allocation3], %s618
        %s620 = smul.u32 8, %s31
        %p621 = scmp.lt.s32.totalorder %s620, 15
        %s622 = scalar_select %p621, %s620, 15
        %s623 = smul.addr %s622, 8
        %s624 = smul.addr %s623, 4
        %s625 = scalar_lea.vmem %s1, %s624
        %s626 = smul.u32 8, %s31
        %v628 = vld [vmem:[%s570] sm:$0xff]
        %v629 = vld [vmem:[%s570 + $0x8] sm:$0xff]
        %v630 = vld [vmem:[%s570 + $0x10] sm:$0xff]
        %v631 = vld [vmem:[%s570 + $0x18] sm:$0xff]
        %v632 = vld [vmem:[%s570 + $0x20] sm:$0xff]
        %v633 = vld [vmem:[%s570 + $0x28] sm:$0xff]
        %v634 = vld [vmem:[%s570 + $0x30] sm:$0xff]
        %v635 = vld [vmem:[%s570 + $0x38] sm:$0xff]
        %v636 = vld [vmem:[%s570 + $0x40] sm:$0xff]
        %v637 = vld [vmem:[%s570 + $0x48] sm:$0xff]
        %v638 = vld [vmem:[%s570 + $0x50] sm:$0xff]
        %v639 = vld [vmem:[%s570 + $0x58] sm:$0xff]
        %v640 = vld [vmem:[%s570 + $0x60] sm:$0xff]
        %v641 = vld [vmem:[%s570 + $0x68] sm:$0xff]
        %v642 = vld [vmem:[%s570 + $0x70] sm:$0xff]
        %v643 = vld [vmem:[%s570 + $0x78] sm:$0xff]
        %vm644 = vcmask 261120
        %v645 = vsel %vm644, %v628, 0.0
        %646 = vadd.xlane.f32.xlu0 %v645
        %v647 = vpop.xlane.xlu0 %646
        %v648 = vsel %vm644, %v629, 0.0
        %649 = vadd.xlane.f32.xlu0 %v648
        %v650 = vpop.xlane.xlu0 %649
        %v651 = vsel %vm644, %v630, 0.0
        %652 = vadd.xlane.f32.xlu0 %v651
        %v653 = vpop.xlane.xlu0 %652
        %v654 = vsel %vm644, %v631, 0.0
        %655 = vadd.xlane.f32.xlu0 %v654
        %v656 = vpop.xlane.xlu0 %655
        %v657 = vsel %vm644, %v632, 0.0
        %658 = vadd.xlane.f32.xlu0 %v657
        %v659 = vpop.xlane.xlu0 %658
        %v660 = vsel %vm644, %v633, 0.0
        %661 = vadd.xlane.f32.xlu0 %v660
        %v662 = vpop.xlane.xlu0 %661
        %v663 = vsel %vm644, %v634, 0.0
        %664 = vadd.xlane.f32.xlu0 %v663
        %v665 = vpop.xlane.xlu0 %664
        %v666 = vsel %vm644, %v635, 0.0
        %667 = vadd.xlane.f32.xlu0 %v666
        %v668 = vpop.xlane.xlu0 %667
        %v669 = vsel %vm644, %v636, 0.0
        %670 = vadd.xlane.f32.xlu0 %v669
        %v671 = vpop.xlane.xlu0 %670
        %v672 = vsel %vm644, %v637, 0.0
        %673 = vadd.xlane.f32.xlu0 %v672
        %v674 = vpop.xlane.xlu0 %673
        %v675 = vsel %vm644, %v638, 0.0
        %676 = vadd.xlane.f32.xlu0 %v675
        %v677 = vpop.xlane.xlu0 %676
        %v678 = vsel %vm644, %v639, 0.0
        %679 = vadd.xlane.f32.xlu0 %v678
        %v680 = vpop.xlane.xlu0 %679
        %v681 = vsel %vm644, %v640, 0.0
        %682 = vadd.xlane.f32.xlu0 %v681
        %v683 = vpop.xlane.xlu0 %682
        %v684 = vsel %vm644, %v641, 0.0
        %685 = vadd.xlane.f32.xlu0 %v684
        %v686 = vpop.xlane.xlu0 %685
        %v687 = vsel %vm644, %v642, 0.0
        %688 = vadd.xlane.f32.xlu0 %v687
        %v689 = vpop.xlane.xlu0 %688
        %v690 = vsel %vm644, %v643, 0.0
        %691 = vadd.xlane.f32.xlu0 %v690
        %v692 = vpop.xlane.xlu0 %691
        %v693 = vmul.f32 %v628, %v628
        %v694 = vmul.f32 %v629, %v629
        %v695 = vmul.f32 %v630, %v630
        %v696 = vmul.f32 %v631, %v631
        %v697 = vmul.f32 %v632, %v632
        %v698 = vmul.f32 %v633, %v633
        %v699 = vmul.f32 %v634, %v634
        %v700 = vmul.f32 %v635, %v635
        %v701 = vmul.f32 %v636, %v636
        %v702 = vmul.f32 %v637, %v637
        %v703 = vmul.f32 %v638, %v638
        %v704 = vmul.f32 %v639, %v639
        %v705 = vmul.f32 %v640, %v640
        %v706 = vmul.f32 %v641, %v641
        %v707 = vmul.f32 %v642, %v642
        %v708 = vmul.f32 %v643, %v643
        %v709 = vsel %vm644, %v693, 0.0
        %710 = vadd.xlane.f32.xlu0 %v709
        %v711 = vpop.xlane.xlu0 %710
        %v712 = vsel %vm644, %v694, 0.0
        %713 = vadd.xlane.f32.xlu0 %v712
        %v714 = vpop.xlane.xlu0 %713
        %v715 = vsel %vm644, %v695, 0.0
        %716 = vadd.xlane.f32.xlu0 %v715
        %v717 = vpop.xlane.xlu0 %716
        %v718 = vsel %vm644, %v696, 0.0
        %719 = vadd.xlane.f32.xlu0 %v718
        %v720 = vpop.xlane.xlu0 %719
        %v721 = vsel %vm644, %v697, 0.0
        %722 = vadd.xlane.f32.xlu0 %v721
        %v723 = vpop.xlane.xlu0 %722
        %v724 = vsel %vm644, %v698, 0.0
        %725 = vadd.xlane.f32.xlu0 %v724
        %v726 = vpop.xlane.xlu0 %725
        %v727 = vsel %vm644, %v699, 0.0
        %728 = vadd.xlane.f32.xlu0 %v727
        %v729 = vpop.xlane.xlu0 %728
        %v730 = vsel %vm644, %v700, 0.0
        %731 = vadd.xlane.f32.xlu0 %v730
        %v732 = vpop.xlane.xlu0 %731
        %v733 = vsel %vm644, %v701, 0.0
        %734 = vadd.xlane.f32.xlu0 %v733
        %v735 = vpop.xlane.xlu0 %734
        %v736 = vsel %vm644, %v702, 0.0
        %737 = vadd.xlane.f32.xlu0 %v736
        %v738 = vpop.xlane.xlu0 %737
        %v739 = vsel %vm644, %v703, 0.0
        %740 = vadd.xlane.f32.xlu0 %v739
        %v741 = vpop.xlane.xlu0 %740
        %v742 = vsel %vm644, %v704, 0.0
        %743 = vadd.xlane.f32.xlu0 %v742
        %v744 = vpop.xlane.xlu0 %743
        %v745 = vsel %vm644, %v705, 0.0
        %746 = vadd.xlane.f32.xlu0 %v745
        %v747 = vpop.xlane.xlu0 %746
        %v748 = vsel %vm644, %v706, 0.0
        %749 = vadd.xlane.f32.xlu0 %v748
        %v750 = vpop.xlane.xlu0 %749
        %v751 = vsel %vm644, %v707, 0.0
        %752 = vadd.xlane.f32.xlu0 %v751
        %v753 = vpop.xlane.xlu0 %752
        %v754 = vsel %vm644, %v708, 0.0
        %755 = vadd.xlane.f32.xlu0 %v754
        %v756 = vpop.xlane.xlu0 %755
        %v757 = vmul.f32 %v647, 0.03125
        %v758 = vmul.f32 %v650, 0.03125
        %v759 = vmul.f32 %v653, 0.03125
        %v760 = vmul.f32 %v656, 0.03125
        %v761 = vmul.f32 %v659, 0.03125
        %v762 = vmul.f32 %v662, 0.03125
        %v763 = vmul.f32 %v665, 0.03125
        %v764 = vmul.f32 %v668, 0.03125
        %v765 = vmul.f32 %v671, 0.03125
        %v766 = vmul.f32 %v674, 0.03125
        %v767 = vmul.f32 %v677, 0.03125
        %v768 = vmul.f32 %v680, 0.03125
        %v769 = vmul.f32 %v683, 0.03125
        %v770 = vmul.f32 %v686, 0.03125
        %v771 = vmul.f32 %v689, 0.03125
        %v772 = vmul.f32 %v692, 0.03125
        %v773 = vmul.f32 %v711, 0.03125
        %v774 = vmul.f32 %v714, 0.03125
        %v775 = vmul.f32 %v717, 0.03125
        %v776 = vmul.f32 %v720, 0.03125
        %v777 = vmul.f32 %v723, 0.03125
        %v778 = vmul.f32 %v726, 0.03125
        %v779 = vmul.f32 %v729, 0.03125
        %v780 = vmul.f32 %v732, 0.03125
        %v781 = vmul.f32 %v735, 0.03125
        %v782 = vmul.f32 %v738, 0.03125
        %v783 = vmul.f32 %v741, 0.03125
        %v784 = vmul.f32 %v744, 0.03125
        %v785 = vmul.f32 %v747, 0.03125
        %v786 = vmul.f32 %v750, 0.03125
        %v787 = vmul.f32 %v753, 0.03125
        %v788 = vmul.f32 %v756, 0.03125
        %v789 = vmul.f32 %v757, %v757
        %v790 = vmul.f32 %v758, %v758
        %v791 = vmul.f32 %v759, %v759
        %v792 = vmul.f32 %v760, %v760
        %v793 = vmul.f32 %v761, %v761
        %v794 = vmul.f32 %v762, %v762
        %v795 = vmul.f32 %v763, %v763
        %v796 = vmul.f32 %v764, %v764
        %v797 = vmul.f32 %v765, %v765
        %v798 = vmul.f32 %v766, %v766
        %v799 = vmul.f32 %v767, %v767
        %v800 = vmul.f32 %v768, %v768
        %v801 = vmul.f32 %v769, %v769
        %v802 = vmul.f32 %v770, %v770
        %v803 = vmul.f32 %v771, %v771
        %v804 = vmul.f32 %v772, %v772
        %v805 = vsub.f32 %v773, %v789
        %v806 = vsub.f32 %v774, %v790
        %v807 = vsub.f32 %v775, %v791
        %v808 = vsub.f32 %v776, %v792
        %v809 = vsub.f32 %v777, %v793
        %v810 = vsub.f32 %v778, %v794
        %v811 = vsub.f32 %v779, %v795
        %v812 = vsub.f32 %v780, %v796
        %v813 = vsub.f32 %v781, %v797
        %v814 = vsub.f32 %v782, %v798
        %v815 = vsub.f32 %v783, %v799
        %v816 = vsub.f32 %v784, %v800
        %v817 = vsub.f32 %v785, %v801
        %v818 = vsub.f32 %v786, %v802
        %v819 = vsub.f32 %v787, %v803
        %v820 = vsub.f32 %v788, %v804
        %v821 = vsub.f32 %v628, %v757
        %v822 = vsub.f32 %v629, %v758
        %v823 = vsub.f32 %v630, %v759
        %v824 = vsub.f32 %v631, %v760
        %v825 = vsub.f32 %v632, %v761
        %v826 = vsub.f32 %v633, %v762
        %v827 = vsub.f32 %v634, %v763
        %v828 = vsub.f32 %v635, %v764
        %v829 = vsub.f32 %v636, %v765
        %v830 = vsub.f32 %v637, %v766
        %v831 = vsub.f32 %v638, %v767
        %v832 = vsub.f32 %v639, %v768
        %v833 = vsub.f32 %v640, %v769
        %v834 = vsub.f32 %v641, %v770
        %v835 = vsub.f32 %v642, %v771
        %v836 = vsub.f32 %v643, %v772
        %v837 = vadd.f32 %v805, 1e-05
        %v838 = vadd.f32 %v806, 1e-05
        %v839 = vadd.f32 %v807, 1e-05
        %v840 = vadd.f32 %v808, 1e-05
        %v841 = vadd.f32 %v809, 1e-05
        %v842 = vadd.f32 %v810, 1e-05
        %v843 = vadd.f32 %v811, 1e-05
        %v844 = vadd.f32 %v812, 1e-05
        %v845 = vadd.f32 %v813, 1e-05
        %v846 = vadd.f32 %v814, 1e-05
        %v847 = vadd.f32 %v815, 1e-05
        %v848 = vadd.f32 %v816, 1e-05
        %v849 = vadd.f32 %v817, 1e-05
        %v850 = vadd.f32 %v818, 1e-05
        %v851 = vadd.f32 %v819, 1e-05
        %v852 = vadd.f32 %v820, 1e-05
        %v853 = vrsqrt.pop %v837
        %v854 = vrsqrt.pop %v838
        %v855 = vrsqrt.pop %v839
        %v856 = vrsqrt.pop %v840
        %v857 = vrsqrt.pop %v841
        %v858 = vrsqrt.pop %v842
        %v859 = vrsqrt.pop %v843
        %v860 = vrsqrt.pop %v844
        %v861 = vrsqrt.pop %v845
        %v862 = vrsqrt.pop %v846
        %v863 = vrsqrt.pop %v847
        %v864 = vrsqrt.pop %v848
        %v865 = vrsqrt.pop %v849
        %v866 = vrsqrt.pop %v850
        %v867 = vrsqrt.pop %v851
        %v868 = vrsqrt.pop %v852
        %v869 = vmul.f32 %v821, %v853
        %v870 = vmul.f32 %v822, %v854
        %v871 = vmul.f32 %v823, %v855
        %v872 = vmul.f32 %v824, %v856
        %v873 = vmul.f32 %v825, %v857
        %v874 = vmul.f32 %v826, %v858
        %v875 = vmul.f32 %v827, %v859
        %v876 = vmul.f32 %v828, %v860
        %v877 = vmul.f32 %v829, %v861
        %v878 = vmul.f32 %v830, %v862
        %v879 = vmul.f32 %v831, %v863
        %v880 = vmul.f32 %v832, %v864
        %v881 = vmul.f32 %v833, %v865
        %v882 = vmul.f32 %v834, %v866
        %v883 = vmul.f32 %v835, %v867
        %v884 = vmul.f32 %v836, %v868
        %v885 = vld [vmem:[%s3] sm:$0x1]
        %v887 = vlaneseq
        %v888 = vshrl.u32 %v887, 7
        %v889 = vsub.s32 0, %v888
        %v890 = vrot.slane %v885, %v889
        %v892 = vmul.f32 %v869, %v890
        %v893 = vmul.f32 %v870, %v890
        %v894 = vmul.f32 %v871, %v890
        %v895 = vmul.f32 %v872, %v890
        %v896 = vmul.f32 %v873, %v890
        %v897 = vmul.f32 %v874, %v890
        %v898 = vmul.f32 %v875, %v890
        %v899 = vmul.f32 %v876, %v890
        %v900 = vmul.f32 %v877, %v890
        %v901 = vmul.f32 %v878, %v890
        %v902 = vmul.f32 %v879, %v890
        %v903 = vmul.f32 %v880, %v890
        %v904 = vmul.f32 %v881, %v890
        %v905 = vmul.f32 %v882, %v890
        %v906 = vmul.f32 %v883, %v890
        %v907 = vmul.f32 %v884, %v890
        %v908 = vld [vmem:[%s4] sm:$0x1]
        %v910 = vlaneseq
        %v911 = vshrl.u32 %v910, 7
        %v912 = vsub.s32 0, %v911
        %v913 = vrot.slane %v908, %v912
        %v915 = vadd.f32 %v892, %v913
        %v916 = vadd.f32 %v893, %v913
        %v917 = vadd.f32 %v894, %v913
        %v918 = vadd.f32 %v895, %v913
        %v919 = vadd.f32 %v896, %v913
        %v920 = vadd.f32 %v897, %v913
        %v921 = vadd.f32 %v898, %v913
        %v922 = vadd.f32 %v899, %v913
        %v923 = vadd.f32 %v900, %v913
        %v924 = vadd.f32 %v901, %v913
        %v925 = vadd.f32 %v902, %v913
        %v926 = vadd.f32 %v903, %v913
        %v927 = vadd.f32 %v904, %v913
        %v928 = vadd.f32 %v905, %v913
        %v929 = vadd.f32 %v906, %v913
        %v930 = vadd.f32 %v907, %v913
        %v931 = vpack.c.bf16 %v916, %v915
        %v932 = vpack.c.bf16 %v918, %v917
        %v933 = vpack.c.bf16 %v920, %v919
        %v934 = vpack.c.bf16 %v922, %v921
        %v935 = vpack.c.bf16 %v924, %v923
        %v936 = vpack.c.bf16 %v926, %v925
        %v937 = vpack.c.bf16 %v928, %v927
        %v938 = vpack.c.bf16 %v930, %v929
        %v939 = vld [vmem:[%s5] sm:$0xf]
        %v940 = vld [vmem:[%s5 + $0x4] sm:$0xf]
        %v941 = vld [vmem:[%s5 + $0x8] sm:$0xf]
        %v942 = vld [vmem:[%s5 + $0xc] sm:$0xf]
        %v943 = vld [vmem:[%s6] sm:$0x1]
        %v945 = vlaneseq
        %v946 = vshrl.u32 %v945, 7
        %v947 = vsub.s32 0, %v946
        %v948 = vrot.slane %v943, %v947
        %v954 = vunpack.c.l.b16 %v939
        %v955 = vunpack.c.l.b16 %v940
        %v956 = vunpack.c.l.b16 %v941
        %v957 = vunpack.c.l.b16 %v942
        %v958 = vpack.c.b16 %v955, %v954
        %v959 = vpack.c.b16 %v957, %v956
        %v963 = vsel %vm644, %v931, 0
        %v966 = vsel %vm644, %v932, 0
        %v969 = vsel %vm644, %v933, 0
        %v972 = vsel %vm644, %v934, 0
        %v975 = vsel %vm644, %v935, 0
        %v978 = vsel %vm644, %v936, 0
        %v981 = vsel %vm644, %v937, 0
        %v984 = vsel %vm644, %v938, 0
        %986 = vmatprep.subr.bf16.mxu0 0
        %987 = vmatpush1.bf16.msra.mxu0 0
        %988 = vmatprep.subr.bf16.mxu0 0
        %989 = vmatpush1.bf16.msra.mxu0 0
        %990 = vmatprep.subr.bf16.mxu0 0
        %991 = vmatpush1.bf16.msra.mxu0 0
        %992 = vmatprep.subr.bf16.mxu0 0
        %993 = vmatpush1.bf16.msra.mxu0 0
        %994 = vmatprep.subr.bf16.mxu0 0
        %995 = vmatpush1.bf16.msra.mxu0 0
        %996 = vmatprep.subr.bf16.mxu0 0
        %997 = vmatpush1.bf16.msra.mxu0 0
        %998 = vmatprep.subr.bf16.mxu0 0
        %999 = vmatpush1.bf16.msra.mxu0 %v959
        %1000 = vmatprep.subr.bf16.mxu0 0
        %1001 = vmatpush1.bf16.msra.mxu0 %v958
        %1002 = vmatprep.subr.bf16.mxu0 0
        %1003 = vmatpush2.bf16.msra.mxu0 0
        %1004 = vmatprep.subr.bf16.mxu0 0
        %1005 = vmatpush2.bf16.msra.mxu0 0
        %1006 = vmatprep.subr.bf16.mxu0 0
        %1007 = vmatpush2.bf16.msra.mxu0 0
        %1008 = vmatprep.subr.bf16.mxu0 0
        %1009 = vmatpush2.bf16.msra.mxu0 0
        %1010 = vmatprep.subr.bf16.mxu0 0
        %1011 = vmatpush2.bf16.msra.mxu0 0
        %1012 = vmatprep.subr.bf16.mxu0 0
        %1013 = vmatpush2.bf16.msra.mxu0 0
        %1014 = vmatprep.subr.bf16.mxu0 0
        %1015 = vmatpush2.bf16.msra.mxu0 0
        %1016 = vmatprep.subr.bf16.mxu0 0
        %1017 = vmatpush2.bf16.msra.mxu0 0
        %1018 = vmatprep.mubr.bf16.mxu0 0
        %1019 = vmatmul.mubr.bf16.gmra.mxu0 %v963
        %v1020 = vpop.f32.mrf.mxu0
        %v1021 = vadd.f32 %v948, %v1020
        %v1022 = vpop.f32.mrf.mxu0
        %v1023 = vpop.f32.mrf.mxu0
        %v1024 = vadd.f32 %v948, %v1023
        %v1025 = vpop.f32.mrf.mxu0
        %1026 = vmatprep.mubr.bf16.mxu0 0
        %1027 = vmatmul.mubr.bf16.gmra.mxu0 %v966
        %v1028 = vpop.f32.mrf.mxu0
        %v1029 = vadd.f32 %v948, %v1028
        %v1030 = vpop.f32.mrf.mxu0
        %v1031 = vpop.f32.mrf.mxu0
        %v1032 = vadd.f32 %v948, %v1031
        %v1033 = vpop.f32.mrf.mxu0
        %1034 = vmatprep.mubr.bf16.mxu0 0
        %1035 = vmatmul.mubr.bf16.gmra.mxu0 %v969
        %v1036 = vpop.f32.mrf.mxu0
        %v1037 = vadd.f32 %v948, %v1036
        %v1038 = vpop.f32.mrf.mxu0
        %v1039 = vpop.f32.mrf.mxu0
        %v1040 = vadd.f32 %v948, %v1039
        %v1041 = vpop.f32.mrf.mxu0
        %1042 = vmatprep.mubr.bf16.mxu0 0
        %1043 = vmatmul.mubr.bf16.gmra.mxu0 %v972
        %v1044 = vpop.f32.mrf.mxu0
        %v1045 = vadd.f32 %v948, %v1044
        %v1046 = vpop.f32.mrf.mxu0
        %v1047 = vpop.f32.mrf.mxu0
        %v1048 = vadd.f32 %v948, %v1047
        %v1049 = vpop.f32.mrf.mxu0
        %1050 = vmatprep.mubr.bf16.mxu0 0
        %1051 = vmatmul.mubr.bf16.gmra.mxu0 %v975
        %v1052 = vpop.f32.mrf.mxu0
        %v1053 = vadd.f32 %v948, %v1052
        %v1054 = vpop.f32.mrf.mxu0
        %v1055 = vpop.f32.mrf.mxu0
        %v1056 = vadd.f32 %v948, %v1055
        %v1057 = vpop.f32.mrf.mxu0
        %1058 = vmatprep.mubr.bf16.mxu0 0
        %1059 = vmatmul.mubr.bf16.gmra.mxu0 %v978
        %v1060 = vpop.f32.mrf.mxu0
        %v1061 = vadd.f32 %v948, %v1060
        %v1062 = vpop.f32.mrf.mxu0
        %v1063 = vpop.f32.mrf.mxu0
        %v1064 = vadd.f32 %v948, %v1063
        %v1065 = vpop.f32.mrf.mxu0
        %1066 = vmatprep.mubr.bf16.mxu0 0
        %1067 = vmatmul.mubr.bf16.gmra.mxu0 %v981
        %v1068 = vpop.f32.mrf.mxu0
        %v1069 = vadd.f32 %v948, %v1068
        %v1070 = vpop.f32.mrf.mxu0
        %v1071 = vpop.f32.mrf.mxu0
        %v1072 = vadd.f32 %v948, %v1071
        %v1073 = vpop.f32.mrf.mxu0
        %1074 = vmatprep.mubr.bf16.mxu0 0
        %1075 = vmatmul.mubr.bf16.gmra.mxu0 %v984
        %v1076 = vpop.f32.mrf.mxu0
        %v1077 = vadd.f32 %v948, %v1076
        %v1078 = vpop.f32.mrf.mxu0
        %v1079 = vpop.f32.mrf.mxu0
        %v1080 = vadd.f32 %v948, %v1079
        %v1081 = vpop.f32.mrf.mxu0
        %1082 = vdwg.mxu0
        %v1083 = vpack.c.bf16 %v1024, %v1021
        %v1084 = vpack.c.bf16 %v1032, %v1029
        %v1085 = vpack.c.bf16 %v1040, %v1037
        %v1086 = vpack.c.bf16 %v1048, %v1045
        %v1087 = vpack.c.bf16 %v1056, %v1053
        %v1088 = vpack.c.bf16 %v1064, %v1061
        %v1089 = vpack.c.bf16 %v1072, %v1069
        %v1090 = vpack.c.bf16 %v1080, %v1077
        %v1091 = vld [vmem:[%s2] sm:$0x1]
        %v1092 = vld [vmem:[%s2 + $0x1] sm:$0x1]
        %v1093 = vld [vmem:[%s2 + $0x2] sm:$0x1]
        %v1094 = vld [vmem:[%s2 + $0x3] sm:$0x1]
        %v1099 = vlaneseq
        %v1100 = vshrl.u32 %v1099, 7
        %v1101 = vsub.s32 0, %v1100
        %v1102 = vrot.slane %v1091, %v1101
        %v1103 = vlaneseq
        %v1104 = vshrl.u32 %v1103, 7
        %v1105 = vsub.s32 0, %v1104
        %v1106 = vrot.slane %v1092, %v1105
        %v1107 = vlaneseq
        %v1108 = vshrl.u32 %v1107, 7
        %v1109 = vsub.s32 0, %v1108
        %v1110 = vrot.slane %v1093, %v1109
        %v1111 = vlaneseq
        %v1112 = vshrl.u32 %v1111, 7
        %v1113 = vsub.s32 0, %v1112
        %v1114 = vrot.slane %v1094, %v1113
        %v1119 = vmul.f32 %v1021, %v1102
        %v1120 = vmul.f32 %v1024, %v1102
        %v1121 = vmul.f32 %v1029, %v1102
        %v1122 = vmul.f32 %v1032, %v1102
        %v1123 = vmul.f32 %v1037, %v1102
        %v1124 = vmul.f32 %v1040, %v1102
        %v1125 = vmul.f32 %v1045, %v1102
        %v1126 = vmul.f32 %v1048, %v1102
        %v1127 = vmul.f32 %v1021, %v1106
        %v1128 = vmul.f32 %v1024, %v1106
        %v1129 = vmul.f32 %v1029, %v1106
        %v1130 = vmul.f32 %v1032, %v1106
        %v1131 = vmul.f32 %v1037, %v1106
        %v1132 = vmul.f32 %v1040, %v1106
        %v1133 = vmul.f32 %v1045, %v1106
        %v1134 = vmul.f32 %v1048, %v1106
        %v1135 = vmul.f32 %v1021, %v1110
        %v1136 = vmul.f32 %v1024, %v1110
        %v1137 = vmul.f32 %v1029, %v1110
        %v1138 = vmul.f32 %v1032, %v1110
        %v1139 = vmul.f32 %v1037, %v1110
        %v1140 = vmul.f32 %v1040, %v1110
        %v1141 = vmul.f32 %v1045, %v1110
        %v1142 = vmul.f32 %v1048, %v1110
        %v1143 = vmul.f32 %v1021, %v1114
        %v1144 = vmul.f32 %v1024, %v1114
        %v1145 = vmul.f32 %v1029, %v1114
        %v1146 = vmul.f32 %v1032, %v1114
        %v1147 = vmul.f32 %v1037, %v1114
        %v1148 = vmul.f32 %v1040, %v1114
        %v1149 = vmul.f32 %v1045, %v1114
        %v1150 = vmul.f32 %v1048, %v1114
        %v1151 = vmul.f32 %v1053, %v1102
        %v1152 = vmul.f32 %v1056, %v1102
        %v1153 = vmul.f32 %v1061, %v1102
        %v1154 = vmul.f32 %v1064, %v1102
        %v1155 = vmul.f32 %v1069, %v1102
        %v1156 = vmul.f32 %v1072, %v1102
        %v1157 = vmul.f32 %v1077, %v1102
        %v1158 = vmul.f32 %v1080, %v1102
        %v1159 = vmul.f32 %v1053, %v1106
        %v1160 = vmul.f32 %v1056, %v1106
        %v1161 = vmul.f32 %v1061, %v1106
        %v1162 = vmul.f32 %v1064, %v1106
        %v1163 = vmul.f32 %v1069, %v1106
        %v1164 = vmul.f32 %v1072, %v1106
        %v1165 = vmul.f32 %v1077, %v1106
        %v1166 = vmul.f32 %v1080, %v1106
        %v1167 = vmul.f32 %v1053, %v1110
        %v1168 = vmul.f32 %v1056, %v1110
        %v1169 = vmul.f32 %v1061, %v1110
        %v1170 = vmul.f32 %v1064, %v1110
        %v1171 = vmul.f32 %v1069, %v1110
        %v1172 = vmul.f32 %v1072, %v1110
        %v1173 = vmul.f32 %v1077, %v1110
        %v1174 = vmul.f32 %v1080, %v1110
        %v1175 = vmul.f32 %v1053, %v1114
        %v1176 = vmul.f32 %v1056, %v1114
        %v1177 = vmul.f32 %v1061, %v1114
        %v1178 = vmul.f32 %v1064, %v1114
        %v1179 = vmul.f32 %v1069, %v1114
        %v1180 = vmul.f32 %v1072, %v1114
        %v1181 = vmul.f32 %v1077, %v1114
        %v1182 = vmul.f32 %v1080, %v1114
        %1199 = vrot.lane.b32.xlu0 %v1021, 96
        %v1200 = vpop.permute.xlu0 %1199
        %1201 = vrot.lane.b32.xlu0 %v1024, 96
        %v1202 = vpop.permute.xlu0 %1201
        %1203 = vrot.lane.b32.xlu0 %v1029, 96
        %v1204 = vpop.permute.xlu0 %1203
        %1205 = vrot.lane.b32.xlu0 %v1032, 96
        %v1206 = vpop.permute.xlu0 %1205
        %1207 = vrot.lane.b32.xlu0 %v1037, 96
        %v1208 = vpop.permute.xlu0 %1207
        %1209 = vrot.lane.b32.xlu0 %v1040, 96
        %v1210 = vpop.permute.xlu0 %1209
        %1211 = vrot.lane.b32.xlu0 %v1045, 96
        %v1212 = vpop.permute.xlu0 %1211
        %1213 = vrot.lane.b32.xlu0 %v1048, 96
        %v1214 = vpop.permute.xlu0 %1213
        %1215 = vrot.lane.b32.xlu0 %v1053, 96
        %v1216 = vpop.permute.xlu0 %1215
        %1217 = vrot.lane.b32.xlu0 %v1056, 96
        %v1218 = vpop.permute.xlu0 %1217
        %1219 = vrot.lane.b32.xlu0 %v1061, 96
        %v1220 = vpop.permute.xlu0 %1219
        %1221 = vrot.lane.b32.xlu0 %v1064, 96
        %v1222 = vpop.permute.xlu0 %1221
        %1223 = vrot.lane.b32.xlu0 %v1069, 96
        %v1224 = vpop.permute.xlu0 %1223
        %1225 = vrot.lane.b32.xlu0 %v1072, 96
        %v1226 = vpop.permute.xlu0 %1225
        %1227 = vrot.lane.b32.xlu0 %v1077, 96
        %v1228 = vpop.permute.xlu0 %1227
        %1229 = vrot.lane.b32.xlu0 %v1080, 96
        %v1230 = vpop.permute.xlu0 %1229
        %1247 = vxpose.xlu0.b32.start [1/16] %v1200, 128
        %1248 = vxpose.xlu0.b32.cont [2/16] %v1202, 128
        %1249 = vxpose.xlu0.b32.cont [3/16] %v1204, 128
        %1250 = vxpose.xlu0.b32.cont [4/16] %v1206, 128
        %1251 = vxpose.xlu0.b32.cont [5/16] %v1208, 128
        %1252 = vxpose.xlu0.b32.cont [6/16] %v1210, 128
        %1253 = vxpose.xlu0.b32.cont [7/16] %v1212, 128
        %1254 = vxpose.xlu0.b32.cont [8/16] %v1214, 128
        %1255 = vxpose.xlu0.b32.cont [9/16] 0.0, 128
        %1256 = vxpose.xlu0.b32.cont [10/16] 0.0, 128
        %1257 = vxpose.xlu0.b32.cont [11/16] 0.0, 128
        %1258 = vxpose.xlu0.b32.cont [12/16] 0.0, 128
        %1259 = vxpose.xlu0.b32.cont [13/16] 0.0, 128
        %1260 = vxpose.xlu0.b32.cont [14/16] 0.0, 128
        %1261 = vxpose.xlu0.b32.cont [15/16] 0.0, 128
        %1262 = vxpose.xlu0.b32.end [16/16] 0.0, 128
        %v1263 = vpop.trf.xlu0
        %v1264 = vpop.trf.xlu0
        %v1265 = vpop.trf.xlu0
        %v1266 = vpop.trf.xlu0
        %v1267 = vpop.trf.xlu0
        %v1268 = vpop.trf.xlu0
        %v1269 = vpop.trf.xlu0
        %v1270 = vpop.trf.xlu0
        %v1271 = vpop.trf.xlu0
        %v1272 = vpop.trf.xlu0
        %v1273 = vpop.trf.xlu0
        %v1274 = vpop.trf.xlu0
        %v1275 = vpop.trf.xlu0
        %v1276 = vpop.trf.xlu0
        %v1277 = vpop.trf.xlu0
        %v1278 = vpop.trf.xlu0
        %1279 = vxpose.xlu0.b32.start [1/16] %v1216, 128
        %1280 = vxpose.xlu0.b32.cont [2/16] %v1218, 128
        %1281 = vxpose.xlu0.b32.cont [3/16] %v1220, 128
        %1282 = vxpose.xlu0.b32.cont [4/16] %v1222, 128
        %1283 = vxpose.xlu0.b32.cont [5/16] %v1224, 128
        %1284 = vxpose.xlu0.b32.cont [6/16] %v1226, 128
        %1285 = vxpose.xlu0.b32.cont [7/16] %v1228, 128
        %1286 = vxpose.xlu0.b32.cont [8/16] %v1230, 128
        %1287 = vxpose.xlu0.b32.cont [9/16] 0.0, 128
        %1288 = vxpose.xlu0.b32.cont [10/16] 0.0, 128
        %1289 = vxpose.xlu0.b32.cont [11/16] 0.0, 128
        %1290 = vxpose.xlu0.b32.cont [12/16] 0.0, 128
        %1291 = vxpose.xlu0.b32.cont [13/16] 0.0, 128
        %1292 = vxpose.xlu0.b32.cont [14/16] 0.0, 128
        %1293 = vxpose.xlu0.b32.cont [15/16] 0.0, 128
        %1294 = vxpose.xlu0.b32.end [16/16] 0.0, 128
        %v1295 = vpop.trf.xlu0
        %v1296 = vpop.trf.xlu0
        %v1297 = vpop.trf.xlu0
        %v1298 = vpop.trf.xlu0
        %v1299 = vpop.trf.xlu0
        %v1300 = vpop.trf.xlu0
        %v1301 = vpop.trf.xlu0
        %v1302 = vpop.trf.xlu0
        %v1303 = vpop.trf.xlu0
        %v1304 = vpop.trf.xlu0
        %v1305 = vpop.trf.xlu0
        %v1306 = vpop.trf.xlu0
        %v1307 = vpop.trf.xlu0
        %v1308 = vpop.trf.xlu0
        %v1309 = vpop.trf.xlu0
        %v1310 = vpop.trf.xlu0
        %v1311 = vpack.c.bf16 %v1120, %v1119
        %v1312 = vpack.c.bf16 %v1122, %v1121
        %v1313 = vpack.c.bf16 %v1124, %v1123
        %v1314 = vpack.c.bf16 %v1126, %v1125
        %v1315 = vpack.c.bf16 %v1128, %v1127
        %v1316 = vpack.c.bf16 %v1130, %v1129
        %v1317 = vpack.c.bf16 %v1132, %v1131
        %v1318 = vpack.c.bf16 %v1134, %v1133
        %v1319 = vpack.c.bf16 %v1136, %v1135
        %v1320 = vpack.c.bf16 %v1138, %v1137
        %v1321 = vpack.c.bf16 %v1140, %v1139
        %v1322 = vpack.c.bf16 %v1142, %v1141
        %v1323 = vpack.c.bf16 %v1144, %v1143
        %v1324 = vpack.c.bf16 %v1146, %v1145
        %v1325 = vpack.c.bf16 %v1148, %v1147
        %v1326 = vpack.c.bf16 %v1150, %v1149
        %v1327 = vpack.c.bf16 %v1152, %v1151
        %v1328 = vpack.c.bf16 %v1154, %v1153
        %v1329 = vpack.c.bf16 %v1156, %v1155
        %v1330 = vpack.c.bf16 %v1158, %v1157
        %v1331 = vpack.c.bf16 %v1160, %v1159
        %v1332 = vpack.c.bf16 %v1162, %v1161
        %v1333 = vpack.c.bf16 %v1164, %v1163
        %v1334 = vpack.c.bf16 %v1166, %v1165
        %v1335 = vpack.c.bf16 %v1168, %v1167
        %v1336 = vpack.c.bf16 %v1170, %v1169
        %v1337 = vpack.c.bf16 %v1172, %v1171
        %v1338 = vpack.c.bf16 %v1174, %v1173
        %v1339 = vpack.c.bf16 %v1176, %v1175
        %v1340 = vpack.c.bf16 %v1178, %v1177
        %v1341 = vpack.c.bf16 %v1180, %v1179
        %v1342 = vpack.c.bf16 %v1182, %v1181
        %v1343 = vpack.c.bf16 %v1264, %v1263
        %v1344 = vpack.c.bf16 %v1266, %v1265
        %v1345 = vpack.c.bf16 %v1296, %v1295
        %v1346 = vpack.c.bf16 %v1298, %v1297
        %v1348 = vsel %vm644, %v1311, 0
        %v1351 = vsel %vm644, %v1312, 0
        %v1354 = vsel %vm644, %v1313, 0
        %v1357 = vsel %vm644, %v1314, 0
        %v1360 = vsel %vm644, %v1315, 0
        %v1363 = vsel %vm644, %v1316, 0
        %v1366 = vsel %vm644, %v1317, 0
        %v1369 = vsel %vm644, %v1318, 0
        %v1372 = vsel %vm644, %v1319, 0
        %v1375 = vsel %vm644, %v1320, 0
        %v1378 = vsel %vm644, %v1321, 0
        %v1381 = vsel %vm644, %v1322, 0
        %v1384 = vsel %vm644, %v1323, 0
        %v1387 = vsel %vm644, %v1324, 0
        %v1390 = vsel %vm644, %v1325, 0
        %v1393 = vsel %vm644, %v1326, 0
        %1395 = vmatprep.subr.bf16.mxu0 0
        %1396 = vmatpush1.bf16.msra.mxu0 0
        %1397 = vmatprep.subr.bf16.mxu0 0
        %1398 = vmatpush1.bf16.msra.mxu0 0
        %1399 = vmatprep.subr.bf16.mxu0 0
        %1400 = vmatpush1.bf16.msra.mxu0 0
        %1401 = vmatprep.subr.bf16.mxu0 0
        %1402 = vmatpush1.bf16.msra.mxu0 0
        %1403 = vmatprep.subr.bf16.mxu0 0
        %1404 = vmatpush1.bf16.msra.mxu0 0
        %1405 = vmatprep.subr.bf16.mxu0 0
        %1406 = vmatpush1.bf16.msra.mxu0 0
        %1407 = vmatprep.subr.bf16.mxu0 0
        %1408 = vmatpush1.bf16.msra.mxu0 %v1344
        %1409 = vmatprep.subr.bf16.mxu0 0
        %1410 = vmatpush1.bf16.msra.mxu0 %v1343
        %1411 = vmatprep.subr.bf16.mxu0 0
        %1412 = vmatpush2.bf16.msra.mxu0 0
        %1413 = vmatprep.subr.bf16.mxu0 0
        %1414 = vmatpush2.bf16.msra.mxu0 0
        %1415 = vmatprep.subr.bf16.mxu0 0
        %1416 = vmatpush2.bf16.msra.mxu0 0
        %1417 = vmatprep.subr.bf16.mxu0 0
        %1418 = vmatpush2.bf16.msra.mxu0 0
        %1419 = vmatprep.subr.bf16.mxu0 0
        %1420 = vmatpush2.bf16.msra.mxu0 0
        %1421 = vmatprep.subr.bf16.mxu0 0
        %1422 = vmatpush2.bf16.msra.mxu0 0
        %1423 = vmatprep.subr.bf16.mxu0 0
        %1424 = vmatpush2.bf16.msra.mxu0 0
        %1425 = vmatprep.subr.bf16.mxu0 0
        %1426 = vmatpush2.bf16.msra.mxu0 0
        %1427 = vmatprep.mubr.bf16.mxu0 0
        %1428 = vmatmul.mubr.bf16.gmra.mxu0 %v1348
        %v1429 = vpop.f32.mrf.mxu0
        %v1430 = vadd.f32 0.0, %v1429
        %v1431 = vpop.f32.mrf.mxu0
        %v1432 = vpop.f32.mrf.mxu0
        %v1433 = vadd.f32 0.0, %v1432
        %v1434 = vpop.f32.mrf.mxu0
        %1435 = vmatprep.mubr.bf16.mxu0 0
        %1436 = vmatmul.mubr.bf16.gmra.mxu0 %v1351
        %v1437 = vpop.f32.mrf.mxu0
        %v1438 = vadd.f32 0.0, %v1437
        %v1439 = vpop.f32.mrf.mxu0
        %v1440 = vpop.f32.mrf.mxu0
        %v1441 = vadd.f32 0.0, %v1440
        %v1442 = vpop.f32.mrf.mxu0
        %1443 = vmatprep.mubr.bf16.mxu0 0
        %1444 = vmatmul.mubr.bf16.gmra.mxu0 %v1354
        %v1445 = vpop.f32.mrf.mxu0
        %v1446 = vadd.f32 0.0, %v1445
        %v1447 = vpop.f32.mrf.mxu0
        %v1448 = vpop.f32.mrf.mxu0
        %v1449 = vadd.f32 0.0, %v1448
        %v1450 = vpop.f32.mrf.mxu0
        %1451 = vmatprep.mubr.bf16.mxu0 0
        %1452 = vmatmul.mubr.bf16.gmra.mxu0 %v1357
        %v1453 = vpop.f32.mrf.mxu0
        %v1454 = vadd.f32 0.0, %v1453
        %v1455 = vpop.f32.mrf.mxu0
        %v1456 = vpop.f32.mrf.mxu0
        %v1457 = vadd.f32 0.0, %v1456
        %v1458 = vpop.f32.mrf.mxu0
        %1459 = vmatprep.mubr.bf16.mxu0 0
        %1460 = vmatmul.mubr.bf16.gmra.mxu0 %v1360
        %v1461 = vpop.f32.mrf.mxu0
        %v1462 = vadd.f32 0.0, %v1461
        %v1463 = vpop.f32.mrf.mxu0
        %v1464 = vpop.f32.mrf.mxu0
        %v1465 = vadd.f32 0.0, %v1464
        %v1466 = vpop.f32.mrf.mxu0
        %1467 = vmatprep.mubr.bf16.mxu0 0
        %1468 = vmatmul.mubr.bf16.gmra.mxu0 %v1363
        %v1469 = vpop.f32.mrf.mxu0
        %v1470 = vadd.f32 0.0, %v1469
        %v1471 = vpop.f32.mrf.mxu0
        %v1472 = vpop.f32.mrf.mxu0
        %v1473 = vadd.f32 0.0, %v1472
        %v1474 = vpop.f32.mrf.mxu0
        %1475 = vmatprep.mubr.bf16.mxu0 0
        %1476 = vmatmul.mubr.bf16.gmra.mxu0 %v1366
        %v1477 = vpop.f32.mrf.mxu0
        %v1478 = vadd.f32 0.0, %v1477
        %v1479 = vpop.f32.mrf.mxu0
        %v1480 = vpop.f32.mrf.mxu0
        %v1481 = vadd.f32 0.0, %v1480
        %v1482 = vpop.f32.mrf.mxu0
        %1483 = vmatprep.mubr.bf16.mxu0 0
        %1484 = vmatmul.mubr.bf16.gmra.mxu0 %v1369
        %v1485 = vpop.f32.mrf.mxu0
        %v1486 = vadd.f32 0.0, %v1485
        %v1487 = vpop.f32.mrf.mxu0
        %v1488 = vpop.f32.mrf.mxu0
        %v1489 = vadd.f32 0.0, %v1488
        %v1490 = vpop.f32.mrf.mxu0
        %1491 = vmatprep.mubr.bf16.mxu0 0
        %1492 = vmatmul.mubr.bf16.gmra.mxu0 %v1372
        %v1493 = vpop.f32.mrf.mxu0
        %v1494 = vadd.f32 0.0, %v1493
        %v1495 = vpop.f32.mrf.mxu0
        %v1496 = vpop.f32.mrf.mxu0
        %v1497 = vadd.f32 0.0, %v1496
        %v1498 = vpop.f32.mrf.mxu0
        %1499 = vmatprep.mubr.bf16.mxu0 0
        %1500 = vmatmul.mubr.bf16.gmra.mxu0 %v1375
        %v1501 = vpop.f32.mrf.mxu0
        %v1502 = vadd.f32 0.0, %v1501
        %v1503 = vpop.f32.mrf.mxu0
        %v1504 = vpop.f32.mrf.mxu0
        %v1505 = vadd.f32 0.0, %v1504
        %v1506 = vpop.f32.mrf.mxu0
        %1507 = vmatprep.mubr.bf16.mxu0 0
        %1508 = vmatmul.mubr.bf16.gmra.mxu0 %v1378
        %v1509 = vpop.f32.mrf.mxu0
        %v1510 = vadd.f32 0.0, %v1509
        %v1511 = vpop.f32.mrf.mxu0
        %v1512 = vpop.f32.mrf.mxu0
        %v1513 = vadd.f32 0.0, %v1512
        %v1514 = vpop.f32.mrf.mxu0
        %1515 = vmatprep.mubr.bf16.mxu0 0
        %1516 = vmatmul.mubr.bf16.gmra.mxu0 %v1381
        %v1517 = vpop.f32.mrf.mxu0
        %v1518 = vadd.f32 0.0, %v1517
        %v1519 = vpop.f32.mrf.mxu0
        %v1520 = vpop.f32.mrf.mxu0
        %v1521 = vadd.f32 0.0, %v1520
        %v1522 = vpop.f32.mrf.mxu0
        %1523 = vmatprep.mubr.bf16.mxu0 0
        %1524 = vmatmul.mubr.bf16.gmra.mxu0 %v1384
        %v1525 = vpop.f32.mrf.mxu0
        %v1526 = vadd.f32 0.0, %v1525
        %v1527 = vpop.f32.mrf.mxu0
        %v1528 = vpop.f32.mrf.mxu0
        %v1529 = vadd.f32 0.0, %v1528
        %v1530 = vpop.f32.mrf.mxu0
        %1531 = vmatprep.mubr.bf16.mxu0 0
        %1532 = vmatmul.mubr.bf16.gmra.mxu0 %v1387
        %v1533 = vpop.f32.mrf.mxu0
        %v1534 = vadd.f32 0.0, %v1533
        %v1535 = vpop.f32.mrf.mxu0
        %v1536 = vpop.f32.mrf.mxu0
        %v1537 = vadd.f32 0.0, %v1536
        %v1538 = vpop.f32.mrf.mxu0
        %1539 = vmatprep.mubr.bf16.mxu0 0
        %1540 = vmatmul.mubr.bf16.gmra.mxu0 %v1390
        %v1541 = vpop.f32.mrf.mxu0
        %v1542 = vadd.f32 0.0, %v1541
        %v1543 = vpop.f32.mrf.mxu0
        %v1544 = vpop.f32.mrf.mxu0
        %v1545 = vadd.f32 0.0, %v1544
        %v1546 = vpop.f32.mrf.mxu0
        %1547 = vmatprep.mubr.bf16.mxu0 0
        %1548 = vmatmul.mubr.bf16.gmra.mxu0 %v1393
        %v1549 = vpop.f32.mrf.mxu0
        %v1550 = vadd.f32 0.0, %v1549
        %v1551 = vpop.f32.mrf.mxu0
        %v1552 = vpop.f32.mrf.mxu0
        %v1553 = vadd.f32 0.0, %v1552
        %v1554 = vpop.f32.mrf.mxu0
        %1555 = vdwg.mxu0
        %v1557 = vsel %vm644, %v1327, 0
        %v1560 = vsel %vm644, %v1328, 0
        %v1563 = vsel %vm644, %v1329, 0
        %v1566 = vsel %vm644, %v1330, 0
        %v1569 = vsel %vm644, %v1331, 0
        %v1572 = vsel %vm644, %v1332, 0
        %v1575 = vsel %vm644, %v1333, 0
        %v1578 = vsel %vm644, %v1334, 0
        %v1581 = vsel %vm644, %v1335, 0
        %v1584 = vsel %vm644, %v1336, 0
        %v1587 = vsel %vm644, %v1337, 0
        %v1590 = vsel %vm644, %v1338, 0
        %v1593 = vsel %vm644, %v1339, 0
        %v1596 = vsel %vm644, %v1340, 0
        %v1599 = vsel %vm644, %v1341, 0
        %v1602 = vsel %vm644, %v1342, 0
        %1604 = vmatprep.subr.bf16.mxu0 0
        %1605 = vmatpush1.bf16.msra.mxu0 0
        %1606 = vmatprep.subr.bf16.mxu0 0
        %1607 = vmatpush1.bf16.msra.mxu0 0
        %1608 = vmatprep.subr.bf16.mxu0 0
        %1609 = vmatpush1.bf16.msra.mxu0 0
        %1610 = vmatprep.subr.bf16.mxu0 0
        %1611 = vmatpush1.bf16.msra.mxu0 0
        %1612 = vmatprep.subr.bf16.mxu0 0
        %1613 = vmatpush1.bf16.msra.mxu0 0
        %1614 = vmatprep.subr.bf16.mxu0 0
        %1615 = vmatpush1.bf16.msra.mxu0 0
        %1616 = vmatprep.subr.bf16.mxu0 0
        %1617 = vmatpush1.bf16.msra.mxu0 %v1346
        %1618 = vmatprep.subr.bf16.mxu0 0
        %1619 = vmatpush1.bf16.msra.mxu0 %v1345
        %1620 = vmatprep.subr.bf16.mxu0 0
        %1621 = vmatpush2.bf16.msra.mxu0 0
        %1622 = vmatprep.subr.bf16.mxu0 0
        %1623 = vmatpush2.bf16.msra.mxu0 0
        %1624 = vmatprep.subr.bf16.mxu0 0
        %1625 = vmatpush2.bf16.msra.mxu0 0
        %1626 = vmatprep.subr.bf16.mxu0 0
        %1627 = vmatpush2.bf16.msra.mxu0 0
        %1628 = vmatprep.subr.bf16.mxu0 0
        %1629 = vmatpush2.bf16.msra.mxu0 0
        %1630 = vmatprep.subr.bf16.mxu0 0
        %1631 = vmatpush2.bf16.msra.mxu0 0
        %1632 = vmatprep.subr.bf16.mxu0 0
        %1633 = vmatpush2.bf16.msra.mxu0 0
        %1634 = vmatprep.subr.bf16.mxu0 0
        %1635 = vmatpush2.bf16.msra.mxu0 0
        %1636 = vmatprep.mubr.bf16.mxu0 0
        %1637 = vmatmul.mubr.bf16.gmra.mxu0 %v1557
        %v1638 = vpop.f32.mrf.mxu0
        %v1639 = vadd.f32 0.0, %v1638
        %v1640 = vpop.f32.mrf.mxu0
        %v1641 = vpop.f32.mrf.mxu0
        %v1642 = vadd.f32 0.0, %v1641
        %v1643 = vpop.f32.mrf.mxu0
        %1644 = vmatprep.mubr.bf16.mxu0 0
        %1645 = vmatmul.mubr.bf16.gmra.mxu0 %v1560
        %v1646 = vpop.f32.mrf.mxu0
        %v1647 = vadd.f32 0.0, %v1646
        %v1648 = vpop.f32.mrf.mxu0
        %v1649 = vpop.f32.mrf.mxu0
        %v1650 = vadd.f32 0.0, %v1649
        %v1651 = vpop.f32.mrf.mxu0
        %1652 = vmatprep.mubr.bf16.mxu0 0
        %1653 = vmatmul.mubr.bf16.gmra.mxu0 %v1563
        %v1654 = vpop.f32.mrf.mxu0
        %v1655 = vadd.f32 0.0, %v1654
        %v1656 = vpop.f32.mrf.mxu0
        %v1657 = vpop.f32.mrf.mxu0
        %v1658 = vadd.f32 0.0, %v1657
        %v1659 = vpop.f32.mrf.mxu0
        %1660 = vmatprep.mubr.bf16.mxu0 0
        %1661 = vmatmul.mubr.bf16.gmra.mxu0 %v1566
        %v1662 = vpop.f32.mrf.mxu0
        %v1663 = vadd.f32 0.0, %v1662
        %v1664 = vpop.f32.mrf.mxu0
        %v1665 = vpop.f32.mrf.mxu0
        %v1666 = vadd.f32 0.0, %v1665
        %v1667 = vpop.f32.mrf.mxu0
        %1668 = vmatprep.mubr.bf16.mxu0 0
        %1669 = vmatmul.mubr.bf16.gmra.mxu0 %v1569
        %v1670 = vpop.f32.mrf.mxu0
        %v1671 = vadd.f32 0.0, %v1670
        %v1672 = vpop.f32.mrf.mxu0
        %v1673 = vpop.f32.mrf.mxu0
        %v1674 = vadd.f32 0.0, %v1673
        %v1675 = vpop.f32.mrf.mxu0
        %1676 = vmatprep.mubr.bf16.mxu0 0
        %1677 = vmatmul.mubr.bf16.gmra.mxu0 %v1572
        %v1678 = vpop.f32.mrf.mxu0
        %v1679 = vadd.f32 0.0, %v1678
        %v1680 = vpop.f32.mrf.mxu0
        %v1681 = vpop.f32.mrf.mxu0
        %v1682 = vadd.f32 0.0, %v1681
        %v1683 = vpop.f32.mrf.mxu0
        %1684 = vmatprep.mubr.bf16.mxu0 0
        %1685 = vmatmul.mubr.bf16.gmra.mxu0 %v1575
        %v1686 = vpop.f32.mrf.mxu0
        %v1687 = vadd.f32 0.0, %v1686
        %v1688 = vpop.f32.mrf.mxu0
        %v1689 = vpop.f32.mrf.mxu0
        %v1690 = vadd.f32 0.0, %v1689
        %v1691 = vpop.f32.mrf.mxu0
        %1692 = vmatprep.mubr.bf16.mxu0 0
        %1693 = vmatmul.mubr.bf16.gmra.mxu0 %v1578
        %v1694 = vpop.f32.mrf.mxu0
        %v1695 = vadd.f32 0.0, %v1694
        %v1696 = vpop.f32.mrf.mxu0
        %v1697 = vpop.f32.mrf.mxu0
        %v1698 = vadd.f32 0.0, %v1697
        %v1699 = vpop.f32.mrf.mxu0
        %1700 = vmatprep.mubr.bf16.mxu0 0
        %1701 = vmatmul.mubr.bf16.gmra.mxu0 %v1581
        %v1702 = vpop.f32.mrf.mxu0
        %v1703 = vadd.f32 0.0, %v1702
        %v1704 = vpop.f32.mrf.mxu0
        %v1705 = vpop.f32.mrf.mxu0
        %v1706 = vadd.f32 0.0, %v1705
        %v1707 = vpop.f32.mrf.mxu0
        %1708 = vmatprep.mubr.bf16.mxu0 0
        %1709 = vmatmul.mubr.bf16.gmra.mxu0 %v1584
        %v1710 = vpop.f32.mrf.mxu0
        %v1711 = vadd.f32 0.0, %v1710
        %v1712 = vpop.f32.mrf.mxu0
        %v1713 = vpop.f32.mrf.mxu0
        %v1714 = vadd.f32 0.0, %v1713
        %v1715 = vpop.f32.mrf.mxu0
        %1716 = vmatprep.mubr.bf16.mxu0 0
        %1717 = vmatmul.mubr.bf16.gmra.mxu0 %v1587
        %v1718 = vpop.f32.mrf.mxu0
        %v1719 = vadd.f32 0.0, %v1718
        %v1720 = vpop.f32.mrf.mxu0
        %v1721 = vpop.f32.mrf.mxu0
        %v1722 = vadd.f32 0.0, %v1721
        %v1723 = vpop.f32.mrf.mxu0
        %1724 = vmatprep.mubr.bf16.mxu0 0
        %1725 = vmatmul.mubr.bf16.gmra.mxu0 %v1590
        %v1726 = vpop.f32.mrf.mxu0
        %v1727 = vadd.f32 0.0, %v1726
        %v1728 = vpop.f32.mrf.mxu0
        %v1729 = vpop.f32.mrf.mxu0
        %v1730 = vadd.f32 0.0, %v1729
        %v1731 = vpop.f32.mrf.mxu0
        %1732 = vmatprep.mubr.bf16.mxu0 0
        %1733 = vmatmul.mubr.bf16.gmra.mxu0 %v1593
        %v1734 = vpop.f32.mrf.mxu0
        %v1735 = vadd.f32 0.0, %v1734
        %v1736 = vpop.f32.mrf.mxu0
        %v1737 = vpop.f32.mrf.mxu0
        %v1738 = vadd.f32 0.0, %v1737
        %v1739 = vpop.f32.mrf.mxu0
        %1740 = vmatprep.mubr.bf16.mxu0 0
        %1741 = vmatmul.mubr.bf16.gmra.mxu0 %v1596
        %v1742 = vpop.f32.mrf.mxu0
        %v1743 = vadd.f32 0.0, %v1742
        %v1744 = vpop.f32.mrf.mxu0
        %v1745 = vpop.f32.mrf.mxu0
        %v1746 = vadd.f32 0.0, %v1745
        %v1747 = vpop.f32.mrf.mxu0
        %1748 = vmatprep.mubr.bf16.mxu0 0
        %1749 = vmatmul.mubr.bf16.gmra.mxu0 %v1599
        %v1750 = vpop.f32.mrf.mxu0
        %v1751 = vadd.f32 0.0, %v1750
        %v1752 = vpop.f32.mrf.mxu0
        %v1753 = vpop.f32.mrf.mxu0
        %v1754 = vadd.f32 0.0, %v1753
        %v1755 = vpop.f32.mrf.mxu0
        %1756 = vmatprep.mubr.bf16.mxu0 0
        %1757 = vmatmul.mubr.bf16.gmra.mxu0 %v1602
        %v1758 = vpop.f32.mrf.mxu0
        %v1759 = vadd.f32 0.0, %v1758
        %v1760 = vpop.f32.mrf.mxu0
        %v1761 = vpop.f32.mrf.mxu0
        %v1762 = vadd.f32 0.0, %v1761
        %v1763 = vpop.f32.mrf.mxu0
        %1764 = vdwg.mxu0
        %v1765 = vld [vmem:[%s625] sm:$0xf]
        %v1766 = vld [vmem:[%s625 + $0x4] sm:$0xf]
        %v1767 = vld [vmem:[%s625 + $0x8] sm:$0xf]
        %v1768 = vld [vmem:[%s625 + $0xc] sm:$0xf]
        %v1769 = vld [vmem:[%s625 + $0x10] sm:$0xf]
        %v1770 = vld [vmem:[%s625 + $0x14] sm:$0xf]
        %v1771 = vld [vmem:[%s625 + $0x18] sm:$0xf]
        %v1772 = vld [vmem:[%s625 + $0x1c] sm:$0xf]
        %v1773 = vld [vmem:[%s625 + $0x20] sm:$0xf]
        %v1774 = vld [vmem:[%s625 + $0x24] sm:$0xf]
        %v1775 = vld [vmem:[%s625 + $0x28] sm:$0xf]
        %v1776 = vld [vmem:[%s625 + $0x2c] sm:$0xf]
        %v1777 = vld [vmem:[%s625 + $0x30] sm:$0xf]
        %v1778 = vld [vmem:[%s625 + $0x34] sm:$0xf]
        %v1779 = vld [vmem:[%s625 + $0x38] sm:$0xf]
        %v1780 = vld [vmem:[%s625 + $0x3c] sm:$0xf]
        %v1781 = vld [vmem:[%s625 + $0x40] sm:$0xf]
        %v1782 = vld [vmem:[%s625 + $0x44] sm:$0xf]
        %v1783 = vld [vmem:[%s625 + $0x48] sm:$0xf]
        %v1784 = vld [vmem:[%s625 + $0x4c] sm:$0xf]
        %v1785 = vld [vmem:[%s625 + $0x50] sm:$0xf]
        %v1786 = vld [vmem:[%s625 + $0x54] sm:$0xf]
        %v1787 = vld [vmem:[%s625 + $0x58] sm:$0xf]
        %v1788 = vld [vmem:[%s625 + $0x5c] sm:$0xf]
        %v1789 = vld [vmem:[%s625 + $0x60] sm:$0xf]
        %v1790 = vld [vmem:[%s625 + $0x64] sm:$0xf]
        %v1791 = vld [vmem:[%s625 + $0x68] sm:$0xf]
        %v1792 = vld [vmem:[%s625 + $0x6c] sm:$0xf]
        %v1793 = vld [vmem:[%s625 + $0x70] sm:$0xf]
        %v1794 = vld [vmem:[%s625 + $0x74] sm:$0xf]
        %v1795 = vld [vmem:[%s625 + $0x78] sm:$0xf]
        %v1796 = vld [vmem:[%s625 + $0x7c] sm:$0xf]
        %v1797 = vld [vmem:[%s625 + $0x80] sm:$0xf]
        %v1798 = vld [vmem:[%s625 + $0x84] sm:$0xf]
        %v1799 = vld [vmem:[%s625 + $0x88] sm:$0xf]
        %v1800 = vld [vmem:[%s625 + $0x8c] sm:$0xf]
        %v1801 = vld [vmem:[%s625 + $0x90] sm:$0xf]
        %v1802 = vld [vmem:[%s625 + $0x94] sm:$0xf]
        %v1803 = vld [vmem:[%s625 + $0x98] sm:$0xf]
        %v1804 = vld [vmem:[%s625 + $0x9c] sm:$0xf]
        %v1805 = vld [vmem:[%s625 + $0xa0] sm:$0xf]
        %v1806 = vld [vmem:[%s625 + $0xa4] sm:$0xf]
        %v1807 = vld [vmem:[%s625 + $0xa8] sm:$0xf]
        %v1808 = vld [vmem:[%s625 + $0xac] sm:$0xf]
        %v1809 = vld [vmem:[%s625 + $0xb0] sm:$0xf]
        %v1810 = vld [vmem:[%s625 + $0xb4] sm:$0xf]
        %v1811 = vld [vmem:[%s625 + $0xb8] sm:$0xf]
        %v1812 = vld [vmem:[%s625 + $0xbc] sm:$0xf]
        %v1813 = vld [vmem:[%s625 + $0xc0] sm:$0xf]
        %v1814 = vld [vmem:[%s625 + $0xc4] sm:$0xf]
        %v1815 = vld [vmem:[%s625 + $0xc8] sm:$0xf]
        %v1816 = vld [vmem:[%s625 + $0xcc] sm:$0xf]
        %v1817 = vld [vmem:[%s625 + $0xd0] sm:$0xf]
        %v1818 = vld [vmem:[%s625 + $0xd4] sm:$0xf]
        %v1819 = vld [vmem:[%s625 + $0xd8] sm:$0xf]
        %v1820 = vld [vmem:[%s625 + $0xdc] sm:$0xf]
        %v1821 = vld [vmem:[%s625 + $0xe0] sm:$0xf]
        %v1822 = vld [vmem:[%s625 + $0xe4] sm:$0xf]
        %v1823 = vld [vmem:[%s625 + $0xe8] sm:$0xf]
        %v1824 = vld [vmem:[%s625 + $0xec] sm:$0xf]
        %v1825 = vld [vmem:[%s625 + $0xf0] sm:$0xf]
        %v1826 = vld [vmem:[%s625 + $0xf4] sm:$0xf]
        %v1827 = vld [vmem:[%s625 + $0xf8] sm:$0xf]
        %v1828 = vld [vmem:[%s625 + $0xfc] sm:$0xf]
        %v1829 = vunpack.c.l.bf16 %v1765
        %v1830 = vunpack.c.l.bf16 %v1766
        %v1831 = vunpack.c.l.bf16 %v1767
        %v1832 = vunpack.c.l.bf16 %v1768
        %v1833 = vunpack.c.l.bf16 %v1769
        %v1834 = vunpack.c.l.bf16 %v1770
        %v1835 = vunpack.c.l.bf16 %v1771
        %v1836 = vunpack.c.l.bf16 %v1772
        %v1837 = vunpack.c.l.bf16 %v1773
        %v1838 = vunpack.c.l.bf16 %v1774
        %v1839 = vunpack.c.l.bf16 %v1775
        %v1840 = vunpack.c.l.bf16 %v1776
        %v1841 = vunpack.c.l.bf16 %v1777
        %v1842 = vunpack.c.l.bf16 %v1778
        %v1843 = vunpack.c.l.bf16 %v1779
        %v1844 = vunpack.c.l.bf16 %v1780
        %v1845 = vunpack.c.l.bf16 %v1781
        %v1846 = vunpack.c.l.bf16 %v1782
        %v1847 = vunpack.c.l.bf16 %v1783
        %v1848 = vunpack.c.l.bf16 %v1784
        %v1849 = vunpack.c.l.bf16 %v1785
        %v1850 = vunpack.c.l.bf16 %v1786
        %v1851 = vunpack.c.l.bf16 %v1787
        %v1852 = vunpack.c.l.bf16 %v1788
        %v1853 = vunpack.c.l.bf16 %v1789
        %v1854 = vunpack.c.l.bf16 %v1790
        %v1855 = vunpack.c.l.bf16 %v1791
        %v1856 = vunpack.c.l.bf16 %v1792
        %v1857 = vunpack.c.l.bf16 %v1793
        %v1858 = vunpack.c.l.bf16 %v1794
        %v1859 = vunpack.c.l.bf16 %v1795
        %v1860 = vunpack.c.l.bf16 %v1796
        %v1861 = vunpack.c.l.bf16 %v1797
        %v1862 = vunpack.c.l.bf16 %v1798
        %v1863 = vunpack.c.l.bf16 %v1799
        %v1864 = vunpack.c.l.bf16 %v1800
        %v1865 = vunpack.c.l.bf16 %v1801
        %v1866 = vunpack.c.l.bf16 %v1802
        %v1867 = vunpack.c.l.bf16 %v1803
        %v1868 = vunpack.c.l.bf16 %v1804
        %v1869 = vunpack.c.l.bf16 %v1805
        %v1870 = vunpack.c.l.bf16 %v1806
        %v1871 = vunpack.c.l.bf16 %v1807
        %v1872 = vunpack.c.l.bf16 %v1808
        %v1873 = vunpack.c.l.bf16 %v1809
        %v1874 = vunpack.c.l.bf16 %v1810
        %v1875 = vunpack.c.l.bf16 %v1811
        %v1876 = vunpack.c.l.bf16 %v1812
        %v1877 = vunpack.c.l.bf16 %v1813
        %v1878 = vunpack.c.l.bf16 %v1814
        %v1879 = vunpack.c.l.bf16 %v1815
        %v1880 = vunpack.c.l.bf16 %v1816
        %v1881 = vunpack.c.l.bf16 %v1817
        %v1882 = vunpack.c.l.bf16 %v1818
        %v1883 = vunpack.c.l.bf16 %v1819
        %v1884 = vunpack.c.l.bf16 %v1820
        %v1885 = vunpack.c.l.bf16 %v1821
        %v1886 = vunpack.c.l.bf16 %v1822
        %v1887 = vunpack.c.l.bf16 %v1823
        %v1888 = vunpack.c.l.bf16 %v1824
        %v1889 = vunpack.c.l.bf16 %v1825
        %v1890 = vunpack.c.l.bf16 %v1826
        %v1891 = vunpack.c.l.bf16 %v1827
        %v1892 = vunpack.c.l.bf16 %v1828
        %v1893 = vadd.f32 %v1430, %v1829
        %v1894 = vadd.f32 %v1433, %v1830
        %v1895 = vadd.f32 %v1438, %v1831
        %v1896 = vadd.f32 %v1441, %v1832
        %v1897 = vadd.f32 %v1446, %v1833
        %v1898 = vadd.f32 %v1449, %v1834
        %v1899 = vadd.f32 %v1454, %v1835
        %v1900 = vadd.f32 %v1457, %v1836
        %v1901 = vadd.f32 %v1462, %v1837
        %v1902 = vadd.f32 %v1465, %v1838
        %v1903 = vadd.f32 %v1470, %v1839
        %v1904 = vadd.f32 %v1473, %v1840
        %v1905 = vadd.f32 %v1478, %v1841
        %v1906 = vadd.f32 %v1481, %v1842
        %v1907 = vadd.f32 %v1486, %v1843
        %v1908 = vadd.f32 %v1489, %v1844
        %v1909 = vadd.f32 %v1494, %v1845
        %v1910 = vadd.f32 %v1497, %v1846
        %v1911 = vadd.f32 %v1502, %v1847
        %v1912 = vadd.f32 %v1505, %v1848
        %v1913 = vadd.f32 %v1510, %v1849
        %v1914 = vadd.f32 %v1513, %v1850
        %v1915 = vadd.f32 %v1518, %v1851
        %v1916 = vadd.f32 %v1521, %v1852
        %v1917 = vadd.f32 %v1526, %v1853
        %v1918 = vadd.f32 %v1529, %v1854
        %v1919 = vadd.f32 %v1534, %v1855
        %v1920 = vadd.f32 %v1537, %v1856
        %v1921 = vadd.f32 %v1542, %v1857
        %v1922 = vadd.f32 %v1545, %v1858
        %v1923 = vadd.f32 %v1550, %v1859
        %v1924 = vadd.f32 %v1553, %v1860
        %v1925 = vadd.f32 %v1639, %v1861
        %v1926 = vadd.f32 %v1642, %v1862
        %v1927 = vadd.f32 %v1647, %v1863
        %v1928 = vadd.f32 %v1650, %v1864
        %v1929 = vadd.f32 %v1655, %v1865
        %v1930 = vadd.f32 %v1658, %v1866
        %v1931 = vadd.f32 %v1663, %v1867
        %v1932 = vadd.f32 %v1666, %v1868
        %v1933 = vadd.f32 %v1671, %v1869
        %v1934 = vadd.f32 %v1674, %v1870
        %v1935 = vadd.f32 %v1679, %v1871
        %v1936 = vadd.f32 %v1682, %v1872
        %v1937 = vadd.f32 %v1687, %v1873
        %v1938 = vadd.f32 %v1690, %v1874
        %v1939 = vadd.f32 %v1695, %v1875
        %v1940 = vadd.f32 %v1698, %v1876
        %v1941 = vadd.f32 %v1703, %v1877
        %v1942 = vadd.f32 %v1706, %v1878
        %v1943 = vadd.f32 %v1711, %v1879
        %v1944 = vadd.f32 %v1714, %v1880
        %v1945 = vadd.f32 %v1719, %v1881
        %v1946 = vadd.f32 %v1722, %v1882
        %v1947 = vadd.f32 %v1727, %v1883
        %v1948 = vadd.f32 %v1730, %v1884
        %v1949 = vadd.f32 %v1735, %v1885
        %v1950 = vadd.f32 %v1738, %v1886
        %v1951 = vadd.f32 %v1743, %v1887
        %v1952 = vadd.f32 %v1746, %v1888
        %v1953 = vadd.f32 %v1751, %v1889
        %v1954 = vadd.f32 %v1754, %v1890
        %v1955 = vadd.f32 %v1759, %v1891
        %v1956 = vadd.f32 %v1762, %v1892
        %vm1957 = vcmask 523264
        %v1958 = vsel %vm1957, %v1893, -inf
        %1959 = vmax.xlane.f32.xlu0 %v1958
        %v1960 = vpop.xlane.xlu0 %1959
        %v1961 = vsel %vm1957, %v1894, -inf
        %1962 = vmax.xlane.f32.xlu0 %v1961
        %v1963 = vpop.xlane.xlu0 %1962
        %v1964 = vsel %vm1957, %v1895, -inf
        %1965 = vmax.xlane.f32.xlu0 %v1964
        %v1966 = vpop.xlane.xlu0 %1965
        %v1967 = vsel %vm1957, %v1896, -inf
        %1968 = vmax.xlane.f32.xlu0 %v1967
        %v1969 = vpop.xlane.xlu0 %1968
        %v1970 = vsel %vm1957, %v1897, -inf
        %1971 = vmax.xlane.f32.xlu0 %v1970
        %v1972 = vpop.xlane.xlu0 %1971
        %v1973 = vsel %vm1957, %v1898, -inf
        %1974 = vmax.xlane.f32.xlu0 %v1973
        %v1975 = vpop.xlane.xlu0 %1974
        %v1976 = vsel %vm1957, %v1899, -inf
        %1977 = vmax.xlane.f32.xlu0 %v1976
        %v1978 = vpop.xlane.xlu0 %1977
        %v1979 = vsel %vm1957, %v1900, -inf
        %1980 = vmax.xlane.f32.xlu0 %v1979
        %v1981 = vpop.xlane.xlu0 %1980
        %v1982 = vsel %vm1957, %v1901, -inf
        %1983 = vmax.xlane.f32.xlu0 %v1982
        %v1984 = vpop.xlane.xlu0 %1983
        %v1985 = vsel %vm1957, %v1902, -inf
        %1986 = vmax.xlane.f32.xlu0 %v1985
        %v1987 = vpop.xlane.xlu0 %1986
        %v1988 = vsel %vm1957, %v1903, -inf
        %1989 = vmax.xlane.f32.xlu0 %v1988
        %v1990 = vpop.xlane.xlu0 %1989
        %v1991 = vsel %vm1957, %v1904, -inf
        %1992 = vmax.xlane.f32.xlu0 %v1991
        %v1993 = vpop.xlane.xlu0 %1992
        %v1994 = vsel %vm1957, %v1905, -inf
        %1995 = vmax.xlane.f32.xlu0 %v1994
        %v1996 = vpop.xlane.xlu0 %1995
        %v1997 = vsel %vm1957, %v1906, -inf
        %1998 = vmax.xlane.f32.xlu0 %v1997
        %v1999 = vpop.xlane.xlu0 %1998
        %v2000 = vsel %vm1957, %v1907, -inf
        %2001 = vmax.xlane.f32.xlu0 %v2000
        %v2002 = vpop.xlane.xlu0 %2001
        %v2003 = vsel %vm1957, %v1908, -inf
        %2004 = vmax.xlane.f32.xlu0 %v2003
        %v2005 = vpop.xlane.xlu0 %2004
        %v2006 = vsel %vm1957, %v1909, -inf
        %2007 = vmax.xlane.f32.xlu0 %v2006
        %v2008 = vpop.xlane.xlu0 %2007
        %v2009 = vsel %vm1957, %v1910, -inf
        %2010 = vmax.xlane.f32.xlu0 %v2009
        %v2011 = vpop.xlane.xlu0 %2010
        %v2012 = vsel %vm1957, %v1911, -inf
        %2013 = vmax.xlane.f32.xlu0 %v2012
        %v2014 = vpop.xlane.xlu0 %2013
        %v2015 = vsel %vm1957, %v1912, -inf
        %2016 = vmax.xlane.f32.xlu0 %v2015
        %v2017 = vpop.xlane.xlu0 %2016
        %v2018 = vsel %vm1957, %v1913, -inf
        %2019 = vmax.xlane.f32.xlu0 %v2018
        %v2020 = vpop.xlane.xlu0 %2019
        %v2021 = vsel %vm1957, %v1914, -inf
        %2022 = vmax.xlane.f32.xlu0 %v2021
        %v2023 = vpop.xlane.xlu0 %2022
        %v2024 = vsel %vm1957, %v1915, -inf
        %2025 = vmax.xlane.f32.xlu0 %v2024
        %v2026 = vpop.xlane.xlu0 %2025
        %v2027 = vsel %vm1957, %v1916, -inf
        %2028 = vmax.xlane.f32.xlu0 %v2027
        %v2029 = vpop.xlane.xlu0 %2028
        %v2030 = vsel %vm1957, %v1917, -inf
        %2031 = vmax.xlane.f32.xlu0 %v2030
        %v2032 = vpop.xlane.xlu0 %2031
        %v2033 = vsel %vm1957, %v1918, -inf
        %2034 = vmax.xlane.f32.xlu0 %v2033
        %v2035 = vpop.xlane.xlu0 %2034
        %v2036 = vsel %vm1957, %v1919, -inf
        %2037 = vmax.xlane.f32.xlu0 %v2036
        %v2038 = vpop.xlane.xlu0 %2037
        %v2039 = vsel %vm1957, %v1920, -inf
        %2040 = vmax.xlane.f32.xlu0 %v2039
        %v2041 = vpop.xlane.xlu0 %2040
        %v2042 = vsel %vm1957, %v1921, -inf
        %2043 = vmax.xlane.f32.xlu0 %v2042
        %v2044 = vpop.xlane.xlu0 %2043
        %v2045 = vsel %vm1957, %v1922, -inf
        %2046 = vmax.xlane.f32.xlu0 %v2045
        %v2047 = vpop.xlane.xlu0 %2046
        %v2048 = vsel %vm1957, %v1923, -inf
        %2049 = vmax.xlane.f32.xlu0 %v2048
        %v2050 = vpop.xlane.xlu0 %2049
        %v2051 = vsel %vm1957, %v1924, -inf
        %2052 = vmax.xlane.f32.xlu0 %v2051
        %v2053 = vpop.xlane.xlu0 %2052
        %v2054 = vsel %vm1957, %v1925, -inf
        %2055 = vmax.xlane.f32.xlu0 %v2054
        %v2056 = vpop.xlane.xlu0 %2055
        %v2057 = vsel %vm1957, %v1926, -inf
        %2058 = vmax.xlane.f32.xlu0 %v2057
        %v2059 = vpop.xlane.xlu0 %2058
        %v2060 = vsel %vm1957, %v1927, -inf
        %2061 = vmax.xlane.f32.xlu0 %v2060
        %v2062 = vpop.xlane.xlu0 %2061
        %v2063 = vsel %vm1957, %v1928, -inf
        %2064 = vmax.xlane.f32.xlu0 %v2063
        %v2065 = vpop.xlane.xlu0 %2064
        %v2066 = vsel %vm1957, %v1929, -inf
        %2067 = vmax.xlane.f32.xlu0 %v2066
        %v2068 = vpop.xlane.xlu0 %2067
        %v2069 = vsel %vm1957, %v1930, -inf
        %2070 = vmax.xlane.f32.xlu0 %v2069
        %v2071 = vpop.xlane.xlu0 %2070
        %v2072 = vsel %vm1957, %v1931, -inf
        %2073 = vmax.xlane.f32.xlu0 %v2072
        %v2074 = vpop.xlane.xlu0 %2073
        %v2075 = vsel %vm1957, %v1932, -inf
        %2076 = vmax.xlane.f32.xlu0 %v2075
        %v2077 = vpop.xlane.xlu0 %2076
        %v2078 = vsel %vm1957, %v1933, -inf
        %2079 = vmax.xlane.f32.xlu0 %v2078
        %v2080 = vpop.xlane.xlu0 %2079
        %v2081 = vsel %vm1957, %v1934, -inf
        %2082 = vmax.xlane.f32.xlu0 %v2081
        %v2083 = vpop.xlane.xlu0 %2082
        %v2084 = vsel %vm1957, %v1935, -inf
        %2085 = vmax.xlane.f32.xlu0 %v2084
        %v2086 = vpop.xlane.xlu0 %2085
        %v2087 = vsel %vm1957, %v1936, -inf
        %2088 = vmax.xlane.f32.xlu0 %v2087
        %v2089 = vpop.xlane.xlu0 %2088
        %v2090 = vsel %vm1957, %v1937, -inf
        %2091 = vmax.xlane.f32.xlu0 %v2090
        %v2092 = vpop.xlane.xlu0 %2091
        %v2093 = vsel %vm1957, %v1938, -inf
        %2094 = vmax.xlane.f32.xlu0 %v2093
        %v2095 = vpop.xlane.xlu0 %2094
        %v2096 = vsel %vm1957, %v1939, -inf
        %2097 = vmax.xlane.f32.xlu0 %v2096
        %v2098 = vpop.xlane.xlu0 %2097
        %v2099 = vsel %vm1957, %v1940, -inf
        %2100 = vmax.xlane.f32.xlu0 %v2099
        %v2101 = vpop.xlane.xlu0 %2100
        %v2102 = vsel %vm1957, %v1941, -inf
        %2103 = vmax.xlane.f32.xlu0 %v2102
        %v2104 = vpop.xlane.xlu0 %2103
        %v2105 = vsel %vm1957, %v1942, -inf
        %2106 = vmax.xlane.f32.xlu0 %v2105
        %v2107 = vpop.xlane.xlu0 %2106
        %v2108 = vsel %vm1957, %v1943, -inf
        %2109 = vmax.xlane.f32.xlu0 %v2108
        %v2110 = vpop.xlane.xlu0 %2109
        %v2111 = vsel %vm1957, %v1944, -inf
        %2112 = vmax.xlane.f32.xlu0 %v2111
        %v2113 = vpop.xlane.xlu0 %2112
        %v2114 = vsel %vm1957, %v1945, -inf
        %2115 = vmax.xlane.f32.xlu0 %v2114
        %v2116 = vpop.xlane.xlu0 %2115
        %v2117 = vsel %vm1957, %v1946, -inf
        %2118 = vmax.xlane.f32.xlu0 %v2117
        %v2119 = vpop.xlane.xlu0 %2118
        %v2120 = vsel %vm1957, %v1947, -inf
        %2121 = vmax.xlane.f32.xlu0 %v2120
        %v2122 = vpop.xlane.xlu0 %2121
        %v2123 = vsel %vm1957, %v1948, -inf
        %2124 = vmax.xlane.f32.xlu0 %v2123
        %v2125 = vpop.xlane.xlu0 %2124
        %v2126 = vsel %vm1957, %v1949, -inf
        %2127 = vmax.xlane.f32.xlu0 %v2126
        %v2128 = vpop.xlane.xlu0 %2127
        %v2129 = vsel %vm1957, %v1950, -inf
        %2130 = vmax.xlane.f32.xlu0 %v2129
        %v2131 = vpop.xlane.xlu0 %2130
        %v2132 = vsel %vm1957, %v1951, -inf
        %2133 = vmax.xlane.f32.xlu0 %v2132
        %v2134 = vpop.xlane.xlu0 %2133
        %v2135 = vsel %vm1957, %v1952, -inf
        %2136 = vmax.xlane.f32.xlu0 %v2135
        %v2137 = vpop.xlane.xlu0 %2136
        %v2138 = vsel %vm1957, %v1953, -inf
        %2139 = vmax.xlane.f32.xlu0 %v2138
        %v2140 = vpop.xlane.xlu0 %2139
        %v2141 = vsel %vm1957, %v1954, -inf
        %2142 = vmax.xlane.f32.xlu0 %v2141
        %v2143 = vpop.xlane.xlu0 %2142
        %v2144 = vsel %vm1957, %v1955, -inf
        %2145 = vmax.xlane.f32.xlu0 %v2144
        %v2146 = vpop.xlane.xlu0 %2145
        %v2147 = vsel %vm1957, %v1956, -inf
        %2148 = vmax.xlane.f32.xlu0 %v2147
        %v2149 = vpop.xlane.xlu0 %2148
        %v2150 = vsub.f32 %v1893, %v1960
        %v2151 = vsub.f32 %v1894, %v1963
        %v2152 = vsub.f32 %v1895, %v1966
        %v2153 = vsub.f32 %v1896, %v1969
        %v2154 = vsub.f32 %v1897, %v1972
        %v2155 = vsub.f32 %v1898, %v1975
        %v2156 = vsub.f32 %v1899, %v1978
        %v2157 = vsub.f32 %v1900, %v1981
        %v2158 = vsub.f32 %v1901, %v1984
        %v2159 = vsub.f32 %v1902, %v1987
        %v2160 = vsub.f32 %v1903, %v1990
        %v2161 = vsub.f32 %v1904, %v1993
        %v2162 = vsub.f32 %v1905, %v1996
        %v2163 = vsub.f32 %v1906, %v1999
        %v2164 = vsub.f32 %v1907, %v2002
        %v2165 = vsub.f32 %v1908, %v2005
        %v2166 = vsub.f32 %v1909, %v2008
        %v2167 = vsub.f32 %v1910, %v2011
        %v2168 = vsub.f32 %v1911, %v2014
        %v2169 = vsub.f32 %v1912, %v2017
        %v2170 = vsub.f32 %v1913, %v2020
        %v2171 = vsub.f32 %v1914, %v2023
        %v2172 = vsub.f32 %v1915, %v2026
        %v2173 = vsub.f32 %v1916, %v2029
        %v2174 = vsub.f32 %v1917, %v2032
        %v2175 = vsub.f32 %v1918, %v2035
        %v2176 = vsub.f32 %v1919, %v2038
        %v2177 = vsub.f32 %v1920, %v2041
        %v2178 = vsub.f32 %v1921, %v2044
        %v2179 = vsub.f32 %v1922, %v2047
        %v2180 = vsub.f32 %v1923, %v2050
        %v2181 = vsub.f32 %v1924, %v2053
        %v2182 = vsub.f32 %v1925, %v2056
        %v2183 = vsub.f32 %v1926, %v2059
        %v2184 = vsub.f32 %v1927, %v2062
        %v2185 = vsub.f32 %v1928, %v2065
        %v2186 = vsub.f32 %v1929, %v2068
        %v2187 = vsub.f32 %v1930, %v2071
        %v2188 = vsub.f32 %v1931, %v2074
        %v2189 = vsub.f32 %v1932, %v2077
        %v2190 = vsub.f32 %v1933, %v2080
        %v2191 = vsub.f32 %v1934, %v2083
        %v2192 = vsub.f32 %v1935, %v2086
        %v2193 = vsub.f32 %v1936, %v2089
        %v2194 = vsub.f32 %v1937, %v2092
        %v2195 = vsub.f32 %v1938, %v2095
        %v2196 = vsub.f32 %v1939, %v2098
        %v2197 = vsub.f32 %v1940, %v2101
        %v2198 = vsub.f32 %v1941, %v2104
        %v2199 = vsub.f32 %v1942, %v2107
        %v2200 = vsub.f32 %v1943, %v2110
        %v2201 = vsub.f32 %v1944, %v2113
        %v2202 = vsub.f32 %v1945, %v2116
        %v2203 = vsub.f32 %v1946, %v2119
        %v2204 = vsub.f32 %v1947, %v2122
        %v2205 = vsub.f32 %v1948, %v2125
        %v2206 = vsub.f32 %v1949, %v2128
        %v2207 = vsub.f32 %v1950, %v2131
        %v2208 = vsub.f32 %v1951, %v2134
        %v2209 = vsub.f32 %v1952, %v2137
        %v2210 = vsub.f32 %v1953, %v2140
        %v2211 = vsub.f32 %v1954, %v2143
        %v2212 = vsub.f32 %v1955, %v2146
        %v2213 = vsub.f32 %v1956, %v2149
        %v2214 = vmul.f32 %v2150, 1.442695
        %v2215 = vpow.pop %v2214
        %v2216 = vmul.f32 %v2151, 1.442695
        %v2217 = vpow.pop %v2216
        %v2218 = vmul.f32 %v2152, 1.442695
        %v2219 = vpow.pop %v2218
        %v2220 = vmul.f32 %v2153, 1.442695
        %v2221 = vpow.pop %v2220
        %v2222 = vmul.f32 %v2154, 1.442695
        %v2223 = vpow.pop %v2222
        %v2224 = vmul.f32 %v2155, 1.442695
        %v2225 = vpow.pop %v2224
        %v2226 = vmul.f32 %v2156, 1.442695
        %v2227 = vpow.pop %v2226
        %v2228 = vmul.f32 %v2157, 1.442695
        %v2229 = vpow.pop %v2228
        %v2230 = vmul.f32 %v2158, 1.442695
        %v2231 = vpow.pop %v2230
        %v2232 = vmul.f32 %v2159, 1.442695
        %v2233 = vpow.pop %v2232
        %v2234 = vmul.f32 %v2160, 1.442695
        %v2235 = vpow.pop %v2234
        %v2236 = vmul.f32 %v2161, 1.442695
        %v2237 = vpow.pop %v2236
        %v2238 = vmul.f32 %v2162, 1.442695
        %v2239 = vpow.pop %v2238
        %v2240 = vmul.f32 %v2163, 1.442695
        %v2241 = vpow.pop %v2240
        %v2242 = vmul.f32 %v2164, 1.442695
        %v2243 = vpow.pop %v2242
        %v2244 = vmul.f32 %v2165, 1.442695
        %v2245 = vpow.pop %v2244
        %v2246 = vmul.f32 %v2166, 1.442695
        %v2247 = vpow.pop %v2246
        %v2248 = vmul.f32 %v2167, 1.442695
        %v2249 = vpow.pop %v2248
        %v2250 = vmul.f32 %v2168, 1.442695
        %v2251 = vpow.pop %v2250
        %v2252 = vmul.f32 %v2169, 1.442695
        %v2253 = vpow.pop %v2252
        %v2254 = vmul.f32 %v2170, 1.442695
        %v2255 = vpow.pop %v2254
        %v2256 = vmul.f32 %v2171, 1.442695
        %v2257 = vpow.pop %v2256
        %v2258 = vmul.f32 %v2172, 1.442695
        %v2259 = vpow.pop %v2258
        %v2260 = vmul.f32 %v2173, 1.442695
        %v2261 = vpow.pop %v2260
        %v2262 = vmul.f32 %v2174, 1.442695
        %v2263 = vpow.pop %v2262
        %v2264 = vmul.f32 %v2175, 1.442695
        %v2265 = vpow.pop %v2264
        %v2266 = vmul.f32 %v2176, 1.442695
        %v2267 = vpow.pop %v2266
        %v2268 = vmul.f32 %v2177, 1.442695
        %v2269 = vpow.pop %v2268
        %v2270 = vmul.f32 %v2178, 1.442695
        %v2271 = vpow.pop %v2270
        %v2272 = vmul.f32 %v2179, 1.442695
        %v2273 = vpow.pop %v2272
        %v2274 = vmul.f32 %v2180, 1.442695
        %v2275 = vpow.pop %v2274
        %v2276 = vmul.f32 %v2181, 1.442695
        %v2277 = vpow.pop %v2276
        %v2278 = vmul.f32 %v2182, 1.442695
        %v2279 = vpow.pop %v2278
        %v2280 = vmul.f32 %v2183, 1.442695
        %v2281 = vpow.pop %v2280
        %v2282 = vmul.f32 %v2184, 1.442695
        %v2283 = vpow.pop %v2282
        %v2284 = vmul.f32 %v2185, 1.442695
        %v2285 = vpow.pop %v2284
        %v2286 = vmul.f32 %v2186, 1.442695
        %v2287 = vpow.pop %v2286
        %v2288 = vmul.f32 %v2187, 1.442695
        %v2289 = vpow.pop %v2288
        %v2290 = vmul.f32 %v2188, 1.442695
        %v2291 = vpow.pop %v2290
        %v2292 = vmul.f32 %v2189, 1.442695
        %v2293 = vpow.pop %v2292
        %v2294 = vmul.f32 %v2190, 1.442695
        %v2295 = vpow.pop %v2294
        %v2296 = vmul.f32 %v2191, 1.442695
        %v2297 = vpow.pop %v2296
        %v2298 = vmul.f32 %v2192, 1.442695
        %v2299 = vpow.pop %v2298
        %v2300 = vmul.f32 %v2193, 1.442695
        %v2301 = vpow.pop %v2300
        %v2302 = vmul.f32 %v2194, 1.442695
        %v2303 = vpow.pop %v2302
        %v2304 = vmul.f32 %v2195, 1.442695
        %v2305 = vpow.pop %v2304
        %v2306 = vmul.f32 %v2196, 1.442695
        %v2307 = vpow.pop %v2306
        %v2308 = vmul.f32 %v2197, 1.442695
        %v2309 = vpow.pop %v2308
        %v2310 = vmul.f32 %v2198, 1.442695
        %v2311 = vpow.pop %v2310
        %v2312 = vmul.f32 %v2199, 1.442695
        %v2313 = vpow.pop %v2312
        %v2314 = vmul.f32 %v2200, 1.442695
        %v2315 = vpow.pop %v2314
        %v2316 = vmul.f32 %v2201, 1.442695
        %v2317 = vpow.pop %v2316
        %v2318 = vmul.f32 %v2202, 1.442695
        %v2319 = vpow.pop %v2318
        %v2320 = vmul.f32 %v2203, 1.442695
        %v2321 = vpow.pop %v2320
        %v2322 = vmul.f32 %v2204, 1.442695
        %v2323 = vpow.pop %v2322
        %v2324 = vmul.f32 %v2205, 1.442695
        %v2325 = vpow.pop %v2324
        %v2326 = vmul.f32 %v2206, 1.442695
        %v2327 = vpow.pop %v2326
        %v2328 = vmul.f32 %v2207, 1.442695
        %v2329 = vpow.pop %v2328
        %v2330 = vmul.f32 %v2208, 1.442695
        %v2331 = vpow.pop %v2330
        %v2332 = vmul.f32 %v2209, 1.442695
        %v2333 = vpow.pop %v2332
        %v2334 = vmul.f32 %v2210, 1.442695
        %v2335 = vpow.pop %v2334
        %v2336 = vmul.f32 %v2211, 1.442695
        %v2337 = vpow.pop %v2336
        %v2338 = vmul.f32 %v2212, 1.442695
        %v2339 = vpow.pop %v2338
        %v2340 = vmul.f32 %v2213, 1.442695
        %v2341 = vpow.pop %v2340
        %v2342 = vsel %vm1957, %v2215, 0.0
        %2343 = vadd.xlane.f32.xlu0 %v2342
        %v2344 = vpop.xlane.xlu0 %2343
        %v2345 = vsel %vm1957, %v2217, 0.0
        %2346 = vadd.xlane.f32.xlu0 %v2345
        %v2347 = vpop.xlane.xlu0 %2346
        %v2348 = vsel %vm1957, %v2219, 0.0
        %2349 = vadd.xlane.f32.xlu0 %v2348
        %v2350 = vpop.xlane.xlu0 %2349
        %v2351 = vsel %vm1957, %v2221, 0.0
        %2352 = vadd.xlane.f32.xlu0 %v2351
        %v2353 = vpop.xlane.xlu0 %2352
        %v2354 = vsel %vm1957, %v2223, 0.0
        %2355 = vadd.xlane.f32.xlu0 %v2354
        %v2356 = vpop.xlane.xlu0 %2355
        %v2357 = vsel %vm1957, %v2225, 0.0
        %2358 = vadd.xlane.f32.xlu0 %v2357
        %v2359 = vpop.xlane.xlu0 %2358
        %v2360 = vsel %vm1957, %v2227, 0.0
        %2361 = vadd.xlane.f32.xlu0 %v2360
        %v2362 = vpop.xlane.xlu0 %2361
        %v2363 = vsel %vm1957, %v2229, 0.0
        %2364 = vadd.xlane.f32.xlu0 %v2363
        %v2365 = vpop.xlane.xlu0 %2364
        %v2366 = vsel %vm1957, %v2231, 0.0
        %2367 = vadd.xlane.f32.xlu0 %v2366
        %v2368 = vpop.xlane.xlu0 %2367
        %v2369 = vsel %vm1957, %v2233, 0.0
        %2370 = vadd.xlane.f32.xlu0 %v2369
        %v2371 = vpop.xlane.xlu0 %2370
        %v2372 = vsel %vm1957, %v2235, 0.0
        %2373 = vadd.xlane.f32.xlu0 %v2372
        %v2374 = vpop.xlane.xlu0 %2373
        %v2375 = vsel %vm1957, %v2237, 0.0
        %2376 = vadd.xlane.f32.xlu0 %v2375
        %v2377 = vpop.xlane.xlu0 %2376
        %v2378 = vsel %vm1957, %v2239, 0.0
        %2379 = vadd.xlane.f32.xlu0 %v2378
        %v2380 = vpop.xlane.xlu0 %2379
        %v2381 = vsel %vm1957, %v2241, 0.0
        %2382 = vadd.xlane.f32.xlu0 %v2381
        %v2383 = vpop.xlane.xlu0 %2382
        %v2384 = vsel %vm1957, %v2243, 0.0
        %2385 = vadd.xlane.f32.xlu0 %v2384
        %v2386 = vpop.xlane.xlu0 %2385
        %v2387 = vsel %vm1957, %v2245, 0.0
        %2388 = vadd.xlane.f32.xlu0 %v2387
        %v2389 = vpop.xlane.xlu0 %2388
        %v2390 = vsel %vm1957, %v2247, 0.0
        %2391 = vadd.xlane.f32.xlu0 %v2390
        %v2392 = vpop.xlane.xlu0 %2391
        %v2393 = vsel %vm1957, %v2249, 0.0
        %2394 = vadd.xlane.f32.xlu0 %v2393
        %v2395 = vpop.xlane.xlu0 %2394
        %v2396 = vsel %vm1957, %v2251, 0.0
        %2397 = vadd.xlane.f32.xlu0 %v2396
        %v2398 = vpop.xlane.xlu0 %2397
        %v2399 = vsel %vm1957, %v2253, 0.0
        %2400 = vadd.xlane.f32.xlu0 %v2399
        %v2401 = vpop.xlane.xlu0 %2400
        %v2402 = vsel %vm1957, %v2255, 0.0
        %2403 = vadd.xlane.f32.xlu0 %v2402
        %v2404 = vpop.xlane.xlu0 %2403
        %v2405 = vsel %vm1957, %v2257, 0.0
        %2406 = vadd.xlane.f32.xlu0 %v2405
        %v2407 = vpop.xlane.xlu0 %2406
        %v2408 = vsel %vm1957, %v2259, 0.0
        %2409 = vadd.xlane.f32.xlu0 %v2408
        %v2410 = vpop.xlane.xlu0 %2409
        %v2411 = vsel %vm1957, %v2261, 0.0
        %2412 = vadd.xlane.f32.xlu0 %v2411
        %v2413 = vpop.xlane.xlu0 %2412
        %v2414 = vsel %vm1957, %v2263, 0.0
        %2415 = vadd.xlane.f32.xlu0 %v2414
        %v2416 = vpop.xlane.xlu0 %2415
        %v2417 = vsel %vm1957, %v2265, 0.0
        %2418 = vadd.xlane.f32.xlu0 %v2417
        %v2419 = vpop.xlane.xlu0 %2418
        %v2420 = vsel %vm1957, %v2267, 0.0
        %2421 = vadd.xlane.f32.xlu0 %v2420
        %v2422 = vpop.xlane.xlu0 %2421
        %v2423 = vsel %vm1957, %v2269, 0.0
        %2424 = vadd.xlane.f32.xlu0 %v2423
        %v2425 = vpop.xlane.xlu0 %2424
        %v2426 = vsel %vm1957, %v2271, 0.0
        %2427 = vadd.xlane.f32.xlu0 %v2426
        %v2428 = vpop.xlane.xlu0 %2427
        %v2429 = vsel %vm1957, %v2273, 0.0
        %2430 = vadd.xlane.f32.xlu0 %v2429
        %v2431 = vpop.xlane.xlu0 %2430
        %v2432 = vsel %vm1957, %v2275, 0.0
        %2433 = vadd.xlane.f32.xlu0 %v2432
        %v2434 = vpop.xlane.xlu0 %2433
        %v2435 = vsel %vm1957, %v2277, 0.0
        %2436 = vadd.xlane.f32.xlu0 %v2435
        %v2437 = vpop.xlane.xlu0 %2436
        %v2438 = vsel %vm1957, %v2279, 0.0
        %2439 = vadd.xlane.f32.xlu0 %v2438
        %v2440 = vpop.xlane.xlu0 %2439
        %v2441 = vsel %vm1957, %v2281, 0.0
        %2442 = vadd.xlane.f32.xlu0 %v2441
        %v2443 = vpop.xlane.xlu0 %2442
        %v2444 = vsel %vm1957, %v2283, 0.0
        %2445 = vadd.xlane.f32.xlu0 %v2444
        %v2446 = vpop.xlane.xlu0 %2445
        %v2447 = vsel %vm1957, %v2285, 0.0
        %2448 = vadd.xlane.f32.xlu0 %v2447
        %v2449 = vpop.xlane.xlu0 %2448
        %v2450 = vsel %vm1957, %v2287, 0.0
        %2451 = vadd.xlane.f32.xlu0 %v2450
        %v2452 = vpop.xlane.xlu0 %2451
        %v2453 = vsel %vm1957, %v2289, 0.0
        %2454 = vadd.xlane.f32.xlu0 %v2453
        %v2455 = vpop.xlane.xlu0 %2454
        %v2456 = vsel %vm1957, %v2291, 0.0
        %2457 = vadd.xlane.f32.xlu0 %v2456
        %v2458 = vpop.xlane.xlu0 %2457
        %v2459 = vsel %vm1957, %v2293, 0.0
        %2460 = vadd.xlane.f32.xlu0 %v2459
        %v2461 = vpop.xlane.xlu0 %2460
        %v2462 = vsel %vm1957, %v2295, 0.0
        %2463 = vadd.xlane.f32.xlu0 %v2462
        %v2464 = vpop.xlane.xlu0 %2463
        %v2465 = vsel %vm1957, %v2297, 0.0
        %2466 = vadd.xlane.f32.xlu0 %v2465
        %v2467 = vpop.xlane.xlu0 %2466
        %v2468 = vsel %vm1957, %v2299, 0.0
        %2469 = vadd.xlane.f32.xlu0 %v2468
        %v2470 = vpop.xlane.xlu0 %2469
        %v2471 = vsel %vm1957, %v2301, 0.0
        %2472 = vadd.xlane.f32.xlu0 %v2471
        %v2473 = vpop.xlane.xlu0 %2472
        %v2474 = vsel %vm1957, %v2303, 0.0
        %2475 = vadd.xlane.f32.xlu0 %v2474
        %v2476 = vpop.xlane.xlu0 %2475
        %v2477 = vsel %vm1957, %v2305, 0.0
        %2478 = vadd.xlane.f32.xlu0 %v2477
        %v2479 = vpop.xlane.xlu0 %2478
        %v2480 = vsel %vm1957, %v2307, 0.0
        %2481 = vadd.xlane.f32.xlu0 %v2480
        %v2482 = vpop.xlane.xlu0 %2481
        %v2483 = vsel %vm1957, %v2309, 0.0
        %2484 = vadd.xlane.f32.xlu0 %v2483
        %v2485 = vpop.xlane.xlu0 %2484
        %v2486 = vsel %vm1957, %v2311, 0.0
        %2487 = vadd.xlane.f32.xlu0 %v2486
        %v2488 = vpop.xlane.xlu0 %2487
        %v2489 = vsel %vm1957, %v2313, 0.0
        %2490 = vadd.xlane.f32.xlu0 %v2489
        %v2491 = vpop.xlane.xlu0 %2490
        %v2492 = vsel %vm1957, %v2315, 0.0
        %2493 = vadd.xlane.f32.xlu0 %v2492
        %v2494 = vpop.xlane.xlu0 %2493
        %v2495 = vsel %vm1957, %v2317, 0.0
        %2496 = vadd.xlane.f32.xlu0 %v2495
        %v2497 = vpop.xlane.xlu0 %2496
        %v2498 = vsel %vm1957, %v2319, 0.0
        %2499 = vadd.xlane.f32.xlu0 %v2498
        %v2500 = vpop.xlane.xlu0 %2499
        %v2501 = vsel %vm1957, %v2321, 0.0
        %2502 = vadd.xlane.f32.xlu0 %v2501
        %v2503 = vpop.xlane.xlu0 %2502
        %v2504 = vsel %vm1957, %v2323, 0.0
        %2505 = vadd.xlane.f32.xlu0 %v2504
        %v2506 = vpop.xlane.xlu0 %2505
        %v2507 = vsel %vm1957, %v2325, 0.0
        %2508 = vadd.xlane.f32.xlu0 %v2507
        %v2509 = vpop.xlane.xlu0 %2508
        %v2510 = vsel %vm1957, %v2327, 0.0
        %2511 = vadd.xlane.f32.xlu0 %v2510
        %v2512 = vpop.xlane.xlu0 %2511
        %v2513 = vsel %vm1957, %v2329, 0.0
        %2514 = vadd.xlane.f32.xlu0 %v2513
        %v2515 = vpop.xlane.xlu0 %2514
        %v2516 = vsel %vm1957, %v2331, 0.0
        %2517 = vadd.xlane.f32.xlu0 %v2516
        %v2518 = vpop.xlane.xlu0 %2517
        %v2519 = vsel %vm1957, %v2333, 0.0
        %2520 = vadd.xlane.f32.xlu0 %v2519
        %v2521 = vpop.xlane.xlu0 %2520
        %v2522 = vsel %vm1957, %v2335, 0.0
        %2523 = vadd.xlane.f32.xlu0 %v2522
        %v2524 = vpop.xlane.xlu0 %2523
        %v2525 = vsel %vm1957, %v2337, 0.0
        %2526 = vadd.xlane.f32.xlu0 %v2525
        %v2527 = vpop.xlane.xlu0 %2526
        %v2528 = vsel %vm1957, %v2339, 0.0
        %2529 = vadd.xlane.f32.xlu0 %v2528
        %v2530 = vpop.xlane.xlu0 %2529
        %v2531 = vsel %vm1957, %v2341, 0.0
        %2532 = vadd.xlane.f32.xlu0 %v2531
        %v2533 = vpop.xlane.xlu0 %2532
        %v2534 = vrcp.pop %v2344
        %v2535 = vrcp.pop %v2347
        %v2536 = vrcp.pop %v2350
        %v2537 = vrcp.pop %v2353
        %v2538 = vrcp.pop %v2356
        %v2539 = vrcp.pop %v2359
        %v2540 = vrcp.pop %v2362
        %v2541 = vrcp.pop %v2365
        %v2542 = vrcp.pop %v2368
        %v2543 = vrcp.pop %v2371
        %v2544 = vrcp.pop %v2374
        %v2545 = vrcp.pop %v2377
        %v2546 = vrcp.pop %v2380
        %v2547 = vrcp.pop %v2383
        %v2548 = vrcp.pop %v2386
        %v2549 = vrcp.pop %v2389
        %v2550 = vrcp.pop %v2392
        %v2551 = vrcp.pop %v2395
        %v2552 = vrcp.pop %v2398
        %v2553 = vrcp.pop %v2401
        %v2554 = vrcp.pop %v2404
        %v2555 = vrcp.pop %v2407
        %v2556 = vrcp.pop %v2410
        %v2557 = vrcp.pop %v2413
        %v2558 = vrcp.pop %v2416
        %v2559 = vrcp.pop %v2419
        %v2560 = vrcp.pop %v2422
        %v2561 = vrcp.pop %v2425
        %v2562 = vrcp.pop %v2428
        %v2563 = vrcp.pop %v2431
        %v2564 = vrcp.pop %v2434
        %v2565 = vrcp.pop %v2437
        %v2566 = vrcp.pop %v2440
        %v2567 = vrcp.pop %v2443
        %v2568 = vrcp.pop %v2446
        %v2569 = vrcp.pop %v2449
        %v2570 = vrcp.pop %v2452
        %v2571 = vrcp.pop %v2455
        %v2572 = vrcp.pop %v2458
        %v2573 = vrcp.pop %v2461
        %v2574 = vrcp.pop %v2464
        %v2575 = vrcp.pop %v2467
        %v2576 = vrcp.pop %v2470
        %v2577 = vrcp.pop %v2473
        %v2578 = vrcp.pop %v2476
        %v2579 = vrcp.pop %v2479
        %v2580 = vrcp.pop %v2482
        %v2581 = vrcp.pop %v2485
        %v2582 = vrcp.pop %v2488
        %v2583 = vrcp.pop %v2491
        %v2584 = vrcp.pop %v2494
        %v2585 = vrcp.pop %v2497
        %v2586 = vrcp.pop %v2500
        %v2587 = vrcp.pop %v2503
        %v2588 = vrcp.pop %v2506
        %v2589 = vrcp.pop %v2509
        %v2590 = vrcp.pop %v2512
        %v2591 = vrcp.pop %v2515
        %v2592 = vrcp.pop %v2518
        %v2593 = vrcp.pop %v2521
        %v2594 = vrcp.pop %v2524
        %v2595 = vrcp.pop %v2527
        %v2596 = vrcp.pop %v2530
        %v2597 = vrcp.pop %v2533
        %v2598 = vmul.f32 %v2215, %v2534
        %v2599 = vmul.f32 %v2217, %v2535
        %v2600 = vmul.f32 %v2219, %v2536
        %v2601 = vmul.f32 %v2221, %v2537
        %v2602 = vmul.f32 %v2223, %v2538
        %v2603 = vmul.f32 %v2225, %v2539
        %v2604 = vmul.f32 %v2227, %v2540
        %v2605 = vmul.f32 %v2229, %v2541
        %v2606 = vmul.f32 %v2231, %v2542
        %v2607 = vmul.f32 %v2233, %v2543
        %v2608 = vmul.f32 %v2235, %v2544
        %v2609 = vmul.f32 %v2237, %v2545
        %v2610 = vmul.f32 %v2239, %v2546
        %v2611 = vmul.f32 %v2241, %v2547
        %v2612 = vmul.f32 %v2243, %v2548
        %v2613 = vmul.f32 %v2245, %v2549
        %v2614 = vmul.f32 %v2247, %v2550
        %v2615 = vmul.f32 %v2249, %v2551
        %v2616 = vmul.f32 %v2251, %v2552
        %v2617 = vmul.f32 %v2253, %v2553
        %v2618 = vmul.f32 %v2255, %v2554
        %v2619 = vmul.f32 %v2257, %v2555
        %v2620 = vmul.f32 %v2259, %v2556
        %v2621 = vmul.f32 %v2261, %v2557
        %v2622 = vmul.f32 %v2263, %v2558
        %v2623 = vmul.f32 %v2265, %v2559
        %v2624 = vmul.f32 %v2267, %v2560
        %v2625 = vmul.f32 %v2269, %v2561
        %v2626 = vmul.f32 %v2271, %v2562
        %v2627 = vmul.f32 %v2273, %v2563
        %v2628 = vmul.f32 %v2275, %v2564
        %v2629 = vmul.f32 %v2277, %v2565
        %v2630 = vmul.f32 %v2279, %v2566
        %v2631 = vmul.f32 %v2281, %v2567
        %v2632 = vmul.f32 %v2283, %v2568
        %v2633 = vmul.f32 %v2285, %v2569
        %v2634 = vmul.f32 %v2287, %v2570
        %v2635 = vmul.f32 %v2289, %v2571
        %v2636 = vmul.f32 %v2291, %v2572
        %v2637 = vmul.f32 %v2293, %v2573
        %v2638 = vmul.f32 %v2295, %v2574
        %v2639 = vmul.f32 %v2297, %v2575
        %v2640 = vmul.f32 %v2299, %v2576
        %v2641 = vmul.f32 %v2301, %v2577
        %v2642 = vmul.f32 %v2303, %v2578
        %v2643 = vmul.f32 %v2305, %v2579
        %v2644 = vmul.f32 %v2307, %v2580
        %v2645 = vmul.f32 %v2309, %v2581
        %v2646 = vmul.f32 %v2311, %v2582
        %v2647 = vmul.f32 %v2313, %v2583
        %v2648 = vmul.f32 %v2315, %v2584
        %v2649 = vmul.f32 %v2317, %v2585
        %v2650 = vmul.f32 %v2319, %v2586
        %v2651 = vmul.f32 %v2321, %v2587
        %v2652 = vmul.f32 %v2323, %v2588
        %v2653 = vmul.f32 %v2325, %v2589
        %v2654 = vmul.f32 %v2327, %v2590
        %v2655 = vmul.f32 %v2329, %v2591
        %v2656 = vmul.f32 %v2331, %v2592
        %v2657 = vmul.f32 %v2333, %v2593
        %v2658 = vmul.f32 %v2335, %v2594
        %v2659 = vmul.f32 %v2337, %v2595
        %v2660 = vmul.f32 %v2339, %v2596
        %v2661 = vmul.f32 %v2341, %v2597
        %v2662 = vpack.c.bf16 %v2599, %v2598
        %v2663 = vpack.c.bf16 %v2601, %v2600
        %v2664 = vpack.c.bf16 %v2603, %v2602
        %v2665 = vpack.c.bf16 %v2605, %v2604
        %v2666 = vpack.c.bf16 %v2607, %v2606
        %v2667 = vpack.c.bf16 %v2609, %v2608
        %v2668 = vpack.c.bf16 %v2611, %v2610
        %v2669 = vpack.c.bf16 %v2613, %v2612
        %v2670 = vpack.c.bf16 %v2615, %v2614
        %v2671 = vpack.c.bf16 %v2617, %v2616
        %v2672 = vpack.c.bf16 %v2619, %v2618
        %v2673 = vpack.c.bf16 %v2621, %v2620
        %v2674 = vpack.c.bf16 %v2623, %v2622
        %v2675 = vpack.c.bf16 %v2625, %v2624
        %v2676 = vpack.c.bf16 %v2627, %v2626
        %v2677 = vpack.c.bf16 %v2629, %v2628
        %v2678 = vpack.c.bf16 %v2631, %v2630
        %v2679 = vpack.c.bf16 %v2633, %v2632
        %v2680 = vpack.c.bf16 %v2635, %v2634
        %v2681 = vpack.c.bf16 %v2637, %v2636
        %v2682 = vpack.c.bf16 %v2639, %v2638
        %v2683 = vpack.c.bf16 %v2641, %v2640
        %v2684 = vpack.c.bf16 %v2643, %v2642
        %v2685 = vpack.c.bf16 %v2645, %v2644
        %v2686 = vpack.c.bf16 %v2647, %v2646
        %v2687 = vpack.c.bf16 %v2649, %v2648
        %v2688 = vpack.c.bf16 %v2651, %v2650
        %v2689 = vpack.c.bf16 %v2653, %v2652
        %v2690 = vpack.c.bf16 %v2655, %v2654
        %v2691 = vpack.c.bf16 %v2657, %v2656
        %v2692 = vpack.c.bf16 %v2659, %v2658
        %v2693 = vpack.c.bf16 %v2661, %v2660
        %2698 = vrot.lane.b32.xlu0 %v1083, 64
        %v2699 = vpop.permute.xlu0 %2698
        %2700 = vrot.lane.b32.xlu0 %v1084, 64
        %v2701 = vpop.permute.xlu0 %2700
        %2702 = vrot.lane.b32.xlu0 %v1085, 64
        %v2703 = vpop.permute.xlu0 %2702
        %2704 = vrot.lane.b32.xlu0 %v1086, 64
        %v2705 = vpop.permute.xlu0 %2704
        %v2711 = vsel %vm1957, %v2662, 0
        %v2714 = vsel %vm1957, %v2663, 0
        %v2717 = vsel %vm1957, %v2664, 0
        %v2720 = vsel %vm1957, %v2665, 0
        %v2723 = vsel %vm1957, %v2666, 0
        %v2726 = vsel %vm1957, %v2667, 0
        %v2729 = vsel %vm1957, %v2668, 0
        %v2732 = vsel %vm1957, %v2669, 0
        %v2735 = vsel %vm1957, %v2670, 0
        %v2738 = vsel %vm1957, %v2671, 0
        %v2741 = vsel %vm1957, %v2672, 0
        %v2744 = vsel %vm1957, %v2673, 0
        %v2747 = vsel %vm1957, %v2674, 0
        %v2750 = vsel %vm1957, %v2675, 0
        %v2753 = vsel %vm1957, %v2676, 0
        %v2756 = vsel %vm1957, %v2677, 0
        %2758 = vmatprep.subr.bf16.mxu0 0
        %2759 = vmatpush1.bf16.msra.mxu0 0
        %2760 = vmatprep.subr.bf16.mxu0 0
        %2761 = vmatpush1.bf16.msra.mxu0 0
        %2762 = vmatprep.subr.bf16.mxu0 0
        %2763 = vmatpush1.bf16.msra.mxu0 0
        %2764 = vmatprep.subr.bf16.mxu0 0
        %2765 = vmatpush1.bf16.msra.mxu0 0
        %2766 = vmatprep.subr.bf16.mxu0 0
        %2767 = vmatpush1.bf16.msra.mxu0 %v2705
        %2768 = vmatprep.subr.bf16.mxu0 0
        %2769 = vmatpush1.bf16.msra.mxu0 %v2703
        %2770 = vmatprep.subr.bf16.mxu0 0
        %2771 = vmatpush1.bf16.msra.mxu0 %v2701
        %2772 = vmatprep.subr.bf16.mxu0 0
        %2773 = vmatpush1.bf16.msra.mxu0 %v2699
        %2774 = vmatprep.subr.bf16.mxu0 0
        %2775 = vmatpush2.bf16.msra.mxu0 0
        %2776 = vmatprep.subr.bf16.mxu0 0
        %2777 = vmatpush2.bf16.msra.mxu0 0
        %2778 = vmatprep.subr.bf16.mxu0 0
        %2779 = vmatpush2.bf16.msra.mxu0 0
        %2780 = vmatprep.subr.bf16.mxu0 0
        %2781 = vmatpush2.bf16.msra.mxu0 0
        %2782 = vmatprep.subr.bf16.mxu0 0
        %2783 = vmatpush2.bf16.msra.mxu0 0
        %2784 = vmatprep.subr.bf16.mxu0 0
        %2785 = vmatpush2.bf16.msra.mxu0 0
        %2786 = vmatprep.subr.bf16.mxu0 0
        %2787 = vmatpush2.bf16.msra.mxu0 0
        %2788 = vmatprep.subr.bf16.mxu0 0
        %2789 = vmatpush2.bf16.msra.mxu0 0
        %2790 = vmatprep.mubr.bf16.mxu0 0
        %2791 = vmatmul.mubr.bf16.gmra.mxu0 %v2711
        %v2792 = vpop.f32.mrf.mxu0
        %v2793 = vadd.f32 0.0, %v2792
        %v2794 = vpop.f32.mrf.mxu0
        %v2795 = vpop.f32.mrf.mxu0
        %v2796 = vadd.f32 0.0, %v2795
        %v2797 = vpop.f32.mrf.mxu0
        %2798 = vmatprep.mubr.bf16.mxu0 0
        %2799 = vmatmul.mubr.bf16.gmra.mxu0 %v2714
        %v2800 = vpop.f32.mrf.mxu0
        %v2801 = vadd.f32 0.0, %v2800
        %v2802 = vpop.f32.mrf.mxu0
        %v2803 = vpop.f32.mrf.mxu0
        %v2804 = vadd.f32 0.0, %v2803
        %v2805 = vpop.f32.mrf.mxu0
        %2806 = vmatprep.mubr.bf16.mxu0 0
        %2807 = vmatmul.mubr.bf16.gmra.mxu0 %v2717
        %v2808 = vpop.f32.mrf.mxu0
        %v2809 = vadd.f32 0.0, %v2808
        %v2810 = vpop.f32.mrf.mxu0
        %v2811 = vpop.f32.mrf.mxu0
        %v2812 = vadd.f32 0.0, %v2811
        %v2813 = vpop.f32.mrf.mxu0
        %2814 = vmatprep.mubr.bf16.mxu0 0
        %2815 = vmatmul.mubr.bf16.gmra.mxu0 %v2720
        %v2816 = vpop.f32.mrf.mxu0
        %v2817 = vadd.f32 0.0, %v2816
        %v2818 = vpop.f32.mrf.mxu0
        %v2819 = vpop.f32.mrf.mxu0
        %v2820 = vadd.f32 0.0, %v2819
        %v2821 = vpop.f32.mrf.mxu0
        %2822 = vmatprep.mubr.bf16.mxu0 0
        %2823 = vmatmul.mubr.bf16.gmra.mxu0 %v2723
        %v2824 = vpop.f32.mrf.mxu0
        %v2825 = vadd.f32 0.0, %v2824
        %v2826 = vpop.f32.mrf.mxu0
        %v2827 = vpop.f32.mrf.mxu0
        %v2828 = vadd.f32 0.0, %v2827
        %v2829 = vpop.f32.mrf.mxu0
        %2830 = vmatprep.mubr.bf16.mxu0 0
        %2831 = vmatmul.mubr.bf16.gmra.mxu0 %v2726
        %v2832 = vpop.f32.mrf.mxu0
        %v2833 = vadd.f32 0.0, %v2832
        %v2834 = vpop.f32.mrf.mxu0
        %v2835 = vpop.f32.mrf.mxu0
        %v2836 = vadd.f32 0.0, %v2835
        %v2837 = vpop.f32.mrf.mxu0
        %2838 = vmatprep.mubr.bf16.mxu0 0
        %2839 = vmatmul.mubr.bf16.gmra.mxu0 %v2729
        %v2840 = vpop.f32.mrf.mxu0
        %v2841 = vadd.f32 0.0, %v2840
        %v2842 = vpop.f32.mrf.mxu0
        %v2843 = vpop.f32.mrf.mxu0
        %v2844 = vadd.f32 0.0, %v2843
        %v2845 = vpop.f32.mrf.mxu0
        %2846 = vmatprep.mubr.bf16.mxu0 0
        %2847 = vmatmul.mubr.bf16.gmra.mxu0 %v2732
        %v2848 = vpop.f32.mrf.mxu0
        %v2849 = vadd.f32 0.0, %v2848
        %v2850 = vpop.f32.mrf.mxu0
        %v2851 = vpop.f32.mrf.mxu0
        %v2852 = vadd.f32 0.0, %v2851
        %v2853 = vpop.f32.mrf.mxu0
        %2854 = vmatprep.mubr.bf16.mxu0 0
        %2855 = vmatmul.mubr.bf16.gmra.mxu0 %v2735
        %v2856 = vpop.f32.mrf.mxu0
        %v2857 = vadd.f32 0.0, %v2856
        %v2858 = vpop.f32.mrf.mxu0
        %v2859 = vpop.f32.mrf.mxu0
        %v2860 = vadd.f32 0.0, %v2859
        %v2861 = vpop.f32.mrf.mxu0
        %2862 = vmatprep.mubr.bf16.mxu0 0
        %2863 = vmatmul.mubr.bf16.gmra.mxu0 %v2738
        %v2864 = vpop.f32.mrf.mxu0
        %v2865 = vadd.f32 0.0, %v2864
        %v2866 = vpop.f32.mrf.mxu0
        %v2867 = vpop.f32.mrf.mxu0
        %v2868 = vadd.f32 0.0, %v2867
        %v2869 = vpop.f32.mrf.mxu0
        %2870 = vmatprep.mubr.bf16.mxu0 0
        %2871 = vmatmul.mubr.bf16.gmra.mxu0 %v2741
        %v2872 = vpop.f32.mrf.mxu0
        %v2873 = vadd.f32 0.0, %v2872
        %v2874 = vpop.f32.mrf.mxu0
        %v2875 = vpop.f32.mrf.mxu0
        %v2876 = vadd.f32 0.0, %v2875
        %v2877 = vpop.f32.mrf.mxu0
        %2878 = vmatprep.mubr.bf16.mxu0 0
        %2879 = vmatmul.mubr.bf16.gmra.mxu0 %v2744
        %v2880 = vpop.f32.mrf.mxu0
        %v2881 = vadd.f32 0.0, %v2880
        %v2882 = vpop.f32.mrf.mxu0
        %v2883 = vpop.f32.mrf.mxu0
        %v2884 = vadd.f32 0.0, %v2883
        %v2885 = vpop.f32.mrf.mxu0
        %2886 = vmatprep.mubr.bf16.mxu0 0
        %2887 = vmatmul.mubr.bf16.gmra.mxu0 %v2747
        %v2888 = vpop.f32.mrf.mxu0
        %v2889 = vadd.f32 0.0, %v2888
        %v2890 = vpop.f32.mrf.mxu0
        %v2891 = vpop.f32.mrf.mxu0
        %v2892 = vadd.f32 0.0, %v2891
        %v2893 = vpop.f32.mrf.mxu0
        %2894 = vmatprep.mubr.bf16.mxu0 0
        %2895 = vmatmul.mubr.bf16.gmra.mxu0 %v2750
        %v2896 = vpop.f32.mrf.mxu0
        %v2897 = vadd.f32 0.0, %v2896
        %v2898 = vpop.f32.mrf.mxu0
        %v2899 = vpop.f32.mrf.mxu0
        %v2900 = vadd.f32 0.0, %v2899
        %v2901 = vpop.f32.mrf.mxu0
        %2902 = vmatprep.mubr.bf16.mxu0 0
        %2903 = vmatmul.mubr.bf16.gmra.mxu0 %v2753
        %v2904 = vpop.f32.mrf.mxu0
        %v2905 = vadd.f32 0.0, %v2904
        %v2906 = vpop.f32.mrf.mxu0
        %v2907 = vpop.f32.mrf.mxu0
        %v2908 = vadd.f32 0.0, %v2907
        %v2909 = vpop.f32.mrf.mxu0
        %2910 = vmatprep.mubr.bf16.mxu0 0
        %2911 = vmatmul.mubr.bf16.gmra.mxu0 %v2756
        %v2912 = vpop.f32.mrf.mxu0
        %v2913 = vadd.f32 0.0, %v2912
        %v2914 = vpop.f32.mrf.mxu0
        %v2915 = vpop.f32.mrf.mxu0
        %v2916 = vadd.f32 0.0, %v2915
        %v2917 = vpop.f32.mrf.mxu0
        %2918 = vdwg.mxu0
        %2923 = vrot.lane.b32.xlu0 %v1087, 64
        %v2924 = vpop.permute.xlu0 %2923
        %2925 = vrot.lane.b32.xlu0 %v1088, 64
        %v2926 = vpop.permute.xlu0 %2925
        %2927 = vrot.lane.b32.xlu0 %v1089, 64
        %v2928 = vpop.permute.xlu0 %2927
        %2929 = vrot.lane.b32.xlu0 %v1090, 64
        %v2930 = vpop.permute.xlu0 %2929
        %v2936 = vsel %vm1957, %v2678, 0
        %v2939 = vsel %vm1957, %v2679, 0
        %v2942 = vsel %vm1957, %v2680, 0
        %v2945 = vsel %vm1957, %v2681, 0
        %v2948 = vsel %vm1957, %v2682, 0
        %v2951 = vsel %vm1957, %v2683, 0
        %v2954 = vsel %vm1957, %v2684, 0
        %v2957 = vsel %vm1957, %v2685, 0
        %v2960 = vsel %vm1957, %v2686, 0
        %v2963 = vsel %vm1957, %v2687, 0
        %v2966 = vsel %vm1957, %v2688, 0
        %v2969 = vsel %vm1957, %v2689, 0
        %v2972 = vsel %vm1957, %v2690, 0
        %v2975 = vsel %vm1957, %v2691, 0
        %v2978 = vsel %vm1957, %v2692, 0
        %v2981 = vsel %vm1957, %v2693, 0
        %2983 = vmatprep.subr.bf16.mxu0 0
        %2984 = vmatpush1.bf16.msra.mxu0 0
        %2985 = vmatprep.subr.bf16.mxu0 0
        %2986 = vmatpush1.bf16.msra.mxu0 0
        %2987 = vmatprep.subr.bf16.mxu0 0
        %2988 = vmatpush1.bf16.msra.mxu0 0
        %2989 = vmatprep.subr.bf16.mxu0 0
        %2990 = vmatpush1.bf16.msra.mxu0 0
        %2991 = vmatprep.subr.bf16.mxu0 0
        %2992 = vmatpush1.bf16.msra.mxu0 %v2930
        %2993 = vmatprep.subr.bf16.mxu0 0
        %2994 = vmatpush1.bf16.msra.mxu0 %v2928
        %2995 = vmatprep.subr.bf16.mxu0 0
        %2996 = vmatpush1.bf16.msra.mxu0 %v2926
        %2997 = vmatprep.subr.bf16.mxu0 0
        %2998 = vmatpush1.bf16.msra.mxu0 %v2924
        %2999 = vmatprep.subr.bf16.mxu0 0
        %3000 = vmatpush2.bf16.msra.mxu0 0
        %3001 = vmatprep.subr.bf16.mxu0 0
        %3002 = vmatpush2.bf16.msra.mxu0 0
        %3003 = vmatprep.subr.bf16.mxu0 0
        %3004 = vmatpush2.bf16.msra.mxu0 0
        %3005 = vmatprep.subr.bf16.mxu0 0
        %3006 = vmatpush2.bf16.msra.mxu0 0
        %3007 = vmatprep.subr.bf16.mxu0 0
        %3008 = vmatpush2.bf16.msra.mxu0 0
        %3009 = vmatprep.subr.bf16.mxu0 0
        %3010 = vmatpush2.bf16.msra.mxu0 0
        %3011 = vmatprep.subr.bf16.mxu0 0
        %3012 = vmatpush2.bf16.msra.mxu0 0
        %3013 = vmatprep.subr.bf16.mxu0 0
        %3014 = vmatpush2.bf16.msra.mxu0 0
        %3015 = vmatprep.mubr.bf16.mxu0 0
        %3016 = vmatmul.mubr.bf16.gmra.mxu0 %v2936
        %v3017 = vpop.f32.mrf.mxu0
        %v3018 = vadd.f32 0.0, %v3017
        %v3019 = vpop.f32.mrf.mxu0
        %v3020 = vpop.f32.mrf.mxu0
        %v3021 = vadd.f32 0.0, %v3020
        %v3022 = vpop.f32.mrf.mxu0
        %3023 = vmatprep.mubr.bf16.mxu0 0
        %3024 = vmatmul.mubr.bf16.gmra.mxu0 %v2939
        %v3025 = vpop.f32.mrf.mxu0
        %v3026 = vadd.f32 0.0, %v3025
        %v3027 = vpop.f32.mrf.mxu0
        %v3028 = vpop.f32.mrf.mxu0
        %v3029 = vadd.f32 0.0, %v3028
        %v3030 = vpop.f32.mrf.mxu0
        %3031 = vmatprep.mubr.bf16.mxu0 0
        %3032 = vmatmul.mubr.bf16.gmra.mxu0 %v2942
        %v3033 = vpop.f32.mrf.mxu0
        %v3034 = vadd.f32 0.0, %v3033
        %v3035 = vpop.f32.mrf.mxu0
        %v3036 = vpop.f32.mrf.mxu0
        %v3037 = vadd.f32 0.0, %v3036
        %v3038 = vpop.f32.mrf.mxu0
        %3039 = vmatprep.mubr.bf16.mxu0 0
        %3040 = vmatmul.mubr.bf16.gmra.mxu0 %v2945
        %v3041 = vpop.f32.mrf.mxu0
        %v3042 = vadd.f32 0.0, %v3041
        %v3043 = vpop.f32.mrf.mxu0
        %v3044 = vpop.f32.mrf.mxu0
        %v3045 = vadd.f32 0.0, %v3044
        %v3046 = vpop.f32.mrf.mxu0
        %3047 = vmatprep.mubr.bf16.mxu0 0
        %3048 = vmatmul.mubr.bf16.gmra.mxu0 %v2948
        %v3049 = vpop.f32.mrf.mxu0
        %v3050 = vadd.f32 0.0, %v3049
        %v3051 = vpop.f32.mrf.mxu0
        %v3052 = vpop.f32.mrf.mxu0
        %v3053 = vadd.f32 0.0, %v3052
        %v3054 = vpop.f32.mrf.mxu0
        %3055 = vmatprep.mubr.bf16.mxu0 0
        %3056 = vmatmul.mubr.bf16.gmra.mxu0 %v2951
        %v3057 = vpop.f32.mrf.mxu0
        %v3058 = vadd.f32 0.0, %v3057
        %v3059 = vpop.f32.mrf.mxu0
        %v3060 = vpop.f32.mrf.mxu0
        %v3061 = vadd.f32 0.0, %v3060
        %v3062 = vpop.f32.mrf.mxu0
        %3063 = vmatprep.mubr.bf16.mxu0 0
        %3064 = vmatmul.mubr.bf16.gmra.mxu0 %v2954
        %v3065 = vpop.f32.mrf.mxu0
        %v3066 = vadd.f32 0.0, %v3065
        %v3067 = vpop.f32.mrf.mxu0
        %v3068 = vpop.f32.mrf.mxu0
        %v3069 = vadd.f32 0.0, %v3068
        %v3070 = vpop.f32.mrf.mxu0
        %3071 = vmatprep.mubr.bf16.mxu0 0
        %3072 = vmatmul.mubr.bf16.gmra.mxu0 %v2957
        %v3073 = vpop.f32.mrf.mxu0
        %v3074 = vadd.f32 0.0, %v3073
        %v3075 = vpop.f32.mrf.mxu0
        %v3076 = vpop.f32.mrf.mxu0
        %v3077 = vadd.f32 0.0, %v3076
        %v3078 = vpop.f32.mrf.mxu0
        %3079 = vmatprep.mubr.bf16.mxu0 0
        %3080 = vmatmul.mubr.bf16.gmra.mxu0 %v2960
        %v3081 = vpop.f32.mrf.mxu0
        %v3082 = vadd.f32 0.0, %v3081
        %v3083 = vpop.f32.mrf.mxu0
        %v3084 = vpop.f32.mrf.mxu0
        %v3085 = vadd.f32 0.0, %v3084
        %v3086 = vpop.f32.mrf.mxu0
        %3087 = vmatprep.mubr.bf16.mxu0 0
        %3088 = vmatmul.mubr.bf16.gmra.mxu0 %v2963
        %v3089 = vpop.f32.mrf.mxu0
        %v3090 = vadd.f32 0.0, %v3089
        %v3091 = vpop.f32.mrf.mxu0
        %v3092 = vpop.f32.mrf.mxu0
        %v3093 = vadd.f32 0.0, %v3092
        %v3094 = vpop.f32.mrf.mxu0
        %3095 = vmatprep.mubr.bf16.mxu0 0
        %3096 = vmatmul.mubr.bf16.gmra.mxu0 %v2966
        %v3097 = vpop.f32.mrf.mxu0
        %v3098 = vadd.f32 0.0, %v3097
        %v3099 = vpop.f32.mrf.mxu0
        %v3100 = vpop.f32.mrf.mxu0
        %v3101 = vadd.f32 0.0, %v3100
        %v3102 = vpop.f32.mrf.mxu0
        %3103 = vmatprep.mubr.bf16.mxu0 0
        %3104 = vmatmul.mubr.bf16.gmra.mxu0 %v2969
        %v3105 = vpop.f32.mrf.mxu0
        %v3106 = vadd.f32 0.0, %v3105
        %v3107 = vpop.f32.mrf.mxu0
        %v3108 = vpop.f32.mrf.mxu0
        %v3109 = vadd.f32 0.0, %v3108
        %v3110 = vpop.f32.mrf.mxu0
        %3111 = vmatprep.mubr.bf16.mxu0 0
        %3112 = vmatmul.mubr.bf16.gmra.mxu0 %v2972
        %v3113 = vpop.f32.mrf.mxu0
        %v3114 = vadd.f32 0.0, %v3113
        %v3115 = vpop.f32.mrf.mxu0
        %v3116 = vpop.f32.mrf.mxu0
        %v3117 = vadd.f32 0.0, %v3116
        %v3118 = vpop.f32.mrf.mxu0
        %3119 = vmatprep.mubr.bf16.mxu0 0
        %3120 = vmatmul.mubr.bf16.gmra.mxu0 %v2975
        %v3121 = vpop.f32.mrf.mxu0
        %v3122 = vadd.f32 0.0, %v3121
        %v3123 = vpop.f32.mrf.mxu0
        %v3124 = vpop.f32.mrf.mxu0
        %v3125 = vadd.f32 0.0, %v3124
        %v3126 = vpop.f32.mrf.mxu0
        %3127 = vmatprep.mubr.bf16.mxu0 0
        %3128 = vmatmul.mubr.bf16.gmra.mxu0 %v2978
        %v3129 = vpop.f32.mrf.mxu0
        %v3130 = vadd.f32 0.0, %v3129
        %v3131 = vpop.f32.mrf.mxu0
        %v3132 = vpop.f32.mrf.mxu0
        %v3133 = vadd.f32 0.0, %v3132
        %v3134 = vpop.f32.mrf.mxu0
        %3135 = vmatprep.mubr.bf16.mxu0 0
        %3136 = vmatmul.mubr.bf16.gmra.mxu0 %v2981
        %v3137 = vpop.f32.mrf.mxu0
        %v3138 = vadd.f32 0.0, %v3137
        %v3139 = vpop.f32.mrf.mxu0
        %v3140 = vpop.f32.mrf.mxu0
        %v3141 = vadd.f32 0.0, %v3140
        %v3142 = vpop.f32.mrf.mxu0
        %3143 = vdwg.mxu0
        %v3144 = vmul.f32 %v2793, %v1102
        %v3145 = vmul.f32 %v2796, %v1102
        %v3146 = vmul.f32 %v2801, %v1102
        %v3147 = vmul.f32 %v2804, %v1102
        %v3148 = vmul.f32 %v2809, %v1102
        %v3149 = vmul.f32 %v2812, %v1102
        %v3150 = vmul.f32 %v2817, %v1102
        %v3151 = vmul.f32 %v2820, %v1102
        %v3152 = vmul.f32 %v2825, %v1106
        %v3153 = vmul.f32 %v2828, %v1106
        %v3154 = vmul.f32 %v2833, %v1106
        %v3155 = vmul.f32 %v2836, %v1106
        %v3156 = vmul.f32 %v2841, %v1106
        %v3157 = vmul.f32 %v2844, %v1106
        %v3158 = vmul.f32 %v2849, %v1106
        %v3159 = vmul.f32 %v2852, %v1106
        %v3160 = vmul.f32 %v2857, %v1110
        %v3161 = vmul.f32 %v2860, %v1110
        %v3162 = vmul.f32 %v2865, %v1110
        %v3163 = vmul.f32 %v2868, %v1110
        %v3164 = vmul.f32 %v2873, %v1110
        %v3165 = vmul.f32 %v2876, %v1110
        %v3166 = vmul.f32 %v2881, %v1110
        %v3167 = vmul.f32 %v2884, %v1110
        %v3168 = vmul.f32 %v2889, %v1114
        %v3169 = vmul.f32 %v2892, %v1114
        %v3170 = vmul.f32 %v2897, %v1114
        %v3171 = vmul.f32 %v2900, %v1114
        %v3172 = vmul.f32 %v2905, %v1114
        %v3173 = vmul.f32 %v2908, %v1114
        %v3174 = vmul.f32 %v2913, %v1114
        %v3175 = vmul.f32 %v2916, %v1114
        %v3176 = vmul.f32 %v3018, %v1102
        %v3177 = vmul.f32 %v3021, %v1102
        %v3178 = vmul.f32 %v3026, %v1102
        %v3179 = vmul.f32 %v3029, %v1102
        %v3180 = vmul.f32 %v3034, %v1102
        %v3181 = vmul.f32 %v3037, %v1102
        %v3182 = vmul.f32 %v3042, %v1102
        %v3183 = vmul.f32 %v3045, %v1102
        %v3184 = vmul.f32 %v3050, %v1106
        %v3185 = vmul.f32 %v3053, %v1106
        %v3186 = vmul.f32 %v3058, %v1106
        %v3187 = vmul.f32 %v3061, %v1106
        %v3188 = vmul.f32 %v3066, %v1106
        %v3189 = vmul.f32 %v3069, %v1106
        %v3190 = vmul.f32 %v3074, %v1106
        %v3191 = vmul.f32 %v3077, %v1106
        %v3192 = vmul.f32 %v3082, %v1110
        %v3193 = vmul.f32 %v3085, %v1110
        %v3194 = vmul.f32 %v3090, %v1110
        %v3195 = vmul.f32 %v3093, %v1110
        %v3196 = vmul.f32 %v3098, %v1110
        %v3197 = vmul.f32 %v3101, %v1110
        %v3198 = vmul.f32 %v3106, %v1110
        %v3199 = vmul.f32 %v3109, %v1110
        %v3200 = vmul.f32 %v3114, %v1114
        %v3201 = vmul.f32 %v3117, %v1114
        %v3202 = vmul.f32 %v3122, %v1114
        %v3203 = vmul.f32 %v3125, %v1114
        %v3204 = vmul.f32 %v3130, %v1114
        %v3205 = vmul.f32 %v3133, %v1114
        %v3206 = vmul.f32 %v3138, %v1114
        %v3207 = vmul.f32 %v3141, %v1114
        %v3208 = vsel %vm644, %v3144, 0.0
        %v3209 = vsel %vm644, %v3152, 0.0
        %v3210 = vadd.f32 %v3208, %v3209
        %v3211 = vsel %vm644, %v3160, 0.0
        %v3212 = vadd.f32 %v3210, %v3211
        %v3213 = vsel %vm644, %v3168, 0.0
        %v3214 = vadd.f32 %v3212, %v3213
        %v3215 = vsel %vm644, %v3145, 0.0
        %v3216 = vsel %vm644, %v3153, 0.0
        %v3217 = vadd.f32 %v3215, %v3216
        %v3218 = vsel %vm644, %v3161, 0.0
        %v3219 = vadd.f32 %v3217, %v3218
        %v3220 = vsel %vm644, %v3169, 0.0
        %v3221 = vadd.f32 %v3219, %v3220
        %v3222 = vsel %vm644, %v3146, 0.0
        %v3223 = vsel %vm644, %v3154, 0.0
        %v3224 = vadd.f32 %v3222, %v3223
        %v3225 = vsel %vm644, %v3162, 0.0
        %v3226 = vadd.f32 %v3224, %v3225
        %v3227 = vsel %vm644, %v3170, 0.0
        %v3228 = vadd.f32 %v3226, %v3227
        %v3229 = vsel %vm644, %v3147, 0.0
        %v3230 = vsel %vm644, %v3155, 0.0
        %v3231 = vadd.f32 %v3229, %v3230
        %v3232 = vsel %vm644, %v3163, 0.0
        %v3233 = vadd.f32 %v3231, %v3232
        %v3234 = vsel %vm644, %v3171, 0.0
        %v3235 = vadd.f32 %v3233, %v3234
        %v3236 = vsel %vm644, %v3148, 0.0
        %v3237 = vsel %vm644, %v3156, 0.0
        %v3238 = vadd.f32 %v3236, %v3237
        %v3239 = vsel %vm644, %v3164, 0.0
        %v3240 = vadd.f32 %v3238, %v3239
        %v3241 = vsel %vm644, %v3172, 0.0
        %v3242 = vadd.f32 %v3240, %v3241
        %v3243 = vsel %vm644, %v3149, 0.0
        %v3244 = vsel %vm644, %v3157, 0.0
        %v3245 = vadd.f32 %v3243, %v3244
        %v3246 = vsel %vm644, %v3165, 0.0
        %v3247 = vadd.f32 %v3245, %v3246
        %v3248 = vsel %vm644, %v3173, 0.0
        %v3249 = vadd.f32 %v3247, %v3248
        %v3250 = vsel %vm644, %v3150, 0.0
        %v3251 = vsel %vm644, %v3158, 0.0
        %v3252 = vadd.f32 %v3250, %v3251
        %v3253 = vsel %vm644, %v3166, 0.0
        %v3254 = vadd.f32 %v3252, %v3253
        %v3255 = vsel %vm644, %v3174, 0.0
        %v3256 = vadd.f32 %v3254, %v3255
        %v3257 = vsel %vm644, %v3151, 0.0
        %v3258 = vsel %vm644, %v3159, 0.0
        %v3259 = vadd.f32 %v3257, %v3258
        %v3260 = vsel %vm644, %v3167, 0.0
        %v3261 = vadd.f32 %v3259, %v3260
        %v3262 = vsel %vm644, %v3175, 0.0
        %v3263 = vadd.f32 %v3261, %v3262
        %v3264 = vsel %vm644, %v3176, 0.0
        %v3265 = vsel %vm644, %v3184, 0.0
        %v3266 = vadd.f32 %v3264, %v3265
        %v3267 = vsel %vm644, %v3192, 0.0
        %v3268 = vadd.f32 %v3266, %v3267
        %v3269 = vsel %vm644, %v3200, 0.0
        %v3270 = vadd.f32 %v3268, %v3269
        %v3271 = vsel %vm644, %v3177, 0.0
        %v3272 = vsel %vm644, %v3185, 0.0
        %v3273 = vadd.f32 %v3271, %v3272
        %v3274 = vsel %vm644, %v3193, 0.0
        %v3275 = vadd.f32 %v3273, %v3274
        %v3276 = vsel %vm644, %v3201, 0.0
        %v3277 = vadd.f32 %v3275, %v3276
        %v3278 = vsel %vm644, %v3178, 0.0
        %v3279 = vsel %vm644, %v3186, 0.0
        %v3280 = vadd.f32 %v3278, %v3279
        %v3281 = vsel %vm644, %v3194, 0.0
        %v3282 = vadd.f32 %v3280, %v3281
        %v3283 = vsel %vm644, %v3202, 0.0
        %v3284 = vadd.f32 %v3282, %v3283
        %v3285 = vsel %vm644, %v3179, 0.0
        %v3286 = vsel %vm644, %v3187, 0.0
        %v3287 = vadd.f32 %v3285, %v3286
        %v3288 = vsel %vm644, %v3195, 0.0
        %v3289 = vadd.f32 %v3287, %v3288
        %v3290 = vsel %vm644, %v3203, 0.0
        %v3291 = vadd.f32 %v3289, %v3290
        %v3292 = vsel %vm644, %v3180, 0.0
        %v3293 = vsel %vm644, %v3188, 0.0
        %v3294 = vadd.f32 %v3292, %v3293
        %v3295 = vsel %vm644, %v3196, 0.0
        %v3296 = vadd.f32 %v3294, %v3295
        %v3297 = vsel %vm644, %v3204, 0.0
        %v3298 = vadd.f32 %v3296, %v3297
        %v3299 = vsel %vm644, %v3181, 0.0
        %v3300 = vsel %vm644, %v3189, 0.0
        %v3301 = vadd.f32 %v3299, %v3300
        %v3302 = vsel %vm644, %v3197, 0.0
        %v3303 = vadd.f32 %v3301, %v3302
        %v3304 = vsel %vm644, %v3205, 0.0
        %v3305 = vadd.f32 %v3303, %v3304
        %v3306 = vsel %vm644, %v3182, 0.0
        %v3307 = vsel %vm644, %v3190, 0.0
        %v3308 = vadd.f32 %v3306, %v3307
        %v3309 = vsel %vm644, %v3198, 0.0
        %v3310 = vadd.f32 %v3308, %v3309
        %v3311 = vsel %vm644, %v3206, 0.0
        %v3312 = vadd.f32 %v3310, %v3311
        %v3313 = vsel %vm644, %v3183, 0.0
        %v3314 = vsel %vm644, %v3191, 0.0
        %v3315 = vadd.f32 %v3313, %v3314
        %v3316 = vsel %vm644, %v3199, 0.0
        %v3317 = vadd.f32 %v3315, %v3316
        %v3318 = vsel %vm644, %v3207, 0.0
        %v3319 = vadd.f32 %v3317, %v3318
        %v3320 = vpack.c.bf16 %v3221, %v3214
        %v3321 = vpack.c.bf16 %v3235, %v3228
        %v3322 = vpack.c.bf16 %v3249, %v3242
        %v3323 = vpack.c.bf16 %v3263, %v3256
        %v3324 = vpack.c.bf16 %v3277, %v3270
        %v3325 = vpack.c.bf16 %v3291, %v3284
        %v3326 = vpack.c.bf16 %v3305, %v3298
        %v3327 = vpack.c.bf16 %v3319, %v3312
        %v3328 = vld [vmem:[%s7] sm:$0xf]
        %v3329 = vld [vmem:[%s7 + $0x4] sm:$0xf]
        %v3330 = vld [vmem:[%s7 + $0x8] sm:$0xf]
        %v3331 = vld [vmem:[%s7 + $0xc] sm:$0xf]
        %v3332 = vld [vmem:[%s8] sm:$0x1]
        %v3334 = vlaneseq
        %v3335 = vshrl.u32 %v3334, 7
        %v3336 = vsub.s32 0, %v3335
        %v3337 = vrot.slane %v3332, %v3336
        %v3343 = vunpack.c.l.b16 %v3328
        %v3344 = vunpack.c.l.b16 %v3329
        %v3345 = vunpack.c.l.b16 %v3330
        %v3346 = vunpack.c.l.b16 %v3331
        %v3347 = vpack.c.b16 %v3344, %v3343
        %v3348 = vpack.c.b16 %v3346, %v3345
        %v3352 = vsel %vm644, %v3320, 0
        %v3355 = vsel %vm644, %v3321, 0
        %v3358 = vsel %vm644, %v3322, 0
        %v3361 = vsel %vm644, %v3323, 0
        %v3364 = vsel %vm644, %v3324, 0
        %v3367 = vsel %vm644, %v3325, 0
        %v3370 = vsel %vm644, %v3326, 0
        %v3373 = vsel %vm644, %v3327, 0
        %3375 = vmatprep.subr.bf16.mxu0 0
        %3376 = vmatpush1.bf16.msra.mxu0 0
        %3377 = vmatprep.subr.bf16.mxu0 0
        %3378 = vmatpush1.bf16.msra.mxu0 0
        %3379 = vmatprep.subr.bf16.mxu0 0
        %3380 = vmatpush1.bf16.msra.mxu0 0
        %3381 = vmatprep.subr.bf16.mxu0 0
        %3382 = vmatpush1.bf16.msra.mxu0 0
        %3383 = vmatprep.subr.bf16.mxu0 0
        %3384 = vmatpush1.bf16.msra.mxu0 0
        %3385 = vmatprep.subr.bf16.mxu0 0
        %3386 = vmatpush1.bf16.msra.mxu0 0
        %3387 = vmatprep.subr.bf16.mxu0 0
        %3388 = vmatpush1.bf16.msra.mxu0 %v3348
        %3389 = vmatprep.subr.bf16.mxu0 0
        %3390 = vmatpush1.bf16.msra.mxu0 %v3347
        %3391 = vmatprep.subr.bf16.mxu0 0
        %3392 = vmatpush2.bf16.msra.mxu0 0
        %3393 = vmatprep.subr.bf16.mxu0 0
        %3394 = vmatpush2.bf16.msra.mxu0 0
        %3395 = vmatprep.subr.bf16.mxu0 0
        %3396 = vmatpush2.bf16.msra.mxu0 0
        %3397 = vmatprep.subr.bf16.mxu0 0
        %3398 = vmatpush2.bf16.msra.mxu0 0
        %3399 = vmatprep.subr.bf16.mxu0 0
        %3400 = vmatpush2.bf16.msra.mxu0 0
        %3401 = vmatprep.subr.bf16.mxu0 0
        %3402 = vmatpush2.bf16.msra.mxu0 0
        %3403 = vmatprep.subr.bf16.mxu0 0
        %3404 = vmatpush2.bf16.msra.mxu0 0
        %3405 = vmatprep.subr.bf16.mxu0 0
        %3406 = vmatpush2.bf16.msra.mxu0 0
        %3407 = vmatprep.mubr.bf16.mxu0 0
        %3408 = vmatmul.mubr.bf16.gmra.mxu0 %v3352
        %v3409 = vpop.f32.mrf.mxu0
        %v3410 = vadd.f32 %v3337, %v3409
        %v3411 = vpop.f32.mrf.mxu0
        %v3412 = vpop.f32.mrf.mxu0
        %v3413 = vadd.f32 %v3337, %v3412
        %v3414 = vpop.f32.mrf.mxu0
        %3415 = vmatprep.mubr.bf16.mxu0 0
        %3416 = vmatmul.mubr.bf16.gmra.mxu0 %v3355
        %v3417 = vpop.f32.mrf.mxu0
        %v3418 = vadd.f32 %v3337, %v3417
        %v3419 = vpop.f32.mrf.mxu0
        %v3420 = vpop.f32.mrf.mxu0
        %v3421 = vadd.f32 %v3337, %v3420
        %v3422 = vpop.f32.mrf.mxu0
        %3423 = vmatprep.mubr.bf16.mxu0 0
        %3424 = vmatmul.mubr.bf16.gmra.mxu0 %v3358
        %v3425 = vpop.f32.mrf.mxu0
        %v3426 = vadd.f32 %v3337, %v3425
        %v3427 = vpop.f32.mrf.mxu0
        %v3428 = vpop.f32.mrf.mxu0
        %v3429 = vadd.f32 %v3337, %v3428
        %v3430 = vpop.f32.mrf.mxu0
        %3431 = vmatprep.mubr.bf16.mxu0 0
        %3432 = vmatmul.mubr.bf16.gmra.mxu0 %v3361
        %v3433 = vpop.f32.mrf.mxu0
        %v3434 = vadd.f32 %v3337, %v3433
        %v3435 = vpop.f32.mrf.mxu0
        %v3436 = vpop.f32.mrf.mxu0
        %v3437 = vadd.f32 %v3337, %v3436
        %v3438 = vpop.f32.mrf.mxu0
        %3439 = vmatprep.mubr.bf16.mxu0 0
        %3440 = vmatmul.mubr.bf16.gmra.mxu0 %v3364
        %v3441 = vpop.f32.mrf.mxu0
        %v3442 = vadd.f32 %v3337, %v3441
        %v3443 = vpop.f32.mrf.mxu0
        %v3444 = vpop.f32.mrf.mxu0
        %v3445 = vadd.f32 %v3337, %v3444
        %v3446 = vpop.f32.mrf.mxu0
        %3447 = vmatprep.mubr.bf16.mxu0 0
        %3448 = vmatmul.mubr.bf16.gmra.mxu0 %v3367
        %v3449 = vpop.f32.mrf.mxu0
        %v3450 = vadd.f32 %v3337, %v3449
        %v3451 = vpop.f32.mrf.mxu0
        %v3452 = vpop.f32.mrf.mxu0
        %v3453 = vadd.f32 %v3337, %v3452
        %v3454 = vpop.f32.mrf.mxu0
        %3455 = vmatprep.mubr.bf16.mxu0 0
        %3456 = vmatmul.mubr.bf16.gmra.mxu0 %v3370
        %v3457 = vpop.f32.mrf.mxu0
        %v3458 = vadd.f32 %v3337, %v3457
        %v3459 = vpop.f32.mrf.mxu0
        %v3460 = vpop.f32.mrf.mxu0
        %v3461 = vadd.f32 %v3337, %v3460
        %v3462 = vpop.f32.mrf.mxu0
        %3463 = vmatprep.mubr.bf16.mxu0 0
        %3464 = vmatmul.mubr.bf16.gmra.mxu0 %v3373
        %v3465 = vpop.f32.mrf.mxu0
        %v3466 = vadd.f32 %v3337, %v3465
        %v3467 = vpop.f32.mrf.mxu0
        %v3468 = vpop.f32.mrf.mxu0
        %v3469 = vadd.f32 %v3337, %v3468
        %v3470 = vpop.f32.mrf.mxu0
        %3471 = vdwg.mxu0
        %v3472 = vadd.f32 %v628, %v3410
        %v3473 = vadd.f32 %v629, %v3413
        %v3474 = vadd.f32 %v630, %v3418
        %v3475 = vadd.f32 %v631, %v3421
        %v3476 = vadd.f32 %v632, %v3426
        %v3477 = vadd.f32 %v633, %v3429
        %v3478 = vadd.f32 %v634, %v3434
        %v3479 = vadd.f32 %v635, %v3437
        %v3480 = vadd.f32 %v636, %v3442
        %v3481 = vadd.f32 %v637, %v3445
        %v3482 = vadd.f32 %v638, %v3450
        %v3483 = vadd.f32 %v639, %v3453
        %v3484 = vadd.f32 %v640, %v3458
        %v3485 = vadd.f32 %v641, %v3461
        %v3486 = vadd.f32 %v642, %v3466
        %v3487 = vadd.f32 %v643, %v3469
        %v3488 = vsel %vm644, %v3472, 0.0
        %3489 = vadd.xlane.f32.xlu0 %v3488
        %v3490 = vpop.xlane.xlu0 %3489
        %v3491 = vsel %vm644, %v3473, 0.0
        %3492 = vadd.xlane.f32.xlu0 %v3491
        %v3493 = vpop.xlane.xlu0 %3492
        %v3494 = vsel %vm644, %v3474, 0.0
        %3495 = vadd.xlane.f32.xlu0 %v3494
        %v3496 = vpop.xlane.xlu0 %3495
        %v3497 = vsel %vm644, %v3475, 0.0
        %3498 = vadd.xlane.f32.xlu0 %v3497
        %v3499 = vpop.xlane.xlu0 %3498
        %v3500 = vsel %vm644, %v3476, 0.0
        %3501 = vadd.xlane.f32.xlu0 %v3500
        %v3502 = vpop.xlane.xlu0 %3501
        %v3503 = vsel %vm644, %v3477, 0.0
        %3504 = vadd.xlane.f32.xlu0 %v3503
        %v3505 = vpop.xlane.xlu0 %3504
        %v3506 = vsel %vm644, %v3478, 0.0
        %3507 = vadd.xlane.f32.xlu0 %v3506
        %v3508 = vpop.xlane.xlu0 %3507
        %v3509 = vsel %vm644, %v3479, 0.0
        %3510 = vadd.xlane.f32.xlu0 %v3509
        %v3511 = vpop.xlane.xlu0 %3510
        %v3512 = vsel %vm644, %v3480, 0.0
        %3513 = vadd.xlane.f32.xlu0 %v3512
        %v3514 = vpop.xlane.xlu0 %3513
        %v3515 = vsel %vm644, %v3481, 0.0
        %3516 = vadd.xlane.f32.xlu0 %v3515
        %v3517 = vpop.xlane.xlu0 %3516
        %v3518 = vsel %vm644, %v3482, 0.0
        %3519 = vadd.xlane.f32.xlu0 %v3518
        %v3520 = vpop.xlane.xlu0 %3519
        %v3521 = vsel %vm644, %v3483, 0.0
        %3522 = vadd.xlane.f32.xlu0 %v3521
        %v3523 = vpop.xlane.xlu0 %3522
        %v3524 = vsel %vm644, %v3484, 0.0
        %3525 = vadd.xlane.f32.xlu0 %v3524
        %v3526 = vpop.xlane.xlu0 %3525
        %v3527 = vsel %vm644, %v3485, 0.0
        %3528 = vadd.xlane.f32.xlu0 %v3527
        %v3529 = vpop.xlane.xlu0 %3528
        %v3530 = vsel %vm644, %v3486, 0.0
        %3531 = vadd.xlane.f32.xlu0 %v3530
        %v3532 = vpop.xlane.xlu0 %3531
        %v3533 = vsel %vm644, %v3487, 0.0
        %3534 = vadd.xlane.f32.xlu0 %v3533
        %v3535 = vpop.xlane.xlu0 %3534
        %v3536 = vmul.f32 %v3472, %v3472
        %v3537 = vmul.f32 %v3473, %v3473
        %v3538 = vmul.f32 %v3474, %v3474
        %v3539 = vmul.f32 %v3475, %v3475
        %v3540 = vmul.f32 %v3476, %v3476
        %v3541 = vmul.f32 %v3477, %v3477
        %v3542 = vmul.f32 %v3478, %v3478
        %v3543 = vmul.f32 %v3479, %v3479
        %v3544 = vmul.f32 %v3480, %v3480
        %v3545 = vmul.f32 %v3481, %v3481
        %v3546 = vmul.f32 %v3482, %v3482
        %v3547 = vmul.f32 %v3483, %v3483
        %v3548 = vmul.f32 %v3484, %v3484
        %v3549 = vmul.f32 %v3485, %v3485
        %v3550 = vmul.f32 %v3486, %v3486
        %v3551 = vmul.f32 %v3487, %v3487
        %v3552 = vsel %vm644, %v3536, 0.0
        %3553 = vadd.xlane.f32.xlu0 %v3552
        %v3554 = vpop.xlane.xlu0 %3553
        %v3555 = vsel %vm644, %v3537, 0.0
        %3556 = vadd.xlane.f32.xlu0 %v3555
        %v3557 = vpop.xlane.xlu0 %3556
        %v3558 = vsel %vm644, %v3538, 0.0
        %3559 = vadd.xlane.f32.xlu0 %v3558
        %v3560 = vpop.xlane.xlu0 %3559
        %v3561 = vsel %vm644, %v3539, 0.0
        %3562 = vadd.xlane.f32.xlu0 %v3561
        %v3563 = vpop.xlane.xlu0 %3562
        %v3564 = vsel %vm644, %v3540, 0.0
        %3565 = vadd.xlane.f32.xlu0 %v3564
        %v3566 = vpop.xlane.xlu0 %3565
        %v3567 = vsel %vm644, %v3541, 0.0
        %3568 = vadd.xlane.f32.xlu0 %v3567
        %v3569 = vpop.xlane.xlu0 %3568
        %v3570 = vsel %vm644, %v3542, 0.0
        %3571 = vadd.xlane.f32.xlu0 %v3570
        %v3572 = vpop.xlane.xlu0 %3571
        %v3573 = vsel %vm644, %v3543, 0.0
        %3574 = vadd.xlane.f32.xlu0 %v3573
        %v3575 = vpop.xlane.xlu0 %3574
        %v3576 = vsel %vm644, %v3544, 0.0
        %3577 = vadd.xlane.f32.xlu0 %v3576
        %v3578 = vpop.xlane.xlu0 %3577
        %v3579 = vsel %vm644, %v3545, 0.0
        %3580 = vadd.xlane.f32.xlu0 %v3579
        %v3581 = vpop.xlane.xlu0 %3580
        %v3582 = vsel %vm644, %v3546, 0.0
        %3583 = vadd.xlane.f32.xlu0 %v3582
        %v3584 = vpop.xlane.xlu0 %3583
        %v3585 = vsel %vm644, %v3547, 0.0
        %3586 = vadd.xlane.f32.xlu0 %v3585
        %v3587 = vpop.xlane.xlu0 %3586
        %v3588 = vsel %vm644, %v3548, 0.0
        %3589 = vadd.xlane.f32.xlu0 %v3588
        %v3590 = vpop.xlane.xlu0 %3589
        %v3591 = vsel %vm644, %v3549, 0.0
        %3592 = vadd.xlane.f32.xlu0 %v3591
        %v3593 = vpop.xlane.xlu0 %3592
        %v3594 = vsel %vm644, %v3550, 0.0
        %3595 = vadd.xlane.f32.xlu0 %v3594
        %v3596 = vpop.xlane.xlu0 %3595
        %v3597 = vsel %vm644, %v3551, 0.0
        %3598 = vadd.xlane.f32.xlu0 %v3597
        %v3599 = vpop.xlane.xlu0 %3598
        %v3600 = vmul.f32 %v3490, 0.03125
        %v3601 = vmul.f32 %v3493, 0.03125
        %v3602 = vmul.f32 %v3496, 0.03125
        %v3603 = vmul.f32 %v3499, 0.03125
        %v3604 = vmul.f32 %v3502, 0.03125
        %v3605 = vmul.f32 %v3505, 0.03125
        %v3606 = vmul.f32 %v3508, 0.03125
        %v3607 = vmul.f32 %v3511, 0.03125
        %v3608 = vmul.f32 %v3514, 0.03125
        %v3609 = vmul.f32 %v3517, 0.03125
        %v3610 = vmul.f32 %v3520, 0.03125
        %v3611 = vmul.f32 %v3523, 0.03125
        %v3612 = vmul.f32 %v3526, 0.03125
        %v3613 = vmul.f32 %v3529, 0.03125
        %v3614 = vmul.f32 %v3532, 0.03125
        %v3615 = vmul.f32 %v3535, 0.03125
        %v3616 = vmul.f32 %v3554, 0.03125
        %v3617 = vmul.f32 %v3557, 0.03125
        %v3618 = vmul.f32 %v3560, 0.03125
        %v3619 = vmul.f32 %v3563, 0.03125
        %v3620 = vmul.f32 %v3566, 0.03125
        %v3621 = vmul.f32 %v3569, 0.03125
        %v3622 = vmul.f32 %v3572, 0.03125
        %v3623 = vmul.f32 %v3575, 0.03125
        %v3624 = vmul.f32 %v3578, 0.03125
        %v3625 = vmul.f32 %v3581, 0.03125
        %v3626 = vmul.f32 %v3584, 0.03125
        %v3627 = vmul.f32 %v3587, 0.03125
        %v3628 = vmul.f32 %v3590, 0.03125
        %v3629 = vmul.f32 %v3593, 0.03125
        %v3630 = vmul.f32 %v3596, 0.03125
        %v3631 = vmul.f32 %v3599, 0.03125
        %v3632 = vmul.f32 %v3600, %v3600
        %v3633 = vmul.f32 %v3601, %v3601
        %v3634 = vmul.f32 %v3602, %v3602
        %v3635 = vmul.f32 %v3603, %v3603
        %v3636 = vmul.f32 %v3604, %v3604
        %v3637 = vmul.f32 %v3605, %v3605
        %v3638 = vmul.f32 %v3606, %v3606
        %v3639 = vmul.f32 %v3607, %v3607
        %v3640 = vmul.f32 %v3608, %v3608
        %v3641 = vmul.f32 %v3609, %v3609
        %v3642 = vmul.f32 %v3610, %v3610
        %v3643 = vmul.f32 %v3611, %v3611
        %v3644 = vmul.f32 %v3612, %v3612
        %v3645 = vmul.f32 %v3613, %v3613
        %v3646 = vmul.f32 %v3614, %v3614
        %v3647 = vmul.f32 %v3615, %v3615
        %v3648 = vsub.f32 %v3616, %v3632
        %v3649 = vsub.f32 %v3617, %v3633
        %v3650 = vsub.f32 %v3618, %v3634
        %v3651 = vsub.f32 %v3619, %v3635
        %v3652 = vsub.f32 %v3620, %v3636
        %v3653 = vsub.f32 %v3621, %v3637
        %v3654 = vsub.f32 %v3622, %v3638
        %v3655 = vsub.f32 %v3623, %v3639
        %v3656 = vsub.f32 %v3624, %v3640
        %v3657 = vsub.f32 %v3625, %v3641
        %v3658 = vsub.f32 %v3626, %v3642
        %v3659 = vsub.f32 %v3627, %v3643
        %v3660 = vsub.f32 %v3628, %v3644
        %v3661 = vsub.f32 %v3629, %v3645
        %v3662 = vsub.f32 %v3630, %v3646
        %v3663 = vsub.f32 %v3631, %v3647
        %v3664 = vsub.f32 %v3472, %v3600
        %v3665 = vsub.f32 %v3473, %v3601
        %v3666 = vsub.f32 %v3474, %v3602
        %v3667 = vsub.f32 %v3475, %v3603
        %v3668 = vsub.f32 %v3476, %v3604
        %v3669 = vsub.f32 %v3477, %v3605
        %v3670 = vsub.f32 %v3478, %v3606
        %v3671 = vsub.f32 %v3479, %v3607
        %v3672 = vsub.f32 %v3480, %v3608
        %v3673 = vsub.f32 %v3481, %v3609
        %v3674 = vsub.f32 %v3482, %v3610
        %v3675 = vsub.f32 %v3483, %v3611
        %v3676 = vsub.f32 %v3484, %v3612
        %v3677 = vsub.f32 %v3485, %v3613
        %v3678 = vsub.f32 %v3486, %v3614
        %v3679 = vsub.f32 %v3487, %v3615
        %v3680 = vadd.f32 %v3648, 1e-05
        %v3681 = vadd.f32 %v3649, 1e-05
        %v3682 = vadd.f32 %v3650, 1e-05
        %v3683 = vadd.f32 %v3651, 1e-05
        %v3684 = vadd.f32 %v3652, 1e-05
        %v3685 = vadd.f32 %v3653, 1e-05
        %v3686 = vadd.f32 %v3654, 1e-05
        %v3687 = vadd.f32 %v3655, 1e-05
        %v3688 = vadd.f32 %v3656, 1e-05
        %v3689 = vadd.f32 %v3657, 1e-05
        %v3690 = vadd.f32 %v3658, 1e-05
        %v3691 = vadd.f32 %v3659, 1e-05
        %v3692 = vadd.f32 %v3660, 1e-05
        %v3693 = vadd.f32 %v3661, 1e-05
        %v3694 = vadd.f32 %v3662, 1e-05
        %v3695 = vadd.f32 %v3663, 1e-05
        %v3696 = vrsqrt.pop %v3680
        %v3697 = vrsqrt.pop %v3681
        %v3698 = vrsqrt.pop %v3682
        %v3699 = vrsqrt.pop %v3683
        %v3700 = vrsqrt.pop %v3684
        %v3701 = vrsqrt.pop %v3685
        %v3702 = vrsqrt.pop %v3686
        %v3703 = vrsqrt.pop %v3687
        %v3704 = vrsqrt.pop %v3688
        %v3705 = vrsqrt.pop %v3689
        %v3706 = vrsqrt.pop %v3690
        %v3707 = vrsqrt.pop %v3691
        %v3708 = vrsqrt.pop %v3692
        %v3709 = vrsqrt.pop %v3693
        %v3710 = vrsqrt.pop %v3694
        %v3711 = vrsqrt.pop %v3695
        %v3712 = vmul.f32 %v3664, %v3696
        %v3713 = vmul.f32 %v3665, %v3697
        %v3714 = vmul.f32 %v3666, %v3698
        %v3715 = vmul.f32 %v3667, %v3699
        %v3716 = vmul.f32 %v3668, %v3700
        %v3717 = vmul.f32 %v3669, %v3701
        %v3718 = vmul.f32 %v3670, %v3702
        %v3719 = vmul.f32 %v3671, %v3703
        %v3720 = vmul.f32 %v3672, %v3704
        %v3721 = vmul.f32 %v3673, %v3705
        %v3722 = vmul.f32 %v3674, %v3706
        %v3723 = vmul.f32 %v3675, %v3707
        %v3724 = vmul.f32 %v3676, %v3708
        %v3725 = vmul.f32 %v3677, %v3709
        %v3726 = vmul.f32 %v3678, %v3710
        %v3727 = vmul.f32 %v3679, %v3711
        %v3728 = vld [vmem:[%s9] sm:$0x1]
        %v3730 = vlaneseq
        %v3731 = vshrl.u32 %v3730, 7
        %v3732 = vsub.s32 0, %v3731
        %v3733 = vrot.slane %v3728, %v3732
        %v3735 = vmul.f32 %v3712, %v3733
        %v3736 = vmul.f32 %v3713, %v3733
        %v3737 = vmul.f32 %v3714, %v3733
        %v3738 = vmul.f32 %v3715, %v3733
        %v3739 = vmul.f32 %v3716, %v3733
        %v3740 = vmul.f32 %v3717, %v3733
        %v3741 = vmul.f32 %v3718, %v3733
        %v3742 = vmul.f32 %v3719, %v3733
        %v3743 = vmul.f32 %v3720, %v3733
        %v3744 = vmul.f32 %v3721, %v3733
        %v3745 = vmul.f32 %v3722, %v3733
        %v3746 = vmul.f32 %v3723, %v3733
        %v3747 = vmul.f32 %v3724, %v3733
        %v3748 = vmul.f32 %v3725, %v3733
        %v3749 = vmul.f32 %v3726, %v3733
        %v3750 = vmul.f32 %v3727, %v3733
        %v3751 = vld [vmem:[%s10] sm:$0x1]
        %v3753 = vlaneseq
        %v3754 = vshrl.u32 %v3753, 7
        %v3755 = vsub.s32 0, %v3754
        %v3756 = vrot.slane %v3751, %v3755
        %v3758 = vadd.f32 %v3735, %v3756
        %v3759 = vadd.f32 %v3736, %v3756
        %v3760 = vadd.f32 %v3737, %v3756
        %v3761 = vadd.f32 %v3738, %v3756
        %v3762 = vadd.f32 %v3739, %v3756
        %v3763 = vadd.f32 %v3740, %v3756
        %v3764 = vadd.f32 %v3741, %v3756
        %v3765 = vadd.f32 %v3742, %v3756
        %v3766 = vadd.f32 %v3743, %v3756
        %v3767 = vadd.f32 %v3744, %v3756
        %v3768 = vadd.f32 %v3745, %v3756
        %v3769 = vadd.f32 %v3746, %v3756
        %v3770 = vadd.f32 %v3747, %v3756
        %v3771 = vadd.f32 %v3748, %v3756
        %v3772 = vadd.f32 %v3749, %v3756
        %v3773 = vadd.f32 %v3750, %v3756
        %v3774 = vpack.c.bf16 %v3759, %v3758
        %v3775 = vpack.c.bf16 %v3761, %v3760
        %v3776 = vpack.c.bf16 %v3763, %v3762
        %v3777 = vpack.c.bf16 %v3765, %v3764
        %v3778 = vpack.c.bf16 %v3767, %v3766
        %v3779 = vpack.c.bf16 %v3769, %v3768
        %v3780 = vpack.c.bf16 %v3771, %v3770
        %v3781 = vpack.c.bf16 %v3773, %v3772
        %v3782 = vld [vmem:[%s11] sm:$0xf]
        %v3783 = vld [vmem:[%s11 + $0x4] sm:$0xf]
        %v3784 = vld [vmem:[%s11 + $0x8] sm:$0xf]
        %v3785 = vld [vmem:[%s11 + $0xc] sm:$0xf]
        %v3786 = vld [vmem:[%s12] sm:$0x1]
        %v3788 = vlaneseq
        %v3789 = vshrl.u32 %v3788, 7
        %v3790 = vsub.s32 0, %v3789
        %v3791 = vrot.slane %v3786, %v3790
        %v3797 = vunpack.c.l.b16 %v3782
        %v3798 = vunpack.c.l.b16 %v3783
        %v3799 = vunpack.c.l.b16 %v3784
        %v3800 = vunpack.c.l.b16 %v3785
        %v3801 = vpack.c.b16 %v3798, %v3797
        %v3802 = vpack.c.b16 %v3800, %v3799
        %v3806 = vsel %vm644, %v3774, 0
        %v3809 = vsel %vm644, %v3775, 0
        %v3812 = vsel %vm644, %v3776, 0
        %v3815 = vsel %vm644, %v3777, 0
        %v3818 = vsel %vm644, %v3778, 0
        %v3821 = vsel %vm644, %v3779, 0
        %v3824 = vsel %vm644, %v3780, 0
        %v3827 = vsel %vm644, %v3781, 0
        %3829 = vmatprep.subr.bf16.mxu0 0
        %3830 = vmatpush1.bf16.msra.mxu0 0
        %3831 = vmatprep.subr.bf16.mxu0 0
        %3832 = vmatpush1.bf16.msra.mxu0 0
        %3833 = vmatprep.subr.bf16.mxu0 0
        %3834 = vmatpush1.bf16.msra.mxu0 0
        %3835 = vmatprep.subr.bf16.mxu0 0
        %3836 = vmatpush1.bf16.msra.mxu0 0
        %3837 = vmatprep.subr.bf16.mxu0 0
        %3838 = vmatpush1.bf16.msra.mxu0 0
        %3839 = vmatprep.subr.bf16.mxu0 0
        %3840 = vmatpush1.bf16.msra.mxu0 0
        %3841 = vmatprep.subr.bf16.mxu0 0
        %3842 = vmatpush1.bf16.msra.mxu0 %v3802
        %3843 = vmatprep.subr.bf16.mxu0 0
        %3844 = vmatpush1.bf16.msra.mxu0 %v3801
        %3845 = vmatprep.subr.bf16.mxu0 0
        %3846 = vmatpush2.bf16.msra.mxu0 0
        %3847 = vmatprep.subr.bf16.mxu0 0
        %3848 = vmatpush2.bf16.msra.mxu0 0
        %3849 = vmatprep.subr.bf16.mxu0 0
        %3850 = vmatpush2.bf16.msra.mxu0 0
        %3851 = vmatprep.subr.bf16.mxu0 0
        %3852 = vmatpush2.bf16.msra.mxu0 0
        %3853 = vmatprep.subr.bf16.mxu0 0
        %3854 = vmatpush2.bf16.msra.mxu0 0
        %3855 = vmatprep.subr.bf16.mxu0 0
        %3856 = vmatpush2.bf16.msra.mxu0 0
        %3857 = vmatprep.subr.bf16.mxu0 0
        %3858 = vmatpush2.bf16.msra.mxu0 0
        %3859 = vmatprep.subr.bf16.mxu0 0
        %3860 = vmatpush2.bf16.msra.mxu0 0
        %3861 = vmatprep.mubr.bf16.mxu0 0
        %3862 = vmatmul.mubr.bf16.gmra.mxu0 %v3806
        %v3863 = vpop.f32.mrf.mxu0
        %v3864 = vadd.f32 %v3791, %v3863
        %v3865 = vpop.f32.mrf.mxu0
        %v3866 = vpop.f32.mrf.mxu0
        %v3867 = vadd.f32 %v3791, %v3866
        %v3868 = vpop.f32.mrf.mxu0
        %3869 = vmatprep.mubr.bf16.mxu0 0
        %3870 = vmatmul.mubr.bf16.gmra.mxu0 %v3809
        %v3871 = vpop.f32.mrf.mxu0
        %v3872 = vadd.f32 %v3791, %v3871
        %v3873 = vpop.f32.mrf.mxu0
        %v3874 = vpop.f32.mrf.mxu0
        %v3875 = vadd.f32 %v3791, %v3874
        %v3876 = vpop.f32.mrf.mxu0
        %3877 = vmatprep.mubr.bf16.mxu0 0
        %3878 = vmatmul.mubr.bf16.gmra.mxu0 %v3812
        %v3879 = vpop.f32.mrf.mxu0
        %v3880 = vadd.f32 %v3791, %v3879
        %v3881 = vpop.f32.mrf.mxu0
        %v3882 = vpop.f32.mrf.mxu0
        %v3883 = vadd.f32 %v3791, %v3882
        %v3884 = vpop.f32.mrf.mxu0
        %3885 = vmatprep.mubr.bf16.mxu0 0
        %3886 = vmatmul.mubr.bf16.gmra.mxu0 %v3815
        %v3887 = vpop.f32.mrf.mxu0
        %v3888 = vadd.f32 %v3791, %v3887
        %v3889 = vpop.f32.mrf.mxu0
        %v3890 = vpop.f32.mrf.mxu0
        %v3891 = vadd.f32 %v3791, %v3890
        %v3892 = vpop.f32.mrf.mxu0
        %3893 = vmatprep.mubr.bf16.mxu0 0
        %3894 = vmatmul.mubr.bf16.gmra.mxu0 %v3818
        %v3895 = vpop.f32.mrf.mxu0
        %v3896 = vadd.f32 %v3791, %v3895
        %v3897 = vpop.f32.mrf.mxu0
        %v3898 = vpop.f32.mrf.mxu0
        %v3899 = vadd.f32 %v3791, %v3898
        %v3900 = vpop.f32.mrf.mxu0
        %3901 = vmatprep.mubr.bf16.mxu0 0
        %3902 = vmatmul.mubr.bf16.gmra.mxu0 %v3821
        %v3903 = vpop.f32.mrf.mxu0
        %v3904 = vadd.f32 %v3791, %v3903
        %v3905 = vpop.f32.mrf.mxu0
        %v3906 = vpop.f32.mrf.mxu0
        %v3907 = vadd.f32 %v3791, %v3906
        %v3908 = vpop.f32.mrf.mxu0
        %3909 = vmatprep.mubr.bf16.mxu0 0
        %3910 = vmatmul.mubr.bf16.gmra.mxu0 %v3824
        %v3911 = vpop.f32.mrf.mxu0
        %v3912 = vadd.f32 %v3791, %v3911
        %v3913 = vpop.f32.mrf.mxu0
        %v3914 = vpop.f32.mrf.mxu0
        %v3915 = vadd.f32 %v3791, %v3914
        %v3916 = vpop.f32.mrf.mxu0
        %3917 = vmatprep.mubr.bf16.mxu0 0
        %3918 = vmatmul.mubr.bf16.gmra.mxu0 %v3827
        %v3919 = vpop.f32.mrf.mxu0
        %v3920 = vadd.f32 %v3791, %v3919
        %v3921 = vpop.f32.mrf.mxu0
        %v3922 = vpop.f32.mrf.mxu0
        %v3923 = vadd.f32 %v3791, %v3922
        %v3924 = vpop.f32.mrf.mxu0
        %3925 = vdwg.mxu0
        %v3926 = vmul.f32 %v3864, 0.5
        %v3927 = vmul.f32 %v3867, 0.5
        %v3928 = vmul.f32 %v3872, 0.5
        %v3929 = vmul.f32 %v3875, 0.5
        %v3930 = vmul.f32 %v3880, 0.5
        %v3931 = vmul.f32 %v3883, 0.5
        %v3932 = vmul.f32 %v3888, 0.5
        %v3933 = vmul.f32 %v3891, 0.5
        %v3934 = vmul.f32 %v3896, 0.5
        %v3935 = vmul.f32 %v3899, 0.5
        %v3936 = vmul.f32 %v3904, 0.5
        %v3937 = vmul.f32 %v3907, 0.5
        %v3938 = vmul.f32 %v3912, 0.5
        %v3939 = vmul.f32 %v3915, 0.5
        %v3940 = vmul.f32 %v3920, 0.5
        %v3941 = vmul.f32 %v3923, 0.5
        %v3942 = vmul.f32 %v3864, 0.70710677
        %v3943 = vmul.f32 %v3867, 0.70710677
        %v3944 = vmul.f32 %v3872, 0.70710677
        %v3945 = vmul.f32 %v3875, 0.70710677
        %v3946 = vmul.f32 %v3880, 0.70710677
        %v3947 = vmul.f32 %v3883, 0.70710677
        %v3948 = vmul.f32 %v3888, 0.70710677
        %v3949 = vmul.f32 %v3891, 0.70710677
        %v3950 = vmul.f32 %v3896, 0.70710677
        %v3951 = vmul.f32 %v3899, 0.70710677
        %v3952 = vmul.f32 %v3904, 0.70710677
        %v3953 = vmul.f32 %v3907, 0.70710677
        %v3954 = vmul.f32 %v3912, 0.70710677
        %v3955 = vmul.f32 %v3915, 0.70710677
        %v3956 = vmul.f32 %v3920, 0.70710677
        %v3957 = vmul.f32 %v3923, 0.70710677
        %v3958 = verf.f32.pop %v3942
        %v3959 = verf.f32.pop %v3943
        %v3960 = verf.f32.pop %v3944
        %v3961 = verf.f32.pop %v3945
        %v3962 = verf.f32.pop %v3946
        %v3963 = verf.f32.pop %v3947
        %v3964 = verf.f32.pop %v3948
        %v3965 = verf.f32.pop %v3949
        %v3966 = verf.f32.pop %v3950
        %v3967 = verf.f32.pop %v3951
        %v3968 = verf.f32.pop %v3952
        %v3969 = verf.f32.pop %v3953
        %v3970 = verf.f32.pop %v3954
        %v3971 = verf.f32.pop %v3955
        %v3972 = verf.f32.pop %v3956
        %v3973 = verf.f32.pop %v3957
        %v3974 = vadd.f32 %v3958, 1.0
        %v3975 = vadd.f32 %v3959, 1.0
        %v3976 = vadd.f32 %v3960, 1.0
        %v3977 = vadd.f32 %v3961, 1.0
        %v3978 = vadd.f32 %v3962, 1.0
        %v3979 = vadd.f32 %v3963, 1.0
        %v3980 = vadd.f32 %v3964, 1.0
        %v3981 = vadd.f32 %v3965, 1.0
        %v3982 = vadd.f32 %v3966, 1.0
        %v3983 = vadd.f32 %v3967, 1.0
        %v3984 = vadd.f32 %v3968, 1.0
        %v3985 = vadd.f32 %v3969, 1.0
        %v3986 = vadd.f32 %v3970, 1.0
        %v3987 = vadd.f32 %v3971, 1.0
        %v3988 = vadd.f32 %v3972, 1.0
        %v3989 = vadd.f32 %v3973, 1.0
        %v3990 = vmul.f32 %v3926, %v3974
        %v3991 = vmul.f32 %v3927, %v3975
        %v3992 = vmul.f32 %v3928, %v3976
        %v3993 = vmul.f32 %v3929, %v3977
        %v3994 = vmul.f32 %v3930, %v3978
        %v3995 = vmul.f32 %v3931, %v3979
        %v3996 = vmul.f32 %v3932, %v3980
        %v3997 = vmul.f32 %v3933, %v3981
        %v3998 = vmul.f32 %v3934, %v3982
        %v3999 = vmul.f32 %v3935, %v3983
        %v4000 = vmul.f32 %v3936, %v3984
        %v4001 = vmul.f32 %v3937, %v3985
        %v4002 = vmul.f32 %v3938, %v3986
        %v4003 = vmul.f32 %v3939, %v3987
        %v4004 = vmul.f32 %v3940, %v3988
        %v4005 = vmul.f32 %v3941, %v3989
        %v4006 = vpack.c.bf16 %v3991, %v3990
        %v4007 = vpack.c.bf16 %v3993, %v3992
        %v4008 = vpack.c.bf16 %v3995, %v3994
        %v4009 = vpack.c.bf16 %v3997, %v3996
        %v4010 = vpack.c.bf16 %v3999, %v3998
        %v4011 = vpack.c.bf16 %v4001, %v4000
        %v4012 = vpack.c.bf16 %v4003, %v4002
        %v4013 = vpack.c.bf16 %v4005, %v4004
        %v4014 = vld [vmem:[%s13] sm:$0xf]
        %v4015 = vld [vmem:[%s13 + $0x4] sm:$0xf]
        %v4016 = vld [vmem:[%s13 + $0x8] sm:$0xf]
        %v4017 = vld [vmem:[%s13 + $0xc] sm:$0xf]
        %v4018 = vld [vmem:[%s13 + $0x10] sm:$0xf]
        %v4019 = vld [vmem:[%s13 + $0x14] sm:$0xf]
        %v4020 = vld [vmem:[%s13 + $0x18] sm:$0xf]
        %v4021 = vld [vmem:[%s13 + $0x1c] sm:$0xf]
        %v4022 = vld [vmem:[%s13 + $0x20] sm:$0xf]
        %v4023 = vld [vmem:[%s13 + $0x24] sm:$0xf]
        %v4024 = vld [vmem:[%s13 + $0x28] sm:$0xf]
        %v4025 = vld [vmem:[%s13 + $0x2c] sm:$0xf]
        %v4026 = vld [vmem:[%s13 + $0x30] sm:$0xf]
        %v4027 = vld [vmem:[%s13 + $0x34] sm:$0xf]
        %v4028 = vld [vmem:[%s13 + $0x38] sm:$0xf]
        %v4029 = vld [vmem:[%s13 + $0x3c] sm:$0xf]
        %v4030 = vld [vmem:[%s14] sm:$0x1]
        %v4032 = vlaneseq
        %v4033 = vshrl.u32 %v4032, 7
        %v4034 = vsub.s32 0, %v4033
        %v4035 = vrot.slane %v4030, %v4034
        %v4053 = vunpack.c.l.b16 %v4014
        %v4054 = vunpack.c.l.b16 %v4015
        %v4055 = vunpack.c.l.b16 %v4016
        %v4056 = vunpack.c.l.b16 %v4017
        %v4057 = vunpack.c.l.b16 %v4018
        %v4058 = vunpack.c.l.b16 %v4019
        %v4059 = vunpack.c.l.b16 %v4020
        %v4060 = vunpack.c.l.b16 %v4021
        %v4061 = vunpack.c.l.b16 %v4022
        %v4062 = vunpack.c.l.b16 %v4023
        %v4063 = vunpack.c.l.b16 %v4024
        %v4064 = vunpack.c.l.b16 %v4025
        %v4065 = vunpack.c.l.b16 %v4026
        %v4066 = vunpack.c.l.b16 %v4027
        %v4067 = vunpack.c.l.b16 %v4028
        %v4068 = vunpack.c.l.b16 %v4029
        %v4069 = vpack.c.b16 %v4054, %v4053
        %v4070 = vpack.c.b16 %v4056, %v4055
        %v4071 = vpack.c.b16 %v4058, %v4057
        %v4072 = vpack.c.b16 %v4060, %v4059
        %v4073 = vpack.c.b16 %v4062, %v4061
        %v4074 = vpack.c.b16 %v4064, %v4063
        %v4075 = vpack.c.b16 %v4066, %v4065
        %v4076 = vpack.c.b16 %v4068, %v4067
        %4085 = vmatprep.subr.bf16.mxu0 0
        %4086 = vmatpush1.bf16.msra.mxu0 %v4076
        %4087 = vmatprep.subr.bf16.mxu0 0
        %4088 = vmatpush1.bf16.msra.mxu0 %v4075
        %4089 = vmatprep.subr.bf16.mxu0 0
        %4090 = vmatpush1.bf16.msra.mxu0 %v4074
        %4091 = vmatprep.subr.bf16.mxu0 0
        %4092 = vmatpush1.bf16.msra.mxu0 %v4073
        %4093 = vmatprep.subr.bf16.mxu0 0
        %4094 = vmatpush1.bf16.msra.mxu0 %v4072
        %4095 = vmatprep.subr.bf16.mxu0 0
        %4096 = vmatpush1.bf16.msra.mxu0 %v4071
        %4097 = vmatprep.subr.bf16.mxu0 0
        %4098 = vmatpush1.bf16.msra.mxu0 %v4070
        %4099 = vmatprep.subr.bf16.mxu0 0
        %4100 = vmatpush1.bf16.msra.mxu0 %v4069
        %4101 = vmatprep.subr.bf16.mxu0 0
        %4102 = vmatpush2.bf16.msra.mxu0 0
        %4103 = vmatprep.subr.bf16.mxu0 0
        %4104 = vmatpush2.bf16.msra.mxu0 0
        %4105 = vmatprep.subr.bf16.mxu0 0
        %4106 = vmatpush2.bf16.msra.mxu0 0
        %4107 = vmatprep.subr.bf16.mxu0 0
        %4108 = vmatpush2.bf16.msra.mxu0 0
        %4109 = vmatprep.subr.bf16.mxu0 0
        %4110 = vmatpush2.bf16.msra.mxu0 0
        %4111 = vmatprep.subr.bf16.mxu0 0
        %4112 = vmatpush2.bf16.msra.mxu0 0
        %4113 = vmatprep.subr.bf16.mxu0 0
        %4114 = vmatpush2.bf16.msra.mxu0 0
        %4115 = vmatprep.subr.bf16.mxu0 0
        %4116 = vmatpush2.bf16.msra.mxu0 0
        %4117 = vmatprep.mubr.bf16.mxu0 0
        %4118 = vmatmul.mubr.bf16.gmra.mxu0 %v4006
        %v4119 = vpop.f32.mrf.mxu0
        %v4120 = vadd.f32 %v4035, %v4119
        %v4121 = vpop.f32.mrf.mxu0
        %v4122 = vpop.f32.mrf.mxu0
        %v4123 = vadd.f32 %v4035, %v4122
        %v4124 = vpop.f32.mrf.mxu0
        %4125 = vmatprep.mubr.bf16.mxu0 0
        %4126 = vmatmul.mubr.bf16.gmra.mxu0 %v4007
        %v4127 = vpop.f32.mrf.mxu0
        %v4128 = vadd.f32 %v4035, %v4127
        %v4129 = vpop.f32.mrf.mxu0
        %v4130 = vpop.f32.mrf.mxu0
        %v4131 = vadd.f32 %v4035, %v4130
        %v4132 = vpop.f32.mrf.mxu0
        %4133 = vmatprep.mubr.bf16.mxu0 0
        %4134 = vmatmul.mubr.bf16.gmra.mxu0 %v4008
        %v4135 = vpop.f32.mrf.mxu0
        %v4136 = vadd.f32 %v4035, %v4135
        %v4137 = vpop.f32.mrf.mxu0
        %v4138 = vpop.f32.mrf.mxu0
        %v4139 = vadd.f32 %v4035, %v4138
        %v4140 = vpop.f32.mrf.mxu0
        %4141 = vmatprep.mubr.bf16.mxu0 0
        %4142 = vmatmul.mubr.bf16.gmra.mxu0 %v4009
        %v4143 = vpop.f32.mrf.mxu0
        %v4144 = vadd.f32 %v4035, %v4143
        %v4145 = vpop.f32.mrf.mxu0
        %v4146 = vpop.f32.mrf.mxu0
        %v4147 = vadd.f32 %v4035, %v4146
        %v4148 = vpop.f32.mrf.mxu0
        %4149 = vmatprep.mubr.bf16.mxu0 0
        %4150 = vmatmul.mubr.bf16.gmra.mxu0 %v4010
        %v4151 = vpop.f32.mrf.mxu0
        %v4152 = vadd.f32 %v4035, %v4151
        %v4153 = vpop.f32.mrf.mxu0
        %v4154 = vpop.f32.mrf.mxu0
        %v4155 = vadd.f32 %v4035, %v4154
        %v4156 = vpop.f32.mrf.mxu0
        %4157 = vmatprep.mubr.bf16.mxu0 0
        %4158 = vmatmul.mubr.bf16.gmra.mxu0 %v4011
        %v4159 = vpop.f32.mrf.mxu0
        %v4160 = vadd.f32 %v4035, %v4159
        %v4161 = vpop.f32.mrf.mxu0
        %v4162 = vpop.f32.mrf.mxu0
        %v4163 = vadd.f32 %v4035, %v4162
        %v4164 = vpop.f32.mrf.mxu0
        %4165 = vmatprep.mubr.bf16.mxu0 0
        %4166 = vmatmul.mubr.bf16.gmra.mxu0 %v4012
        %v4167 = vpop.f32.mrf.mxu0
        %v4168 = vadd.f32 %v4035, %v4167
        %v4169 = vpop.f32.mrf.mxu0
        %v4170 = vpop.f32.mrf.mxu0
        %v4171 = vadd.f32 %v4035, %v4170
        %v4172 = vpop.f32.mrf.mxu0
        %4173 = vmatprep.mubr.bf16.mxu0 0
        %4174 = vmatmul.mubr.bf16.gmra.mxu0 %v4013
        %v4175 = vpop.f32.mrf.mxu0
        %v4176 = vadd.f32 %v4035, %v4175
        %v4177 = vpop.f32.mrf.mxu0
        %v4178 = vpop.f32.mrf.mxu0
        %v4179 = vadd.f32 %v4035, %v4178
        %v4180 = vpop.f32.mrf.mxu0
        %4181 = vdwg.mxu0
        %v4182 = vadd.f32 %v3472, %v4120
        %v4183 = vadd.f32 %v3473, %v4123
        %v4184 = vadd.f32 %v3474, %v4128
        %v4185 = vadd.f32 %v3475, %v4131
        %v4186 = vadd.f32 %v3476, %v4136
        %v4187 = vadd.f32 %v3477, %v4139
        %v4188 = vadd.f32 %v3478, %v4144
        %v4189 = vadd.f32 %v3479, %v4147
        %v4190 = vadd.f32 %v3480, %v4152
        %v4191 = vadd.f32 %v3481, %v4155
        %v4192 = vadd.f32 %v3482, %v4160
        %v4193 = vadd.f32 %v3483, %v4163
        %v4194 = vadd.f32 %v3484, %v4168
        %v4195 = vadd.f32 %v3485, %v4171
        %v4196 = vadd.f32 %v3486, %v4176
        %v4197 = vadd.f32 %v3487, %v4179
        %4198 = vst.msk [vmem:[%s619] sm:$0xff] %vm644, %v4182
        %4199 = vst.msk [vmem:[%s619 + $0x8] sm:$0xff] %vm644, %v4183
        %4200 = vst.msk [vmem:[%s619 + $0x10] sm:$0xff] %vm644, %v4184
        %4201 = vst.msk [vmem:[%s619 + $0x18] sm:$0xff] %vm644, %v4185
        %4202 = vst.msk [vmem:[%s619 + $0x20] sm:$0xff] %vm644, %v4186
        %4203 = vst.msk [vmem:[%s619 + $0x28] sm:$0xff] %vm644, %v4187
        %4204 = vst.msk [vmem:[%s619 + $0x30] sm:$0xff] %vm644, %v4188
        %4205 = vst.msk [vmem:[%s619 + $0x38] sm:$0xff] %vm644, %v4189
        %4206 = vst.msk [vmem:[%s619 + $0x40] sm:$0xff] %vm644, %v4190
        %4207 = vst.msk [vmem:[%s619 + $0x48] sm:$0xff] %vm644, %v4191
        %4208 = vst.msk [vmem:[%s619 + $0x50] sm:$0xff] %vm644, %v4192
        %4209 = vst.msk [vmem:[%s619 + $0x58] sm:$0xff] %vm644, %v4193
        %4210 = vst.msk [vmem:[%s619 + $0x60] sm:$0xff] %vm644, %v4194
        %4211 = vst.msk [vmem:[%s619 + $0x68] sm:$0xff] %vm644, %v4195
        %4212 = vst.msk [vmem:[%s619 + $0x70] sm:$0xff] %vm644, %v4196
        %4213 = vst.msk [vmem:[%s619 + $0x78] sm:$0xff] %vm644, %v4197
        %s4214 = sand.u32 %s375, 1
        %s4215 = sand.u32 %s375, 1
        %s4216 = smul.addr %s4215, 128
        %s4217 = scalar_lea.vmem [#allocation3], %s4216
        // Predicated region
        $region119: #{basic_layer_forward.3} parent=113 // pred_check
          %p4218 = pneg %p385
        $region120: #{basic_layer_forward.3} parent=113 // pred_check_branch
          %4220 = sbr.rel (%p4218) target = $region122
        $region121: #{basic_layer_forward.3} parent=113 // pred_region
          %s4221 = smul.addr %s30, 32
          %s4222 = sadd.s32 %s31, %s4221
          %s4223 = smul.addr %s4222, 8
          %s4224 = scalar_lea.vmem %s15, %s4223
          // Predicated region
          $region123: #{basic_layer_forward.3} parent=121 // pred_check
            _
          $region124: #{basic_layer_forward.3} parent=121 // pred_check_branch
            %4226 = sbr.rel (0) target = $region126
          $region125: #{basic_layer_forward.3} parent=121 // pred_region
            // Predicated region
            $region127: #{basic_layer_forward.3} parent=125 // pred_check
              _
            $region128: #{basic_layer_forward.3} parent=125 // pred_check_branch
              %4228 = sbr.rel (0) target = $region130
            $region129: #{basic_layer_forward.3} parent=125 // pred_region
              // Predicated region
              $region142: #{basic_layer_forward.3} parent=129 // pred_check
                _
              $region143: #{basic_layer_forward.3} parent=129 // pred_check_branch
                %4274 = sbr.rel (0) target = $region145
              $region144: #{basic_layer_forward.3} parent=129 // pred_region
                loop: start=0, step=1, limit=1
                $region146: #{basic_layer_forward.3} parent=144 // loop_pre_header
                  _
                $region147: #{basic_layer_forward.3} parent=144 // loop_header
                  %s4276 = sphi 0, %s4280
                  %p4277 = scmp.ge.s32.totalorder %s4276, 1
                  %s4281 = sphi %s4217, %s4217
                  %s4282 = sphi %s4224, %s4224
                $region148: #{basic_layer_forward.3} parent=144 // loop_header_branch
                  %4279 = sbr.rel (%p4277) target = $region152
                $region149: #{basic_layer_forward.3} parent=144 // loop_body
                  %v4283 = vld [vmem:[%s4281] sm:$0xff]
                  %4284 = vst [vmem:[%s4282] sm:$0xff] %v4283
                  %v4285 = vld [vmem:[%s4281 + $0x8] sm:$0xff]
                  %4286 = vst [vmem:[%s4282 + $0x10] sm:$0xff] %v4285
                  %v4287 = vld [vmem:[%s4281 + $0x10] sm:$0xff]
                  %4288 = vst [vmem:[%s4282 + $0x20] sm:$0xff] %v4287
                  %v4289 = vld [vmem:[%s4281 + $0x18] sm:$0xff]
                  %4290 = vst [vmem:[%s4282 + $0x30] sm:$0xff] %v4289
                  %v4291 = vld [vmem:[%s4281 + $0x20] sm:$0xff]
                  %4292 = vst [vmem:[%s4282 + $0x40] sm:$0xff] %v4291
                  %v4293 = vld [vmem:[%s4281 + $0x28] sm:$0xff]
                  %4294 = vst [vmem:[%s4282 + $0x50] sm:$0xff] %v4293
                  %v4295 = vld [vmem:[%s4281 + $0x30] sm:$0xff]
                  %4296 = vst [vmem:[%s4282 + $0x60] sm:$0xff] %v4295
                  %v4297 = vld [vmem:[%s4281 + $0x38] sm:$0xff]
                  %4298 = vst [vmem:[%s4282 + $0x70] sm:$0xff] %v4297
                  %v4299 = vld [vmem:[%s4281 + $0x40] sm:$0xff]
                  %4300 = vst [vmem:[%s4282 + $0x80] sm:$0xff] %v4299
                  %v4301 = vld [vmem:[%s4281 + $0x48] sm:$0xff]
                  %4302 = vst [vmem:[%s4282 + $0x90] sm:$0xff] %v4301
                  %v4303 = vld [vmem:[%s4281 + $0x50] sm:$0xff]
                  %4304 = vst [vmem:[%s4282 + $0xa0] sm:$0xff] %v4303
                  %v4305 = vld [vmem:[%s4281 + $0x58] sm:$0xff]
                  %4306 = vst [vmem:[%s4282 + $0xb0] sm:$0xff] %v4305
                  %v4307 = vld [vmem:[%s4281 + $0x60] sm:$0xff]
                  %4308 = vst [vmem:[%s4282 + $0xc0] sm:$0xff] %v4307
                  %v4309 = vld [vmem:[%s4281 + $0x68] sm:$0xff]
                  %4310 = vst [vmem:[%s4282 + $0xd0] sm:$0xff] %v4309
                  %v4311 = vld [vmem:[%s4281 + $0x70] sm:$0xff]
                  %4312 = vst [vmem:[%s4282 + $0xe0] sm:$0xff] %v4311
                  %v4313 = vld [vmem:[%s4281 + $0x78] sm:$0xff]
                  %4314 = vst [vmem:[%s4282 + $0xf0] sm:$0xff] %v4313
                $region150: #{basic_layer_forward.3} parent=144 // loop_footer
                  %s4280 = sadd.s32 1, %s4276
                $region151: #{basic_layer_forward.3} parent=144 // loop_footer_branch
                  %4275 = sbr.rel target = $region147
                $region152: #{basic_layer_forward.3} parent=144 // loop_exit
                  _
              $region145: #{basic_layer_forward.3} parent=129 // pred_fallthru
                _
              // Predicated region
              $region153: #{basic_layer_forward.3} parent=129 // pred_check
                _
              $region154: #{basic_layer_forward.3} parent=129 // pred_check_branch
                %4316 = sbr.rel target = $region156
              $region155: #{basic_layer_forward.3} parent=129 // pred_region
                _
              $region156: #{basic_layer_forward.3} parent=129 // pred_fallthru
                _
            $region130: #{basic_layer_forward.3} parent=125 // pred_fallthru
              _
            // Predicated region
            $region131: #{basic_layer_forward.3} parent=125 // pred_check
              _
            $region132: #{basic_layer_forward.3} parent=125 // pred_check_branch
              %4230 = sbr.rel target = $region134
            $region133: #{basic_layer_forward.3} parent=125 // pred_region
              %s4232 = ssub.s32 256, 1
              loop: start=0, step=1, limit=1
              $region135: #{basic_layer_forward.3} parent=133 // loop_pre_header
                _
              $region136: #{basic_layer_forward.3} parent=133 // loop_header
                %s4234 = sphi 0, %s4238
                %p4235 = scmp.ge.s32.totalorder %s4234, 1
                %s4239 = sphi %s4217, %s4217
                %s4240 = sphi %s4224, %s4224
              $region137: #{basic_layer_forward.3} parent=133 // loop_header_branch
                %4237 = sbr.rel (%p4235) target = $region141
              $region138: #{basic_layer_forward.3} parent=133 // loop_body
                %v4241 = vld [vmem:[%s4239] sm:%s4232]
                %4242 = vst [vmem:[%s4240] sm:%s4232] %v4241
                %v4243 = vld [vmem:[%s4239 + $0x8] sm:%s4232]
                %4244 = vst [vmem:[%s4240 + $0x10] sm:%s4232] %v4243
                %v4245 = vld [vmem:[%s4239 + $0x10] sm:%s4232]
                %4246 = vst [vmem:[%s4240 + $0x20] sm:%s4232] %v4245
                %v4247 = vld [vmem:[%s4239 + $0x18] sm:%s4232]
                %4248 = vst [vmem:[%s4240 + $0x30] sm:%s4232] %v4247
                %v4249 = vld [vmem:[%s4239 + $0x20] sm:%s4232]
                %4250 = vst [vmem:[%s4240 + $0x40] sm:%s4232] %v4249
                %v4251 = vld [vmem:[%s4239 + $0x28] sm:%s4232]
                %4252 = vst [vmem:[%s4240 + $0x50] sm:%s4232] %v4251
                %v4253 = vld [vmem:[%s4239 + $0x30] sm:%s4232]
                %4254 = vst [vmem:[%s4240 + $0x60] sm:%s4232] %v4253
                %v4255 = vld [vmem:[%s4239 + $0x38] sm:%s4232]
                %4256 = vst [vmem:[%s4240 + $0x70] sm:%s4232] %v4255
                %v4257 = vld [vmem:[%s4239 + $0x40] sm:%s4232]
                %4258 = vst [vmem:[%s4240 + $0x80] sm:%s4232] %v4257
                %v4259 = vld [vmem:[%s4239 + $0x48] sm:%s4232]
                %4260 = vst [vmem:[%s4240 + $0x90] sm:%s4232] %v4259
                %v4261 = vld [vmem:[%s4239 + $0x50] sm:%s4232]
                %4262 = vst [vmem:[%s4240 + $0xa0] sm:%s4232] %v4261
                %v4263 = vld [vmem:[%s4239 + $0x58] sm:%s4232]
                %4264 = vst [vmem:[%s4240 + $0xb0] sm:%s4232] %v4263
                %v4265 = vld [vmem:[%s4239 + $0x60] sm:%s4232]
                %4266 = vst [vmem:[%s4240 + $0xc0] sm:%s4232] %v4265
                %v4267 = vld [vmem:[%s4239 + $0x68] sm:%s4232]
                %4268 = vst [vmem:[%s4240 + $0xd0] sm:%s4232] %v4267
                %v4269 = vld [vmem:[%s4239 + $0x70] sm:%s4232]
                %4270 = vst [vmem:[%s4240 + $0xe0] sm:%s4232] %v4269
                %v4271 = vld [vmem:[%s4239 + $0x78] sm:%s4232]
                %4272 = vst [vmem:[%s4240 + $0xf0] sm:%s4232] %v4271
              $region139: #{basic_layer_forward.3} parent=133 // loop_footer
                %s4238 = sadd.s32 1, %s4234
              $region140: #{basic_layer_forward.3} parent=133 // loop_footer_branch
                %4233 = sbr.rel target = $region136
              $region141: #{basic_layer_forward.3} parent=133 // loop_exit
                _
            $region134: #{basic_layer_forward.3} parent=125 // pred_fallthru
              _
          $region126: #{basic_layer_forward.3} parent=121 // pred_fallthru
            _
          %4317 = vnop
        $region122: #{basic_layer_forward.3} parent=113 // pred_fallthru
          _
      $region114: #{basic_layer_forward.3} parent=5 // pred_fallthru
        _
      %p4318 = scmp.le.s32.totalorder 2, %s21
      // Predicated region
      $region157: #{basic_layer_forward.3} parent=5 // pred_check
        %p4319 = pneg %p4318
      $region158: #{basic_layer_forward.3} parent=5 // pred_check_branch
        %4321 = sbr.rel (%p4319) target = $region160
      $region159: #{basic_layer_forward.3} parent=5 // pred_region
        %s4322 = ssub.s32 %s21, 2
        // Predicated region
        $region161: #{basic_layer_forward.3} parent=159 // pred_check
          %p4323 = pneg %p391
        $region162: #{basic_layer_forward.3} parent=159 // pred_check_branch
          %4325 = sbr.rel (%p4323) target = $region164
        $region163: #{basic_layer_forward.3} parent=159 // pred_region
          %s4326 = sand.u32 %s376, 1
          %s4327 = sand.u32 %s376, 1
          %s4328 = smul.addr %s4327, 128
          %s4329 = scalar_lea.vmem [#allocation3], %s4328
        $region164: #{basic_layer_forward.3} parent=159 // pred_fallthru
          _
      $region160: #{basic_layer_forward.3} parent=5 // pred_fallthru
        _
    $region6: #{basic_layer_forward.3} parent=1 // loop_footer
      %s25 = sadd.s32 1, %s21
    $region7: #{basic_layer_forward.3} parent=1 // loop_footer_branch
      %20 = sbr.rel target = $region3
    $region8: #{basic_layer_forward.3} parent=1 // loop_exit
      _

</llo_original>
